<compile_context>
chip_gen: v7x
topology: tpu7x:2x2x1
jax: 0.10.0
libtpu: 0.0.40
codegen_flags: <defaults>
</compile_context>

<pallas_src>
import jax
import jax.numpy as jnp
from jax import lax
from jax.experimental import pallas as pl
from jax.experimental.pallas import tpu as pltpu

MATMUL_DTYPE = jnp.float32

_TAPS = tuple((dy, dx) for dy in range(3) for dx in range(3))   # tap k = dy*3 + dx


def _im2col(padded, x_dim, y_dim):
    """padded (ref or value): (N, X+2, Y+2, C)  ->  (N*X*Y, 9*C) shifted-window slab.

    Column order is tap-major (k = dy*3 + dx), channel-minor, matching the wrapper's
    weight reshape (9, C, Ch) -> (9*C, Ch)."""
    n = padded.shape[0]
    c = padded.shape[-1]
    m = n * x_dim * y_dim
    cols = [padded[:, dy:dy + x_dim, dx:dx + y_dim, :].reshape(m, c)
            for dy, dx in _TAPS]
    return jnp.concatenate(cols, axis=-1)


# ----------------------------------------------------------------------------
# Prologue kernel: h-independent projection for one timestep
#   pre = (bl + bi + bt) + conv([x ; x_iter], [Wl ; Wi])      (3x3, padding=1)
# as a single im2col matmul on the MXU.
# ----------------------------------------------------------------------------
def input_proj_kernel(xz_ref, w_ref, bias_ref, pre_ref):
    n, xp2, yp2, _ = xz_ref.shape
    x_dim, y_dim = xp2 - 2, yp2 - 2
    slab = _im2col(xz_ref, x_dim, y_dim)                          # (M, 9K)
    pre_ref[...] = (jnp.dot(slab.astype(MATMUL_DTYPE),
                            w_ref[...].astype(MATMUL_DTYPE),
                            preferred_element_type=jnp.float32)
                    + bias_ref[...])


# ----------------------------------------------------------------------------
# Fused bidirectional recurrence kernel.  One grid step = one (direction, time-block);
# TB timesteps are processed by an in-kernel loop to amortize per-grid-step overhead.
#   h = BatchNorm( ReLU( pre + conv(h_prev, Wt) ) )
# Hidden state h lives in a padded VMEM scratch persisting across grid steps.
# ----------------------------------------------------------------------------
def bcrnn_recurrence_kernel(pre_ref, wt_ref, gamma_ref, beta_ref, out_ref, h_ref):
    d = pl.program_id(0)          # 0 = forward in time, 1 = backward
    tb = pl.program_id(1)         # time-block index within the direction
    n, xp2, yp2, ch = h_ref.shape
    x_dim, y_dim = xp2 - 2, yp2 - 2
    m = n * x_dim * y_dim
    t_blk = pre_ref.shape[0]

    # Fresh zero hidden state at the start of each direction.
    @pl.when(tb == 0)
    def _():
        h_ref[...] = jnp.zeros_like(h_ref)

    inv_m = 1.0 / m
    wt = wt_ref[...].astype(MATMUL_DTYPE)     # hoisted: loaded once per grid step
    gamma = gamma_ref[...]
    beta = beta_ref[...]

    @pl.loop(0, t_blk)
    def _(j):
        # In-block time index: forward consumes j, backward consumes t_blk-1-j, so the
        # output block is already time-aligned for both directions.
        local_t = j * (1 - d) + (t_blk - 1 - j) * d

        # One fused im2col matmul per step: (M, 9*Ch) @ (9*Ch, Ch).
        slab = _im2col(h_ref, x_dim, y_dim)
        acc = pre_ref[local_t] + jnp.dot(slab.astype(MATMUL_DTYPE), wt,
                                         preferred_element_type=jnp.float32)
        act = jnp.maximum(acc, 0.0)

        # BatchNorm2d, training-mode batch stats; two-pass variance for robustness.
        mean = jnp.sum(act, axis=0, keepdims=True) * inv_m
        cen = act - mean
        var = jnp.sum(cen * cen, axis=0, keepdims=True) * inv_m
        h_new = cen * (lax.rsqrt(var + 1e-5) * gamma) + beta          # (M, Ch)

        # Update hidden state: interior of the padded scratch (borders stay zero).
        h_ref[:, 1:x_dim + 1, 1:y_dim + 1, :] = h_new.reshape(n, x_dim, y_dim, ch)

        # Store directly in NCHW-flattened layout (N, Ch, X*Y): lane-dense output
        # (X*Y on lanes) and no post-kernel XLA transpose.  The transpose rides the XLU.
        out_ref[local_t] = jnp.transpose(h_new.reshape(n, x_dim * y_dim, ch), (0, 2, 1))


def _pick_time_block(T, max_tb=8):
    """Largest divisor of T that is <= max_tb (amortizes per-grid-step overhead)."""
    tb = min(T, max_tb)
    while T % tb:
        tb -= 1
    return tb


# ----------------------------------------------------------------------------
# BCRNN forward (wrapper: 2 pallas_calls total)
# ----------------------------------------------------------------------------
@jax.jit
def bcrnn_forward(x, x_iter, params):
    """x: (T, N, Cin, X, Y); x_iter: (T, N, Ch, X, Y).
    Returns (T*N, Ch, X, Y), or (T, 1, Ch, X, Y) if N == 1 (matches BCRNN.forward)."""
    T, N, cin, X, Y = x.shape
    ch = params["wl"].shape[-1]
    K = cin + ch
    M = N * X * Y
    XY = X * Y

    # ---- whole-tensor preprocessing (done once, not per step) ----
    xz = jnp.concatenate([x, x_iter], axis=2)                     # (T, N, K, X, Y)
    xz = jnp.transpose(xz, (0, 1, 3, 4, 2))                       # (T, N, X, Y, K)
    xz = jnp.pad(xz, ((0, 0), (0, 0), (1, 1), (1, 1), (0, 0)))    # (T, N, X+2, Y+2, K)

    # im2col weight layout: rows tap-major (k = dy*3+dx), channel-minor.
    wxi = jnp.concatenate([params["wl"], params["wi"]], axis=1).reshape(9 * K, ch)
    wt = params["wt"].reshape(9 * ch, ch)
    bias = (params["bl"] + params["bi"] + params["bt"]).reshape(1, ch)
    gamma = params["gamma"].reshape(1, ch)
    beta = params["beta"].reshape(1, ch)

    # ---- prologue: h-independent projection for every timestep (both dirs reuse it) --
    # TODO(synk): for large production frames on v7x (64 MiB VMEM) add spatial tiling of
    # the per-t frame (halo of 1 row) and/or stream xz in bf16.
    pre = pl.pallas_call(
        input_proj_kernel,
        out_shape=jax.ShapeDtypeStruct((T, M, ch), jnp.float32),
        grid=(T,),
        in_specs=[
            pl.BlockSpec((None, N, X + 2, Y + 2, K), lambda t: (t, 0, 0, 0, 0)),
            pl.BlockSpec((9 * K, ch), lambda t: (0, 0)),
            pl.BlockSpec((1, ch), lambda t: (0, 0)),
        ],
        out_specs=pl.BlockSpec((None, M, ch), lambda t: (t, 0, 0)),
        compiler_params=pltpu.CompilerParams(dimension_semantics=("parallel",)),
    )(xz, wxi, bias)

    # ---- fused bidirectional recurrence: grid = (direction, time-block) ----
    TB = _pick_time_block(T)
    nTB = T // TB

    # Direction 1 consumes time blocks (and in-block steps) in reverse, so its output
    # block is already time-aligned and the two directions just sum.
    def blk_idx(d, tb):
        return tb * (1 - d) + (nTB - 1 - tb) * d

    flops = 2 * (2 * T) * M * (9 * ch) * ch
    bytes_accessed = 4 * T * M * ch * 4 + 9 * ch * ch * 4

    # TODO(synk): on v7x, evaluate pltpu.CORE_PARALLEL on the direction axis (and verify
    # the per-core h scratch) to actually shard the two directions across TensorCores.
    out2 = pl.pallas_call(
        bcrnn_recurrence_kernel,
        out_shape=jax.ShapeDtypeStruct((2, T, N, ch, XY), jnp.float32),
        grid=(2, nTB),
        in_specs=[
            pl.BlockSpec((TB, M, ch), lambda d, tb: (blk_idx(d, tb), 0, 0)),
            pl.BlockSpec((9 * ch, ch), lambda d, tb: (0, 0)),
            pl.BlockSpec((1, ch), lambda d, tb: (0, 0)),
            pl.BlockSpec((1, ch), lambda d, tb: (0, 0)),
        ],
        out_specs=pl.BlockSpec((None, TB, N, ch, XY),
                               lambda d, tb: (d, blk_idx(d, tb), 0, 0, 0)),
        scratch_shapes=[pltpu.VMEM((N, X + 2, Y + 2, ch), jnp.float32)],
        compiler_params=pltpu.CompilerParams(
            dimension_semantics=("parallel", "arbitrary")),
        cost_estimate=pl.CostEstimate(flops=flops, transcendentals=2 * T * ch,
                                      bytes_accessed=bytes_accessed),
    )(pre, wt, gamma, beta)

    # Direction sum: single fused elementwise HBM pass in XLA (kept separate so the
    # direction axis stays safely parallel / core-shardable); the NCHW transpose was
    # already done in-kernel and the reshape below is contiguous (free).
    out = (out2[0] + out2[1]).reshape(T * N, ch, X, Y)
    if N == 1:
        out = out.reshape(T, 1, ch, X, Y)
    return out


# ----------------------------------------------------------------------------
# Pure-JAX reference (lax.conv) for the correctness check
# ----------------------------------------------------------------------------
def _conv_ref(x, w9, b):
    cin, cout = w9.shape[1], w9.shape[2]
    w4 = jnp.transpose(w9.reshape(3, 3, cin, cout), (3, 2, 0, 1))
    y = lax.conv_general_dilated(x, w4, (1, 1), ((1, 1), (1, 1)),
                                 dimension_numbers=("NCHW", "OIHW", "NCHW"))
    return y + b.reshape(1, cout, 1, 1)


def _crnn_cell_ref(x, it, h, p):
    pre = (_conv_ref(x, p["wl"], p["bl"]) + _conv_ref(it, p["wi"], p["bi"])
           + _conv_ref(h, p["wt"], p["bt"]))
    a = jnp.maximum(pre, 0.0)
    mean = a.mean(axis=(0, 2, 3), keepdims=True)
    var = ((a - mean) ** 2).mean(axis=(0, 2, 3), keepdims=True)
    xhat = (a - mean) / jnp.sqrt(var + 1e-5)
    return xhat * p["gamma"].reshape(1, -1, 1, 1) + p["beta"].reshape(1, -1, 1, 1)


def bcrnn_ref(x, x_iter, p):
    T, N, _, X, Y = x.shape
    ch = p["wl"].shape[-1]
    h0 = jnp.zeros((N, ch, X, Y), jnp.float32)
    fwd, bwd = [], []
    h = h0
    for t in range(T):
        h = _crnn_cell_ref(x[t], x_iter[t], h, p)
        fwd.append(h)
    h = h0
    for t in range(T):
        h = _crnn_cell_ref(x[T - 1 - t], x_iter[T - 1 - t], h, p)
        bwd.append(h)
    out = jnp.concatenate(fwd, 0) + jnp.concatenate(bwd[::-1], 0)
    if N == 1:
        out = out.reshape(T, 1, ch, X, Y)
    return out


# ----------------------------------------------------------------------------
if __name__ == "__main__":
    T, N, CIN, CH, X, Y = 4, 2, 2, 32, 16, 16

    key = jax.random.PRNGKey(0)
    ks = jax.random.split(key, 10)
    params = {
        "wl": 0.10 * jax.random.normal(ks[0], (9, CIN, CH), jnp.float32),
        "wi": 0.05 * jax.random.normal(ks[1], (9, CH, CH), jnp.float32),
        "wt": 0.05 * jax.random.normal(ks[2], (9, CH, CH), jnp.float32),
        "bl": 0.01 * jax.random.normal(ks[3], (CH,), jnp.float32),
        "bi": 0.01 * jax.random.normal(ks[4], (CH,), jnp.float32),
        "bt": 0.01 * jax.random.normal(ks[5], (CH,), jnp.float32),
        "gamma": jnp.ones((CH,), jnp.float32),   # PyTorch BatchNorm2d default init
        "beta": jnp.zeros((CH,), jnp.float32),
    }
    # TODO(synk): BatchNorm running-statistics tracking (running_mean/var buffers) is
    # not modeled; training-mode batch statistics are used, matching the module forward.

    x = jax.random.normal(ks[6], (T, N, CIN, X, Y), jnp.float32)
    x_iter = jax.random.normal(ks[7], (T, N, CH, X, Y), jnp.float32)

    out = bcrnn_forward(x, x_iter, params)
    out = jax.block_until_ready(out)

    ref = jax.block_until_ready(bcrnn_ref(x, x_iter, params))
    assert out.shape == (T * N, CH, X, Y), out.shape
    assert jnp.allclose(out, ref, atol=2e-3, rtol=2e-3), float(jnp.max(jnp.abs(out - ref)))

    print("KERNEL_OK")
</pallas_src>

<mosaic_0001>
module attributes {stable_mosaic.version = 11 : i64} {
  func.func @input_proj_kernel(%arg0: i32, %arg1: memref<1x2x18x18x34xf32, #tpu.memory_space<vmem>>, %arg2: memref<306x32xf32, #tpu.memory_space<vmem>>, %arg3: memref<1x32xf32, #tpu.memory_space<vmem>>, %arg4: memref<1x512x32xf32, #tpu.memory_space<vmem>>) attributes {dimension_semantics = [#tpu.dimension_semantics<parallel>], iteration_bounds = array<i64: 4>, scalar_prefetch = 0 : i64, scratch_operands = 0 : i64, tpu.core_type = #tpu.core_type<tc>, window_params = [{transform_indices = @transform_0, window_bounds = array<i64: 1, 2, 18, 18, 34>}, {pipeline_mode = #tpu.pipeline_mode<synchronous>, transform_indices = @transform_1, window_bounds = array<i64: 306, 32>}, {pipeline_mode = #tpu.pipeline_mode<synchronous>, transform_indices = @transform_2, window_bounds = array<i64: 1, 32>}, {transform_indices = @transform_3, window_bounds = array<i64: 1, 512, 32>}]} {
    %c0 = arith.constant 0 : index
    %c0_0 = arith.constant 0 : index
    %c0_1 = arith.constant 0 : index
    %c0_2 = arith.constant 0 : index
    %c0_3 = arith.constant 0 : index
    %0 = vector.load %arg1[%c0, %c0_0, %c0_1, %c0_2, %c0_3] : memref<1x2x18x18x34xf32, #tpu.memory_space<vmem>>, vector<1x2x16x16x34xf32>
    %1 = vector.shape_cast %0 : vector<1x2x16x16x34xf32> to vector<2x16x16x34xf32>
    %2 = vector.shape_cast %1 : vector<2x16x16x34xf32> to vector<512x34xf32>
    %c0_4 = arith.constant 0 : index
    %c0_5 = arith.constant 0 : index
    %c0_6 = arith.constant 0 : index
    %c1 = arith.constant 1 : index
    %c0_7 = arith.constant 0 : index
    %3 = vector.load %arg1[%c0_4, %c0_5, %c0_6, %c1, %c0_7] : memref<1x2x18x18x34xf32, #tpu.memory_space<vmem>>, vector<1x2x16x16x34xf32>
    %4 = vector.shape_cast %3 : vector<1x2x16x16x34xf32> to vector<2x16x16x34xf32>
    %5 = vector.shape_cast %4 : vector<2x16x16x34xf32> to vector<512x34xf32>
    %c0_8 = arith.constant 0 : index
    %c0_9 = arith.constant 0 : index
    %c0_10 = arith.constant 0 : index
    %c2 = arith.constant 2 : index
    %c0_11 = arith.constant 0 : index
    %6 = vector.load %arg1[%c0_8, %c0_9, %c0_10, %c2, %c0_11] : memref<1x2x18x18x34xf32, #tpu.memory_space<vmem>>, vector<1x2x16x16x34xf32>
    %7 = vector.shape_cast %6 : vector<1x2x16x16x34xf32> to vector<2x16x16x34xf32>
    %8 = vector.shape_cast %7 : vector<2x16x16x34xf32> to vector<512x34xf32>
    %c0_12 = arith.constant 0 : index
    %c0_13 = arith.constant 0 : index
    %c1_14 = arith.constant 1 : index
    %c0_15 = arith.constant 0 : index
    %c0_16 = arith.constant 0 : index
    %9 = vector.load %arg1[%c0_12, %c0_13, %c1_14, %c0_15, %c0_16] : memref<1x2x18x18x34xf32, #tpu.memory_space<vmem>>, vector<1x2x16x16x34xf32>
    %10 = vector.shape_cast %9 : vector<1x2x16x16x34xf32> to vector<2x16x16x34xf32>
    %11 = vector.shape_cast %10 : vector<2x16x16x34xf32> to vector<512x34xf32>
    %c0_17 = arith.constant 0 : index
    %c0_18 = arith.constant 0 : index
    %c1_19 = arith.constant 1 : index
    %c1_20 = arith.constant 1 : index
    %c0_21 = arith.constant 0 : index
    %12 = vector.load %arg1[%c0_17, %c0_18, %c1_19, %c1_20, %c0_21] : memref<1x2x18x18x34xf32, #tpu.memory_space<vmem>>, vector<1x2x16x16x34xf32>
    %13 = vector.shape_cast %12 : vector<1x2x16x16x34xf32> to vector<2x16x16x34xf32>
    %14 = vector.shape_cast %13 : vector<2x16x16x34xf32> to vector<512x34xf32>
    %c0_22 = arith.constant 0 : index
    %c0_23 = arith.constant 0 : index
    %c1_24 = arith.constant 1 : index
    %c2_25 = arith.constant 2 : index
    %c0_26 = arith.constant 0 : index
    %15 = vector.load %arg1[%c0_22, %c0_23, %c1_24, %c2_25, %c0_26] : memref<1x2x18x18x34xf32, #tpu.memory_space<vmem>>, vector<1x2x16x16x34xf32>
    %16 = vector.shape_cast %15 : vector<1x2x16x16x34xf32> to vector<2x16x16x34xf32>
    %17 = vector.shape_cast %16 : vector<2x16x16x34xf32> to vector<512x34xf32>
    %c0_27 = arith.constant 0 : index
    %c0_28 = arith.constant 0 : index
    %c2_29 = arith.constant 2 : index
    %c0_30 = arith.constant 0 : index
    %c0_31 = arith.constant 0 : index
    %18 = vector.load %arg1[%c0_27, %c0_28, %c2_29, %c0_30, %c0_31] : memref<1x2x18x18x34xf32, #tpu.memory_space<vmem>>, vector<1x2x16x16x34xf32>
    %19 = vector.shape_cast %18 : vector<1x2x16x16x34xf32> to vector<2x16x16x34xf32>
    %20 = vector.shape_cast %19 : vector<2x16x16x34xf32> to vector<512x34xf32>
    %c0_32 = arith.constant 0 : index
    %c0_33 = arith.constant 0 : index
    %c2_34 = arith.constant 2 : index
    %c1_35 = arith.constant 1 : index
    %c0_36 = arith.constant 0 : index
    %21 = vector.load %arg1[%c0_32, %c0_33, %c2_34, %c1_35, %c0_36] : memref<1x2x18x18x34xf32, #tpu.memory_space<vmem>>, vector<1x2x16x16x34xf32>
    %22 = vector.shape_cast %21 : vector<1x2x16x16x34xf32> to vector<2x16x16x34xf32>
    %23 = vector.shape_cast %22 : vector<2x16x16x34xf32> to vector<512x34xf32>
    %c0_37 = arith.constant 0 : index
    %c0_38 = arith.constant 0 : index
    %c2_39 = arith.constant 2 : index
    %c2_40 = arith.constant 2 : index
    %c0_41 = arith.constant 0 : index
    %24 = vector.load %arg1[%c0_37, %c0_38, %c2_39, %c2_40, %c0_41] : memref<1x2x18x18x34xf32, #tpu.memory_space<vmem>>, vector<1x2x16x16x34xf32>
    %25 = vector.shape_cast %24 : vector<1x2x16x16x34xf32> to vector<2x16x16x34xf32>
    %26 = vector.shape_cast %25 : vector<2x16x16x34xf32> to vector<512x34xf32>
    %27 = tpu.concatenate %2, %5, %8, %11, %14, %17, %20, %23, %26 in 1 : vector<512x34xf32>, vector<512x34xf32>, vector<512x34xf32>, vector<512x34xf32>, vector<512x34xf32>, vector<512x34xf32>, vector<512x34xf32>, vector<512x34xf32>, vector<512x34xf32> -> vector<512x306xf32>
    %c0_42 = arith.constant 0 : index
    %c0_43 = arith.constant 0 : index
    %28 = vector.load %arg2[%c0_42, %c0_43] : memref<306x32xf32, #tpu.memory_space<vmem>>, vector<306x32xf32>
    %cst = arith.constant dense<0.000000e+00> : vector<512x32xf32>
    %29 = tpu.matmul %27, %28, %cst {dimension_numbers = #tpu.dot_dimension_numbers<[1], [0], [0], [1], [0, 0, 1, 1], [], []>} : vector<512x306xf32>, vector<306x32xf32>, vector<512x32xf32> -> vector<512x32xf32>
    %c0_44 = arith.constant 0 : index
    %c0_45 = arith.constant 0 : index
    %30 = vector.load %arg3[%c0_44, %c0_45] : memref<1x32xf32, #tpu.memory_space<vmem>>, vector<1x32xf32>
    %31 = vector.broadcast %30 : vector<1x32xf32> to vector<512x32xf32>
    %32 = arith.addf %29, %31 : vector<512x32xf32>
    %c0_46 = arith.constant 0 : index
    %c0_47 = arith.constant 0 : index
    %c0_48 = arith.constant 0 : index
    %33 = vector.load %arg4[%c0_46, %c0_47, %c0_48] : memref<1x512x32xf32, #tpu.memory_space<vmem>>, vector<1x512x32xf32>
    %34 = vector.shape_cast %33 : vector<1x512x32xf32> to vector<512x32xf32>
    %35 = vector.shape_cast %32 : vector<512x32xf32> to vector<1x512x32xf32>
    tpu.vector_store %arg4[%c0_46, %c0_47, %c0_48], %35 {strides = array<i32>} : memref<1x512x32xf32, #tpu.memory_space<vmem>>, vector<1x512x32xf32>,
    return
  }
  func.func @transform_0(%arg0: i32) -> (i32, i32, i32, i32, i32) {
    %c0_i32 = arith.constant 0 : i32
    %c0_i32_0 = arith.constant 0 : i32
    %c0_i32_1 = arith.constant 0 : i32
    %c0_i32_2 = arith.constant 0 : i32
    %c0_i32_3 = arith.constant 0 : i32
    return %arg0, %c0_i32, %c0_i32_0, %c0_i32_1, %c0_i32_2 : i32, i32, i32, i32, i32
  }
  func.func @transform_1(%arg0: i32) -> (i32, i32) {
    %c0_i32 = arith.constant 0 : i32
    %c0_i32_0 = arith.constant 0 : i32
    %c0_i32_1 = arith.constant 0 : i32
    return %c0_i32, %c0_i32_0 : i32, i32
  }
  func.func @transform_2(%arg0: i32) -> (i32, i32) {
    %c0_i32 = arith.constant 0 : i32
    %c0_i32_0 = arith.constant 0 : i32
    %c0_i32_1 = arith.constant 0 : i32
    return %c0_i32, %c0_i32_0 : i32, i32
  }
  func.func @transform_3(%arg0: i32) -> (i32, i32, i32) {
    %c0_i32 = arith.constant 0 : i32
    %c0_i32_0 = arith.constant 0 : i32
    %c0_i32_1 = arith.constant 0 : i32
    return %arg0, %c0_i32, %c0_i32_0 : i32, i32, i32
  }
}

module attributes {stable_mosaic.version = 11 : i64} {
  func.func @bcrnn_recurrence_kernel(%arg0: i32, %arg1: i32, %arg2: memref<4x512x32xf32, #tpu.memory_space<vmem>>, %arg3: memref<288x32xf32, #tpu.memory_space<vmem>>, %arg4: memref<1x32xf32, #tpu.memory_space<vmem>>, %arg5: memref<1x32xf32, #tpu.memory_space<vmem>>, %arg6: memref<1x4x2x32x256xf32, #tpu.memory_space<vmem>>, %arg7: memref<2x18x18x32xf32, #tpu.memory_space<vmem>>) attributes {dimension_semantics = [#tpu.dimension_semantics<parallel>, #tpu.dimension_semantics<arbitrary>], iteration_bounds = array<i64: 2, 1>, scalar_prefetch = 0 : i64, scratch_operands = 1 : i64, tpu.core_type = #tpu.core_type<tc>, window_params = [{transform_indices = @transform_0, window_bounds = array<i64: 4, 512, 32>}, {pipeline_mode = #tpu.pipeline_mode<synchronous>, transform_indices = @transform_1, window_bounds = array<i64: 288, 32>}, {pipeline_mode = #tpu.pipeline_mode<synchronous>, transform_indices = @transform_2, window_bounds = array<i64: 1, 32>}, {pipeline_mode = #tpu.pipeline_mode<synchronous>, transform_indices = @transform_3, window_bounds = array<i64: 1, 32>}, {transform_indices = @transform_4, window_bounds = array<i64: 1, 4, 2, 32, 256>}]} {
    %c0_i32 = arith.constant 0 : i32
    %0 = arith.cmpi eq, %arg1, %c0_i32 : i32
    %1 = arith.extui %0 : i1 to i32
    %c0_i32_0 = arith.constant 0 : i32
    %2 = arith.cmpi ne, %1, %c0_i32_0 : i32
    scf.if %2 {
      %cst = arith.constant 0.000000e+00 : f32
      %7 = vector.broadcast %cst : f32 to vector<2x18x18x32xf32>
      %c0_8 = arith.constant 0 : index
      %c0_9 = arith.constant 0 : index
      %c0_10 = arith.constant 0 : index
      %c0_11 = arith.constant 0 : index
      %8 = vector.load %arg7[%c0_8, %c0_9, %c0_10, %c0_11] : memref<2x18x18x32xf32, #tpu.memory_space<vmem>>, vector<2x18x18x32xf32>
      tpu.vector_store %arg7[%c0_8, %c0_9, %c0_10, %c0_11], %7 {strides = array<i32>} : memref<2x18x18x32xf32, #tpu.memory_space<vmem>>, vector<2x18x18x32xf32>,
    } else {
    }
    %c0 = arith.constant 0 : index
    %c0_1 = arith.constant 0 : index
    %3 = vector.load %arg3[%c0, %c0_1] : memref<288x32xf32, #tpu.memory_space<vmem>>, vector<288x32xf32>
    %c0_2 = arith.constant 0 : index
    %c0_3 = arith.constant 0 : index
    %4 = vector.load %arg4[%c0_2, %c0_3] : memref<1x32xf32, #tpu.memory_space<vmem>>, vector<1x32xf32>
    %c0_4 = arith.constant 0 : index
    %c0_5 = arith.constant 0 : index
    %5 = vector.load %arg5[%c0_4, %c0_5] : memref<1x32xf32, #tpu.memory_space<vmem>>, vector<1x32xf32>
    %c0_i32_6 = arith.constant 0 : i32
    %c4_i32 = arith.constant 4 : i32
    %6 = arith.addi %c0_i32_6, %c4_i32 : i32
    %c1_i32 = arith.constant 1 : i32
    scf.for %arg8 = %c0_i32_6 to %6 step %c1_i32  : i32 {
      %c1_i32_8 = arith.constant 1 : i32
      %7 = arith.muli %arg8, %c1_i32_8 : i32
      %c0_i32_9 = arith.constant 0 : i32
      %8 = arith.addi %c0_i32_9, %7 : i32
      %c1_i32_10 = arith.constant 1 : i32
      %9 = arith.subi %c1_i32_10, %arg0 : i32
      %10 = arith.muli %8, %9 : i32
      %c3_i32 = arith.constant 3 : i32
      %11 = arith.subi %c3_i32, %8 : i32
      %12 = arith.muli %11, %arg0 : i32
      %13 = arith.addi %10, %12 : i32
      %c0_11 = arith.constant 0 : index
      %c0_12 = arith.constant 0 : index
      %c0_13 = arith.constant 0 : index
      %c0_14 = arith.constant 0 : index
      %14 = vector.load %arg7[%c0_11, %c0_12, %c0_13, %c0_14] : memref<2x18x18x32xf32, #tpu.memory_space<vmem>>, vector<2x16x16x32xf32>
      %15 = vector.shape_cast %14 : vector<2x16x16x32xf32> to vector<512x32xf32>
      %c0_15 = arith.constant 0 : index
      %c0_16 = arith.constant 0 : index
      %c1 = arith.constant 1 : index
      %c0_17 = arith.constant 0 : index
      %16 = vector.load %arg7[%c0_15, %c0_16, %c1, %c0_17] : memref<2x18x18x32xf32, #tpu.memory_space<vmem>>, vector<2x16x16x32xf32>
      %17 = vector.shape_cast %16 : vector<2x16x16x32xf32> to vector<512x32xf32>
      %c0_18 = arith.constant 0 : index
      %c0_19 = arith.constant 0 : index
      %c2 = arith.constant 2 : index
      %c0_20 = arith.constant 0 : index
      %18 = vector.load %arg7[%c0_18, %c0_19, %c2, %c0_20] : memref<2x18x18x32xf32, #tpu.memory_space<vmem>>, vector<2x16x16x32xf32>
      %19 = vector.shape_cast %18 : vector<2x16x16x32xf32> to vector<512x32xf32>
      %c0_21 = arith.constant 0 : index
      %c1_22 = arith.constant 1 : index
      %c0_23 = arith.constant 0 : index
      %c0_24 = arith.constant 0 : index
      %20 = vector.load %arg7[%c0_21, %c1_22, %c0_23, %c0_24] : memref<2x18x18x32xf32, #tpu.memory_space<vmem>>, vector<2x16x16x32xf32>
      %21 = vector.shape_cast %20 : vector<2x16x16x32xf32> to vector<512x32xf32>
      %c0_25 = arith.constant 0 : index
      %c1_26 = arith.constant 1 : index
      %c1_27 = arith.constant 1 : index
      %c0_28 = arith.constant 0 : index
      %22 = vector.load %arg7[%c0_25, %c1_26, %c1_27, %c0_28] : memref<2x18x18x32xf32, #tpu.memory_space<vmem>>, vector<2x16x16x32xf32>
      %23 = vector.shape_cast %22 : vector<2x16x16x32xf32> to vector<512x32xf32>
      %c0_29 = arith.constant 0 : index
      %c1_30 = arith.constant 1 : index
      %c2_31 = arith.constant 2 : index
      %c0_32 = arith.constant 0 : index
      %24 = vector.load %arg7[%c0_29, %c1_30, %c2_31, %c0_32] : memref<2x18x18x32xf32, #tpu.memory_space<vmem>>, vector<2x16x16x32xf32>
      %25 = vector.shape_cast %24 : vector<2x16x16x32xf32> to vector<512x32xf32>
      %c0_33 = arith.constant 0 : index
      %c2_34 = arith.constant 2 : index
      %c0_35 = arith.constant 0 : index
      %c0_36 = arith.constant 0 : index
      %26 = vector.load %arg7[%c0_33, %c2_34, %c0_35, %c0_36] : memref<2x18x18x32xf32, #tpu.memory_space<vmem>>, vector<2x16x16x32xf32>
      %27 = vector.shape_cast %26 : vector<2x16x16x32xf32> to vector<512x32xf32>
      %c0_37 = arith.constant 0 : index
      %c2_38 = arith.constant 2 : index
      %c1_39 = arith.constant 1 : index
      %c0_40 = arith.constant 0 : index
      %28 = vector.load %arg7[%c0_37, %c2_38, %c1_39, %c0_40] : memref<2x18x18x32xf32, #tpu.memory_space<vmem>>, vector<2x16x16x32xf32>
      %29 = vector.shape_cast %28 : vector<2x16x16x32xf32> to vector<512x32xf32>
      %c0_41 = arith.constant 0 : index
      %c2_42 = arith.constant 2 : index
      %c2_43 = arith.constant 2 : index
      %c0_44 = arith.constant 0 : index
      %30 = vector.load %arg7[%c0_41, %c2_42, %c2_43, %c0_44] : memref<2x18x18x32xf32, #tpu.memory_space<vmem>>, vector<2x16x16x32xf32>
      %31 = vector.shape_cast %30 : vector<2x16x16x32xf32> to vector<512x32xf32>
      %32 = tpu.concatenate %15, %17, %19, %21, %23, %25, %27, %29, %31 in 1 : vector<512x32xf32>, vector<512x32xf32>, vector<512x32xf32>, vector<512x32xf32>, vector<512x32xf32>, vector<512x32xf32>, vector<512x32xf32>, vector<512x32xf32>, vector<512x32xf32> -> vector<512x288xf32>
      %33 = arith.index_cast %13 : i32 to index
      %c0_45 = arith.constant 0 : index
      %c0_46 = arith.constant 0 : index
      %34 = vector.load %arg2[%33, %c0_45, %c0_46] : memref<4x512x32xf32, #tpu.memory_space<vmem>>, vector<1x512x32xf32>
      %35 = vector.shape_cast %34 : vector<1x512x32xf32> to vector<512x32xf32>
      %cst = arith.constant dense<0.000000e+00> : vector<512x32xf32>
      %36 = tpu.matmul %32, %3, %cst {dimension_numbers = #tpu.dot_dimension_numbers<[1], [0], [0], [1], [0, 0, 1, 1], [], []>} : vector<512x288xf32>, vector<288x32xf32>, vector<512x32xf32> -> vector<512x32xf32>
      %37 = arith.addf %35, %36 : vector<512x32xf32>
      %cst_47 = arith.constant 0.000000e+00 : f32
      %38 = vector.broadcast %cst_47 : f32 to vector<512x32xf32>
      %39 = arith.maximumf %37, %38 : vector<512x32xf32>
      %cst_48 = arith.constant dense<0.000000e+00> : vector<32xf32>
      %40 = vector.multi_reduction <add>, %39, %cst_48 [0] : vector<512x32xf32> to vector<32xf32>
      %41 = vector.shape_cast %40 : vector<32xf32> to vector<1x32xf32>
      %cst_49 = arith.constant 0.001953125 : f32
      %42 = vector.broadcast %cst_49 : f32 to vector<1x32xf32>
      %43 = arith.mulf %41, %42 : vector<1x32xf32>
      %44 = vector.broadcast %43 : vector<1x32xf32> to vector<512x32xf32>
      %45 = arith.subf %39, %44 : vector<512x32xf32>
      %46 = arith.mulf %45, %45 : vector<512x32xf32>
      %cst_50 = arith.constant dense<0.000000e+00> : vector<32xf32>
      %47 = vector.multi_reduction <add>, %46, %cst_50 [0] : vector<512x32xf32> to vector<32xf32>
      %48 = vector.shape_cast %47 : vector<32xf32> to vector<1x32xf32>
      %cst_51 = arith.constant 0.001953125 : f32
      %49 = vector.broadcast %cst_51 : f32 to vector<1x32xf32>
      %50 = arith.mulf %48, %49 : vector<1x32xf32>
      %cst_52 = arith.constant 9.99999974E-6 : f32
      %51 = vector.broadcast %cst_52 : f32 to vector<1x32xf32>
      %52 = arith.addf %50, %51 : vector<1x32xf32>
      %53 = math.rsqrt %52 : vector<1x32xf32>
      %54 = arith.mulf %53, %4 : vector<1x32xf32>
      %55 = vector.broadcast %54 : vector<1x32xf32> to vector<512x32xf32>
      %56 = arith.mulf %45, %55 : vector<512x32xf32>
      %57 = vector.broadcast %5 : vector<1x32xf32> to vector<512x32xf32>
      %58 = arith.addf %56, %57 : vector<512x32xf32>
      %59 = vector.shape_cast %58 : vector<512x32xf32> to vector<2x16x16x32xf32>
      %c0_53 = arith.constant 0 : index
      %c1_54 = arith.constant 1 : index
      %c1_55 = arith.constant 1 : index
      %c0_56 = arith.constant 0 : index
      %60 = vector.load %arg7[%c0_53, %c1_54, %c1_55, %c0_56] : memref<2x18x18x32xf32, #tpu.memory_space<vmem>>, vector<2x16x16x32xf32>
      tpu.vector_store %arg7[%c0_53, %c1_54, %c1_55, %c0_56], %59 {strides = array<i32>} : memref<2x18x18x32xf32, #tpu.memory_space<vmem>>, vector<2x16x16x32xf32>,
      %61 = vector.shape_cast %58 : vector<512x32xf32> to vector<2x256x32xf32>
      %62 = tpu.transpose %61, [0, 2, 1] : vector<2x256x32xf32> -> vector<2x32x256xf32>
      %c0_57 = arith.constant 0 : index
      %63 = arith.index_cast %13 : i32 to index
      %c0_58 = arith.constant 0 : index
      %c0_59 = arith.constant 0 : index
      %c0_60 = arith.constant 0 : index
      %64 = vector.load %arg6[%c0_57, %63, %c0_58, %c0_59, %c0_60] : memref<1x4x2x32x256xf32, #tpu.memory_space<vmem>>, vector<1x1x2x32x256xf32>
      %65 = vector.shape_cast %64 : vector<1x1x2x32x256xf32> to vector<2x32x256xf32>
      %66 = vector.shape_cast %62 : vector<2x32x256xf32> to vector<1x1x2x32x256xf32>
      tpu.vector_store %arg6[%c0_57, %63, %c0_58, %c0_59, %c0_60], %66 {strides = array<i32>} : memref<1x4x2x32x256xf32, #tpu.memory_space<vmem>>, vector<1x1x2x32x256xf32>,
    }
    %c4_i32_7 = arith.constant 4 : i32
    return
  }
  func.func @transform_0(%arg0: i32, %arg1: i32) -> (i32, i32, i32) {
    %c1_i32 = arith.constant 1 : i32
    %0 = arith.subi %c1_i32, %arg0 : i32
    %1 = arith.muli %arg1, %0 : i32
    %c0_i32 = arith.constant 0 : i32
    %2 = arith.subi %c0_i32, %arg1 : i32
    %3 = arith.muli %2, %arg0 : i32
    %4 = arith.addi %1, %3 : i32
    %c0_i32_0 = arith.constant 0 : i32
    %c0_i32_1 = arith.constant 0 : i32
    %c0_i32_2 = arith.constant 0 : i32
    return %4, %c0_i32_0, %c0_i32_1 : i32, i32, i32
  }
  func.func @transform_1(%arg0: i32, %arg1: i32) -> (i32, i32) {
    %c0_i32 = arith.constant 0 : i32
    %c0_i32_0 = arith.constant 0 : i32
    %c0_i32_1 = arith.constant 0 : i32
    return %c0_i32, %c0_i32_0 : i32, i32
  }
  func.func @transform_2(%arg0: i32, %arg1: i32) -> (i32, i32) {
    %c0_i32 = arith.constant 0 : i32
    %c0_i32_0 = arith.constant 0 : i32
    %c0_i32_1 = arith.constant 0 : i32
    return %c0_i32, %c0_i32_0 : i32, i32
  }
  func.func @transform_3(%arg0: i32, %arg1: i32) -> (i32, i32) {
    %c0_i32 = arith.constant 0 : i32
    %c0_i32_0 = arith.constant 0 : i32
    %c0_i32_1 = arith.constant 0 : i32
    return %c0_i32, %c0_i32_0 : i32, i32
  }
  func.func @transform_4(%arg0: i32, %arg1: i32) -> (i32, i32, i32, i32, i32) {
    %c1_i32 = arith.constant 1 : i32
    %0 = arith.subi %c1_i32, %arg0 : i32
    %1 = arith.muli %arg1, %0 : i32
    %c0_i32 = arith.constant 0 : i32
    %2 = arith.subi %c0_i32, %arg1 : i32
    %3 = arith.muli %2, %arg0 : i32
    %4 = arith.addi %1, %3 : i32
    %c0_i32_0 = arith.constant 0 : i32
    %c0_i32_1 = arith.constant 0 : i32
    %c0_i32_2 = arith.constant 0 : i32
    %c0_i32_3 = arith.constant 0 : i32
    return %arg0, %4, %c0_i32_0, %c0_i32_1, %c0_i32_2 : i32, i32, i32, i32, i32
  }
}

</mosaic_0001>

<llo_original>
// kernel: bcrnn_forward.2
$region0: #{bcrnn_forward.2}
  #allocation0 [shape = 'u32[]', space=smem, size = 0x4, offset = 0x4, fixed_abs, tag = 'smem constant byte address 0x4 - core index']
  #allocation1 [shape = 'u32[144,128]{1,0:T(1,128)}', space=vmem, size = 0x12000, scoped, tag = 'internal scratch']
  %s0 = inlined_call_operand.vmem [shape: f32[4,2,18,18,34], index: 0, kind: input, shape index: {}]
  %s1 = inlined_call_operand.vmem [shape: f32[306,32], index: 1, kind: input, shape index: {}]
  %s2 = inlined_call_operand.vmem [shape: f32[1,32], index: 2, kind: input, shape index: {}]
  %s3 = inlined_call_operand.vmem [shape: f32[4,512,32], index: 3, kind: output, shape index: {}]
  %s4 = sld [smem:[#allocation0]]
  $region45: #{bcrnn_forward.2} parent=0
    _
  %s6 = ssub.s32 1, %s4
  %s7 = scalar_select 0, %s6, %s4
  loop: start=0, step=1, limit=6
  $region2: #{bcrnn_forward.2} parent=0 // loop_pre_header
    _
  $region3: #{bcrnn_forward.2} parent=0 // loop_header
    %s9 = sphi 0, %s13
    %p10 = scmp.ge.s32.totalorder %s9, 6
    %s19 = sphi 0, %s21
    %s22 = sphi 0, %s19
    %s23 = sphi 0, %s22
    %s39 = sphi 0, %s23
    %s43 = sphi 0, %s43
    %s45 = sphi 0, %s43
    %s46 = sphi 0, %s45
    %s60 = sphi 0, %s46
    %s64 = sphi 0, %s64
    %s66 = sphi 0, %s64
    %s67 = sphi 0, %s66
    %s81 = sphi 0, %s67
    %s87 = sphi 0, %s89
    %s90 = sphi 0, %s87
    %s91 = sphi 0, %s90
    %s107 = sphi 0, %s91
  $region4: #{bcrnn_forward.2} parent=0 // loop_header_branch
    %12 = sbr.rel (%p10) target = $region8
  $region5: #{bcrnn_forward.2} parent=0 // loop_body
    %s14 = ssub.s32 %s9, 1
    %s15 = ssub.s32 %s9, 2
    %s16 = sadd.s32 %s9, 1
    %s17 = ssub.s32 %s9, %s16
    %p18 = scmp.eq.s32.totalorder %s17, 0
    %s20 = sadd.s32 %s19, 1
    %s21 = scalar_select %p18, %s19, %s20
    %p24 = pneg %p18
    %p25 = scmp.eq.s32.totalorder %s9, 3
    %p26 = por %p24, %p25
    %p27 = scmp.ne.s32.totalorder %s19, %s22
    %p28 = scmp.eq.s32.totalorder %s9, 0
    %p29 = por %p27, %p28
    %p30 = scmp.ne.s32.totalorder %s19, %s22
    %p31 = scmp.eq.s32.totalorder %s14, 3
    %p32 = por %p30, %p31
    %p33 = scmp.ne.s32.totalorder %s22, %s23
    %p34 = scmp.eq.s32.totalorder %s14, 0
    %p35 = por %p33, %p34
    %p36 = scmp.ne.s32.totalorder %s22, %s23
    %p37 = scmp.eq.s32.totalorder %s15, 3
    %p38 = por %p36, %p37
    %p40 = scmp.ne.s32.totalorder %s23, %s39
    %p41 = scmp.eq.s32.totalorder %s15, 0
    %p42 = por %p40, %p41
    %s44 = sadd.s32 %s43, 1
    %p47 = scmp.eq.s32.totalorder %s9, 3
    %p48 = scmp.ne.s32.totalorder %s43, %s45
    %p49 = scmp.eq.s32.totalorder %s9, 0
    %p50 = por %p48, %p49
    %p51 = scmp.ne.s32.totalorder %s43, %s45
    %p52 = scmp.eq.s32.totalorder %s14, 3
    %p53 = por %p51, %p52
    %p54 = scmp.ne.s32.totalorder %s45, %s46
    %p55 = scmp.eq.s32.totalorder %s14, 0
    %p56 = por %p54, %p55
    %p57 = scmp.ne.s32.totalorder %s45, %s46
    %p58 = scmp.eq.s32.totalorder %s15, 3
    %p59 = por %p57, %p58
    %p61 = scmp.ne.s32.totalorder %s46, %s60
    %p62 = scmp.eq.s32.totalorder %s15, 0
    %p63 = por %p61, %p62
    %s65 = sadd.s32 %s64, 1
    %p68 = scmp.eq.s32.totalorder %s9, 3
    %p69 = scmp.ne.s32.totalorder %s64, %s66
    %p70 = scmp.eq.s32.totalorder %s9, 0
    %p71 = por %p69, %p70
    %p72 = scmp.ne.s32.totalorder %s64, %s66
    %p73 = scmp.eq.s32.totalorder %s14, 3
    %p74 = por %p72, %p73
    %p75 = scmp.ne.s32.totalorder %s66, %s67
    %p76 = scmp.eq.s32.totalorder %s14, 0
    %p77 = por %p75, %p76
    %p78 = scmp.ne.s32.totalorder %s66, %s67
    %p79 = scmp.eq.s32.totalorder %s15, 3
    %p80 = por %p78, %p79
    %p82 = scmp.ne.s32.totalorder %s67, %s81
    %p83 = scmp.eq.s32.totalorder %s15, 0
    %p84 = por %p82, %p83
    %s85 = ssub.s32 %s9, %s16
    %p86 = scmp.eq.s32.totalorder %s85, 0
    %s88 = sadd.s32 %s87, 1
    %s89 = scalar_select %p86, %s87, %s88
    %p92 = pneg %p86
    %p93 = scmp.eq.s32.totalorder %s9, 3
    %p94 = por %p92, %p93
    %p95 = scmp.ne.s32.totalorder %s87, %s90
    %p96 = scmp.eq.s32.totalorder %s9, 0
    %p97 = por %p95, %p96
    %p98 = scmp.ne.s32.totalorder %s87, %s90
    %p99 = scmp.eq.s32.totalorder %s14, 3
    %p100 = por %p98, %p99
    %p101 = scmp.ne.s32.totalorder %s90, %s91
    %p102 = scmp.eq.s32.totalorder %s14, 0
    %p103 = por %p101, %p102
    %p104 = scmp.ne.s32.totalorder %s90, %s91
    %p105 = scmp.eq.s32.totalorder %s15, 3
    %p106 = por %p104, %p105
    %p108 = scmp.ne.s32.totalorder %s91, %s107
    %p109 = scmp.eq.s32.totalorder %s15, 0
    %p110 = por %p108, %p109
    %p111 = scmp.le.s32.totalorder 1, %s9
    %p112 = scmp.lt.s32.totalorder %s9, 5
    %p113 = pnand %p111, %p112
    %p114 = pneg %p113
    // Predicated region
    $region9: #{bcrnn_forward.2} parent=5 // pred_check
      _
    $region10: #{bcrnn_forward.2} parent=5 // pred_check_branch
      %116 = sbr.rel (%p113) target = $region12
    $region11: #{bcrnn_forward.2} parent=5 // pred_region
      %s117 = ssub.s32 %s9, 1
      // Predicated region
      $region13: #{bcrnn_forward.2} parent=11 // pred_check
        %p118 = pneg %p56
      $region14: #{bcrnn_forward.2} parent=11 // pred_check_branch
        %120 = sbr.rel (%p118) target = $region16
      $region15: #{bcrnn_forward.2} parent=11 // pred_region
        _
      $region16: #{bcrnn_forward.2} parent=11 // pred_fallthru
        _
      // Predicated region
      $region17: #{bcrnn_forward.2} parent=11 // pred_check
        %p121 = pneg %p77
      $region18: #{bcrnn_forward.2} parent=11 // pred_check_branch
        %123 = sbr.rel (%p121) target = $region20
      $region19: #{bcrnn_forward.2} parent=11 // pred_region
        _
      $region20: #{bcrnn_forward.2} parent=11 // pred_fallthru
        _
    $region12: #{bcrnn_forward.2} parent=5 // pred_fallthru
      _
    %p124 = scmp.lt.s32.totalorder %s9, 4
    // Predicated region
    $region21: #{bcrnn_forward.2} parent=5 // pred_check
      %p125 = pneg %p124
    $region22: #{bcrnn_forward.2} parent=5 // pred_check_branch
      %127 = sbr.rel (%p125) target = $region24
    $region23: #{bcrnn_forward.2} parent=5 // pred_region
      // Predicated region
      $region25: #{bcrnn_forward.2} parent=23 // pred_check
        %p128 = pneg %p29
      $region26: #{bcrnn_forward.2} parent=23 // pred_check_branch
        %130 = sbr.rel (%p128) target = $region28
      $region27: #{bcrnn_forward.2} parent=23 // pred_region
        %p131 = scmp.lt.s32.totalorder %s9, 3
        %s132 = scalar_select %p131, %s9, 3
        %s133 = smul.addr %s132, 108
        %s134 = smul.addr %s133, 8
        %s135 = scalar_lea.vmem %s0, %s134
      $region28: #{bcrnn_forward.2} parent=23 // pred_fallthru
        _
    $region24: #{bcrnn_forward.2} parent=5 // pred_fallthru
      _
    %p136 = scmp.le.s32.totalorder 1, %s9
    %p137 = scmp.lt.s32.totalorder %s9, 5
    %p138 = pnand %p136, %p137
    %p139 = pneg %p138
    // Predicated region
    $region29: #{bcrnn_forward.2} parent=5 // pred_check
      _
    $region30: #{bcrnn_forward.2} parent=5 // pred_check_branch
      %141 = sbr.rel (%p138) target = $region32
    $region31: #{bcrnn_forward.2} parent=5 // pred_region
      %s142 = ssub.s32 %s9, 1
      %p143 = scmp.lt.s32.totalorder %s14, 3
      %s144 = scalar_select %p143, %s14, 3
      %s145 = smul.addr %s144, 108
      %s146 = smul.addr %s145, 8
      %s147 = scalar_lea.vmem %s0, %s146
      %p148 = pneg %p35
      %p149 = pneg %p32
      %p150 = pneg %p56
      %p151 = pneg %p53
      %p152 = pneg %p77
      %p153 = pneg %p74
      %p154 = pneg %p103
      %p155 = pneg %p100
      %p156 = scmp.lt.s32.totalorder %s14, 3
      %s157 = scalar_select %p156, %s14, 3
      %s158 = smul.addr %s157, 64
      %s159 = smul.addr %s158, 8
      %s160 = scalar_lea.vmem %s3, %s159
      %p161 = scmp.lt.s32.totalorder %s14, 3
      %s162 = scalar_select %p161, %s14, 3
      %s163 = smul.addr %s162, 108
      %s164 = smul.addr %s163, 8
      %s165 = scalar_lea.vmem %s0, %s164
      %p166 = scmp.lt.s32.totalorder %s14, 3
      %s167 = scalar_select %p166, %s14, 3
      %s168 = smul.addr %s167, 64
      %s169 = smul.addr %s168, 8
      %s170 = scalar_lea.vmem %s3, %s169
      %v171 = vld [vmem:[%s165] sm:$0xff]
      %v172 = vld [vmem:[%s165 + $0x8] sm:$0xff]
      %v173 = vld [vmem:[%s165 + $0x18] sm:$0xff]
      %v174 = vld [vmem:[%s165 + $0x20] sm:$0xff]
      %v175 = vld [vmem:[%s165 + $0x30] sm:$0xff]
      %v176 = vld [vmem:[%s165 + $0x38] sm:$0xff]
      %v177 = vld [vmem:[%s165 + $0x48] sm:$0xff]
      %v178 = vld [vmem:[%s165 + $0x50] sm:$0xff]
      %v179 = vld [vmem:[%s165 + $0x60] sm:$0xff]
      %v180 = vld [vmem:[%s165 + $0x68] sm:$0xff]
      %v181 = vld [vmem:[%s165 + $0x78] sm:$0xff]
      %v182 = vld [vmem:[%s165 + $0x80] sm:$0xff]
      %v183 = vld [vmem:[%s165 + $0x90] sm:$0xff]
      %v184 = vld [vmem:[%s165 + $0x98] sm:$0xff]
      %v185 = vld [vmem:[%s165 + $0xa8] sm:$0xff]
      %v186 = vld [vmem:[%s165 + $0xb0] sm:$0xff]
      %v187 = vld [vmem:[%s165 + $0xc0] sm:$0xff]
      %v188 = vld [vmem:[%s165 + $0xc8] sm:$0xff]
      %v189 = vld [vmem:[%s165 + $0xd8] sm:$0xff]
      %v190 = vld [vmem:[%s165 + $0xe0] sm:$0xff]
      %v191 = vld [vmem:[%s165 + $0xf0] sm:$0xff]
      %v192 = vld [vmem:[%s165 + $0xf8] sm:$0xff]
      %v193 = vld [vmem:[%s165 + $0x108] sm:$0xff]
      %v194 = vld [vmem:[%s165 + $0x110] sm:$0xff]
      %v195 = vld [vmem:[%s165 + $0x120] sm:$0xff]
      %v196 = vld [vmem:[%s165 + $0x128] sm:$0xff]
      %v197 = vld [vmem:[%s165 + $0x138] sm:$0xff]
      %v198 = vld [vmem:[%s165 + $0x140] sm:$0xff]
      %v199 = vld [vmem:[%s165 + $0x150] sm:$0xff]
      %v200 = vld [vmem:[%s165 + $0x158] sm:$0xff]
      %v201 = vld [vmem:[%s165 + $0x168] sm:$0xff]
      %v202 = vld [vmem:[%s165 + $0x170] sm:$0xff]
      %v203 = vld [vmem:[%s165 + $0x1b0] sm:$0xff]
      %v204 = vld [vmem:[%s165 + $0x1b8] sm:$0xff]
      %v205 = vld [vmem:[%s165 + $0x1c8] sm:$0xff]
      %v206 = vld [vmem:[%s165 + $0x1d0] sm:$0xff]
      %v207 = vld [vmem:[%s165 + $0x1e0] sm:$0xff]
      %v208 = vld [vmem:[%s165 + $0x1e8] sm:$0xff]
      %v209 = vld [vmem:[%s165 + $0x1f8] sm:$0xff]
      %v210 = vld [vmem:[%s165 + $0x200] sm:$0xff]
      %v211 = vld [vmem:[%s165 + $0x210] sm:$0xff]
      %v212 = vld [vmem:[%s165 + $0x218] sm:$0xff]
      %v213 = vld [vmem:[%s165 + $0x228] sm:$0xff]
      %v214 = vld [vmem:[%s165 + $0x230] sm:$0xff]
      %v215 = vld [vmem:[%s165 + $0x240] sm:$0xff]
      %v216 = vld [vmem:[%s165 + $0x248] sm:$0xff]
      %v217 = vld [vmem:[%s165 + $0x258] sm:$0xff]
      %v218 = vld [vmem:[%s165 + $0x260] sm:$0xff]
      %v219 = vld [vmem:[%s165 + $0x270] sm:$0xff]
      %v220 = vld [vmem:[%s165 + $0x278] sm:$0xff]
      %v221 = vld [vmem:[%s165 + $0x288] sm:$0xff]
      %v222 = vld [vmem:[%s165 + $0x290] sm:$0xff]
      %v223 = vld [vmem:[%s165 + $0x2a0] sm:$0xff]
      %v224 = vld [vmem:[%s165 + $0x2a8] sm:$0xff]
      %v225 = vld [vmem:[%s165 + $0x2b8] sm:$0xff]
      %v226 = vld [vmem:[%s165 + $0x2c0] sm:$0xff]
      %v227 = vld [vmem:[%s165 + $0x2d0] sm:$0xff]
      %v228 = vld [vmem:[%s165 + $0x2d8] sm:$0xff]
      %v229 = vld [vmem:[%s165 + $0x2e8] sm:$0xff]
      %v230 = vld [vmem:[%s165 + $0x2f0] sm:$0xff]
      %v231 = vld [vmem:[%s165 + $0x300] sm:$0xff]
      %v232 = vld [vmem:[%s165 + $0x308] sm:$0xff]
      %v233 = vld [vmem:[%s165 + $0x318] sm:$0xff]
      %v234 = vld [vmem:[%s165 + $0x320] sm:$0xff]
      %v235 = vld [vmem:[%s165 + $0x1] sm:$0xff]
      %v236 = vld [vmem:[%s165 + $0x9] sm:$0xff]
      %v237 = vld [vmem:[%s165 + $0x19] sm:$0xff]
      %v238 = vld [vmem:[%s165 + $0x21] sm:$0xff]
      %v239 = vld [vmem:[%s165 + $0x31] sm:$0xff]
      %v240 = vld [vmem:[%s165 + $0x39] sm:$0xff]
      %v241 = vld [vmem:[%s165 + $0x49] sm:$0xff]
      %v242 = vld [vmem:[%s165 + $0x51] sm:$0xff]
      %v243 = vld [vmem:[%s165 + $0x61] sm:$0xff]
      %v244 = vld [vmem:[%s165 + $0x69] sm:$0xff]
      %v245 = vld [vmem:[%s165 + $0x79] sm:$0xff]
      %v246 = vld [vmem:[%s165 + $0x81] sm:$0xff]
      %v247 = vld [vmem:[%s165 + $0x91] sm:$0xff]
      %v248 = vld [vmem:[%s165 + $0x99] sm:$0xff]
      %v249 = vld [vmem:[%s165 + $0xa9] sm:$0xff]
      %v250 = vld [vmem:[%s165 + $0xb1] sm:$0xff]
      %v251 = vld [vmem:[%s165 + $0xc1] sm:$0xff]
      %v252 = vld [vmem:[%s165 + $0xc9] sm:$0xff]
      %v253 = vld [vmem:[%s165 + $0xd9] sm:$0xff]
      %v254 = vld [vmem:[%s165 + $0xe1] sm:$0xff]
      %v255 = vld [vmem:[%s165 + $0xf1] sm:$0xff]
      %v256 = vld [vmem:[%s165 + $0xf9] sm:$0xff]
      %v257 = vld [vmem:[%s165 + $0x109] sm:$0xff]
      %v258 = vld [vmem:[%s165 + $0x111] sm:$0xff]
      %v259 = vld [vmem:[%s165 + $0x121] sm:$0xff]
      %v260 = vld [vmem:[%s165 + $0x129] sm:$0xff]
      %v261 = vld [vmem:[%s165 + $0x139] sm:$0xff]
      %v262 = vld [vmem:[%s165 + $0x141] sm:$0xff]
      %v263 = vld [vmem:[%s165 + $0x151] sm:$0xff]
      %v264 = vld [vmem:[%s165 + $0x159] sm:$0xff]
      %v265 = vld [vmem:[%s165 + $0x169] sm:$0xff]
      %v266 = vld [vmem:[%s165 + $0x171] sm:$0xff]
      %v267 = vld [vmem:[%s165 + $0x1b1] sm:$0xff]
      %v268 = vld [vmem:[%s165 + $0x1b9] sm:$0xff]
      %v269 = vld [vmem:[%s165 + $0x1c9] sm:$0xff]
      %v270 = vld [vmem:[%s165 + $0x1d1] sm:$0xff]
      %v271 = vld [vmem:[%s165 + $0x1e1] sm:$0xff]
      %v272 = vld [vmem:[%s165 + $0x1e9] sm:$0xff]
      %v273 = vld [vmem:[%s165 + $0x1f9] sm:$0xff]
      %v274 = vld [vmem:[%s165 + $0x201] sm:$0xff]
      %v275 = vld [vmem:[%s165 + $0x211] sm:$0xff]
      %v276 = vld [vmem:[%s165 + $0x219] sm:$0xff]
      %v277 = vld [vmem:[%s165 + $0x229] sm:$0xff]
      %v278 = vld [vmem:[%s165 + $0x231] sm:$0xff]
      %v279 = vld [vmem:[%s165 + $0x241] sm:$0xff]
      %v280 = vld [vmem:[%s165 + $0x249] sm:$0xff]
      %v281 = vld [vmem:[%s165 + $0x259] sm:$0xff]
      %v282 = vld [vmem:[%s165 + $0x261] sm:$0xff]
      %v283 = vld [vmem:[%s165 + $0x271] sm:$0xff]
      %v284 = vld [vmem:[%s165 + $0x279] sm:$0xff]
      %v285 = vld [vmem:[%s165 + $0x289] sm:$0xff]
      %v286 = vld [vmem:[%s165 + $0x291] sm:$0xff]
      %v287 = vld [vmem:[%s165 + $0x2a1] sm:$0xff]
      %v288 = vld [vmem:[%s165 + $0x2a9] sm:$0xff]
      %v289 = vld [vmem:[%s165 + $0x2b9] sm:$0xff]
      %v290 = vld [vmem:[%s165 + $0x2c1] sm:$0xff]
      %v291 = vld [vmem:[%s165 + $0x2d1] sm:$0xff]
      %v292 = vld [vmem:[%s165 + $0x2d9] sm:$0xff]
      %v293 = vld [vmem:[%s165 + $0x2e9] sm:$0xff]
      %v294 = vld [vmem:[%s165 + $0x2f1] sm:$0xff]
      %v295 = vld [vmem:[%s165 + $0x301] sm:$0xff]
      %v296 = vld [vmem:[%s165 + $0x309] sm:$0xff]
      %v297 = vld [vmem:[%s165 + $0x319] sm:$0xff]
      %v298 = vld [vmem:[%s165 + $0x321] sm:$0xff]
      %v299 = vld [vmem:[%s165 + $0x2] sm:$0xff]
      %v300 = vld [vmem:[%s165 + $0xa] sm:$0xff]
      %v301 = vld [vmem:[%s165 + $0x1a] sm:$0xff]
      %v302 = vld [vmem:[%s165 + $0x22] sm:$0xff]
      %v303 = vld [vmem:[%s165 + $0x32] sm:$0xff]
      %v304 = vld [vmem:[%s165 + $0x3a] sm:$0xff]
      %v305 = vld [vmem:[%s165 + $0x4a] sm:$0xff]
      %v306 = vld [vmem:[%s165 + $0x52] sm:$0xff]
      %v307 = vld [vmem:[%s165 + $0x62] sm:$0xff]
      %v308 = vld [vmem:[%s165 + $0x6a] sm:$0xff]
      %v309 = vld [vmem:[%s165 + $0x7a] sm:$0xff]
      %v310 = vld [vmem:[%s165 + $0x82] sm:$0xff]
      %v311 = vld [vmem:[%s165 + $0x92] sm:$0xff]
      %v312 = vld [vmem:[%s165 + $0x9a] sm:$0xff]
      %v313 = vld [vmem:[%s165 + $0xaa] sm:$0xff]
      %v314 = vld [vmem:[%s165 + $0xb2] sm:$0xff]
      %v315 = vld [vmem:[%s165 + $0xc2] sm:$0xff]
      %v316 = vld [vmem:[%s165 + $0xca] sm:$0xff]
      %v317 = vld [vmem:[%s165 + $0xda] sm:$0xff]
      %v318 = vld [vmem:[%s165 + $0xe2] sm:$0xff]
      %v319 = vld [vmem:[%s165 + $0xf2] sm:$0xff]
      %v320 = vld [vmem:[%s165 + $0xfa] sm:$0xff]
      %v321 = vld [vmem:[%s165 + $0x10a] sm:$0xff]
      %v322 = vld [vmem:[%s165 + $0x112] sm:$0xff]
      %v323 = vld [vmem:[%s165 + $0x122] sm:$0xff]
      %v324 = vld [vmem:[%s165 + $0x12a] sm:$0xff]
      %v325 = vld [vmem:[%s165 + $0x13a] sm:$0xff]
      %v326 = vld [vmem:[%s165 + $0x142] sm:$0xff]
      %v327 = vld [vmem:[%s165 + $0x152] sm:$0xff]
      %v328 = vld [vmem:[%s165 + $0x15a] sm:$0xff]
      %v329 = vld [vmem:[%s165 + $0x16a] sm:$0xff]
      %v330 = vld [vmem:[%s165 + $0x172] sm:$0xff]
      %v331 = vld [vmem:[%s165 + $0x1b2] sm:$0xff]
      %v332 = vld [vmem:[%s165 + $0x1ba] sm:$0xff]
      %v333 = vld [vmem:[%s165 + $0x1ca] sm:$0xff]
      %v334 = vld [vmem:[%s165 + $0x1d2] sm:$0xff]
      %v335 = vld [vmem:[%s165 + $0x1e2] sm:$0xff]
      %v336 = vld [vmem:[%s165 + $0x1ea] sm:$0xff]
      %v337 = vld [vmem:[%s165 + $0x1fa] sm:$0xff]
      %v338 = vld [vmem:[%s165 + $0x202] sm:$0xff]
      %v339 = vld [vmem:[%s165 + $0x212] sm:$0xff]
      %v340 = vld [vmem:[%s165 + $0x21a] sm:$0xff]
      %v341 = vld [vmem:[%s165 + $0x22a] sm:$0xff]
      %v342 = vld [vmem:[%s165 + $0x232] sm:$0xff]
      %v343 = vld [vmem:[%s165 + $0x242] sm:$0xff]
      %v344 = vld [vmem:[%s165 + $0x24a] sm:$0xff]
      %v345 = vld [vmem:[%s165 + $0x25a] sm:$0xff]
      %v346 = vld [vmem:[%s165 + $0x262] sm:$0xff]
      %v347 = vld [vmem:[%s165 + $0x272] sm:$0xff]
      %v348 = vld [vmem:[%s165 + $0x27a] sm:$0xff]
      %v349 = vld [vmem:[%s165 + $0x28a] sm:$0xff]
      %v350 = vld [vmem:[%s165 + $0x292] sm:$0xff]
      %v351 = vld [vmem:[%s165 + $0x2a2] sm:$0xff]
      %v352 = vld [vmem:[%s165 + $0x2aa] sm:$0xff]
      %v353 = vld [vmem:[%s165 + $0x2ba] sm:$0xff]
      %v354 = vld [vmem:[%s165 + $0x2c2] sm:$0xff]
      %v355 = vld [vmem:[%s165 + $0x2d2] sm:$0xff]
      %v356 = vld [vmem:[%s165 + $0x2da] sm:$0xff]
      %v357 = vld [vmem:[%s165 + $0x2ea] sm:$0xff]
      %v358 = vld [vmem:[%s165 + $0x2f2] sm:$0xff]
      %v359 = vld [vmem:[%s165 + $0x302] sm:$0xff]
      %v360 = vld [vmem:[%s165 + $0x30a] sm:$0xff]
      %v361 = vld [vmem:[%s165 + $0x31a] sm:$0xff]
      %v362 = vld [vmem:[%s165 + $0x322] sm:$0xff]
      %s363 = scalar_lea.vmem %s165, 24
      %v364 = vld [vmem:[%s363] sm:$0xff]
      %v365 = vld [vmem:[%s363 + $0x8] sm:$0xff]
      %v366 = vld [vmem:[%s363 + $0x18] sm:$0xff]
      %v367 = vld [vmem:[%s363 + $0x20] sm:$0xff]
      %v368 = vld [vmem:[%s363 + $0x30] sm:$0xff]
      %v369 = vld [vmem:[%s363 + $0x38] sm:$0xff]
      %v370 = vld [vmem:[%s363 + $0x48] sm:$0xff]
      %v371 = vld [vmem:[%s363 + $0x50] sm:$0xff]
      %v372 = vld [vmem:[%s363 + $0x60] sm:$0xff]
      %v373 = vld [vmem:[%s363 + $0x68] sm:$0xff]
      %v374 = vld [vmem:[%s363 + $0x78] sm:$0xff]
      %v375 = vld [vmem:[%s363 + $0x80] sm:$0xff]
      %v376 = vld [vmem:[%s363 + $0x90] sm:$0xff]
      %v377 = vld [vmem:[%s363 + $0x98] sm:$0xff]
      %v378 = vld [vmem:[%s363 + $0xa8] sm:$0xff]
      %v379 = vld [vmem:[%s363 + $0xb0] sm:$0xff]
      %v380 = vld [vmem:[%s363 + $0xc0] sm:$0xff]
      %v381 = vld [vmem:[%s363 + $0xc8] sm:$0xff]
      %v382 = vld [vmem:[%s363 + $0xd8] sm:$0xff]
      %v383 = vld [vmem:[%s363 + $0xe0] sm:$0xff]
      %v384 = vld [vmem:[%s363 + $0xf0] sm:$0xff]
      %v385 = vld [vmem:[%s363 + $0xf8] sm:$0xff]
      %v386 = vld [vmem:[%s363 + $0x108] sm:$0xff]
      %v387 = vld [vmem:[%s363 + $0x110] sm:$0xff]
      %v388 = vld [vmem:[%s363 + $0x120] sm:$0xff]
      %v389 = vld [vmem:[%s363 + $0x128] sm:$0xff]
      %v390 = vld [vmem:[%s363 + $0x138] sm:$0xff]
      %v391 = vld [vmem:[%s363 + $0x140] sm:$0xff]
      %v392 = vld [vmem:[%s363 + $0x150] sm:$0xff]
      %v393 = vld [vmem:[%s363 + $0x158] sm:$0xff]
      %v394 = vld [vmem:[%s363 + $0x168] sm:$0xff]
      %v395 = vld [vmem:[%s363 + $0x170] sm:$0xff]
      %v396 = vld [vmem:[%s363 + $0x1b0] sm:$0xff]
      %v397 = vld [vmem:[%s363 + $0x1b8] sm:$0xff]
      %v398 = vld [vmem:[%s363 + $0x1c8] sm:$0xff]
      %v399 = vld [vmem:[%s363 + $0x1d0] sm:$0xff]
      %v400 = vld [vmem:[%s363 + $0x1e0] sm:$0xff]
      %v401 = vld [vmem:[%s363 + $0x1e8] sm:$0xff]
      %v402 = vld [vmem:[%s363 + $0x1f8] sm:$0xff]
      %v403 = vld [vmem:[%s363 + $0x200] sm:$0xff]
      %v404 = vld [vmem:[%s363 + $0x210] sm:$0xff]
      %v405 = vld [vmem:[%s363 + $0x218] sm:$0xff]
      %v406 = vld [vmem:[%s363 + $0x228] sm:$0xff]
      %v407 = vld [vmem:[%s363 + $0x230] sm:$0xff]
      %v408 = vld [vmem:[%s363 + $0x240] sm:$0xff]
      %v409 = vld [vmem:[%s363 + $0x248] sm:$0xff]
      %v410 = vld [vmem:[%s363 + $0x258] sm:$0xff]
      %v411 = vld [vmem:[%s363 + $0x260] sm:$0xff]
      %v412 = vld [vmem:[%s363 + $0x270] sm:$0xff]
      %v413 = vld [vmem:[%s363 + $0x278] sm:$0xff]
      %v414 = vld [vmem:[%s363 + $0x288] sm:$0xff]
      %v415 = vld [vmem:[%s363 + $0x290] sm:$0xff]
      %v416 = vld [vmem:[%s363 + $0x2a0] sm:$0xff]
      %v417 = vld [vmem:[%s363 + $0x2a8] sm:$0xff]
      %v418 = vld [vmem:[%s363 + $0x2b8] sm:$0xff]
      %v419 = vld [vmem:[%s363 + $0x2c0] sm:$0xff]
      %v420 = vld [vmem:[%s363 + $0x2d0] sm:$0xff]
      %v421 = vld [vmem:[%s363 + $0x2d8] sm:$0xff]
      %v422 = vld [vmem:[%s363 + $0x2e8] sm:$0xff]
      %v423 = vld [vmem:[%s363 + $0x2f0] sm:$0xff]
      %v424 = vld [vmem:[%s363 + $0x300] sm:$0xff]
      %v425 = vld [vmem:[%s363 + $0x308] sm:$0xff]
      %v426 = vld [vmem:[%s363 + $0x318] sm:$0xff]
      %v427 = vld [vmem:[%s363 + $0x320] sm:$0xff]
      %v428 = vld [vmem:[%s363 + $0x1] sm:$0xff]
      %v429 = vld [vmem:[%s363 + $0x9] sm:$0xff]
      %v430 = vld [vmem:[%s363 + $0x19] sm:$0xff]
      %v431 = vld [vmem:[%s363 + $0x21] sm:$0xff]
      %v432 = vld [vmem:[%s363 + $0x31] sm:$0xff]
      %v433 = vld [vmem:[%s363 + $0x39] sm:$0xff]
      %v434 = vld [vmem:[%s363 + $0x49] sm:$0xff]
      %v435 = vld [vmem:[%s363 + $0x51] sm:$0xff]
      %v436 = vld [vmem:[%s363 + $0x61] sm:$0xff]
      %v437 = vld [vmem:[%s363 + $0x69] sm:$0xff]
      %v438 = vld [vmem:[%s363 + $0x79] sm:$0xff]
      %v439 = vld [vmem:[%s363 + $0x81] sm:$0xff]
      %v440 = vld [vmem:[%s363 + $0x91] sm:$0xff]
      %v441 = vld [vmem:[%s363 + $0x99] sm:$0xff]
      %v442 = vld [vmem:[%s363 + $0xa9] sm:$0xff]
      %v443 = vld [vmem:[%s363 + $0xb1] sm:$0xff]
      %v444 = vld [vmem:[%s363 + $0xc1] sm:$0xff]
      %v445 = vld [vmem:[%s363 + $0xc9] sm:$0xff]
      %v446 = vld [vmem:[%s363 + $0xd9] sm:$0xff]
      %v447 = vld [vmem:[%s363 + $0xe1] sm:$0xff]
      %v448 = vld [vmem:[%s363 + $0xf1] sm:$0xff]
      %v449 = vld [vmem:[%s363 + $0xf9] sm:$0xff]
      %v450 = vld [vmem:[%s363 + $0x109] sm:$0xff]
      %v451 = vld [vmem:[%s363 + $0x111] sm:$0xff]
      %v452 = vld [vmem:[%s363 + $0x121] sm:$0xff]
      %v453 = vld [vmem:[%s363 + $0x129] sm:$0xff]
      %v454 = vld [vmem:[%s363 + $0x139] sm:$0xff]
      %v455 = vld [vmem:[%s363 + $0x141] sm:$0xff]
      %v456 = vld [vmem:[%s363 + $0x151] sm:$0xff]
      %v457 = vld [vmem:[%s363 + $0x159] sm:$0xff]
      %v458 = vld [vmem:[%s363 + $0x169] sm:$0xff]
      %v459 = vld [vmem:[%s363 + $0x171] sm:$0xff]
      %v460 = vld [vmem:[%s363 + $0x1b1] sm:$0xff]
      %v461 = vld [vmem:[%s363 + $0x1b9] sm:$0xff]
      %v462 = vld [vmem:[%s363 + $0x1c9] sm:$0xff]
      %v463 = vld [vmem:[%s363 + $0x1d1] sm:$0xff]
      %v464 = vld [vmem:[%s363 + $0x1e1] sm:$0xff]
      %v465 = vld [vmem:[%s363 + $0x1e9] sm:$0xff]
      %v466 = vld [vmem:[%s363 + $0x1f9] sm:$0xff]
      %v467 = vld [vmem:[%s363 + $0x201] sm:$0xff]
      %v468 = vld [vmem:[%s363 + $0x211] sm:$0xff]
      %v469 = vld [vmem:[%s363 + $0x219] sm:$0xff]
      %v470 = vld [vmem:[%s363 + $0x229] sm:$0xff]
      %v471 = vld [vmem:[%s363 + $0x231] sm:$0xff]
      %v472 = vld [vmem:[%s363 + $0x241] sm:$0xff]
      %v473 = vld [vmem:[%s363 + $0x249] sm:$0xff]
      %v474 = vld [vmem:[%s363 + $0x259] sm:$0xff]
      %v475 = vld [vmem:[%s363 + $0x261] sm:$0xff]
      %v476 = vld [vmem:[%s363 + $0x271] sm:$0xff]
      %v477 = vld [vmem:[%s363 + $0x279] sm:$0xff]
      %v478 = vld [vmem:[%s363 + $0x289] sm:$0xff]
      %v479 = vld [vmem:[%s363 + $0x291] sm:$0xff]
      %v480 = vld [vmem:[%s363 + $0x2a1] sm:$0xff]
      %v481 = vld [vmem:[%s363 + $0x2a9] sm:$0xff]
      %v482 = vld [vmem:[%s363 + $0x2b9] sm:$0xff]
      %v483 = vld [vmem:[%s363 + $0x2c1] sm:$0xff]
      %v484 = vld [vmem:[%s363 + $0x2d1] sm:$0xff]
      %v485 = vld [vmem:[%s363 + $0x2d9] sm:$0xff]
      %v486 = vld [vmem:[%s363 + $0x2e9] sm:$0xff]
      %v487 = vld [vmem:[%s363 + $0x2f1] sm:$0xff]
      %v488 = vld [vmem:[%s363 + $0x301] sm:$0xff]
      %v489 = vld [vmem:[%s363 + $0x309] sm:$0xff]
      %v490 = vld [vmem:[%s363 + $0x319] sm:$0xff]
      %v491 = vld [vmem:[%s363 + $0x321] sm:$0xff]
      %v492 = vld [vmem:[%s363 + $0x2] sm:$0xff]
      %v493 = vld [vmem:[%s363 + $0xa] sm:$0xff]
      %v494 = vld [vmem:[%s363 + $0x1a] sm:$0xff]
      %v495 = vld [vmem:[%s363 + $0x22] sm:$0xff]
      %v496 = vld [vmem:[%s363 + $0x32] sm:$0xff]
      %v497 = vld [vmem:[%s363 + $0x3a] sm:$0xff]
      %v498 = vld [vmem:[%s363 + $0x4a] sm:$0xff]
      %v499 = vld [vmem:[%s363 + $0x52] sm:$0xff]
      %v500 = vld [vmem:[%s363 + $0x62] sm:$0xff]
      %v501 = vld [vmem:[%s363 + $0x6a] sm:$0xff]
      %v502 = vld [vmem:[%s363 + $0x7a] sm:$0xff]
      %v503 = vld [vmem:[%s363 + $0x82] sm:$0xff]
      %v504 = vld [vmem:[%s363 + $0x92] sm:$0xff]
      %v505 = vld [vmem:[%s363 + $0x9a] sm:$0xff]
      %v506 = vld [vmem:[%s363 + $0xaa] sm:$0xff]
      %v507 = vld [vmem:[%s363 + $0xb2] sm:$0xff]
      %v508 = vld [vmem:[%s363 + $0xc2] sm:$0xff]
      %v509 = vld [vmem:[%s363 + $0xca] sm:$0xff]
      %v510 = vld [vmem:[%s363 + $0xda] sm:$0xff]
      %v511 = vld [vmem:[%s363 + $0xe2] sm:$0xff]
      %v512 = vld [vmem:[%s363 + $0xf2] sm:$0xff]
      %v513 = vld [vmem:[%s363 + $0xfa] sm:$0xff]
      %v514 = vld [vmem:[%s363 + $0x10a] sm:$0xff]
      %v515 = vld [vmem:[%s363 + $0x112] sm:$0xff]
      %v516 = vld [vmem:[%s363 + $0x122] sm:$0xff]
      %v517 = vld [vmem:[%s363 + $0x12a] sm:$0xff]
      %v518 = vld [vmem:[%s363 + $0x13a] sm:$0xff]
      %v519 = vld [vmem:[%s363 + $0x142] sm:$0xff]
      %v520 = vld [vmem:[%s363 + $0x152] sm:$0xff]
      %v521 = vld [vmem:[%s363 + $0x15a] sm:$0xff]
      %v522 = vld [vmem:[%s363 + $0x16a] sm:$0xff]
      %v523 = vld [vmem:[%s363 + $0x172] sm:$0xff]
      %v524 = vld [vmem:[%s363 + $0x1b2] sm:$0xff]
      %v525 = vld [vmem:[%s363 + $0x1ba] sm:$0xff]
      %v526 = vld [vmem:[%s363 + $0x1ca] sm:$0xff]
      %v527 = vld [vmem:[%s363 + $0x1d2] sm:$0xff]
      %v528 = vld [vmem:[%s363 + $0x1e2] sm:$0xff]
      %v529 = vld [vmem:[%s363 + $0x1ea] sm:$0xff]
      %v530 = vld [vmem:[%s363 + $0x1fa] sm:$0xff]
      %v531 = vld [vmem:[%s363 + $0x202] sm:$0xff]
      %v532 = vld [vmem:[%s363 + $0x212] sm:$0xff]
      %v533 = vld [vmem:[%s363 + $0x21a] sm:$0xff]
      %v534 = vld [vmem:[%s363 + $0x22a] sm:$0xff]
      %v535 = vld [vmem:[%s363 + $0x232] sm:$0xff]
      %v536 = vld [vmem:[%s363 + $0x242] sm:$0xff]
      %v537 = vld [vmem:[%s363 + $0x24a] sm:$0xff]
      %v538 = vld [vmem:[%s363 + $0x25a] sm:$0xff]
      %v539 = vld [vmem:[%s363 + $0x262] sm:$0xff]
      %v540 = vld [vmem:[%s363 + $0x272] sm:$0xff]
      %v541 = vld [vmem:[%s363 + $0x27a] sm:$0xff]
      %v542 = vld [vmem:[%s363 + $0x28a] sm:$0xff]
      %v543 = vld [vmem:[%s363 + $0x292] sm:$0xff]
      %v544 = vld [vmem:[%s363 + $0x2a2] sm:$0xff]
      %v545 = vld [vmem:[%s363 + $0x2aa] sm:$0xff]
      %v546 = vld [vmem:[%s363 + $0x2ba] sm:$0xff]
      %v547 = vld [vmem:[%s363 + $0x2c2] sm:$0xff]
      %v548 = vld [vmem:[%s363 + $0x2d2] sm:$0xff]
      %v549 = vld [vmem:[%s363 + $0x2da] sm:$0xff]
      %v550 = vld [vmem:[%s363 + $0x2ea] sm:$0xff]
      %v551 = vld [vmem:[%s363 + $0x2f2] sm:$0xff]
      %v552 = vld [vmem:[%s363 + $0x302] sm:$0xff]
      %v553 = vld [vmem:[%s363 + $0x30a] sm:$0xff]
      %v554 = vld [vmem:[%s363 + $0x31a] sm:$0xff]
      %v555 = vld [vmem:[%s363 + $0x322] sm:$0xff]
      %s556 = scalar_lea.vmem %s165, 48
      %v557 = vld [vmem:[%s556] sm:$0xff]
      %v558 = vld [vmem:[%s556 + $0x8] sm:$0xff]
      %v559 = vld [vmem:[%s556 + $0x18] sm:$0xff]
      %v560 = vld [vmem:[%s556 + $0x20] sm:$0xff]
      %v561 = vld [vmem:[%s556 + $0x30] sm:$0xff]
      %v562 = vld [vmem:[%s556 + $0x38] sm:$0xff]
      %v563 = vld [vmem:[%s556 + $0x48] sm:$0xff]
      %v564 = vld [vmem:[%s556 + $0x50] sm:$0xff]
      %v565 = vld [vmem:[%s556 + $0x60] sm:$0xff]
      %v566 = vld [vmem:[%s556 + $0x68] sm:$0xff]
      %v567 = vld [vmem:[%s556 + $0x78] sm:$0xff]
      %v568 = vld [vmem:[%s556 + $0x80] sm:$0xff]
      %v569 = vld [vmem:[%s556 + $0x90] sm:$0xff]
      %v570 = vld [vmem:[%s556 + $0x98] sm:$0xff]
      %v571 = vld [vmem:[%s556 + $0xa8] sm:$0xff]
      %v572 = vld [vmem:[%s556 + $0xb0] sm:$0xff]
      %v573 = vld [vmem:[%s556 + $0xc0] sm:$0xff]
      %v574 = vld [vmem:[%s556 + $0xc8] sm:$0xff]
      %v575 = vld [vmem:[%s556 + $0xd8] sm:$0xff]
      %v576 = vld [vmem:[%s556 + $0xe0] sm:$0xff]
      %v577 = vld [vmem:[%s556 + $0xf0] sm:$0xff]
      %v578 = vld [vmem:[%s556 + $0xf8] sm:$0xff]
      %v579 = vld [vmem:[%s556 + $0x108] sm:$0xff]
      %v580 = vld [vmem:[%s556 + $0x110] sm:$0xff]
      %v581 = vld [vmem:[%s556 + $0x120] sm:$0xff]
      %v582 = vld [vmem:[%s556 + $0x128] sm:$0xff]
      %v583 = vld [vmem:[%s556 + $0x138] sm:$0xff]
      %v584 = vld [vmem:[%s556 + $0x140] sm:$0xff]
      %v585 = vld [vmem:[%s556 + $0x150] sm:$0xff]
      %v586 = vld [vmem:[%s556 + $0x158] sm:$0xff]
      %v587 = vld [vmem:[%s556 + $0x168] sm:$0xff]
      %v588 = vld [vmem:[%s556 + $0x170] sm:$0xff]
      %v589 = vld [vmem:[%s556 + $0x1b0] sm:$0xff]
      %v590 = vld [vmem:[%s556 + $0x1b8] sm:$0xff]
      %v591 = vld [vmem:[%s556 + $0x1c8] sm:$0xff]
      %v592 = vld [vmem:[%s556 + $0x1d0] sm:$0xff]
      %v593 = vld [vmem:[%s556 + $0x1e0] sm:$0xff]
      %v594 = vld [vmem:[%s556 + $0x1e8] sm:$0xff]
      %v595 = vld [vmem:[%s556 + $0x1f8] sm:$0xff]
      %v596 = vld [vmem:[%s556 + $0x200] sm:$0xff]
      %v597 = vld [vmem:[%s556 + $0x210] sm:$0xff]
      %v598 = vld [vmem:[%s556 + $0x218] sm:$0xff]
      %v599 = vld [vmem:[%s556 + $0x228] sm:$0xff]
      %v600 = vld [vmem:[%s556 + $0x230] sm:$0xff]
      %v601 = vld [vmem:[%s556 + $0x240] sm:$0xff]
      %v602 = vld [vmem:[%s556 + $0x248] sm:$0xff]
      %v603 = vld [vmem:[%s556 + $0x258] sm:$0xff]
      %v604 = vld [vmem:[%s556 + $0x260] sm:$0xff]
      %v605 = vld [vmem:[%s556 + $0x270] sm:$0xff]
      %v606 = vld [vmem:[%s556 + $0x278] sm:$0xff]
      %v607 = vld [vmem:[%s556 + $0x288] sm:$0xff]
      %v608 = vld [vmem:[%s556 + $0x290] sm:$0xff]
      %v609 = vld [vmem:[%s556 + $0x2a0] sm:$0xff]
      %v610 = vld [vmem:[%s556 + $0x2a8] sm:$0xff]
      %v611 = vld [vmem:[%s556 + $0x2b8] sm:$0xff]
      %v612 = vld [vmem:[%s556 + $0x2c0] sm:$0xff]
      %v613 = vld [vmem:[%s556 + $0x2d0] sm:$0xff]
      %v614 = vld [vmem:[%s556 + $0x2d8] sm:$0xff]
      %v615 = vld [vmem:[%s556 + $0x2e8] sm:$0xff]
      %v616 = vld [vmem:[%s556 + $0x2f0] sm:$0xff]
      %v617 = vld [vmem:[%s556 + $0x300] sm:$0xff]
      %v618 = vld [vmem:[%s556 + $0x308] sm:$0xff]
      %v619 = vld [vmem:[%s556 + $0x318] sm:$0xff]
      %v620 = vld [vmem:[%s556 + $0x320] sm:$0xff]
      %v621 = vld [vmem:[%s556 + $0x1] sm:$0xff]
      %v622 = vld [vmem:[%s556 + $0x9] sm:$0xff]
      %v623 = vld [vmem:[%s556 + $0x19] sm:$0xff]
      %v624 = vld [vmem:[%s556 + $0x21] sm:$0xff]
      %v625 = vld [vmem:[%s556 + $0x31] sm:$0xff]
      %v626 = vld [vmem:[%s556 + $0x39] sm:$0xff]
      %v627 = vld [vmem:[%s556 + $0x49] sm:$0xff]
      %v628 = vld [vmem:[%s556 + $0x51] sm:$0xff]
      %v629 = vld [vmem:[%s556 + $0x61] sm:$0xff]
      %v630 = vld [vmem:[%s556 + $0x69] sm:$0xff]
      %v631 = vld [vmem:[%s556 + $0x79] sm:$0xff]
      %v632 = vld [vmem:[%s556 + $0x81] sm:$0xff]
      %v633 = vld [vmem:[%s556 + $0x91] sm:$0xff]
      %v634 = vld [vmem:[%s556 + $0x99] sm:$0xff]
      %v635 = vld [vmem:[%s556 + $0xa9] sm:$0xff]
      %v636 = vld [vmem:[%s556 + $0xb1] sm:$0xff]
      %v637 = vld [vmem:[%s556 + $0xc1] sm:$0xff]
      %v638 = vld [vmem:[%s556 + $0xc9] sm:$0xff]
      %v639 = vld [vmem:[%s556 + $0xd9] sm:$0xff]
      %v640 = vld [vmem:[%s556 + $0xe1] sm:$0xff]
      %v641 = vld [vmem:[%s556 + $0xf1] sm:$0xff]
      %v642 = vld [vmem:[%s556 + $0xf9] sm:$0xff]
      %v643 = vld [vmem:[%s556 + $0x109] sm:$0xff]
      %v644 = vld [vmem:[%s556 + $0x111] sm:$0xff]
      %v645 = vld [vmem:[%s556 + $0x121] sm:$0xff]
      %v646 = vld [vmem:[%s556 + $0x129] sm:$0xff]
      %v647 = vld [vmem:[%s556 + $0x139] sm:$0xff]
      %v648 = vld [vmem:[%s556 + $0x141] sm:$0xff]
      %v649 = vld [vmem:[%s556 + $0x151] sm:$0xff]
      %v650 = vld [vmem:[%s556 + $0x159] sm:$0xff]
      %v651 = vld [vmem:[%s556 + $0x169] sm:$0xff]
      %v652 = vld [vmem:[%s556 + $0x171] sm:$0xff]
      %v653 = vld [vmem:[%s556 + $0x1b1] sm:$0xff]
      %v654 = vld [vmem:[%s556 + $0x1b9] sm:$0xff]
      %v655 = vld [vmem:[%s556 + $0x1c9] sm:$0xff]
      %v656 = vld [vmem:[%s556 + $0x1d1] sm:$0xff]
      %v657 = vld [vmem:[%s556 + $0x1e1] sm:$0xff]
      %v658 = vld [vmem:[%s556 + $0x1e9] sm:$0xff]
      %v659 = vld [vmem:[%s556 + $0x1f9] sm:$0xff]
      %v660 = vld [vmem:[%s556 + $0x201] sm:$0xff]
      %v661 = vld [vmem:[%s556 + $0x211] sm:$0xff]
      %v662 = vld [vmem:[%s556 + $0x219] sm:$0xff]
      %v663 = vld [vmem:[%s556 + $0x229] sm:$0xff]
      %v664 = vld [vmem:[%s556 + $0x231] sm:$0xff]
      %v665 = vld [vmem:[%s556 + $0x241] sm:$0xff]
      %v666 = vld [vmem:[%s556 + $0x249] sm:$0xff]
      %v667 = vld [vmem:[%s556 + $0x259] sm:$0xff]
      %v668 = vld [vmem:[%s556 + $0x261] sm:$0xff]
      %v669 = vld [vmem:[%s556 + $0x271] sm:$0xff]
      %v670 = vld [vmem:[%s556 + $0x279] sm:$0xff]
      %v671 = vld [vmem:[%s556 + $0x289] sm:$0xff]
      %v672 = vld [vmem:[%s556 + $0x291] sm:$0xff]
      %v673 = vld [vmem:[%s556 + $0x2a1] sm:$0xff]
      %v674 = vld [vmem:[%s556 + $0x2a9] sm:$0xff]
      %v675 = vld [vmem:[%s556 + $0x2b9] sm:$0xff]
      %v676 = vld [vmem:[%s556 + $0x2c1] sm:$0xff]
      %v677 = vld [vmem:[%s556 + $0x2d1] sm:$0xff]
      %v678 = vld [vmem:[%s556 + $0x2d9] sm:$0xff]
      %v679 = vld [vmem:[%s556 + $0x2e9] sm:$0xff]
      %v680 = vld [vmem:[%s556 + $0x2f1] sm:$0xff]
      %v681 = vld [vmem:[%s556 + $0x301] sm:$0xff]
      %v682 = vld [vmem:[%s556 + $0x309] sm:$0xff]
      %v683 = vld [vmem:[%s556 + $0x319] sm:$0xff]
      %v684 = vld [vmem:[%s556 + $0x321] sm:$0xff]
      %v685 = vld [vmem:[%s556 + $0x2] sm:$0xff]
      %v686 = vld [vmem:[%s556 + $0xa] sm:$0xff]
      %v687 = vld [vmem:[%s556 + $0x1a] sm:$0xff]
      %v688 = vld [vmem:[%s556 + $0x22] sm:$0xff]
      %v689 = vld [vmem:[%s556 + $0x32] sm:$0xff]
      %v690 = vld [vmem:[%s556 + $0x3a] sm:$0xff]
      %v691 = vld [vmem:[%s556 + $0x4a] sm:$0xff]
      %v692 = vld [vmem:[%s556 + $0x52] sm:$0xff]
      %v693 = vld [vmem:[%s556 + $0x62] sm:$0xff]
      %v694 = vld [vmem:[%s556 + $0x6a] sm:$0xff]
      %v695 = vld [vmem:[%s556 + $0x7a] sm:$0xff]
      %v696 = vld [vmem:[%s556 + $0x82] sm:$0xff]
      %v697 = vld [vmem:[%s556 + $0x92] sm:$0xff]
      %v698 = vld [vmem:[%s556 + $0x9a] sm:$0xff]
      %v699 = vld [vmem:[%s556 + $0xaa] sm:$0xff]
      %v700 = vld [vmem:[%s556 + $0xb2] sm:$0xff]
      %v701 = vld [vmem:[%s556 + $0xc2] sm:$0xff]
      %v702 = vld [vmem:[%s556 + $0xca] sm:$0xff]
      %v703 = vld [vmem:[%s556 + $0xda] sm:$0xff]
      %v704 = vld [vmem:[%s556 + $0xe2] sm:$0xff]
      %v705 = vld [vmem:[%s556 + $0xf2] sm:$0xff]
      %v706 = vld [vmem:[%s556 + $0xfa] sm:$0xff]
      %v707 = vld [vmem:[%s556 + $0x10a] sm:$0xff]
      %v708 = vld [vmem:[%s556 + $0x112] sm:$0xff]
      %v709 = vld [vmem:[%s556 + $0x122] sm:$0xff]
      %v710 = vld [vmem:[%s556 + $0x12a] sm:$0xff]
      %v711 = vld [vmem:[%s556 + $0x13a] sm:$0xff]
      %v712 = vld [vmem:[%s556 + $0x142] sm:$0xff]
      %v713 = vld [vmem:[%s556 + $0x152] sm:$0xff]
      %v714 = vld [vmem:[%s556 + $0x15a] sm:$0xff]
      %v715 = vld [vmem:[%s556 + $0x16a] sm:$0xff]
      %v716 = vld [vmem:[%s556 + $0x172] sm:$0xff]
      %v717 = vld [vmem:[%s556 + $0x1b2] sm:$0xff]
      %v718 = vld [vmem:[%s556 + $0x1ba] sm:$0xff]
      %v719 = vld [vmem:[%s556 + $0x1ca] sm:$0xff]
      %v720 = vld [vmem:[%s556 + $0x1d2] sm:$0xff]
      %v721 = vld [vmem:[%s556 + $0x1e2] sm:$0xff]
      %v722 = vld [vmem:[%s556 + $0x1ea] sm:$0xff]
      %v723 = vld [vmem:[%s556 + $0x1fa] sm:$0xff]
      %v724 = vld [vmem:[%s556 + $0x202] sm:$0xff]
      %v725 = vld [vmem:[%s556 + $0x212] sm:$0xff]
      %v726 = vld [vmem:[%s556 + $0x21a] sm:$0xff]
      %v727 = vld [vmem:[%s556 + $0x22a] sm:$0xff]
      %v728 = vld [vmem:[%s556 + $0x232] sm:$0xff]
      %v729 = vld [vmem:[%s556 + $0x242] sm:$0xff]
      %v730 = vld [vmem:[%s556 + $0x24a] sm:$0xff]
      %v731 = vld [vmem:[%s556 + $0x25a] sm:$0xff]
      %v732 = vld [vmem:[%s556 + $0x262] sm:$0xff]
      %v733 = vld [vmem:[%s556 + $0x272] sm:$0xff]
      %v734 = vld [vmem:[%s556 + $0x27a] sm:$0xff]
      %v735 = vld [vmem:[%s556 + $0x28a] sm:$0xff]
      %v736 = vld [vmem:[%s556 + $0x292] sm:$0xff]
      %v737 = vld [vmem:[%s556 + $0x2a2] sm:$0xff]
      %v738 = vld [vmem:[%s556 + $0x2aa] sm:$0xff]
      %v739 = vld [vmem:[%s556 + $0x2ba] sm:$0xff]
      %v740 = vld [vmem:[%s556 + $0x2c2] sm:$0xff]
      %v741 = vld [vmem:[%s556 + $0x2d2] sm:$0xff]
      %v742 = vld [vmem:[%s556 + $0x2da] sm:$0xff]
      %v743 = vld [vmem:[%s556 + $0x2ea] sm:$0xff]
      %v744 = vld [vmem:[%s556 + $0x2f2] sm:$0xff]
      %v745 = vld [vmem:[%s556 + $0x302] sm:$0xff]
      %v746 = vld [vmem:[%s556 + $0x30a] sm:$0xff]
      %v747 = vld [vmem:[%s556 + $0x31a] sm:$0xff]
      %v748 = vld [vmem:[%s556 + $0x322] sm:$0xff]
      %813 = vrot.lane.b32.xlu0 %v235, 34
      %v814 = vpop.permute.xlu0 %813
      %815 = vrot.lane.b32.xlu0 %v236, 34
      %v816 = vpop.permute.xlu0 %815
      %817 = vrot.lane.b32.xlu0 %v237, 34
      %v818 = vpop.permute.xlu0 %817
      %819 = vrot.lane.b32.xlu0 %v238, 34
      %v820 = vpop.permute.xlu0 %819
      %821 = vrot.lane.b32.xlu0 %v239, 34
      %v822 = vpop.permute.xlu0 %821
      %823 = vrot.lane.b32.xlu0 %v240, 34
      %v824 = vpop.permute.xlu0 %823
      %825 = vrot.lane.b32.xlu0 %v241, 34
      %v826 = vpop.permute.xlu0 %825
      %827 = vrot.lane.b32.xlu0 %v242, 34
      %v828 = vpop.permute.xlu0 %827
      %829 = vrot.lane.b32.xlu0 %v243, 34
      %v830 = vpop.permute.xlu0 %829
      %831 = vrot.lane.b32.xlu0 %v244, 34
      %v832 = vpop.permute.xlu0 %831
      %833 = vrot.lane.b32.xlu0 %v245, 34
      %v834 = vpop.permute.xlu0 %833
      %835 = vrot.lane.b32.xlu0 %v246, 34
      %v836 = vpop.permute.xlu0 %835
      %837 = vrot.lane.b32.xlu0 %v247, 34
      %v838 = vpop.permute.xlu0 %837
      %839 = vrot.lane.b32.xlu0 %v248, 34
      %v840 = vpop.permute.xlu0 %839
      %841 = vrot.lane.b32.xlu0 %v249, 34
      %v842 = vpop.permute.xlu0 %841
      %843 = vrot.lane.b32.xlu0 %v250, 34
      %v844 = vpop.permute.xlu0 %843
      %845 = vrot.lane.b32.xlu0 %v251, 34
      %v846 = vpop.permute.xlu0 %845
      %847 = vrot.lane.b32.xlu0 %v252, 34
      %v848 = vpop.permute.xlu0 %847
      %849 = vrot.lane.b32.xlu0 %v253, 34
      %v850 = vpop.permute.xlu0 %849
      %851 = vrot.lane.b32.xlu0 %v254, 34
      %v852 = vpop.permute.xlu0 %851
      %853 = vrot.lane.b32.xlu0 %v255, 34
      %v854 = vpop.permute.xlu0 %853
      %855 = vrot.lane.b32.xlu0 %v256, 34
      %v856 = vpop.permute.xlu0 %855
      %857 = vrot.lane.b32.xlu0 %v257, 34
      %v858 = vpop.permute.xlu0 %857
      %859 = vrot.lane.b32.xlu0 %v258, 34
      %v860 = vpop.permute.xlu0 %859
      %861 = vrot.lane.b32.xlu0 %v259, 34
      %v862 = vpop.permute.xlu0 %861
      %863 = vrot.lane.b32.xlu0 %v260, 34
      %v864 = vpop.permute.xlu0 %863
      %865 = vrot.lane.b32.xlu0 %v261, 34
      %v866 = vpop.permute.xlu0 %865
      %867 = vrot.lane.b32.xlu0 %v262, 34
      %v868 = vpop.permute.xlu0 %867
      %869 = vrot.lane.b32.xlu0 %v263, 34
      %v870 = vpop.permute.xlu0 %869
      %871 = vrot.lane.b32.xlu0 %v264, 34
      %v872 = vpop.permute.xlu0 %871
      %873 = vrot.lane.b32.xlu0 %v265, 34
      %v874 = vpop.permute.xlu0 %873
      %875 = vrot.lane.b32.xlu0 %v266, 34
      %v876 = vpop.permute.xlu0 %875
      %877 = vrot.lane.b32.xlu0 %v267, 34
      %v878 = vpop.permute.xlu0 %877
      %879 = vrot.lane.b32.xlu0 %v268, 34
      %v880 = vpop.permute.xlu0 %879
      %881 = vrot.lane.b32.xlu0 %v269, 34
      %v882 = vpop.permute.xlu0 %881
      %883 = vrot.lane.b32.xlu0 %v270, 34
      %v884 = vpop.permute.xlu0 %883
      %885 = vrot.lane.b32.xlu0 %v271, 34
      %v886 = vpop.permute.xlu0 %885
      %887 = vrot.lane.b32.xlu0 %v272, 34
      %v888 = vpop.permute.xlu0 %887
      %889 = vrot.lane.b32.xlu0 %v273, 34
      %v890 = vpop.permute.xlu0 %889
      %891 = vrot.lane.b32.xlu0 %v274, 34
      %v892 = vpop.permute.xlu0 %891
      %893 = vrot.lane.b32.xlu0 %v275, 34
      %v894 = vpop.permute.xlu0 %893
      %895 = vrot.lane.b32.xlu0 %v276, 34
      %v896 = vpop.permute.xlu0 %895
      %897 = vrot.lane.b32.xlu0 %v277, 34
      %v898 = vpop.permute.xlu0 %897
      %899 = vrot.lane.b32.xlu0 %v278, 34
      %v900 = vpop.permute.xlu0 %899
      %901 = vrot.lane.b32.xlu0 %v279, 34
      %v902 = vpop.permute.xlu0 %901
      %903 = vrot.lane.b32.xlu0 %v280, 34
      %v904 = vpop.permute.xlu0 %903
      %905 = vrot.lane.b32.xlu0 %v281, 34
      %v906 = vpop.permute.xlu0 %905
      %907 = vrot.lane.b32.xlu0 %v282, 34
      %v908 = vpop.permute.xlu0 %907
      %909 = vrot.lane.b32.xlu0 %v283, 34
      %v910 = vpop.permute.xlu0 %909
      %911 = vrot.lane.b32.xlu0 %v284, 34
      %v912 = vpop.permute.xlu0 %911
      %913 = vrot.lane.b32.xlu0 %v285, 34
      %v914 = vpop.permute.xlu0 %913
      %915 = vrot.lane.b32.xlu0 %v286, 34
      %v916 = vpop.permute.xlu0 %915
      %917 = vrot.lane.b32.xlu0 %v287, 34
      %v918 = vpop.permute.xlu0 %917
      %919 = vrot.lane.b32.xlu0 %v288, 34
      %v920 = vpop.permute.xlu0 %919
      %921 = vrot.lane.b32.xlu0 %v289, 34
      %v922 = vpop.permute.xlu0 %921
      %923 = vrot.lane.b32.xlu0 %v290, 34
      %v924 = vpop.permute.xlu0 %923
      %925 = vrot.lane.b32.xlu0 %v291, 34
      %v926 = vpop.permute.xlu0 %925
      %927 = vrot.lane.b32.xlu0 %v292, 34
      %v928 = vpop.permute.xlu0 %927
      %929 = vrot.lane.b32.xlu0 %v293, 34
      %v930 = vpop.permute.xlu0 %929
      %931 = vrot.lane.b32.xlu0 %v294, 34
      %v932 = vpop.permute.xlu0 %931
      %933 = vrot.lane.b32.xlu0 %v295, 34
      %v934 = vpop.permute.xlu0 %933
      %935 = vrot.lane.b32.xlu0 %v296, 34
      %v936 = vpop.permute.xlu0 %935
      %937 = vrot.lane.b32.xlu0 %v297, 34
      %v938 = vpop.permute.xlu0 %937
      %939 = vrot.lane.b32.xlu0 %v298, 34
      %v940 = vpop.permute.xlu0 %939
      %1069 = vrot.lane.b32.xlu0 %v299, 68
      %v1070 = vpop.permute.xlu0 %1069
      %1071 = vrot.lane.b32.xlu0 %v300, 68
      %v1072 = vpop.permute.xlu0 %1071
      %1073 = vrot.lane.b32.xlu0 %v301, 68
      %v1074 = vpop.permute.xlu0 %1073
      %1075 = vrot.lane.b32.xlu0 %v302, 68
      %v1076 = vpop.permute.xlu0 %1075
      %1077 = vrot.lane.b32.xlu0 %v303, 68
      %v1078 = vpop.permute.xlu0 %1077
      %1079 = vrot.lane.b32.xlu0 %v304, 68
      %v1080 = vpop.permute.xlu0 %1079
      %1081 = vrot.lane.b32.xlu0 %v305, 68
      %v1082 = vpop.permute.xlu0 %1081
      %1083 = vrot.lane.b32.xlu0 %v306, 68
      %v1084 = vpop.permute.xlu0 %1083
      %1085 = vrot.lane.b32.xlu0 %v307, 68
      %v1086 = vpop.permute.xlu0 %1085
      %1087 = vrot.lane.b32.xlu0 %v308, 68
      %v1088 = vpop.permute.xlu0 %1087
      %1089 = vrot.lane.b32.xlu0 %v309, 68
      %v1090 = vpop.permute.xlu0 %1089
      %1091 = vrot.lane.b32.xlu0 %v310, 68
      %v1092 = vpop.permute.xlu0 %1091
      %1093 = vrot.lane.b32.xlu0 %v311, 68
      %v1094 = vpop.permute.xlu0 %1093
      %1095 = vrot.lane.b32.xlu0 %v312, 68
      %v1096 = vpop.permute.xlu0 %1095
      %1097 = vrot.lane.b32.xlu0 %v313, 68
      %v1098 = vpop.permute.xlu0 %1097
      %1099 = vrot.lane.b32.xlu0 %v314, 68
      %v1100 = vpop.permute.xlu0 %1099
      %1101 = vrot.lane.b32.xlu0 %v315, 68
      %v1102 = vpop.permute.xlu0 %1101
      %1103 = vrot.lane.b32.xlu0 %v316, 68
      %v1104 = vpop.permute.xlu0 %1103
      %1105 = vrot.lane.b32.xlu0 %v317, 68
      %v1106 = vpop.permute.xlu0 %1105
      %1107 = vrot.lane.b32.xlu0 %v318, 68
      %v1108 = vpop.permute.xlu0 %1107
      %1109 = vrot.lane.b32.xlu0 %v319, 68
      %v1110 = vpop.permute.xlu0 %1109
      %1111 = vrot.lane.b32.xlu0 %v320, 68
      %v1112 = vpop.permute.xlu0 %1111
      %1113 = vrot.lane.b32.xlu0 %v321, 68
      %v1114 = vpop.permute.xlu0 %1113
      %1115 = vrot.lane.b32.xlu0 %v322, 68
      %v1116 = vpop.permute.xlu0 %1115
      %1117 = vrot.lane.b32.xlu0 %v323, 68
      %v1118 = vpop.permute.xlu0 %1117
      %1119 = vrot.lane.b32.xlu0 %v324, 68
      %v1120 = vpop.permute.xlu0 %1119
      %1121 = vrot.lane.b32.xlu0 %v325, 68
      %v1122 = vpop.permute.xlu0 %1121
      %1123 = vrot.lane.b32.xlu0 %v326, 68
      %v1124 = vpop.permute.xlu0 %1123
      %1125 = vrot.lane.b32.xlu0 %v327, 68
      %v1126 = vpop.permute.xlu0 %1125
      %1127 = vrot.lane.b32.xlu0 %v328, 68
      %v1128 = vpop.permute.xlu0 %1127
      %1129 = vrot.lane.b32.xlu0 %v329, 68
      %v1130 = vpop.permute.xlu0 %1129
      %1131 = vrot.lane.b32.xlu0 %v330, 68
      %v1132 = vpop.permute.xlu0 %1131
      %1133 = vrot.lane.b32.xlu0 %v331, 68
      %v1134 = vpop.permute.xlu0 %1133
      %1135 = vrot.lane.b32.xlu0 %v332, 68
      %v1136 = vpop.permute.xlu0 %1135
      %1137 = vrot.lane.b32.xlu0 %v333, 68
      %v1138 = vpop.permute.xlu0 %1137
      %1139 = vrot.lane.b32.xlu0 %v334, 68
      %v1140 = vpop.permute.xlu0 %1139
      %1141 = vrot.lane.b32.xlu0 %v335, 68
      %v1142 = vpop.permute.xlu0 %1141
      %1143 = vrot.lane.b32.xlu0 %v336, 68
      %v1144 = vpop.permute.xlu0 %1143
      %1145 = vrot.lane.b32.xlu0 %v337, 68
      %v1146 = vpop.permute.xlu0 %1145
      %1147 = vrot.lane.b32.xlu0 %v338, 68
      %v1148 = vpop.permute.xlu0 %1147
      %1149 = vrot.lane.b32.xlu0 %v339, 68
      %v1150 = vpop.permute.xlu0 %1149
      %1151 = vrot.lane.b32.xlu0 %v340, 68
      %v1152 = vpop.permute.xlu0 %1151
      %1153 = vrot.lane.b32.xlu0 %v341, 68
      %v1154 = vpop.permute.xlu0 %1153
      %1155 = vrot.lane.b32.xlu0 %v342, 68
      %v1156 = vpop.permute.xlu0 %1155
      %1157 = vrot.lane.b32.xlu0 %v343, 68
      %v1158 = vpop.permute.xlu0 %1157
      %1159 = vrot.lane.b32.xlu0 %v344, 68
      %v1160 = vpop.permute.xlu0 %1159
      %1161 = vrot.lane.b32.xlu0 %v345, 68
      %v1162 = vpop.permute.xlu0 %1161
      %1163 = vrot.lane.b32.xlu0 %v346, 68
      %v1164 = vpop.permute.xlu0 %1163
      %1165 = vrot.lane.b32.xlu0 %v347, 68
      %v1166 = vpop.permute.xlu0 %1165
      %1167 = vrot.lane.b32.xlu0 %v348, 68
      %v1168 = vpop.permute.xlu0 %1167
      %1169 = vrot.lane.b32.xlu0 %v349, 68
      %v1170 = vpop.permute.xlu0 %1169
      %1171 = vrot.lane.b32.xlu0 %v350, 68
      %v1172 = vpop.permute.xlu0 %1171
      %1173 = vrot.lane.b32.xlu0 %v351, 68
      %v1174 = vpop.permute.xlu0 %1173
      %1175 = vrot.lane.b32.xlu0 %v352, 68
      %v1176 = vpop.permute.xlu0 %1175
      %1177 = vrot.lane.b32.xlu0 %v353, 68
      %v1178 = vpop.permute.xlu0 %1177
      %1179 = vrot.lane.b32.xlu0 %v354, 68
      %v1180 = vpop.permute.xlu0 %1179
      %1181 = vrot.lane.b32.xlu0 %v355, 68
      %v1182 = vpop.permute.xlu0 %1181
      %1183 = vrot.lane.b32.xlu0 %v356, 68
      %v1184 = vpop.permute.xlu0 %1183
      %1185 = vrot.lane.b32.xlu0 %v357, 68
      %v1186 = vpop.permute.xlu0 %1185
      %1187 = vrot.lane.b32.xlu0 %v358, 68
      %v1188 = vpop.permute.xlu0 %1187
      %1189 = vrot.lane.b32.xlu0 %v359, 68
      %v1190 = vpop.permute.xlu0 %1189
      %1191 = vrot.lane.b32.xlu0 %v360, 68
      %v1192 = vpop.permute.xlu0 %1191
      %1193 = vrot.lane.b32.xlu0 %v361, 68
      %v1194 = vpop.permute.xlu0 %1193
      %1195 = vrot.lane.b32.xlu0 %v362, 68
      %v1196 = vpop.permute.xlu0 %1195
      %1325 = vrot.lane.b32.xlu0 %v364, 102
      %v1326 = vpop.permute.xlu0 %1325
      %1327 = vrot.lane.b32.xlu0 %v365, 102
      %v1328 = vpop.permute.xlu0 %1327
      %1329 = vrot.lane.b32.xlu0 %v366, 102
      %v1330 = vpop.permute.xlu0 %1329
      %1331 = vrot.lane.b32.xlu0 %v367, 102
      %v1332 = vpop.permute.xlu0 %1331
      %1333 = vrot.lane.b32.xlu0 %v368, 102
      %v1334 = vpop.permute.xlu0 %1333
      %1335 = vrot.lane.b32.xlu0 %v369, 102
      %v1336 = vpop.permute.xlu0 %1335
      %1337 = vrot.lane.b32.xlu0 %v370, 102
      %v1338 = vpop.permute.xlu0 %1337
      %1339 = vrot.lane.b32.xlu0 %v371, 102
      %v1340 = vpop.permute.xlu0 %1339
      %1341 = vrot.lane.b32.xlu0 %v372, 102
      %v1342 = vpop.permute.xlu0 %1341
      %1343 = vrot.lane.b32.xlu0 %v373, 102
      %v1344 = vpop.permute.xlu0 %1343
      %1345 = vrot.lane.b32.xlu0 %v374, 102
      %v1346 = vpop.permute.xlu0 %1345
      %1347 = vrot.lane.b32.xlu0 %v375, 102
      %v1348 = vpop.permute.xlu0 %1347
      %1349 = vrot.lane.b32.xlu0 %v376, 102
      %v1350 = vpop.permute.xlu0 %1349
      %1351 = vrot.lane.b32.xlu0 %v377, 102
      %v1352 = vpop.permute.xlu0 %1351
      %1353 = vrot.lane.b32.xlu0 %v378, 102
      %v1354 = vpop.permute.xlu0 %1353
      %1355 = vrot.lane.b32.xlu0 %v379, 102
      %v1356 = vpop.permute.xlu0 %1355
      %1357 = vrot.lane.b32.xlu0 %v380, 102
      %v1358 = vpop.permute.xlu0 %1357
      %1359 = vrot.lane.b32.xlu0 %v381, 102
      %v1360 = vpop.permute.xlu0 %1359
      %1361 = vrot.lane.b32.xlu0 %v382, 102
      %v1362 = vpop.permute.xlu0 %1361
      %1363 = vrot.lane.b32.xlu0 %v383, 102
      %v1364 = vpop.permute.xlu0 %1363
      %1365 = vrot.lane.b32.xlu0 %v384, 102
      %v1366 = vpop.permute.xlu0 %1365
      %1367 = vrot.lane.b32.xlu0 %v385, 102
      %v1368 = vpop.permute.xlu0 %1367
      %1369 = vrot.lane.b32.xlu0 %v386, 102
      %v1370 = vpop.permute.xlu0 %1369
      %1371 = vrot.lane.b32.xlu0 %v387, 102
      %v1372 = vpop.permute.xlu0 %1371
      %1373 = vrot.lane.b32.xlu0 %v388, 102
      %v1374 = vpop.permute.xlu0 %1373
      %1375 = vrot.lane.b32.xlu0 %v389, 102
      %v1376 = vpop.permute.xlu0 %1375
      %1377 = vrot.lane.b32.xlu0 %v390, 102
      %v1378 = vpop.permute.xlu0 %1377
      %1379 = vrot.lane.b32.xlu0 %v391, 102
      %v1380 = vpop.permute.xlu0 %1379
      %1381 = vrot.lane.b32.xlu0 %v392, 102
      %v1382 = vpop.permute.xlu0 %1381
      %1383 = vrot.lane.b32.xlu0 %v393, 102
      %v1384 = vpop.permute.xlu0 %1383
      %1385 = vrot.lane.b32.xlu0 %v394, 102
      %v1386 = vpop.permute.xlu0 %1385
      %1387 = vrot.lane.b32.xlu0 %v395, 102
      %v1388 = vpop.permute.xlu0 %1387
      %1389 = vrot.lane.b32.xlu0 %v396, 102
      %v1390 = vpop.permute.xlu0 %1389
      %1391 = vrot.lane.b32.xlu0 %v397, 102
      %v1392 = vpop.permute.xlu0 %1391
      %1393 = vrot.lane.b32.xlu0 %v398, 102
      %v1394 = vpop.permute.xlu0 %1393
      %1395 = vrot.lane.b32.xlu0 %v399, 102
      %v1396 = vpop.permute.xlu0 %1395
      %1397 = vrot.lane.b32.xlu0 %v400, 102
      %v1398 = vpop.permute.xlu0 %1397
      %1399 = vrot.lane.b32.xlu0 %v401, 102
      %v1400 = vpop.permute.xlu0 %1399
      %1401 = vrot.lane.b32.xlu0 %v402, 102
      %v1402 = vpop.permute.xlu0 %1401
      %1403 = vrot.lane.b32.xlu0 %v403, 102
      %v1404 = vpop.permute.xlu0 %1403
      %1405 = vrot.lane.b32.xlu0 %v404, 102
      %v1406 = vpop.permute.xlu0 %1405
      %1407 = vrot.lane.b32.xlu0 %v405, 102
      %v1408 = vpop.permute.xlu0 %1407
      %1409 = vrot.lane.b32.xlu0 %v406, 102
      %v1410 = vpop.permute.xlu0 %1409
      %1411 = vrot.lane.b32.xlu0 %v407, 102
      %v1412 = vpop.permute.xlu0 %1411
      %1413 = vrot.lane.b32.xlu0 %v408, 102
      %v1414 = vpop.permute.xlu0 %1413
      %1415 = vrot.lane.b32.xlu0 %v409, 102
      %v1416 = vpop.permute.xlu0 %1415
      %1417 = vrot.lane.b32.xlu0 %v410, 102
      %v1418 = vpop.permute.xlu0 %1417
      %1419 = vrot.lane.b32.xlu0 %v411, 102
      %v1420 = vpop.permute.xlu0 %1419
      %1421 = vrot.lane.b32.xlu0 %v412, 102
      %v1422 = vpop.permute.xlu0 %1421
      %1423 = vrot.lane.b32.xlu0 %v413, 102
      %v1424 = vpop.permute.xlu0 %1423
      %1425 = vrot.lane.b32.xlu0 %v414, 102
      %v1426 = vpop.permute.xlu0 %1425
      %1427 = vrot.lane.b32.xlu0 %v415, 102
      %v1428 = vpop.permute.xlu0 %1427
      %1429 = vrot.lane.b32.xlu0 %v416, 102
      %v1430 = vpop.permute.xlu0 %1429
      %1431 = vrot.lane.b32.xlu0 %v417, 102
      %v1432 = vpop.permute.xlu0 %1431
      %1433 = vrot.lane.b32.xlu0 %v418, 102
      %v1434 = vpop.permute.xlu0 %1433
      %1435 = vrot.lane.b32.xlu0 %v419, 102
      %v1436 = vpop.permute.xlu0 %1435
      %1437 = vrot.lane.b32.xlu0 %v420, 102
      %v1438 = vpop.permute.xlu0 %1437
      %1439 = vrot.lane.b32.xlu0 %v421, 102
      %v1440 = vpop.permute.xlu0 %1439
      %1441 = vrot.lane.b32.xlu0 %v422, 102
      %v1442 = vpop.permute.xlu0 %1441
      %1443 = vrot.lane.b32.xlu0 %v423, 102
      %v1444 = vpop.permute.xlu0 %1443
      %1445 = vrot.lane.b32.xlu0 %v424, 102
      %v1446 = vpop.permute.xlu0 %1445
      %1447 = vrot.lane.b32.xlu0 %v425, 102
      %v1448 = vpop.permute.xlu0 %1447
      %1449 = vrot.lane.b32.xlu0 %v426, 102
      %v1450 = vpop.permute.xlu0 %1449
      %1451 = vrot.lane.b32.xlu0 %v427, 102
      %v1452 = vpop.permute.xlu0 %1451
      %1581 = vrot.lane.b32.xlu0 %v428, 8
      %v1582 = vpop.permute.xlu0 %1581
      %1583 = vrot.lane.b32.xlu0 %v429, 8
      %v1584 = vpop.permute.xlu0 %1583
      %1585 = vrot.lane.b32.xlu0 %v430, 8
      %v1586 = vpop.permute.xlu0 %1585
      %1587 = vrot.lane.b32.xlu0 %v431, 8
      %v1588 = vpop.permute.xlu0 %1587
      %1589 = vrot.lane.b32.xlu0 %v432, 8
      %v1590 = vpop.permute.xlu0 %1589
      %1591 = vrot.lane.b32.xlu0 %v433, 8
      %v1592 = vpop.permute.xlu0 %1591
      %1593 = vrot.lane.b32.xlu0 %v434, 8
      %v1594 = vpop.permute.xlu0 %1593
      %1595 = vrot.lane.b32.xlu0 %v435, 8
      %v1596 = vpop.permute.xlu0 %1595
      %1597 = vrot.lane.b32.xlu0 %v436, 8
      %v1598 = vpop.permute.xlu0 %1597
      %1599 = vrot.lane.b32.xlu0 %v437, 8
      %v1600 = vpop.permute.xlu0 %1599
      %1601 = vrot.lane.b32.xlu0 %v438, 8
      %v1602 = vpop.permute.xlu0 %1601
      %1603 = vrot.lane.b32.xlu0 %v439, 8
      %v1604 = vpop.permute.xlu0 %1603
      %1605 = vrot.lane.b32.xlu0 %v440, 8
      %v1606 = vpop.permute.xlu0 %1605
      %1607 = vrot.lane.b32.xlu0 %v441, 8
      %v1608 = vpop.permute.xlu0 %1607
      %1609 = vrot.lane.b32.xlu0 %v442, 8
      %v1610 = vpop.permute.xlu0 %1609
      %1611 = vrot.lane.b32.xlu0 %v443, 8
      %v1612 = vpop.permute.xlu0 %1611
      %1613 = vrot.lane.b32.xlu0 %v444, 8
      %v1614 = vpop.permute.xlu0 %1613
      %1615 = vrot.lane.b32.xlu0 %v445, 8
      %v1616 = vpop.permute.xlu0 %1615
      %1617 = vrot.lane.b32.xlu0 %v446, 8
      %v1618 = vpop.permute.xlu0 %1617
      %1619 = vrot.lane.b32.xlu0 %v447, 8
      %v1620 = vpop.permute.xlu0 %1619
      %1621 = vrot.lane.b32.xlu0 %v448, 8
      %v1622 = vpop.permute.xlu0 %1621
      %1623 = vrot.lane.b32.xlu0 %v449, 8
      %v1624 = vpop.permute.xlu0 %1623
      %1625 = vrot.lane.b32.xlu0 %v450, 8
      %v1626 = vpop.permute.xlu0 %1625
      %1627 = vrot.lane.b32.xlu0 %v451, 8
      %v1628 = vpop.permute.xlu0 %1627
      %1629 = vrot.lane.b32.xlu0 %v452, 8
      %v1630 = vpop.permute.xlu0 %1629
      %1631 = vrot.lane.b32.xlu0 %v453, 8
      %v1632 = vpop.permute.xlu0 %1631
      %1633 = vrot.lane.b32.xlu0 %v454, 8
      %v1634 = vpop.permute.xlu0 %1633
      %1635 = vrot.lane.b32.xlu0 %v455, 8
      %v1636 = vpop.permute.xlu0 %1635
      %1637 = vrot.lane.b32.xlu0 %v456, 8
      %v1638 = vpop.permute.xlu0 %1637
      %1639 = vrot.lane.b32.xlu0 %v457, 8
      %v1640 = vpop.permute.xlu0 %1639
      %1641 = vrot.lane.b32.xlu0 %v458, 8
      %v1642 = vpop.permute.xlu0 %1641
      %1643 = vrot.lane.b32.xlu0 %v459, 8
      %v1644 = vpop.permute.xlu0 %1643
      %1645 = vrot.lane.b32.xlu0 %v460, 8
      %v1646 = vpop.permute.xlu0 %1645
      %1647 = vrot.lane.b32.xlu0 %v461, 8
      %v1648 = vpop.permute.xlu0 %1647
      %1649 = vrot.lane.b32.xlu0 %v462, 8
      %v1650 = vpop.permute.xlu0 %1649
      %1651 = vrot.lane.b32.xlu0 %v463, 8
      %v1652 = vpop.permute.xlu0 %1651
      %1653 = vrot.lane.b32.xlu0 %v464, 8
      %v1654 = vpop.permute.xlu0 %1653
      %1655 = vrot.lane.b32.xlu0 %v465, 8
      %v1656 = vpop.permute.xlu0 %1655
      %1657 = vrot.lane.b32.xlu0 %v466, 8
      %v1658 = vpop.permute.xlu0 %1657
      %1659 = vrot.lane.b32.xlu0 %v467, 8
      %v1660 = vpop.permute.xlu0 %1659
      %1661 = vrot.lane.b32.xlu0 %v468, 8
      %v1662 = vpop.permute.xlu0 %1661
      %1663 = vrot.lane.b32.xlu0 %v469, 8
      %v1664 = vpop.permute.xlu0 %1663
      %1665 = vrot.lane.b32.xlu0 %v470, 8
      %v1666 = vpop.permute.xlu0 %1665
      %1667 = vrot.lane.b32.xlu0 %v471, 8
      %v1668 = vpop.permute.xlu0 %1667
      %1669 = vrot.lane.b32.xlu0 %v472, 8
      %v1670 = vpop.permute.xlu0 %1669
      %1671 = vrot.lane.b32.xlu0 %v473, 8
      %v1672 = vpop.permute.xlu0 %1671
      %1673 = vrot.lane.b32.xlu0 %v474, 8
      %v1674 = vpop.permute.xlu0 %1673
      %1675 = vrot.lane.b32.xlu0 %v475, 8
      %v1676 = vpop.permute.xlu0 %1675
      %1677 = vrot.lane.b32.xlu0 %v476, 8
      %v1678 = vpop.permute.xlu0 %1677
      %1679 = vrot.lane.b32.xlu0 %v477, 8
      %v1680 = vpop.permute.xlu0 %1679
      %1681 = vrot.lane.b32.xlu0 %v478, 8
      %v1682 = vpop.permute.xlu0 %1681
      %1683 = vrot.lane.b32.xlu0 %v479, 8
      %v1684 = vpop.permute.xlu0 %1683
      %1685 = vrot.lane.b32.xlu0 %v480, 8
      %v1686 = vpop.permute.xlu0 %1685
      %1687 = vrot.lane.b32.xlu0 %v481, 8
      %v1688 = vpop.permute.xlu0 %1687
      %1689 = vrot.lane.b32.xlu0 %v482, 8
      %v1690 = vpop.permute.xlu0 %1689
      %1691 = vrot.lane.b32.xlu0 %v483, 8
      %v1692 = vpop.permute.xlu0 %1691
      %1693 = vrot.lane.b32.xlu0 %v484, 8
      %v1694 = vpop.permute.xlu0 %1693
      %1695 = vrot.lane.b32.xlu0 %v485, 8
      %v1696 = vpop.permute.xlu0 %1695
      %1697 = vrot.lane.b32.xlu0 %v486, 8
      %v1698 = vpop.permute.xlu0 %1697
      %1699 = vrot.lane.b32.xlu0 %v487, 8
      %v1700 = vpop.permute.xlu0 %1699
      %1701 = vrot.lane.b32.xlu0 %v488, 8
      %v1702 = vpop.permute.xlu0 %1701
      %1703 = vrot.lane.b32.xlu0 %v489, 8
      %v1704 = vpop.permute.xlu0 %1703
      %1705 = vrot.lane.b32.xlu0 %v490, 8
      %v1706 = vpop.permute.xlu0 %1705
      %1707 = vrot.lane.b32.xlu0 %v491, 8
      %v1708 = vpop.permute.xlu0 %1707
      %1837 = vrot.lane.b32.xlu0 %v492, 42
      %v1838 = vpop.permute.xlu0 %1837
      %1839 = vrot.lane.b32.xlu0 %v493, 42
      %v1840 = vpop.permute.xlu0 %1839
      %1841 = vrot.lane.b32.xlu0 %v494, 42
      %v1842 = vpop.permute.xlu0 %1841
      %1843 = vrot.lane.b32.xlu0 %v495, 42
      %v1844 = vpop.permute.xlu0 %1843
      %1845 = vrot.lane.b32.xlu0 %v496, 42
      %v1846 = vpop.permute.xlu0 %1845
      %1847 = vrot.lane.b32.xlu0 %v497, 42
      %v1848 = vpop.permute.xlu0 %1847
      %1849 = vrot.lane.b32.xlu0 %v498, 42
      %v1850 = vpop.permute.xlu0 %1849
      %1851 = vrot.lane.b32.xlu0 %v499, 42
      %v1852 = vpop.permute.xlu0 %1851
      %1853 = vrot.lane.b32.xlu0 %v500, 42
      %v1854 = vpop.permute.xlu0 %1853
      %1855 = vrot.lane.b32.xlu0 %v501, 42
      %v1856 = vpop.permute.xlu0 %1855
      %1857 = vrot.lane.b32.xlu0 %v502, 42
      %v1858 = vpop.permute.xlu0 %1857
      %1859 = vrot.lane.b32.xlu0 %v503, 42
      %v1860 = vpop.permute.xlu0 %1859
      %1861 = vrot.lane.b32.xlu0 %v504, 42
      %v1862 = vpop.permute.xlu0 %1861
      %1863 = vrot.lane.b32.xlu0 %v505, 42
      %v1864 = vpop.permute.xlu0 %1863
      %1865 = vrot.lane.b32.xlu0 %v506, 42
      %v1866 = vpop.permute.xlu0 %1865
      %1867 = vrot.lane.b32.xlu0 %v507, 42
      %v1868 = vpop.permute.xlu0 %1867
      %1869 = vrot.lane.b32.xlu0 %v508, 42
      %v1870 = vpop.permute.xlu0 %1869
      %1871 = vrot.lane.b32.xlu0 %v509, 42
      %v1872 = vpop.permute.xlu0 %1871
      %1873 = vrot.lane.b32.xlu0 %v510, 42
      %v1874 = vpop.permute.xlu0 %1873
      %1875 = vrot.lane.b32.xlu0 %v511, 42
      %v1876 = vpop.permute.xlu0 %1875
      %1877 = vrot.lane.b32.xlu0 %v512, 42
      %v1878 = vpop.permute.xlu0 %1877
      %1879 = vrot.lane.b32.xlu0 %v513, 42
      %v1880 = vpop.permute.xlu0 %1879
      %1881 = vrot.lane.b32.xlu0 %v514, 42
      %v1882 = vpop.permute.xlu0 %1881
      %1883 = vrot.lane.b32.xlu0 %v515, 42
      %v1884 = vpop.permute.xlu0 %1883
      %1885 = vrot.lane.b32.xlu0 %v516, 42
      %v1886 = vpop.permute.xlu0 %1885
      %1887 = vrot.lane.b32.xlu0 %v517, 42
      %v1888 = vpop.permute.xlu0 %1887
      %1889 = vrot.lane.b32.xlu0 %v518, 42
      %v1890 = vpop.permute.xlu0 %1889
      %1891 = vrot.lane.b32.xlu0 %v519, 42
      %v1892 = vpop.permute.xlu0 %1891
      %1893 = vrot.lane.b32.xlu0 %v520, 42
      %v1894 = vpop.permute.xlu0 %1893
      %1895 = vrot.lane.b32.xlu0 %v521, 42
      %v1896 = vpop.permute.xlu0 %1895
      %1897 = vrot.lane.b32.xlu0 %v522, 42
      %v1898 = vpop.permute.xlu0 %1897
      %1899 = vrot.lane.b32.xlu0 %v523, 42
      %v1900 = vpop.permute.xlu0 %1899
      %1901 = vrot.lane.b32.xlu0 %v524, 42
      %v1902 = vpop.permute.xlu0 %1901
      %1903 = vrot.lane.b32.xlu0 %v525, 42
      %v1904 = vpop.permute.xlu0 %1903
      %1905 = vrot.lane.b32.xlu0 %v526, 42
      %v1906 = vpop.permute.xlu0 %1905
      %1907 = vrot.lane.b32.xlu0 %v527, 42
      %v1908 = vpop.permute.xlu0 %1907
      %1909 = vrot.lane.b32.xlu0 %v528, 42
      %v1910 = vpop.permute.xlu0 %1909
      %1911 = vrot.lane.b32.xlu0 %v529, 42
      %v1912 = vpop.permute.xlu0 %1911
      %1913 = vrot.lane.b32.xlu0 %v530, 42
      %v1914 = vpop.permute.xlu0 %1913
      %1915 = vrot.lane.b32.xlu0 %v531, 42
      %v1916 = vpop.permute.xlu0 %1915
      %1917 = vrot.lane.b32.xlu0 %v532, 42
      %v1918 = vpop.permute.xlu0 %1917
      %1919 = vrot.lane.b32.xlu0 %v533, 42
      %v1920 = vpop.permute.xlu0 %1919
      %1921 = vrot.lane.b32.xlu0 %v534, 42
      %v1922 = vpop.permute.xlu0 %1921
      %1923 = vrot.lane.b32.xlu0 %v535, 42
      %v1924 = vpop.permute.xlu0 %1923
      %1925 = vrot.lane.b32.xlu0 %v536, 42
      %v1926 = vpop.permute.xlu0 %1925
      %1927 = vrot.lane.b32.xlu0 %v537, 42
      %v1928 = vpop.permute.xlu0 %1927
      %1929 = vrot.lane.b32.xlu0 %v538, 42
      %v1930 = vpop.permute.xlu0 %1929
      %1931 = vrot.lane.b32.xlu0 %v539, 42
      %v1932 = vpop.permute.xlu0 %1931
      %1933 = vrot.lane.b32.xlu0 %v540, 42
      %v1934 = vpop.permute.xlu0 %1933
      %1935 = vrot.lane.b32.xlu0 %v541, 42
      %v1936 = vpop.permute.xlu0 %1935
      %1937 = vrot.lane.b32.xlu0 %v542, 42
      %v1938 = vpop.permute.xlu0 %1937
      %1939 = vrot.lane.b32.xlu0 %v543, 42
      %v1940 = vpop.permute.xlu0 %1939
      %1941 = vrot.lane.b32.xlu0 %v544, 42
      %v1942 = vpop.permute.xlu0 %1941
      %1943 = vrot.lane.b32.xlu0 %v545, 42
      %v1944 = vpop.permute.xlu0 %1943
      %1945 = vrot.lane.b32.xlu0 %v546, 42
      %v1946 = vpop.permute.xlu0 %1945
      %1947 = vrot.lane.b32.xlu0 %v547, 42
      %v1948 = vpop.permute.xlu0 %1947
      %1949 = vrot.lane.b32.xlu0 %v548, 42
      %v1950 = vpop.permute.xlu0 %1949
      %1951 = vrot.lane.b32.xlu0 %v549, 42
      %v1952 = vpop.permute.xlu0 %1951
      %1953 = vrot.lane.b32.xlu0 %v550, 42
      %v1954 = vpop.permute.xlu0 %1953
      %1955 = vrot.lane.b32.xlu0 %v551, 42
      %v1956 = vpop.permute.xlu0 %1955
      %1957 = vrot.lane.b32.xlu0 %v552, 42
      %v1958 = vpop.permute.xlu0 %1957
      %1959 = vrot.lane.b32.xlu0 %v553, 42
      %v1960 = vpop.permute.xlu0 %1959
      %1961 = vrot.lane.b32.xlu0 %v554, 42
      %v1962 = vpop.permute.xlu0 %1961
      %1963 = vrot.lane.b32.xlu0 %v555, 42
      %v1964 = vpop.permute.xlu0 %1963
      %2093 = vrot.lane.b32.xlu0 %v557, 76
      %v2094 = vpop.permute.xlu0 %2093
      %2095 = vrot.lane.b32.xlu0 %v558, 76
      %v2096 = vpop.permute.xlu0 %2095
      %2097 = vrot.lane.b32.xlu0 %v559, 76
      %v2098 = vpop.permute.xlu0 %2097
      %2099 = vrot.lane.b32.xlu0 %v560, 76
      %v2100 = vpop.permute.xlu0 %2099
      %2101 = vrot.lane.b32.xlu0 %v561, 76
      %v2102 = vpop.permute.xlu0 %2101
      %2103 = vrot.lane.b32.xlu0 %v562, 76
      %v2104 = vpop.permute.xlu0 %2103
      %2105 = vrot.lane.b32.xlu0 %v563, 76
      %v2106 = vpop.permute.xlu0 %2105
      %2107 = vrot.lane.b32.xlu0 %v564, 76
      %v2108 = vpop.permute.xlu0 %2107
      %2109 = vrot.lane.b32.xlu0 %v565, 76
      %v2110 = vpop.permute.xlu0 %2109
      %2111 = vrot.lane.b32.xlu0 %v566, 76
      %v2112 = vpop.permute.xlu0 %2111
      %2113 = vrot.lane.b32.xlu0 %v567, 76
      %v2114 = vpop.permute.xlu0 %2113
      %2115 = vrot.lane.b32.xlu0 %v568, 76
      %v2116 = vpop.permute.xlu0 %2115
      %2117 = vrot.lane.b32.xlu0 %v569, 76
      %v2118 = vpop.permute.xlu0 %2117
      %2119 = vrot.lane.b32.xlu0 %v570, 76
      %v2120 = vpop.permute.xlu0 %2119
      %2121 = vrot.lane.b32.xlu0 %v571, 76
      %v2122 = vpop.permute.xlu0 %2121
      %2123 = vrot.lane.b32.xlu0 %v572, 76
      %v2124 = vpop.permute.xlu0 %2123
      %2125 = vrot.lane.b32.xlu0 %v573, 76
      %v2126 = vpop.permute.xlu0 %2125
      %2127 = vrot.lane.b32.xlu0 %v574, 76
      %v2128 = vpop.permute.xlu0 %2127
      %2129 = vrot.lane.b32.xlu0 %v575, 76
      %v2130 = vpop.permute.xlu0 %2129
      %2131 = vrot.lane.b32.xlu0 %v576, 76
      %v2132 = vpop.permute.xlu0 %2131
      %2133 = vrot.lane.b32.xlu0 %v577, 76
      %v2134 = vpop.permute.xlu0 %2133
      %2135 = vrot.lane.b32.xlu0 %v578, 76
      %v2136 = vpop.permute.xlu0 %2135
      %2137 = vrot.lane.b32.xlu0 %v579, 76
      %v2138 = vpop.permute.xlu0 %2137
      %2139 = vrot.lane.b32.xlu0 %v580, 76
      %v2140 = vpop.permute.xlu0 %2139
      %2141 = vrot.lane.b32.xlu0 %v581, 76
      %v2142 = vpop.permute.xlu0 %2141
      %2143 = vrot.lane.b32.xlu0 %v582, 76
      %v2144 = vpop.permute.xlu0 %2143
      %2145 = vrot.lane.b32.xlu0 %v583, 76
      %v2146 = vpop.permute.xlu0 %2145
      %2147 = vrot.lane.b32.xlu0 %v584, 76
      %v2148 = vpop.permute.xlu0 %2147
      %2149 = vrot.lane.b32.xlu0 %v585, 76
      %v2150 = vpop.permute.xlu0 %2149
      %2151 = vrot.lane.b32.xlu0 %v586, 76
      %v2152 = vpop.permute.xlu0 %2151
      %2153 = vrot.lane.b32.xlu0 %v587, 76
      %v2154 = vpop.permute.xlu0 %2153
      %2155 = vrot.lane.b32.xlu0 %v588, 76
      %v2156 = vpop.permute.xlu0 %2155
      %2157 = vrot.lane.b32.xlu0 %v589, 76
      %v2158 = vpop.permute.xlu0 %2157
      %2159 = vrot.lane.b32.xlu0 %v590, 76
      %v2160 = vpop.permute.xlu0 %2159
      %2161 = vrot.lane.b32.xlu0 %v591, 76
      %v2162 = vpop.permute.xlu0 %2161
      %2163 = vrot.lane.b32.xlu0 %v592, 76
      %v2164 = vpop.permute.xlu0 %2163
      %2165 = vrot.lane.b32.xlu0 %v593, 76
      %v2166 = vpop.permute.xlu0 %2165
      %2167 = vrot.lane.b32.xlu0 %v594, 76
      %v2168 = vpop.permute.xlu0 %2167
      %2169 = vrot.lane.b32.xlu0 %v595, 76
      %v2170 = vpop.permute.xlu0 %2169
      %2171 = vrot.lane.b32.xlu0 %v596, 76
      %v2172 = vpop.permute.xlu0 %2171
      %2173 = vrot.lane.b32.xlu0 %v597, 76
      %v2174 = vpop.permute.xlu0 %2173
      %2175 = vrot.lane.b32.xlu0 %v598, 76
      %v2176 = vpop.permute.xlu0 %2175
      %2177 = vrot.lane.b32.xlu0 %v599, 76
      %v2178 = vpop.permute.xlu0 %2177
      %2179 = vrot.lane.b32.xlu0 %v600, 76
      %v2180 = vpop.permute.xlu0 %2179
      %2181 = vrot.lane.b32.xlu0 %v601, 76
      %v2182 = vpop.permute.xlu0 %2181
      %2183 = vrot.lane.b32.xlu0 %v602, 76
      %v2184 = vpop.permute.xlu0 %2183
      %2185 = vrot.lane.b32.xlu0 %v603, 76
      %v2186 = vpop.permute.xlu0 %2185
      %2187 = vrot.lane.b32.xlu0 %v604, 76
      %v2188 = vpop.permute.xlu0 %2187
      %2189 = vrot.lane.b32.xlu0 %v605, 76
      %v2190 = vpop.permute.xlu0 %2189
      %2191 = vrot.lane.b32.xlu0 %v606, 76
      %v2192 = vpop.permute.xlu0 %2191
      %2193 = vrot.lane.b32.xlu0 %v607, 76
      %v2194 = vpop.permute.xlu0 %2193
      %2195 = vrot.lane.b32.xlu0 %v608, 76
      %v2196 = vpop.permute.xlu0 %2195
      %2197 = vrot.lane.b32.xlu0 %v609, 76
      %v2198 = vpop.permute.xlu0 %2197
      %2199 = vrot.lane.b32.xlu0 %v610, 76
      %v2200 = vpop.permute.xlu0 %2199
      %2201 = vrot.lane.b32.xlu0 %v611, 76
      %v2202 = vpop.permute.xlu0 %2201
      %2203 = vrot.lane.b32.xlu0 %v612, 76
      %v2204 = vpop.permute.xlu0 %2203
      %2205 = vrot.lane.b32.xlu0 %v613, 76
      %v2206 = vpop.permute.xlu0 %2205
      %2207 = vrot.lane.b32.xlu0 %v614, 76
      %v2208 = vpop.permute.xlu0 %2207
      %2209 = vrot.lane.b32.xlu0 %v615, 76
      %v2210 = vpop.permute.xlu0 %2209
      %2211 = vrot.lane.b32.xlu0 %v616, 76
      %v2212 = vpop.permute.xlu0 %2211
      %2213 = vrot.lane.b32.xlu0 %v617, 76
      %v2214 = vpop.permute.xlu0 %2213
      %2215 = vrot.lane.b32.xlu0 %v618, 76
      %v2216 = vpop.permute.xlu0 %2215
      %2217 = vrot.lane.b32.xlu0 %v619, 76
      %v2218 = vpop.permute.xlu0 %2217
      %2219 = vrot.lane.b32.xlu0 %v620, 76
      %v2220 = vpop.permute.xlu0 %2219
      %2349 = vrot.lane.b32.xlu0 %v621, 110
      %v2350 = vpop.permute.xlu0 %2349
      %2351 = vrot.lane.b32.xlu0 %v622, 110
      %v2352 = vpop.permute.xlu0 %2351
      %2353 = vrot.lane.b32.xlu0 %v623, 110
      %v2354 = vpop.permute.xlu0 %2353
      %2355 = vrot.lane.b32.xlu0 %v624, 110
      %v2356 = vpop.permute.xlu0 %2355
      %2357 = vrot.lane.b32.xlu0 %v625, 110
      %v2358 = vpop.permute.xlu0 %2357
      %2359 = vrot.lane.b32.xlu0 %v626, 110
      %v2360 = vpop.permute.xlu0 %2359
      %2361 = vrot.lane.b32.xlu0 %v627, 110
      %v2362 = vpop.permute.xlu0 %2361
      %2363 = vrot.lane.b32.xlu0 %v628, 110
      %v2364 = vpop.permute.xlu0 %2363
      %2365 = vrot.lane.b32.xlu0 %v629, 110
      %v2366 = vpop.permute.xlu0 %2365
      %2367 = vrot.lane.b32.xlu0 %v630, 110
      %v2368 = vpop.permute.xlu0 %2367
      %2369 = vrot.lane.b32.xlu0 %v631, 110
      %v2370 = vpop.permute.xlu0 %2369
      %2371 = vrot.lane.b32.xlu0 %v632, 110
      %v2372 = vpop.permute.xlu0 %2371
      %2373 = vrot.lane.b32.xlu0 %v633, 110
      %v2374 = vpop.permute.xlu0 %2373
      %2375 = vrot.lane.b32.xlu0 %v634, 110
      %v2376 = vpop.permute.xlu0 %2375
      %2377 = vrot.lane.b32.xlu0 %v635, 110
      %v2378 = vpop.permute.xlu0 %2377
      %2379 = vrot.lane.b32.xlu0 %v636, 110
      %v2380 = vpop.permute.xlu0 %2379
      %2381 = vrot.lane.b32.xlu0 %v637, 110
      %v2382 = vpop.permute.xlu0 %2381
      %2383 = vrot.lane.b32.xlu0 %v638, 110
      %v2384 = vpop.permute.xlu0 %2383
      %2385 = vrot.lane.b32.xlu0 %v639, 110
      %v2386 = vpop.permute.xlu0 %2385
      %2387 = vrot.lane.b32.xlu0 %v640, 110
      %v2388 = vpop.permute.xlu0 %2387
      %2389 = vrot.lane.b32.xlu0 %v641, 110
      %v2390 = vpop.permute.xlu0 %2389
      %2391 = vrot.lane.b32.xlu0 %v642, 110
      %v2392 = vpop.permute.xlu0 %2391
      %2393 = vrot.lane.b32.xlu0 %v643, 110
      %v2394 = vpop.permute.xlu0 %2393
      %2395 = vrot.lane.b32.xlu0 %v644, 110
      %v2396 = vpop.permute.xlu0 %2395
      %2397 = vrot.lane.b32.xlu0 %v645, 110
      %v2398 = vpop.permute.xlu0 %2397
      %2399 = vrot.lane.b32.xlu0 %v646, 110
      %v2400 = vpop.permute.xlu0 %2399
      %2401 = vrot.lane.b32.xlu0 %v647, 110
      %v2402 = vpop.permute.xlu0 %2401
      %2403 = vrot.lane.b32.xlu0 %v648, 110
      %v2404 = vpop.permute.xlu0 %2403
      %2405 = vrot.lane.b32.xlu0 %v649, 110
      %v2406 = vpop.permute.xlu0 %2405
      %2407 = vrot.lane.b32.xlu0 %v650, 110
      %v2408 = vpop.permute.xlu0 %2407
      %2409 = vrot.lane.b32.xlu0 %v651, 110
      %v2410 = vpop.permute.xlu0 %2409
      %2411 = vrot.lane.b32.xlu0 %v652, 110
      %v2412 = vpop.permute.xlu0 %2411
      %2413 = vrot.lane.b32.xlu0 %v653, 110
      %v2414 = vpop.permute.xlu0 %2413
      %2415 = vrot.lane.b32.xlu0 %v654, 110
      %v2416 = vpop.permute.xlu0 %2415
      %2417 = vrot.lane.b32.xlu0 %v655, 110
      %v2418 = vpop.permute.xlu0 %2417
      %2419 = vrot.lane.b32.xlu0 %v656, 110
      %v2420 = vpop.permute.xlu0 %2419
      %2421 = vrot.lane.b32.xlu0 %v657, 110
      %v2422 = vpop.permute.xlu0 %2421
      %2423 = vrot.lane.b32.xlu0 %v658, 110
      %v2424 = vpop.permute.xlu0 %2423
      %2425 = vrot.lane.b32.xlu0 %v659, 110
      %v2426 = vpop.permute.xlu0 %2425
      %2427 = vrot.lane.b32.xlu0 %v660, 110
      %v2428 = vpop.permute.xlu0 %2427
      %2429 = vrot.lane.b32.xlu0 %v661, 110
      %v2430 = vpop.permute.xlu0 %2429
      %2431 = vrot.lane.b32.xlu0 %v662, 110
      %v2432 = vpop.permute.xlu0 %2431
      %2433 = vrot.lane.b32.xlu0 %v663, 110
      %v2434 = vpop.permute.xlu0 %2433
      %2435 = vrot.lane.b32.xlu0 %v664, 110
      %v2436 = vpop.permute.xlu0 %2435
      %2437 = vrot.lane.b32.xlu0 %v665, 110
      %v2438 = vpop.permute.xlu0 %2437
      %2439 = vrot.lane.b32.xlu0 %v666, 110
      %v2440 = vpop.permute.xlu0 %2439
      %2441 = vrot.lane.b32.xlu0 %v667, 110
      %v2442 = vpop.permute.xlu0 %2441
      %2443 = vrot.lane.b32.xlu0 %v668, 110
      %v2444 = vpop.permute.xlu0 %2443
      %2445 = vrot.lane.b32.xlu0 %v669, 110
      %v2446 = vpop.permute.xlu0 %2445
      %2447 = vrot.lane.b32.xlu0 %v670, 110
      %v2448 = vpop.permute.xlu0 %2447
      %2449 = vrot.lane.b32.xlu0 %v671, 110
      %v2450 = vpop.permute.xlu0 %2449
      %2451 = vrot.lane.b32.xlu0 %v672, 110
      %v2452 = vpop.permute.xlu0 %2451
      %2453 = vrot.lane.b32.xlu0 %v673, 110
      %v2454 = vpop.permute.xlu0 %2453
      %2455 = vrot.lane.b32.xlu0 %v674, 110
      %v2456 = vpop.permute.xlu0 %2455
      %2457 = vrot.lane.b32.xlu0 %v675, 110
      %v2458 = vpop.permute.xlu0 %2457
      %2459 = vrot.lane.b32.xlu0 %v676, 110
      %v2460 = vpop.permute.xlu0 %2459
      %2461 = vrot.lane.b32.xlu0 %v677, 110
      %v2462 = vpop.permute.xlu0 %2461
      %2463 = vrot.lane.b32.xlu0 %v678, 110
      %v2464 = vpop.permute.xlu0 %2463
      %2465 = vrot.lane.b32.xlu0 %v679, 110
      %v2466 = vpop.permute.xlu0 %2465
      %2467 = vrot.lane.b32.xlu0 %v680, 110
      %v2468 = vpop.permute.xlu0 %2467
      %2469 = vrot.lane.b32.xlu0 %v681, 110
      %v2470 = vpop.permute.xlu0 %2469
      %2471 = vrot.lane.b32.xlu0 %v682, 110
      %v2472 = vpop.permute.xlu0 %2471
      %2473 = vrot.lane.b32.xlu0 %v683, 110
      %v2474 = vpop.permute.xlu0 %2473
      %2475 = vrot.lane.b32.xlu0 %v684, 110
      %v2476 = vpop.permute.xlu0 %2475
      %2605 = vrot.lane.b32.xlu0 %v685, 16
      %v2606 = vpop.permute.xlu0 %2605
      %2607 = vrot.lane.b32.xlu0 %v686, 16
      %v2608 = vpop.permute.xlu0 %2607
      %2609 = vrot.lane.b32.xlu0 %v687, 16
      %v2610 = vpop.permute.xlu0 %2609
      %2611 = vrot.lane.b32.xlu0 %v688, 16
      %v2612 = vpop.permute.xlu0 %2611
      %2613 = vrot.lane.b32.xlu0 %v689, 16
      %v2614 = vpop.permute.xlu0 %2613
      %2615 = vrot.lane.b32.xlu0 %v690, 16
      %v2616 = vpop.permute.xlu0 %2615
      %2617 = vrot.lane.b32.xlu0 %v691, 16
      %v2618 = vpop.permute.xlu0 %2617
      %2619 = vrot.lane.b32.xlu0 %v692, 16
      %v2620 = vpop.permute.xlu0 %2619
      %2621 = vrot.lane.b32.xlu0 %v693, 16
      %v2622 = vpop.permute.xlu0 %2621
      %2623 = vrot.lane.b32.xlu0 %v694, 16
      %v2624 = vpop.permute.xlu0 %2623
      %2625 = vrot.lane.b32.xlu0 %v695, 16
      %v2626 = vpop.permute.xlu0 %2625
      %2627 = vrot.lane.b32.xlu0 %v696, 16
      %v2628 = vpop.permute.xlu0 %2627
      %2629 = vrot.lane.b32.xlu0 %v697, 16
      %v2630 = vpop.permute.xlu0 %2629
      %2631 = vrot.lane.b32.xlu0 %v698, 16
      %v2632 = vpop.permute.xlu0 %2631
      %2633 = vrot.lane.b32.xlu0 %v699, 16
      %v2634 = vpop.permute.xlu0 %2633
      %2635 = vrot.lane.b32.xlu0 %v700, 16
      %v2636 = vpop.permute.xlu0 %2635
      %2637 = vrot.lane.b32.xlu0 %v701, 16
      %v2638 = vpop.permute.xlu0 %2637
      %2639 = vrot.lane.b32.xlu0 %v702, 16
      %v2640 = vpop.permute.xlu0 %2639
      %2641 = vrot.lane.b32.xlu0 %v703, 16
      %v2642 = vpop.permute.xlu0 %2641
      %2643 = vrot.lane.b32.xlu0 %v704, 16
      %v2644 = vpop.permute.xlu0 %2643
      %2645 = vrot.lane.b32.xlu0 %v705, 16
      %v2646 = vpop.permute.xlu0 %2645
      %2647 = vrot.lane.b32.xlu0 %v706, 16
      %v2648 = vpop.permute.xlu0 %2647
      %2649 = vrot.lane.b32.xlu0 %v707, 16
      %v2650 = vpop.permute.xlu0 %2649
      %2651 = vrot.lane.b32.xlu0 %v708, 16
      %v2652 = vpop.permute.xlu0 %2651
      %2653 = vrot.lane.b32.xlu0 %v709, 16
      %v2654 = vpop.permute.xlu0 %2653
      %2655 = vrot.lane.b32.xlu0 %v710, 16
      %v2656 = vpop.permute.xlu0 %2655
      %2657 = vrot.lane.b32.xlu0 %v711, 16
      %v2658 = vpop.permute.xlu0 %2657
      %2659 = vrot.lane.b32.xlu0 %v712, 16
      %v2660 = vpop.permute.xlu0 %2659
      %2661 = vrot.lane.b32.xlu0 %v713, 16
      %v2662 = vpop.permute.xlu0 %2661
      %2663 = vrot.lane.b32.xlu0 %v714, 16
      %v2664 = vpop.permute.xlu0 %2663
      %2665 = vrot.lane.b32.xlu0 %v715, 16
      %v2666 = vpop.permute.xlu0 %2665
      %2667 = vrot.lane.b32.xlu0 %v716, 16
      %v2668 = vpop.permute.xlu0 %2667
      %2669 = vrot.lane.b32.xlu0 %v717, 16
      %v2670 = vpop.permute.xlu0 %2669
      %2671 = vrot.lane.b32.xlu0 %v718, 16
      %v2672 = vpop.permute.xlu0 %2671
      %2673 = vrot.lane.b32.xlu0 %v719, 16
      %v2674 = vpop.permute.xlu0 %2673
      %2675 = vrot.lane.b32.xlu0 %v720, 16
      %v2676 = vpop.permute.xlu0 %2675
      %2677 = vrot.lane.b32.xlu0 %v721, 16
      %v2678 = vpop.permute.xlu0 %2677
      %2679 = vrot.lane.b32.xlu0 %v722, 16
      %v2680 = vpop.permute.xlu0 %2679
      %2681 = vrot.lane.b32.xlu0 %v723, 16
      %v2682 = vpop.permute.xlu0 %2681
      %2683 = vrot.lane.b32.xlu0 %v724, 16
      %v2684 = vpop.permute.xlu0 %2683
      %2685 = vrot.lane.b32.xlu0 %v725, 16
      %v2686 = vpop.permute.xlu0 %2685
      %2687 = vrot.lane.b32.xlu0 %v726, 16
      %v2688 = vpop.permute.xlu0 %2687
      %2689 = vrot.lane.b32.xlu0 %v727, 16
      %v2690 = vpop.permute.xlu0 %2689
      %2691 = vrot.lane.b32.xlu0 %v728, 16
      %v2692 = vpop.permute.xlu0 %2691
      %2693 = vrot.lane.b32.xlu0 %v729, 16
      %v2694 = vpop.permute.xlu0 %2693
      %2695 = vrot.lane.b32.xlu0 %v730, 16
      %v2696 = vpop.permute.xlu0 %2695
      %2697 = vrot.lane.b32.xlu0 %v731, 16
      %v2698 = vpop.permute.xlu0 %2697
      %2699 = vrot.lane.b32.xlu0 %v732, 16
      %v2700 = vpop.permute.xlu0 %2699
      %2701 = vrot.lane.b32.xlu0 %v733, 16
      %v2702 = vpop.permute.xlu0 %2701
      %2703 = vrot.lane.b32.xlu0 %v734, 16
      %v2704 = vpop.permute.xlu0 %2703
      %2705 = vrot.lane.b32.xlu0 %v735, 16
      %v2706 = vpop.permute.xlu0 %2705
      %2707 = vrot.lane.b32.xlu0 %v736, 16
      %v2708 = vpop.permute.xlu0 %2707
      %2709 = vrot.lane.b32.xlu0 %v737, 16
      %v2710 = vpop.permute.xlu0 %2709
      %2711 = vrot.lane.b32.xlu0 %v738, 16
      %v2712 = vpop.permute.xlu0 %2711
      %2713 = vrot.lane.b32.xlu0 %v739, 16
      %v2714 = vpop.permute.xlu0 %2713
      %2715 = vrot.lane.b32.xlu0 %v740, 16
      %v2716 = vpop.permute.xlu0 %2715
      %2717 = vrot.lane.b32.xlu0 %v741, 16
      %v2718 = vpop.permute.xlu0 %2717
      %2719 = vrot.lane.b32.xlu0 %v742, 16
      %v2720 = vpop.permute.xlu0 %2719
      %2721 = vrot.lane.b32.xlu0 %v743, 16
      %v2722 = vpop.permute.xlu0 %2721
      %2723 = vrot.lane.b32.xlu0 %v744, 16
      %v2724 = vpop.permute.xlu0 %2723
      %2725 = vrot.lane.b32.xlu0 %v745, 16
      %v2726 = vpop.permute.xlu0 %2725
      %2727 = vrot.lane.b32.xlu0 %v746, 16
      %v2728 = vpop.permute.xlu0 %2727
      %2729 = vrot.lane.b32.xlu0 %v747, 16
      %v2730 = vpop.permute.xlu0 %2729
      %2731 = vrot.lane.b32.xlu0 %v748, 16
      %v2732 = vpop.permute.xlu0 %2731
      %vm2797 = vcmask 277504
      %v2798 = vsel %vm2797, %v171, %v814
      %v2799 = vsel %vm2797, %v172, %v816
      %v2800 = vsel %vm2797, %v173, %v818
      %v2801 = vsel %vm2797, %v174, %v820
      %v2802 = vsel %vm2797, %v175, %v822
      %v2803 = vsel %vm2797, %v176, %v824
      %v2804 = vsel %vm2797, %v177, %v826
      %v2805 = vsel %vm2797, %v178, %v828
      %v2806 = vsel %vm2797, %v179, %v830
      %v2807 = vsel %vm2797, %v180, %v832
      %v2808 = vsel %vm2797, %v181, %v834
      %v2809 = vsel %vm2797, %v182, %v836
      %v2810 = vsel %vm2797, %v183, %v838
      %v2811 = vsel %vm2797, %v184, %v840
      %v2812 = vsel %vm2797, %v185, %v842
      %v2813 = vsel %vm2797, %v186, %v844
      %v2814 = vsel %vm2797, %v187, %v846
      %v2815 = vsel %vm2797, %v188, %v848
      %v2816 = vsel %vm2797, %v189, %v850
      %v2817 = vsel %vm2797, %v190, %v852
      %v2818 = vsel %vm2797, %v191, %v854
      %v2819 = vsel %vm2797, %v192, %v856
      %v2820 = vsel %vm2797, %v193, %v858
      %v2821 = vsel %vm2797, %v194, %v860
      %v2822 = vsel %vm2797, %v195, %v862
      %v2823 = vsel %vm2797, %v196, %v864
      %v2824 = vsel %vm2797, %v197, %v866
      %v2825 = vsel %vm2797, %v198, %v868
      %v2826 = vsel %vm2797, %v199, %v870
      %v2827 = vsel %vm2797, %v200, %v872
      %v2828 = vsel %vm2797, %v201, %v874
      %v2829 = vsel %vm2797, %v202, %v876
      %v2830 = vsel %vm2797, %v203, %v878
      %v2831 = vsel %vm2797, %v204, %v880
      %v2832 = vsel %vm2797, %v205, %v882
      %v2833 = vsel %vm2797, %v206, %v884
      %v2834 = vsel %vm2797, %v207, %v886
      %v2835 = vsel %vm2797, %v208, %v888
      %v2836 = vsel %vm2797, %v209, %v890
      %v2837 = vsel %vm2797, %v210, %v892
      %v2838 = vsel %vm2797, %v211, %v894
      %v2839 = vsel %vm2797, %v212, %v896
      %v2840 = vsel %vm2797, %v213, %v898
      %v2841 = vsel %vm2797, %v214, %v900
      %v2842 = vsel %vm2797, %v215, %v902
      %v2843 = vsel %vm2797, %v216, %v904
      %v2844 = vsel %vm2797, %v217, %v906
      %v2845 = vsel %vm2797, %v218, %v908
      %v2846 = vsel %vm2797, %v219, %v910
      %v2847 = vsel %vm2797, %v220, %v912
      %v2848 = vsel %vm2797, %v221, %v914
      %v2849 = vsel %vm2797, %v222, %v916
      %v2850 = vsel %vm2797, %v223, %v918
      %v2851 = vsel %vm2797, %v224, %v920
      %v2852 = vsel %vm2797, %v225, %v922
      %v2853 = vsel %vm2797, %v226, %v924
      %v2854 = vsel %vm2797, %v227, %v926
      %v2855 = vsel %vm2797, %v228, %v928
      %v2856 = vsel %vm2797, %v229, %v930
      %v2857 = vsel %vm2797, %v230, %v932
      %v2858 = vsel %vm2797, %v231, %v934
      %v2859 = vsel %vm2797, %v232, %v936
      %v2860 = vsel %vm2797, %v233, %v938
      %v2861 = vsel %vm2797, %v234, %v940
      %vm2862 = vcmask 556032
      %v2863 = vsel %vm2862, %v2798, %v1070
      %v2864 = vsel %vm2862, %v2799, %v1072
      %v2865 = vsel %vm2862, %v2800, %v1074
      %v2866 = vsel %vm2862, %v2801, %v1076
      %v2867 = vsel %vm2862, %v2802, %v1078
      %v2868 = vsel %vm2862, %v2803, %v1080
      %v2869 = vsel %vm2862, %v2804, %v1082
      %v2870 = vsel %vm2862, %v2805, %v1084
      %v2871 = vsel %vm2862, %v2806, %v1086
      %v2872 = vsel %vm2862, %v2807, %v1088
      %v2873 = vsel %vm2862, %v2808, %v1090
      %v2874 = vsel %vm2862, %v2809, %v1092
      %v2875 = vsel %vm2862, %v2810, %v1094
      %v2876 = vsel %vm2862, %v2811, %v1096
      %v2877 = vsel %vm2862, %v2812, %v1098
      %v2878 = vsel %vm2862, %v2813, %v1100
      %v2879 = vsel %vm2862, %v2814, %v1102
      %v2880 = vsel %vm2862, %v2815, %v1104
      %v2881 = vsel %vm2862, %v2816, %v1106
      %v2882 = vsel %vm2862, %v2817, %v1108
      %v2883 = vsel %vm2862, %v2818, %v1110
      %v2884 = vsel %vm2862, %v2819, %v1112
      %v2885 = vsel %vm2862, %v2820, %v1114
      %v2886 = vsel %vm2862, %v2821, %v1116
      %v2887 = vsel %vm2862, %v2822, %v1118
      %v2888 = vsel %vm2862, %v2823, %v1120
      %v2889 = vsel %vm2862, %v2824, %v1122
      %v2890 = vsel %vm2862, %v2825, %v1124
      %v2891 = vsel %vm2862, %v2826, %v1126
      %v2892 = vsel %vm2862, %v2827, %v1128
      %v2893 = vsel %vm2862, %v2828, %v1130
      %v2894 = vsel %vm2862, %v2829, %v1132
      %v2895 = vsel %vm2862, %v2830, %v1134
      %v2896 = vsel %vm2862, %v2831, %v1136
      %v2897 = vsel %vm2862, %v2832, %v1138
      %v2898 = vsel %vm2862, %v2833, %v1140
      %v2899 = vsel %vm2862, %v2834, %v1142
      %v2900 = vsel %vm2862, %v2835, %v1144
      %v2901 = vsel %vm2862, %v2836, %v1146
      %v2902 = vsel %vm2862, %v2837, %v1148
      %v2903 = vsel %vm2862, %v2838, %v1150
      %v2904 = vsel %vm2862, %v2839, %v1152
      %v2905 = vsel %vm2862, %v2840, %v1154
      %v2906 = vsel %vm2862, %v2841, %v1156
      %v2907 = vsel %vm2862, %v2842, %v1158
      %v2908 = vsel %vm2862, %v2843, %v1160
      %v2909 = vsel %vm2862, %v2844, %v1162
      %v2910 = vsel %vm2862, %v2845, %v1164
      %v2911 = vsel %vm2862, %v2846, %v1166
      %v2912 = vsel %vm2862, %v2847, %v1168
      %v2913 = vsel %vm2862, %v2848, %v1170
      %v2914 = vsel %vm2862, %v2849, %v1172
      %v2915 = vsel %vm2862, %v2850, %v1174
      %v2916 = vsel %vm2862, %v2851, %v1176
      %v2917 = vsel %vm2862, %v2852, %v1178
      %v2918 = vsel %vm2862, %v2853, %v1180
      %v2919 = vsel %vm2862, %v2854, %v1182
      %v2920 = vsel %vm2862, %v2855, %v1184
      %v2921 = vsel %vm2862, %v2856, %v1186
      %v2922 = vsel %vm2862, %v2857, %v1188
      %v2923 = vsel %vm2862, %v2858, %v1190
      %v2924 = vsel %vm2862, %v2859, %v1192
      %v2925 = vsel %vm2862, %v2860, %v1194
      %v2926 = vsel %vm2862, %v2861, %v1196
      %vm2927 = vcmask 834560
      %v2928 = vsel %vm2927, %v2863, %v1326
      %v2929 = vsel %vm2927, %v2864, %v1328
      %v2930 = vsel %vm2927, %v2865, %v1330
      %v2931 = vsel %vm2927, %v2866, %v1332
      %v2932 = vsel %vm2927, %v2867, %v1334
      %v2933 = vsel %vm2927, %v2868, %v1336
      %v2934 = vsel %vm2927, %v2869, %v1338
      %v2935 = vsel %vm2927, %v2870, %v1340
      %v2936 = vsel %vm2927, %v2871, %v1342
      %v2937 = vsel %vm2927, %v2872, %v1344
      %v2938 = vsel %vm2927, %v2873, %v1346
      %v2939 = vsel %vm2927, %v2874, %v1348
      %v2940 = vsel %vm2927, %v2875, %v1350
      %v2941 = vsel %vm2927, %v2876, %v1352
      %v2942 = vsel %vm2927, %v2877, %v1354
      %v2943 = vsel %vm2927, %v2878, %v1356
      %v2944 = vsel %vm2927, %v2879, %v1358
      %v2945 = vsel %vm2927, %v2880, %v1360
      %v2946 = vsel %vm2927, %v2881, %v1362
      %v2947 = vsel %vm2927, %v2882, %v1364
      %v2948 = vsel %vm2927, %v2883, %v1366
      %v2949 = vsel %vm2927, %v2884, %v1368
      %v2950 = vsel %vm2927, %v2885, %v1370
      %v2951 = vsel %vm2927, %v2886, %v1372
      %v2952 = vsel %vm2927, %v2887, %v1374
      %v2953 = vsel %vm2927, %v2888, %v1376
      %v2954 = vsel %vm2927, %v2889, %v1378
      %v2955 = vsel %vm2927, %v2890, %v1380
      %v2956 = vsel %vm2927, %v2891, %v1382
      %v2957 = vsel %vm2927, %v2892, %v1384
      %v2958 = vsel %vm2927, %v2893, %v1386
      %v2959 = vsel %vm2927, %v2894, %v1388
      %v2960 = vsel %vm2927, %v2895, %v1390
      %v2961 = vsel %vm2927, %v2896, %v1392
      %v2962 = vsel %vm2927, %v2897, %v1394
      %v2963 = vsel %vm2927, %v2898, %v1396
      %v2964 = vsel %vm2927, %v2899, %v1398
      %v2965 = vsel %vm2927, %v2900, %v1400
      %v2966 = vsel %vm2927, %v2901, %v1402
      %v2967 = vsel %vm2927, %v2902, %v1404
      %v2968 = vsel %vm2927, %v2903, %v1406
      %v2969 = vsel %vm2927, %v2904, %v1408
      %v2970 = vsel %vm2927, %v2905, %v1410
      %v2971 = vsel %vm2927, %v2906, %v1412
      %v2972 = vsel %vm2927, %v2907, %v1414
      %v2973 = vsel %vm2927, %v2908, %v1416
      %v2974 = vsel %vm2927, %v2909, %v1418
      %v2975 = vsel %vm2927, %v2910, %v1420
      %v2976 = vsel %vm2927, %v2911, %v1422
      %v2977 = vsel %vm2927, %v2912, %v1424
      %v2978 = vsel %vm2927, %v2913, %v1426
      %v2979 = vsel %vm2927, %v2914, %v1428
      %v2980 = vsel %vm2927, %v2915, %v1430
      %v2981 = vsel %vm2927, %v2916, %v1432
      %v2982 = vsel %vm2927, %v2917, %v1434
      %v2983 = vsel %vm2927, %v2918, %v1436
      %v2984 = vsel %vm2927, %v2919, %v1438
      %v2985 = vsel %vm2927, %v2920, %v1440
      %v2986 = vsel %vm2927, %v2921, %v1442
      %v2987 = vsel %vm2927, %v2922, %v1444
      %v2988 = vsel %vm2927, %v2923, %v1446
      %v2989 = vsel %vm2927, %v2924, %v1448
      %v2990 = vsel %vm2927, %v2925, %v1450
      %v2991 = vsel %vm2927, %v2926, %v1452
      %vm2992 = vcmask 64512
      %v2993 = vsel %vm2992, %v1326, %v1582
      %v2994 = vsel %vm2992, %v1328, %v1584
      %v2995 = vsel %vm2992, %v1330, %v1586
      %v2996 = vsel %vm2992, %v1332, %v1588
      %v2997 = vsel %vm2992, %v1334, %v1590
      %v2998 = vsel %vm2992, %v1336, %v1592
      %v2999 = vsel %vm2992, %v1338, %v1594
      %v3000 = vsel %vm2992, %v1340, %v1596
      %v3001 = vsel %vm2992, %v1342, %v1598
      %v3002 = vsel %vm2992, %v1344, %v1600
      %v3003 = vsel %vm2992, %v1346, %v1602
      %v3004 = vsel %vm2992, %v1348, %v1604
      %v3005 = vsel %vm2992, %v1350, %v1606
      %v3006 = vsel %vm2992, %v1352, %v1608
      %v3007 = vsel %vm2992, %v1354, %v1610
      %v3008 = vsel %vm2992, %v1356, %v1612
      %v3009 = vsel %vm2992, %v1358, %v1614
      %v3010 = vsel %vm2992, %v1360, %v1616
      %v3011 = vsel %vm2992, %v1362, %v1618
      %v3012 = vsel %vm2992, %v1364, %v1620
      %v3013 = vsel %vm2992, %v1366, %v1622
      %v3014 = vsel %vm2992, %v1368, %v1624
      %v3015 = vsel %vm2992, %v1370, %v1626
      %v3016 = vsel %vm2992, %v1372, %v1628
      %v3017 = vsel %vm2992, %v1374, %v1630
      %v3018 = vsel %vm2992, %v1376, %v1632
      %v3019 = vsel %vm2992, %v1378, %v1634
      %v3020 = vsel %vm2992, %v1380, %v1636
      %v3021 = vsel %vm2992, %v1382, %v1638
      %v3022 = vsel %vm2992, %v1384, %v1640
      %v3023 = vsel %vm2992, %v1386, %v1642
      %v3024 = vsel %vm2992, %v1388, %v1644
      %v3025 = vsel %vm2992, %v1390, %v1646
      %v3026 = vsel %vm2992, %v1392, %v1648
      %v3027 = vsel %vm2992, %v1394, %v1650
      %v3028 = vsel %vm2992, %v1396, %v1652
      %v3029 = vsel %vm2992, %v1398, %v1654
      %v3030 = vsel %vm2992, %v1400, %v1656
      %v3031 = vsel %vm2992, %v1402, %v1658
      %v3032 = vsel %vm2992, %v1404, %v1660
      %v3033 = vsel %vm2992, %v1406, %v1662
      %v3034 = vsel %vm2992, %v1408, %v1664
      %v3035 = vsel %vm2992, %v1410, %v1666
      %v3036 = vsel %vm2992, %v1412, %v1668
      %v3037 = vsel %vm2992, %v1414, %v1670
      %v3038 = vsel %vm2992, %v1416, %v1672
      %v3039 = vsel %vm2992, %v1418, %v1674
      %v3040 = vsel %vm2992, %v1420, %v1676
      %v3041 = vsel %vm2992, %v1422, %v1678
      %v3042 = vsel %vm2992, %v1424, %v1680
      %v3043 = vsel %vm2992, %v1426, %v1682
      %v3044 = vsel %vm2992, %v1428, %v1684
      %v3045 = vsel %vm2992, %v1430, %v1686
      %v3046 = vsel %vm2992, %v1432, %v1688
      %v3047 = vsel %vm2992, %v1434, %v1690
      %v3048 = vsel %vm2992, %v1436, %v1692
      %v3049 = vsel %vm2992, %v1438, %v1694
      %v3050 = vsel %vm2992, %v1440, %v1696
      %v3051 = vsel %vm2992, %v1442, %v1698
      %v3052 = vsel %vm2992, %v1444, %v1700
      %v3053 = vsel %vm2992, %v1446, %v1702
      %v3054 = vsel %vm2992, %v1448, %v1704
      %v3055 = vsel %vm2992, %v1450, %v1706
      %v3056 = vsel %vm2992, %v1452, %v1708
      %vm3057 = vcmask 343040
      %v3058 = vsel %vm3057, %v2993, %v1838
      %v3059 = vsel %vm3057, %v2994, %v1840
      %v3060 = vsel %vm3057, %v2995, %v1842
      %v3061 = vsel %vm3057, %v2996, %v1844
      %v3062 = vsel %vm3057, %v2997, %v1846
      %v3063 = vsel %vm3057, %v2998, %v1848
      %v3064 = vsel %vm3057, %v2999, %v1850
      %v3065 = vsel %vm3057, %v3000, %v1852
      %v3066 = vsel %vm3057, %v3001, %v1854
      %v3067 = vsel %vm3057, %v3002, %v1856
      %v3068 = vsel %vm3057, %v3003, %v1858
      %v3069 = vsel %vm3057, %v3004, %v1860
      %v3070 = vsel %vm3057, %v3005, %v1862
      %v3071 = vsel %vm3057, %v3006, %v1864
      %v3072 = vsel %vm3057, %v3007, %v1866
      %v3073 = vsel %vm3057, %v3008, %v1868
      %v3074 = vsel %vm3057, %v3009, %v1870
      %v3075 = vsel %vm3057, %v3010, %v1872
      %v3076 = vsel %vm3057, %v3011, %v1874
      %v3077 = vsel %vm3057, %v3012, %v1876
      %v3078 = vsel %vm3057, %v3013, %v1878
      %v3079 = vsel %vm3057, %v3014, %v1880
      %v3080 = vsel %vm3057, %v3015, %v1882
      %v3081 = vsel %vm3057, %v3016, %v1884
      %v3082 = vsel %vm3057, %v3017, %v1886
      %v3083 = vsel %vm3057, %v3018, %v1888
      %v3084 = vsel %vm3057, %v3019, %v1890
      %v3085 = vsel %vm3057, %v3020, %v1892
      %v3086 = vsel %vm3057, %v3021, %v1894
      %v3087 = vsel %vm3057, %v3022, %v1896
      %v3088 = vsel %vm3057, %v3023, %v1898
      %v3089 = vsel %vm3057, %v3024, %v1900
      %v3090 = vsel %vm3057, %v3025, %v1902
      %v3091 = vsel %vm3057, %v3026, %v1904
      %v3092 = vsel %vm3057, %v3027, %v1906
      %v3093 = vsel %vm3057, %v3028, %v1908
      %v3094 = vsel %vm3057, %v3029, %v1910
      %v3095 = vsel %vm3057, %v3030, %v1912
      %v3096 = vsel %vm3057, %v3031, %v1914
      %v3097 = vsel %vm3057, %v3032, %v1916
      %v3098 = vsel %vm3057, %v3033, %v1918
      %v3099 = vsel %vm3057, %v3034, %v1920
      %v3100 = vsel %vm3057, %v3035, %v1922
      %v3101 = vsel %vm3057, %v3036, %v1924
      %v3102 = vsel %vm3057, %v3037, %v1926
      %v3103 = vsel %vm3057, %v3038, %v1928
      %v3104 = vsel %vm3057, %v3039, %v1930
      %v3105 = vsel %vm3057, %v3040, %v1932
      %v3106 = vsel %vm3057, %v3041, %v1934
      %v3107 = vsel %vm3057, %v3042, %v1936
      %v3108 = vsel %vm3057, %v3043, %v1938
      %v3109 = vsel %vm3057, %v3044, %v1940
      %v3110 = vsel %vm3057, %v3045, %v1942
      %v3111 = vsel %vm3057, %v3046, %v1944
      %v3112 = vsel %vm3057, %v3047, %v1946
      %v3113 = vsel %vm3057, %v3048, %v1948
      %v3114 = vsel %vm3057, %v3049, %v1950
      %v3115 = vsel %vm3057, %v3050, %v1952
      %v3116 = vsel %vm3057, %v3051, %v1954
      %v3117 = vsel %vm3057, %v3052, %v1956
      %v3118 = vsel %vm3057, %v3053, %v1958
      %v3119 = vsel %vm3057, %v3054, %v1960
      %v3120 = vsel %vm3057, %v3055, %v1962
      %v3121 = vsel %vm3057, %v3056, %v1964
      %vm3122 = vcmask 621568
      %v3123 = vsel %vm3122, %v3058, %v2094
      %v3124 = vsel %vm3122, %v3059, %v2096
      %v3125 = vsel %vm3122, %v3060, %v2098
      %v3126 = vsel %vm3122, %v3061, %v2100
      %v3127 = vsel %vm3122, %v3062, %v2102
      %v3128 = vsel %vm3122, %v3063, %v2104
      %v3129 = vsel %vm3122, %v3064, %v2106
      %v3130 = vsel %vm3122, %v3065, %v2108
      %v3131 = vsel %vm3122, %v3066, %v2110
      %v3132 = vsel %vm3122, %v3067, %v2112
      %v3133 = vsel %vm3122, %v3068, %v2114
      %v3134 = vsel %vm3122, %v3069, %v2116
      %v3135 = vsel %vm3122, %v3070, %v2118
      %v3136 = vsel %vm3122, %v3071, %v2120
      %v3137 = vsel %vm3122, %v3072, %v2122
      %v3138 = vsel %vm3122, %v3073, %v2124
      %v3139 = vsel %vm3122, %v3074, %v2126
      %v3140 = vsel %vm3122, %v3075, %v2128
      %v3141 = vsel %vm3122, %v3076, %v2130
      %v3142 = vsel %vm3122, %v3077, %v2132
      %v3143 = vsel %vm3122, %v3078, %v2134
      %v3144 = vsel %vm3122, %v3079, %v2136
      %v3145 = vsel %vm3122, %v3080, %v2138
      %v3146 = vsel %vm3122, %v3081, %v2140
      %v3147 = vsel %vm3122, %v3082, %v2142
      %v3148 = vsel %vm3122, %v3083, %v2144
      %v3149 = vsel %vm3122, %v3084, %v2146
      %v3150 = vsel %vm3122, %v3085, %v2148
      %v3151 = vsel %vm3122, %v3086, %v2150
      %v3152 = vsel %vm3122, %v3087, %v2152
      %v3153 = vsel %vm3122, %v3088, %v2154
      %v3154 = vsel %vm3122, %v3089, %v2156
      %v3155 = vsel %vm3122, %v3090, %v2158
      %v3156 = vsel %vm3122, %v3091, %v2160
      %v3157 = vsel %vm3122, %v3092, %v2162
      %v3158 = vsel %vm3122, %v3093, %v2164
      %v3159 = vsel %vm3122, %v3094, %v2166
      %v3160 = vsel %vm3122, %v3095, %v2168
      %v3161 = vsel %vm3122, %v3096, %v2170
      %v3162 = vsel %vm3122, %v3097, %v2172
      %v3163 = vsel %vm3122, %v3098, %v2174
      %v3164 = vsel %vm3122, %v3099, %v2176
      %v3165 = vsel %vm3122, %v3100, %v2178
      %v3166 = vsel %vm3122, %v3101, %v2180
      %v3167 = vsel %vm3122, %v3102, %v2182
      %v3168 = vsel %vm3122, %v3103, %v2184
      %v3169 = vsel %vm3122, %v3104, %v2186
      %v3170 = vsel %vm3122, %v3105, %v2188
      %v3171 = vsel %vm3122, %v3106, %v2190
      %v3172 = vsel %vm3122, %v3107, %v2192
      %v3173 = vsel %vm3122, %v3108, %v2194
      %v3174 = vsel %vm3122, %v3109, %v2196
      %v3175 = vsel %vm3122, %v3110, %v2198
      %v3176 = vsel %vm3122, %v3111, %v2200
      %v3177 = vsel %vm3122, %v3112, %v2202
      %v3178 = vsel %vm3122, %v3113, %v2204
      %v3179 = vsel %vm3122, %v3114, %v2206
      %v3180 = vsel %vm3122, %v3115, %v2208
      %v3181 = vsel %vm3122, %v3116, %v2210
      %v3182 = vsel %vm3122, %v3117, %v2212
      %v3183 = vsel %vm3122, %v3118, %v2214
      %v3184 = vsel %vm3122, %v3119, %v2216
      %v3185 = vsel %vm3122, %v3120, %v2218
      %v3186 = vsel %vm3122, %v3121, %v2220
      %vm3187 = vcmask 900096
      %v3188 = vsel %vm3187, %v3123, %v2350
      %v3189 = vsel %vm3187, %v3124, %v2352
      %v3190 = vsel %vm3187, %v3125, %v2354
      %v3191 = vsel %vm3187, %v3126, %v2356
      %v3192 = vsel %vm3187, %v3127, %v2358
      %v3193 = vsel %vm3187, %v3128, %v2360
      %v3194 = vsel %vm3187, %v3129, %v2362
      %v3195 = vsel %vm3187, %v3130, %v2364
      %v3196 = vsel %vm3187, %v3131, %v2366
      %v3197 = vsel %vm3187, %v3132, %v2368
      %v3198 = vsel %vm3187, %v3133, %v2370
      %v3199 = vsel %vm3187, %v3134, %v2372
      %v3200 = vsel %vm3187, %v3135, %v2374
      %v3201 = vsel %vm3187, %v3136, %v2376
      %v3202 = vsel %vm3187, %v3137, %v2378
      %v3203 = vsel %vm3187, %v3138, %v2380
      %v3204 = vsel %vm3187, %v3139, %v2382
      %v3205 = vsel %vm3187, %v3140, %v2384
      %v3206 = vsel %vm3187, %v3141, %v2386
      %v3207 = vsel %vm3187, %v3142, %v2388
      %v3208 = vsel %vm3187, %v3143, %v2390
      %v3209 = vsel %vm3187, %v3144, %v2392
      %v3210 = vsel %vm3187, %v3145, %v2394
      %v3211 = vsel %vm3187, %v3146, %v2396
      %v3212 = vsel %vm3187, %v3147, %v2398
      %v3213 = vsel %vm3187, %v3148, %v2400
      %v3214 = vsel %vm3187, %v3149, %v2402
      %v3215 = vsel %vm3187, %v3150, %v2404
      %v3216 = vsel %vm3187, %v3151, %v2406
      %v3217 = vsel %vm3187, %v3152, %v2408
      %v3218 = vsel %vm3187, %v3153, %v2410
      %v3219 = vsel %vm3187, %v3154, %v2412
      %v3220 = vsel %vm3187, %v3155, %v2414
      %v3221 = vsel %vm3187, %v3156, %v2416
      %v3222 = vsel %vm3187, %v3157, %v2418
      %v3223 = vsel %vm3187, %v3158, %v2420
      %v3224 = vsel %vm3187, %v3159, %v2422
      %v3225 = vsel %vm3187, %v3160, %v2424
      %v3226 = vsel %vm3187, %v3161, %v2426
      %v3227 = vsel %vm3187, %v3162, %v2428
      %v3228 = vsel %vm3187, %v3163, %v2430
      %v3229 = vsel %vm3187, %v3164, %v2432
      %v3230 = vsel %vm3187, %v3165, %v2434
      %v3231 = vsel %vm3187, %v3166, %v2436
      %v3232 = vsel %vm3187, %v3167, %v2438
      %v3233 = vsel %vm3187, %v3168, %v2440
      %v3234 = vsel %vm3187, %v3169, %v2442
      %v3235 = vsel %vm3187, %v3170, %v2444
      %v3236 = vsel %vm3187, %v3171, %v2446
      %v3237 = vsel %vm3187, %v3172, %v2448
      %v3238 = vsel %vm3187, %v3173, %v2450
      %v3239 = vsel %vm3187, %v3174, %v2452
      %v3240 = vsel %vm3187, %v3175, %v2454
      %v3241 = vsel %vm3187, %v3176, %v2456
      %v3242 = vsel %vm3187, %v3177, %v2458
      %v3243 = vsel %vm3187, %v3178, %v2460
      %v3244 = vsel %vm3187, %v3179, %v2462
      %v3245 = vsel %vm3187, %v3180, %v2464
      %v3246 = vsel %vm3187, %v3181, %v2466
      %v3247 = vsel %vm3187, %v3182, %v2468
      %v3248 = vsel %vm3187, %v3183, %v2470
      %v3249 = vsel %vm3187, %v3184, %v2472
      %v3250 = vsel %vm3187, %v3185, %v2474
      %v3251 = vsel %vm3187, %v3186, %v2476
      %vm3252 = vcmask 130048
      %v3253 = vsel %vm3252, %v2350, %v2606
      %v3254 = vsel %vm3252, %v2352, %v2608
      %v3255 = vsel %vm3252, %v2354, %v2610
      %v3256 = vsel %vm3252, %v2356, %v2612
      %v3257 = vsel %vm3252, %v2358, %v2614
      %v3258 = vsel %vm3252, %v2360, %v2616
      %v3259 = vsel %vm3252, %v2362, %v2618
      %v3260 = vsel %vm3252, %v2364, %v2620
      %v3261 = vsel %vm3252, %v2366, %v2622
      %v3262 = vsel %vm3252, %v2368, %v2624
      %v3263 = vsel %vm3252, %v2370, %v2626
      %v3264 = vsel %vm3252, %v2372, %v2628
      %v3265 = vsel %vm3252, %v2374, %v2630
      %v3266 = vsel %vm3252, %v2376, %v2632
      %v3267 = vsel %vm3252, %v2378, %v2634
      %v3268 = vsel %vm3252, %v2380, %v2636
      %v3269 = vsel %vm3252, %v2382, %v2638
      %v3270 = vsel %vm3252, %v2384, %v2640
      %v3271 = vsel %vm3252, %v2386, %v2642
      %v3272 = vsel %vm3252, %v2388, %v2644
      %v3273 = vsel %vm3252, %v2390, %v2646
      %v3274 = vsel %vm3252, %v2392, %v2648
      %v3275 = vsel %vm3252, %v2394, %v2650
      %v3276 = vsel %vm3252, %v2396, %v2652
      %v3277 = vsel %vm3252, %v2398, %v2654
      %v3278 = vsel %vm3252, %v2400, %v2656
      %v3279 = vsel %vm3252, %v2402, %v2658
      %v3280 = vsel %vm3252, %v2404, %v2660
      %v3281 = vsel %vm3252, %v2406, %v2662
      %v3282 = vsel %vm3252, %v2408, %v2664
      %v3283 = vsel %vm3252, %v2410, %v2666
      %v3284 = vsel %vm3252, %v2412, %v2668
      %v3285 = vsel %vm3252, %v2414, %v2670
      %v3286 = vsel %vm3252, %v2416, %v2672
      %v3287 = vsel %vm3252, %v2418, %v2674
      %v3288 = vsel %vm3252, %v2420, %v2676
      %v3289 = vsel %vm3252, %v2422, %v2678
      %v3290 = vsel %vm3252, %v2424, %v2680
      %v3291 = vsel %vm3252, %v2426, %v2682
      %v3292 = vsel %vm3252, %v2428, %v2684
      %v3293 = vsel %vm3252, %v2430, %v2686
      %v3294 = vsel %vm3252, %v2432, %v2688
      %v3295 = vsel %vm3252, %v2434, %v2690
      %v3296 = vsel %vm3252, %v2436, %v2692
      %v3297 = vsel %vm3252, %v2438, %v2694
      %v3298 = vsel %vm3252, %v2440, %v2696
      %v3299 = vsel %vm3252, %v2442, %v2698
      %v3300 = vsel %vm3252, %v2444, %v2700
      %v3301 = vsel %vm3252, %v2446, %v2702
      %v3302 = vsel %vm3252, %v2448, %v2704
      %v3303 = vsel %vm3252, %v2450, %v2706
      %v3304 = vsel %vm3252, %v2452, %v2708
      %v3305 = vsel %vm3252, %v2454, %v2710
      %v3306 = vsel %vm3252, %v2456, %v2712
      %v3307 = vsel %vm3252, %v2458, %v2714
      %v3308 = vsel %vm3252, %v2460, %v2716
      %v3309 = vsel %vm3252, %v2462, %v2718
      %v3310 = vsel %vm3252, %v2464, %v2720
      %v3311 = vsel %vm3252, %v2466, %v2722
      %v3312 = vsel %vm3252, %v2468, %v2724
      %v3313 = vsel %vm3252, %v2470, %v2726
      %v3314 = vsel %vm3252, %v2472, %v2728
      %v3315 = vsel %vm3252, %v2474, %v2730
      %v3316 = vsel %vm3252, %v2476, %v2732
      %v3317 = vld [vmem:[%s1] sm:$0xff]
      %v3318 = vld [vmem:[%s1 + $0x8] sm:$0xff]
      %v3319 = vld [vmem:[%s1 + $0x10] sm:$0xff]
      %v3320 = vld [vmem:[%s1 + $0x18] sm:$0xff]
      %v3321 = vld [vmem:[%s1 + $0x20] sm:$0xff]
      %v3322 = vld [vmem:[%s1 + $0x28] sm:$0xff]
      %v3323 = vld [vmem:[%s1 + $0x30] sm:$0xff]
      %v3324 = vld [vmem:[%s1 + $0x38] sm:$0xff]
      %v3325 = vld [vmem:[%s1 + $0x40] sm:$0xff]
      %v3326 = vld [vmem:[%s1 + $0x48] sm:$0xff]
      %v3327 = vld [vmem:[%s1 + $0x50] sm:$0xff]
      %v3328 = vld [vmem:[%s1 + $0x58] sm:$0xff]
      %v3329 = vld [vmem:[%s1 + $0x60] sm:$0xff]
      %v3330 = vld [vmem:[%s1 + $0x68] sm:$0xff]
      %v3331 = vld [vmem:[%s1 + $0x70] sm:$0xff]
      %v3332 = vld [vmem:[%s1 + $0x78] sm:$0xff]
      %v3333 = vld [vmem:[%s1 + $0x80] sm:$0xff]
      %v3334 = vld [vmem:[%s1 + $0x88] sm:$0xff]
      %v3335 = vld [vmem:[%s1 + $0x90] sm:$0xff]
      %v3336 = vld [vmem:[%s1 + $0x98] sm:$0xff]
      %v3337 = vld [vmem:[%s1 + $0xa0] sm:$0xff]
      %v3338 = vld [vmem:[%s1 + $0xa8] sm:$0xff]
      %v3339 = vld [vmem:[%s1 + $0xb0] sm:$0xff]
      %v3340 = vld [vmem:[%s1 + $0xb8] sm:$0xff]
      %v3341 = vld [vmem:[%s1 + $0xc0] sm:$0xff]
      %v3342 = vld [vmem:[%s1 + $0xc8] sm:$0xff]
      %v3343 = vld [vmem:[%s1 + $0xd0] sm:$0xff]
      %v3344 = vld [vmem:[%s1 + $0xd8] sm:$0xff]
      %v3345 = vld [vmem:[%s1 + $0xe0] sm:$0xff]
      %v3346 = vld [vmem:[%s1 + $0xe8] sm:$0xff]
      %v3347 = vld [vmem:[%s1 + $0xf0] sm:$0xff]
      %v3348 = vld [vmem:[%s1 + $0xf8] sm:$0xff]
      %v3349 = vld [vmem:[%s1 + $0x100] sm:$0xff]
      %v3350 = vld [vmem:[%s1 + $0x108] sm:$0xff]
      %v3351 = vld [vmem:[%s1 + $0x110] sm:$0xff]
      %v3352 = vld [vmem:[%s1 + $0x118] sm:$0xff]
      %v3353 = vld [vmem:[%s1 + $0x120] sm:$0xff]
      %v3354 = vld [vmem:[%s1 + $0x128] sm:$0xff]
      %v3355 = vld [vmem:[%s1 + $0x130] sm:$0x3]
      %v3356 = vld [vmem:[%s2] sm:$0x1]
      %v3358 = vlaneseq
      %v3359 = vshrl.u32 %v3358, 7
      %v3360 = vsub.s32 0, %v3359
      %v3361 = vrot.slane %v3356, %v3360
      %vm3363 = vcmask 408576
      %v3365 = vsel %vm3363, %v3253, 0
      %v3368 = vsel %vm3363, %v3254, 0
      %v3371 = vsel %vm3363, %v3255, 0
      %v3374 = vsel %vm3363, %v3256, 0
      %v3377 = vsel %vm3363, %v3257, 0
      %v3380 = vsel %vm3363, %v3258, 0
      %v3383 = vsel %vm3363, %v3259, 0
      %v3386 = vsel %vm3363, %v3260, 0
      %v3389 = vsel %vm3363, %v3261, 0
      %v3392 = vsel %vm3363, %v3262, 0
      %v3395 = vsel %vm3363, %v3263, 0
      %v3398 = vsel %vm3363, %v3264, 0
      %v3401 = vsel %vm3363, %v3265, 0
      %v3404 = vsel %vm3363, %v3266, 0
      %v3407 = vsel %vm3363, %v3267, 0
      %v3410 = vsel %vm3363, %v3268, 0
      %v3413 = vsel %vm3363, %v3269, 0
      %v3416 = vsel %vm3363, %v3270, 0
      %v3419 = vsel %vm3363, %v3271, 0
      %v3422 = vsel %vm3363, %v3272, 0
      %v3425 = vsel %vm3363, %v3273, 0
      %v3428 = vsel %vm3363, %v3274, 0
      %v3431 = vsel %vm3363, %v3275, 0
      %v3434 = vsel %vm3363, %v3276, 0
      %v3437 = vsel %vm3363, %v3277, 0
      %v3440 = vsel %vm3363, %v3278, 0
      %v3443 = vsel %vm3363, %v3279, 0
      %v3446 = vsel %vm3363, %v3280, 0
      %v3449 = vsel %vm3363, %v3281, 0
      %v3452 = vsel %vm3363, %v3282, 0
      %v3455 = vsel %vm3363, %v3283, 0
      %v3458 = vsel %vm3363, %v3284, 0
      %v3461 = vsel %vm3363, %v3285, 0
      %v3464 = vsel %vm3363, %v3286, 0
      %v3467 = vsel %vm3363, %v3287, 0
      %v3470 = vsel %vm3363, %v3288, 0
      %v3473 = vsel %vm3363, %v3289, 0
      %v3476 = vsel %vm3363, %v3290, 0
      %v3479 = vsel %vm3363, %v3291, 0
      %v3482 = vsel %vm3363, %v3292, 0
      %v3485 = vsel %vm3363, %v3293, 0
      %v3488 = vsel %vm3363, %v3294, 0
      %v3491 = vsel %vm3363, %v3295, 0
      %v3494 = vsel %vm3363, %v3296, 0
      %v3497 = vsel %vm3363, %v3297, 0
      %v3500 = vsel %vm3363, %v3298, 0
      %v3503 = vsel %vm3363, %v3299, 0
      %v3506 = vsel %vm3363, %v3300, 0
      %v3509 = vsel %vm3363, %v3301, 0
      %v3512 = vsel %vm3363, %v3302, 0
      %v3515 = vsel %vm3363, %v3303, 0
      %v3518 = vsel %vm3363, %v3304, 0
      %v3521 = vsel %vm3363, %v3305, 0
      %v3524 = vsel %vm3363, %v3306, 0
      %v3527 = vsel %vm3363, %v3307, 0
      %v3530 = vsel %vm3363, %v3308, 0
      %v3533 = vsel %vm3363, %v3309, 0
      %v3536 = vsel %vm3363, %v3310, 0
      %v3539 = vsel %vm3363, %v3311, 0
      %v3542 = vsel %vm3363, %v3312, 0
      %v3545 = vsel %vm3363, %v3313, 0
      %v3548 = vsel %vm3363, %v3314, 0
      %v3551 = vsel %vm3363, %v3315, 0
      %v3554 = vsel %vm3363, %v3316, 0
      %vm3556 = vcmask 1041408
      %v3558 = vsel %vm3556, %v3355, 0
      %3560 = vmatprep.subr.mxu0 0.0
      %3561 = vmatpush1.msra.mxu0 %v3317
      %3562 = vmatprep.subr.mxu0 0.0
      %3563 = vmatpush1.msra.mxu0 %v3318
      %3564 = vmatprep.subr.mxu0 0.0
      %3565 = vmatpush1.msra.mxu0 %v3319
      %3566 = vmatprep.subr.mxu0 0.0
      %3567 = vmatpush1.msra.mxu0 %v3320
      %3568 = vmatprep.subr.mxu0 0.0
      %3569 = vmatpush1.msra.mxu0 %v3321
      %3570 = vmatprep.subr.mxu0 0.0
      %3571 = vmatpush1.msra.mxu0 %v3322
      %3572 = vmatprep.subr.mxu0 0.0
      %3573 = vmatpush1.msra.mxu0 %v3323
      %3574 = vmatprep.subr.mxu0 0.0
      %3575 = vmatpush1.msra.mxu0 %v3324
      %3576 = vmatprep.subr.mxu0 0.0
      %3577 = vmatpush1.msra.mxu0 %v3325
      %3578 = vmatprep.subr.mxu0 0.0
      %3579 = vmatpush1.msra.mxu0 %v3326
      %3580 = vmatprep.subr.mxu0 0.0
      %3581 = vmatpush1.msra.mxu0 %v3327
      %3582 = vmatprep.subr.mxu0 0.0
      %3583 = vmatpush1.msra.mxu0 %v3328
      %3584 = vmatprep.subr.mxu0 0.0
      %3585 = vmatpush1.msra.mxu0 %v3329
      %3586 = vmatprep.subr.mxu0 0.0
      %3587 = vmatpush1.msra.mxu0 %v3330
      %3588 = vmatprep.subr.mxu0 0.0
      %3589 = vmatpush1.msra.mxu0 %v3331
      %3590 = vmatprep.subr.mxu0 0.0
      %3591 = vmatpush1.msra.mxu0 %v3332
      %3592 = vmatprep.subr.mxu0 0.0
      %3593 = vmatpush1.msra.mxu0 %v3333
      %3594 = vmatprep.subr.mxu0 0.0
      %3595 = vmatpush1.msra.mxu0 %v3334
      %3596 = vmatprep.subr.mxu0 0.0
      %3597 = vmatpush1.msra.mxu0 %v3335
      %3598 = vmatprep.subr.mxu0 0.0
      %3599 = vmatpush1.msra.mxu0 %v3336
      %3600 = vmatprep.subr.mxu0 0.0
      %3601 = vmatpush1.msra.mxu0 %v3337
      %3602 = vmatprep.subr.mxu0 0.0
      %3603 = vmatpush1.msra.mxu0 %v3338
      %3604 = vmatprep.subr.mxu0 0.0
      %3605 = vmatpush1.msra.mxu0 %v3339
      %3606 = vmatprep.subr.mxu0 0.0
      %3607 = vmatpush1.msra.mxu0 %v3340
      %3608 = vmatprep.subr.mxu0 0.0
      %3609 = vmatpush1.msra.mxu0 %v3341
      %3610 = vmatprep.subr.mxu0 0.0
      %3611 = vmatpush1.msra.mxu0 %v3342
      %3612 = vmatprep.subr.mxu0 0.0
      %3613 = vmatpush1.msra.mxu0 %v3343
      %3614 = vmatprep.subr.mxu0 0.0
      %3615 = vmatpush1.msra.mxu0 %v3344
      %3616 = vmatprep.subr.mxu0 0.0
      %3617 = vmatpush1.msra.mxu0 %v3345
      %3618 = vmatprep.subr.mxu0 0.0
      %3619 = vmatpush1.msra.mxu0 %v3346
      %3620 = vmatprep.subr.mxu0 0.0
      %3621 = vmatpush1.msra.mxu0 %v3347
      %3622 = vmatprep.subr.mxu0 0.0
      %3623 = vmatpush1.msra.mxu0 %v3348
      %3624 = vmatprep.mubr.f32.mxu0 %v3188
      %3625 = vmatmul.mubr.f32.gmra.mrb[0].mxu0 %v2928
      %v3626 = vpop.f32.mrb[0].mxu0
      %v3627 = vadd.f32 %v3361, %v3626
      %v3628 = vpop.f32.mrb[0].mxu0
      %3629 = vmatprep.mubr.f32.mxu0 %v3189
      %3630 = vmatmul.mubr.f32.gmra.mrb[0].mxu0 %v2929
      %v3631 = vpop.f32.mrb[0].mxu0
      %v3632 = vadd.f32 %v3361, %v3631
      %v3633 = vpop.f32.mrb[0].mxu0
      %3634 = vmatprep.mubr.f32.mxu0 %v3190
      %3635 = vmatmul.mubr.f32.gmra.mrb[0].mxu0 %v2930
      %v3636 = vpop.f32.mrb[0].mxu0
      %v3637 = vadd.f32 %v3361, %v3636
      %v3638 = vpop.f32.mrb[0].mxu0
      %3639 = vmatprep.mubr.f32.mxu0 %v3191
      %3640 = vmatmul.mubr.f32.gmra.mrb[0].mxu0 %v2931
      %v3641 = vpop.f32.mrb[0].mxu0
      %v3642 = vadd.f32 %v3361, %v3641
      %v3643 = vpop.f32.mrb[0].mxu0
      %3644 = vmatprep.mubr.f32.mxu0 %v3192
      %3645 = vmatmul.mubr.f32.gmra.mrb[0].mxu0 %v2932
      %v3646 = vpop.f32.mrb[0].mxu0
      %v3647 = vadd.f32 %v3361, %v3646
      %v3648 = vpop.f32.mrb[0].mxu0
      %3649 = vmatprep.mubr.f32.mxu0 %v3193
      %3650 = vmatmul.mubr.f32.gmra.mrb[0].mxu0 %v2933
      %v3651 = vpop.f32.mrb[0].mxu0
      %v3652 = vadd.f32 %v3361, %v3651
      %v3653 = vpop.f32.mrb[0].mxu0
      %3654 = vmatprep.mubr.f32.mxu0 %v3194
      %3655 = vmatmul.mubr.f32.gmra.mrb[0].mxu0 %v2934
      %v3656 = vpop.f32.mrb[0].mxu0
      %v3657 = vadd.f32 %v3361, %v3656
      %v3658 = vpop.f32.mrb[0].mxu0
      %3659 = vmatprep.mubr.f32.mxu0 %v3195
      %3660 = vmatmul.mubr.f32.gmra.mrb[0].mxu0 %v2935
      %v3661 = vpop.f32.mrb[0].mxu0
      %v3662 = vadd.f32 %v3361, %v3661
      %v3663 = vpop.f32.mrb[0].mxu0
      %3664 = vmatprep.mubr.f32.mxu0 %v3196
      %3665 = vmatmul.mubr.f32.gmra.mrb[0].mxu0 %v2936
      %v3666 = vpop.f32.mrb[0].mxu0
      %v3667 = vadd.f32 %v3361, %v3666
      %v3668 = vpop.f32.mrb[0].mxu0
      %3669 = vmatprep.mubr.f32.mxu0 %v3197
      %3670 = vmatmul.mubr.f32.gmra.mrb[0].mxu0 %v2937
      %v3671 = vpop.f32.mrb[0].mxu0
      %v3672 = vadd.f32 %v3361, %v3671
      %v3673 = vpop.f32.mrb[0].mxu0
      %3674 = vmatprep.mubr.f32.mxu0 %v3198
      %3675 = vmatmul.mubr.f32.gmra.mrb[0].mxu0 %v2938
      %v3676 = vpop.f32.mrb[0].mxu0
      %v3677 = vadd.f32 %v3361, %v3676
      %v3678 = vpop.f32.mrb[0].mxu0
      %3679 = vmatprep.mubr.f32.mxu0 %v3199
      %3680 = vmatmul.mubr.f32.gmra.mrb[0].mxu0 %v2939
      %v3681 = vpop.f32.mrb[0].mxu0
      %v3682 = vadd.f32 %v3361, %v3681
      %v3683 = vpop.f32.mrb[0].mxu0
      %3684 = vmatprep.mubr.f32.mxu0 %v3200
      %3685 = vmatmul.mubr.f32.gmra.mrb[0].mxu0 %v2940
      %v3686 = vpop.f32.mrb[0].mxu0
      %v3687 = vadd.f32 %v3361, %v3686
      %v3688 = vpop.f32.mrb[0].mxu0
      %3689 = vmatprep.mubr.f32.mxu0 %v3201
      %3690 = vmatmul.mubr.f32.gmra.mrb[0].mxu0 %v2941
      %v3691 = vpop.f32.mrb[0].mxu0
      %v3692 = vadd.f32 %v3361, %v3691
      %v3693 = vpop.f32.mrb[0].mxu0
      %3694 = vmatprep.mubr.f32.mxu0 %v3202
      %3695 = vmatmul.mubr.f32.gmra.mrb[0].mxu0 %v2942
      %v3696 = vpop.f32.mrb[0].mxu0
      %v3697 = vadd.f32 %v3361, %v3696
      %v3698 = vpop.f32.mrb[0].mxu0
      %3699 = vmatprep.mubr.f32.mxu0 %v3203
      %3700 = vmatmul.mubr.f32.gmra.mrb[0].mxu0 %v2943
      %v3701 = vpop.f32.mrb[0].mxu0
      %v3702 = vadd.f32 %v3361, %v3701
      %v3703 = vpop.f32.mrb[0].mxu0
      %3704 = vmatprep.mubr.f32.mxu0 %v3204
      %3705 = vmatmul.mubr.f32.gmra.mrb[0].mxu0 %v2944
      %v3706 = vpop.f32.mrb[0].mxu0
      %v3707 = vadd.f32 %v3361, %v3706
      %v3708 = vpop.f32.mrb[0].mxu0
      %3709 = vmatprep.mubr.f32.mxu0 %v3205
      %3710 = vmatmul.mubr.f32.gmra.mrb[0].mxu0 %v2945
      %v3711 = vpop.f32.mrb[0].mxu0
      %v3712 = vadd.f32 %v3361, %v3711
      %v3713 = vpop.f32.mrb[0].mxu0
      %3714 = vmatprep.mubr.f32.mxu0 %v3206
      %3715 = vmatmul.mubr.f32.gmra.mrb[0].mxu0 %v2946
      %v3716 = vpop.f32.mrb[0].mxu0
      %v3717 = vadd.f32 %v3361, %v3716
      %v3718 = vpop.f32.mrb[0].mxu0
      %3719 = vmatprep.mubr.f32.mxu0 %v3207
      %3720 = vmatmul.mubr.f32.gmra.mrb[0].mxu0 %v2947
      %v3721 = vpop.f32.mrb[0].mxu0
      %v3722 = vadd.f32 %v3361, %v3721
      %v3723 = vpop.f32.mrb[0].mxu0
      %3724 = vmatprep.mubr.f32.mxu0 %v3208
      %3725 = vmatmul.mubr.f32.gmra.mrb[0].mxu0 %v2948
      %v3726 = vpop.f32.mrb[0].mxu0
      %v3727 = vadd.f32 %v3361, %v3726
      %v3728 = vpop.f32.mrb[0].mxu0
      %3729 = vmatprep.mubr.f32.mxu0 %v3209
      %3730 = vmatmul.mubr.f32.gmra.mrb[0].mxu0 %v2949
      %v3731 = vpop.f32.mrb[0].mxu0
      %v3732 = vadd.f32 %v3361, %v3731
      %v3733 = vpop.f32.mrb[0].mxu0
      %3734 = vmatprep.mubr.f32.mxu0 %v3210
      %3735 = vmatmul.mubr.f32.gmra.mrb[0].mxu0 %v2950
      %v3736 = vpop.f32.mrb[0].mxu0
      %v3737 = vadd.f32 %v3361, %v3736
      %v3738 = vpop.f32.mrb[0].mxu0
      %3739 = vmatprep.mubr.f32.mxu0 %v3211
      %3740 = vmatmul.mubr.f32.gmra.mrb[0].mxu0 %v2951
      %v3741 = vpop.f32.mrb[0].mxu0
      %v3742 = vadd.f32 %v3361, %v3741
      %v3743 = vpop.f32.mrb[0].mxu0
      %3744 = vmatprep.mubr.f32.mxu0 %v3212
      %3745 = vmatmul.mubr.f32.gmra.mrb[0].mxu0 %v2952
      %v3746 = vpop.f32.mrb[0].mxu0
      %v3747 = vadd.f32 %v3361, %v3746
      %v3748 = vpop.f32.mrb[0].mxu0
      %3749 = vmatprep.mubr.f32.mxu0 %v3213
      %3750 = vmatmul.mubr.f32.gmra.mrb[0].mxu0 %v2953
      %v3751 = vpop.f32.mrb[0].mxu0
      %v3752 = vadd.f32 %v3361, %v3751
      %v3753 = vpop.f32.mrb[0].mxu0
      %3754 = vmatprep.mubr.f32.mxu0 %v3214
      %3755 = vmatmul.mubr.f32.gmra.mrb[0].mxu0 %v2954
      %v3756 = vpop.f32.mrb[0].mxu0
      %v3757 = vadd.f32 %v3361, %v3756
      %v3758 = vpop.f32.mrb[0].mxu0
      %3759 = vmatprep.mubr.f32.mxu0 %v3215
      %3760 = vmatmul.mubr.f32.gmra.mrb[0].mxu0 %v2955
      %v3761 = vpop.f32.mrb[0].mxu0
      %v3762 = vadd.f32 %v3361, %v3761
      %v3763 = vpop.f32.mrb[0].mxu0
      %3764 = vmatprep.mubr.f32.mxu0 %v3216
      %3765 = vmatmul.mubr.f32.gmra.mrb[0].mxu0 %v2956
      %v3766 = vpop.f32.mrb[0].mxu0
      %v3767 = vadd.f32 %v3361, %v3766
      %v3768 = vpop.f32.mrb[0].mxu0
      %3769 = vmatprep.mubr.f32.mxu0 %v3217
      %3770 = vmatmul.mubr.f32.gmra.mrb[0].mxu0 %v2957
      %v3771 = vpop.f32.mrb[0].mxu0
      %v3772 = vadd.f32 %v3361, %v3771
      %v3773 = vpop.f32.mrb[0].mxu0
      %3774 = vmatprep.mubr.f32.mxu0 %v3218
      %3775 = vmatmul.mubr.f32.gmra.mrb[0].mxu0 %v2958
      %v3776 = vpop.f32.mrb[0].mxu0
      %v3777 = vadd.f32 %v3361, %v3776
      %v3778 = vpop.f32.mrb[0].mxu0
      %3779 = vmatprep.mubr.f32.mxu0 %v3219
      %3780 = vmatmul.mubr.f32.gmra.mrb[0].mxu0 %v2959
      %v3781 = vpop.f32.mrb[0].mxu0
      %v3782 = vadd.f32 %v3361, %v3781
      %v3783 = vpop.f32.mrb[0].mxu0
      %3784 = vmatprep.mubr.f32.mxu0 %v3220
      %3785 = vmatmul.mubr.f32.gmra.mrb[0].mxu0 %v2960
      %v3786 = vpop.f32.mrb[0].mxu0
      %v3787 = vadd.f32 %v3361, %v3786
      %v3788 = vpop.f32.mrb[0].mxu0
      %3789 = vmatprep.mubr.f32.mxu0 %v3221
      %3790 = vmatmul.mubr.f32.gmra.mrb[0].mxu0 %v2961
      %v3791 = vpop.f32.mrb[0].mxu0
      %v3792 = vadd.f32 %v3361, %v3791
      %v3793 = vpop.f32.mrb[0].mxu0
      %3794 = vmatprep.mubr.f32.mxu0 %v3222
      %3795 = vmatmul.mubr.f32.gmra.mrb[0].mxu0 %v2962
      %v3796 = vpop.f32.mrb[0].mxu0
      %v3797 = vadd.f32 %v3361, %v3796
      %v3798 = vpop.f32.mrb[0].mxu0
      %3799 = vmatprep.mubr.f32.mxu0 %v3223
      %3800 = vmatmul.mubr.f32.gmra.mrb[0].mxu0 %v2963
      %v3801 = vpop.f32.mrb[0].mxu0
      %v3802 = vadd.f32 %v3361, %v3801
      %v3803 = vpop.f32.mrb[0].mxu0
      %3804 = vmatprep.mubr.f32.mxu0 %v3224
      %3805 = vmatmul.mubr.f32.gmra.mrb[0].mxu0 %v2964
      %v3806 = vpop.f32.mrb[0].mxu0
      %v3807 = vadd.f32 %v3361, %v3806
      %v3808 = vpop.f32.mrb[0].mxu0
      %3809 = vmatprep.mubr.f32.mxu0 %v3225
      %3810 = vmatmul.mubr.f32.gmra.mrb[0].mxu0 %v2965
      %v3811 = vpop.f32.mrb[0].mxu0
      %v3812 = vadd.f32 %v3361, %v3811
      %v3813 = vpop.f32.mrb[0].mxu0
      %3814 = vmatprep.mubr.f32.mxu0 %v3226
      %3815 = vmatmul.mubr.f32.gmra.mrb[0].mxu0 %v2966
      %v3816 = vpop.f32.mrb[0].mxu0
      %v3817 = vadd.f32 %v3361, %v3816
      %v3818 = vpop.f32.mrb[0].mxu0
      %3819 = vmatprep.mubr.f32.mxu0 %v3227
      %3820 = vmatmul.mubr.f32.gmra.mrb[0].mxu0 %v2967
      %v3821 = vpop.f32.mrb[0].mxu0
      %v3822 = vadd.f32 %v3361, %v3821
      %v3823 = vpop.f32.mrb[0].mxu0
      %3824 = vmatprep.mubr.f32.mxu0 %v3228
      %3825 = vmatmul.mubr.f32.gmra.mrb[0].mxu0 %v2968
      %v3826 = vpop.f32.mrb[0].mxu0
      %v3827 = vadd.f32 %v3361, %v3826
      %v3828 = vpop.f32.mrb[0].mxu0
      %3829 = vmatprep.mubr.f32.mxu0 %v3229
      %3830 = vmatmul.mubr.f32.gmra.mrb[0].mxu0 %v2969
      %v3831 = vpop.f32.mrb[0].mxu0
      %v3832 = vadd.f32 %v3361, %v3831
      %v3833 = vpop.f32.mrb[0].mxu0
      %3834 = vmatprep.mubr.f32.mxu0 %v3230
      %3835 = vmatmul.mubr.f32.gmra.mrb[0].mxu0 %v2970
      %v3836 = vpop.f32.mrb[0].mxu0
      %v3837 = vadd.f32 %v3361, %v3836
      %v3838 = vpop.f32.mrb[0].mxu0
      %3839 = vmatprep.mubr.f32.mxu0 %v3231
      %3840 = vmatmul.mubr.f32.gmra.mrb[0].mxu0 %v2971
      %v3841 = vpop.f32.mrb[0].mxu0
      %v3842 = vadd.f32 %v3361, %v3841
      %v3843 = vpop.f32.mrb[0].mxu0
      %3844 = vmatprep.mubr.f32.mxu0 %v3232
      %3845 = vmatmul.mubr.f32.gmra.mrb[0].mxu0 %v2972
      %v3846 = vpop.f32.mrb[0].mxu0
      %v3847 = vadd.f32 %v3361, %v3846
      %v3848 = vpop.f32.mrb[0].mxu0
      %3849 = vmatprep.mubr.f32.mxu0 %v3233
      %3850 = vmatmul.mubr.f32.gmra.mrb[0].mxu0 %v2973
      %v3851 = vpop.f32.mrb[0].mxu0
      %v3852 = vadd.f32 %v3361, %v3851
      %v3853 = vpop.f32.mrb[0].mxu0
      %3854 = vmatprep.mubr.f32.mxu0 %v3234
      %3855 = vmatmul.mubr.f32.gmra.mrb[0].mxu0 %v2974
      %v3856 = vpop.f32.mrb[0].mxu0
      %v3857 = vadd.f32 %v3361, %v3856
      %v3858 = vpop.f32.mrb[0].mxu0
      %3859 = vmatprep.mubr.f32.mxu0 %v3235
      %3860 = vmatmul.mubr.f32.gmra.mrb[0].mxu0 %v2975
      %v3861 = vpop.f32.mrb[0].mxu0
      %v3862 = vadd.f32 %v3361, %v3861
      %v3863 = vpop.f32.mrb[0].mxu0
      %3864 = vmatprep.mubr.f32.mxu0 %v3236
      %3865 = vmatmul.mubr.f32.gmra.mrb[0].mxu0 %v2976
      %v3866 = vpop.f32.mrb[0].mxu0
      %v3867 = vadd.f32 %v3361, %v3866
      %v3868 = vpop.f32.mrb[0].mxu0
      %3869 = vmatprep.mubr.f32.mxu0 %v3237
      %3870 = vmatmul.mubr.f32.gmra.mrb[0].mxu0 %v2977
      %v3871 = vpop.f32.mrb[0].mxu0
      %v3872 = vadd.f32 %v3361, %v3871
      %v3873 = vpop.f32.mrb[0].mxu0
      %3874 = vmatprep.mubr.f32.mxu0 %v3238
      %3875 = vmatmul.mubr.f32.gmra.mrb[0].mxu0 %v2978
      %v3876 = vpop.f32.mrb[0].mxu0
      %v3877 = vadd.f32 %v3361, %v3876
      %v3878 = vpop.f32.mrb[0].mxu0
      %3879 = vmatprep.mubr.f32.mxu0 %v3239
      %3880 = vmatmul.mubr.f32.gmra.mrb[0].mxu0 %v2979
      %v3881 = vpop.f32.mrb[0].mxu0
      %v3882 = vadd.f32 %v3361, %v3881
      %v3883 = vpop.f32.mrb[0].mxu0
      %3884 = vmatprep.mubr.f32.mxu0 %v3240
      %3885 = vmatmul.mubr.f32.gmra.mrb[0].mxu0 %v2980
      %v3886 = vpop.f32.mrb[0].mxu0
      %v3887 = vadd.f32 %v3361, %v3886
      %v3888 = vpop.f32.mrb[0].mxu0
      %3889 = vmatprep.mubr.f32.mxu0 %v3241
      %3890 = vmatmul.mubr.f32.gmra.mrb[0].mxu0 %v2981
      %v3891 = vpop.f32.mrb[0].mxu0
      %v3892 = vadd.f32 %v3361, %v3891
      %v3893 = vpop.f32.mrb[0].mxu0
      %3894 = vmatprep.mubr.f32.mxu0 %v3242
      %3895 = vmatmul.mubr.f32.gmra.mrb[0].mxu0 %v2982
      %v3896 = vpop.f32.mrb[0].mxu0
      %v3897 = vadd.f32 %v3361, %v3896
      %v3898 = vpop.f32.mrb[0].mxu0
      %3899 = vmatprep.mubr.f32.mxu0 %v3243
      %3900 = vmatmul.mubr.f32.gmra.mrb[0].mxu0 %v2983
      %v3901 = vpop.f32.mrb[0].mxu0
      %v3902 = vadd.f32 %v3361, %v3901
      %v3903 = vpop.f32.mrb[0].mxu0
      %3904 = vmatprep.mubr.f32.mxu0 %v3244
      %3905 = vmatmul.mubr.f32.gmra.mrb[0].mxu0 %v2984
      %v3906 = vpop.f32.mrb[0].mxu0
      %v3907 = vadd.f32 %v3361, %v3906
      %v3908 = vpop.f32.mrb[0].mxu0
      %3909 = vmatprep.mubr.f32.mxu0 %v3245
      %3910 = vmatmul.mubr.f32.gmra.mrb[0].mxu0 %v2985
      %v3911 = vpop.f32.mrb[0].mxu0
      %v3912 = vadd.f32 %v3361, %v3911
      %v3913 = vpop.f32.mrb[0].mxu0
      %3914 = vmatprep.mubr.f32.mxu0 %v3246
      %3915 = vmatmul.mubr.f32.gmra.mrb[0].mxu0 %v2986
      %v3916 = vpop.f32.mrb[0].mxu0
      %v3917 = vadd.f32 %v3361, %v3916
      %v3918 = vpop.f32.mrb[0].mxu0
      %3919 = vmatprep.mubr.f32.mxu0 %v3247
      %3920 = vmatmul.mubr.f32.gmra.mrb[0].mxu0 %v2987
      %v3921 = vpop.f32.mrb[0].mxu0
      %v3922 = vadd.f32 %v3361, %v3921
      %v3923 = vpop.f32.mrb[0].mxu0
      %3924 = vmatprep.mubr.f32.mxu0 %v3248
      %3925 = vmatmul.mubr.f32.gmra.mrb[0].mxu0 %v2988
      %v3926 = vpop.f32.mrb[0].mxu0
      %v3927 = vadd.f32 %v3361, %v3926
      %v3928 = vpop.f32.mrb[0].mxu0
      %3929 = vmatprep.mubr.f32.mxu0 %v3249
      %3930 = vmatmul.mubr.f32.gmra.mrb[0].mxu0 %v2989
      %v3931 = vpop.f32.mrb[0].mxu0
      %v3932 = vadd.f32 %v3361, %v3931
      %v3933 = vpop.f32.mrb[0].mxu0
      %3934 = vmatprep.mubr.f32.mxu0 %v3250
      %3935 = vmatmul.mubr.f32.gmra.mrb[0].mxu0 %v2990
      %v3936 = vpop.f32.mrb[0].mxu0
      %v3937 = vadd.f32 %v3361, %v3936
      %v3938 = vpop.f32.mrb[0].mxu0
      %3939 = vmatprep.mubr.f32.mxu0 %v3251
      %3940 = vmatmul.mubr.f32.gmra.mrb[0].mxu0 %v2991
      %v3941 = vpop.f32.mrb[0].mxu0
      %v3942 = vadd.f32 %v3361, %v3941
      %v3943 = vpop.f32.mrb[0].mxu0
      %3944 = vdwg.mxu0
      %3945 = vmatprep.subr.mxu0 0.0
      %3946 = vmatpush1.msra.mxu0 %v3349
      %3947 = vmatprep.subr.mxu0 0.0
      %3948 = vmatpush1.msra.mxu0 %v3350
      %3949 = vmatprep.subr.mxu0 0.0
      %3950 = vmatpush1.msra.mxu0 %v3351
      %3951 = vmatprep.subr.mxu0 0.0
      %3952 = vmatpush1.msra.mxu0 %v3352
      %3953 = vmatprep.subr.mxu0 0.0
      %3954 = vmatpush1.msra.mxu0 %v3353
      %3955 = vmatprep.subr.mxu0 0.0
      %3956 = vmatpush1.msra.mxu0 %v3354
      %3957 = vmatprep.subr.mxu0 0.0
      %3958 = vmatpush1.msra.mxu0 %v3558
      %3959 = vmatprep.subr.mxu0 0.0
      %3960 = vmatpush1.msra.mxu0 0.0
      %3961 = vmatprep.subr.mxu0 0.0
      %3962 = vmatpush1.msra.mxu0 0.0
      %3963 = vmatprep.subr.mxu0 0.0
      %3964 = vmatpush1.msra.mxu0 0.0
      %3965 = vmatprep.subr.mxu0 0.0
      %3966 = vmatpush1.msra.mxu0 0.0
      %3967 = vmatprep.subr.mxu0 0.0
      %3968 = vmatpush1.msra.mxu0 0.0
      %3969 = vmatprep.subr.mxu0 0.0
      %3970 = vmatpush1.msra.mxu0 0.0
      %3971 = vmatprep.subr.mxu0 0.0
      %3972 = vmatpush1.msra.mxu0 0.0
      %3973 = vmatprep.subr.mxu0 0.0
      %3974 = vmatpush1.msra.mxu0 0.0
      %3975 = vmatprep.subr.mxu0 0.0
      %3976 = vmatpush1.msra.mxu0 0.0
      %3977 = vmatprep.subr.mxu0 0.0
      %3978 = vmatpush1.msra.mxu0 0.0
      %3979 = vmatprep.subr.mxu0 0.0
      %3980 = vmatpush1.msra.mxu0 0.0
      %3981 = vmatprep.subr.mxu0 0.0
      %3982 = vmatpush1.msra.mxu0 0.0
      %3983 = vmatprep.subr.mxu0 0.0
      %3984 = vmatpush1.msra.mxu0 0.0
      %3985 = vmatprep.subr.mxu0 0.0
      %3986 = vmatpush1.msra.mxu0 0.0
      %3987 = vmatprep.subr.mxu0 0.0
      %3988 = vmatpush1.msra.mxu0 0.0
      %3989 = vmatprep.subr.mxu0 0.0
      %3990 = vmatpush1.msra.mxu0 0.0
      %3991 = vmatprep.subr.mxu0 0.0
      %3992 = vmatpush1.msra.mxu0 0.0
      %3993 = vmatprep.subr.mxu0 0.0
      %3994 = vmatpush1.msra.mxu0 0.0
      %3995 = vmatprep.subr.mxu0 0.0
      %3996 = vmatpush1.msra.mxu0 0.0
      %3997 = vmatprep.subr.mxu0 0.0
      %3998 = vmatpush1.msra.mxu0 0.0
      %3999 = vmatprep.subr.mxu0 0.0
      %4000 = vmatpush1.msra.mxu0 0.0
      %4001 = vmatprep.subr.mxu0 0.0
      %4002 = vmatpush1.msra.mxu0 0.0
      %4003 = vmatprep.subr.mxu0 0.0
      %4004 = vmatpush1.msra.mxu0 0.0
      %4005 = vmatprep.subr.mxu0 0.0
      %4006 = vmatpush1.msra.mxu0 0.0
      %4007 = vmatprep.subr.mxu0 0.0
      %4008 = vmatpush1.msra.mxu0 0.0
      %4009 = vmatprep.mubr.f32.mxu0 0.0
      %4010 = vmatmul.mubr.f32.gmra.mrb[0].mxu0 %v3365
      %v4011 = vpop.f32.mrb[0].mxu0
      %v4012 = vadd.f32 %v3627, %v4011
      %v4013 = vpop.f32.mrb[0].mxu0
      %4014 = vmatprep.mubr.f32.mxu0 0.0
      %4015 = vmatmul.mubr.f32.gmra.mrb[0].mxu0 %v3368
      %v4016 = vpop.f32.mrb[0].mxu0
      %v4017 = vadd.f32 %v3632, %v4016
      %v4018 = vpop.f32.mrb[0].mxu0
      %4019 = vmatprep.mubr.f32.mxu0 0.0
      %4020 = vmatmul.mubr.f32.gmra.mrb[0].mxu0 %v3371
      %v4021 = vpop.f32.mrb[0].mxu0
      %v4022 = vadd.f32 %v3637, %v4021
      %v4023 = vpop.f32.mrb[0].mxu0
      %4024 = vmatprep.mubr.f32.mxu0 0.0
      %4025 = vmatmul.mubr.f32.gmra.mrb[0].mxu0 %v3374
      %v4026 = vpop.f32.mrb[0].mxu0
      %v4027 = vadd.f32 %v3642, %v4026
      %v4028 = vpop.f32.mrb[0].mxu0
      %4029 = vmatprep.mubr.f32.mxu0 0.0
      %4030 = vmatmul.mubr.f32.gmra.mrb[0].mxu0 %v3377
      %v4031 = vpop.f32.mrb[0].mxu0
      %v4032 = vadd.f32 %v3647, %v4031
      %v4033 = vpop.f32.mrb[0].mxu0
      %4034 = vmatprep.mubr.f32.mxu0 0.0
      %4035 = vmatmul.mubr.f32.gmra.mrb[0].mxu0 %v3380
      %v4036 = vpop.f32.mrb[0].mxu0
      %v4037 = vadd.f32 %v3652, %v4036
      %v4038 = vpop.f32.mrb[0].mxu0
      %4039 = vmatprep.mubr.f32.mxu0 0.0
      %4040 = vmatmul.mubr.f32.gmra.mrb[0].mxu0 %v3383
      %v4041 = vpop.f32.mrb[0].mxu0
      %v4042 = vadd.f32 %v3657, %v4041
      %v4043 = vpop.f32.mrb[0].mxu0
      %4044 = vmatprep.mubr.f32.mxu0 0.0
      %4045 = vmatmul.mubr.f32.gmra.mrb[0].mxu0 %v3386
      %v4046 = vpop.f32.mrb[0].mxu0
      %v4047 = vadd.f32 %v3662, %v4046
      %v4048 = vpop.f32.mrb[0].mxu0
      %4049 = vmatprep.mubr.f32.mxu0 0.0
      %4050 = vmatmul.mubr.f32.gmra.mrb[0].mxu0 %v3389
      %v4051 = vpop.f32.mrb[0].mxu0
      %v4052 = vadd.f32 %v3667, %v4051
      %v4053 = vpop.f32.mrb[0].mxu0
      %4054 = vmatprep.mubr.f32.mxu0 0.0
      %4055 = vmatmul.mubr.f32.gmra.mrb[0].mxu0 %v3392
      %v4056 = vpop.f32.mrb[0].mxu0
      %v4057 = vadd.f32 %v3672, %v4056
      %v4058 = vpop.f32.mrb[0].mxu0
      %4059 = vmatprep.mubr.f32.mxu0 0.0
      %4060 = vmatmul.mubr.f32.gmra.mrb[0].mxu0 %v3395
      %v4061 = vpop.f32.mrb[0].mxu0
      %v4062 = vadd.f32 %v3677, %v4061
      %v4063 = vpop.f32.mrb[0].mxu0
      %4064 = vmatprep.mubr.f32.mxu0 0.0
      %4065 = vmatmul.mubr.f32.gmra.mrb[0].mxu0 %v3398
      %v4066 = vpop.f32.mrb[0].mxu0
      %v4067 = vadd.f32 %v3682, %v4066
      %v4068 = vpop.f32.mrb[0].mxu0
      %4069 = vmatprep.mubr.f32.mxu0 0.0
      %4070 = vmatmul.mubr.f32.gmra.mrb[0].mxu0 %v3401
      %v4071 = vpop.f32.mrb[0].mxu0
      %v4072 = vadd.f32 %v3687, %v4071
      %v4073 = vpop.f32.mrb[0].mxu0
      %4074 = vmatprep.mubr.f32.mxu0 0.0
      %4075 = vmatmul.mubr.f32.gmra.mrb[0].mxu0 %v3404
      %v4076 = vpop.f32.mrb[0].mxu0
      %v4077 = vadd.f32 %v3692, %v4076
      %v4078 = vpop.f32.mrb[0].mxu0
      %4079 = vmatprep.mubr.f32.mxu0 0.0
      %4080 = vmatmul.mubr.f32.gmra.mrb[0].mxu0 %v3407
      %v4081 = vpop.f32.mrb[0].mxu0
      %v4082 = vadd.f32 %v3697, %v4081
      %v4083 = vpop.f32.mrb[0].mxu0
      %4084 = vmatprep.mubr.f32.mxu0 0.0
      %4085 = vmatmul.mubr.f32.gmra.mrb[0].mxu0 %v3410
      %v4086 = vpop.f32.mrb[0].mxu0
      %v4087 = vadd.f32 %v3702, %v4086
      %v4088 = vpop.f32.mrb[0].mxu0
      %4089 = vmatprep.mubr.f32.mxu0 0.0
      %4090 = vmatmul.mubr.f32.gmra.mrb[0].mxu0 %v3413
      %v4091 = vpop.f32.mrb[0].mxu0
      %v4092 = vadd.f32 %v3707, %v4091
      %v4093 = vpop.f32.mrb[0].mxu0
      %4094 = vmatprep.mubr.f32.mxu0 0.0
      %4095 = vmatmul.mubr.f32.gmra.mrb[0].mxu0 %v3416
      %v4096 = vpop.f32.mrb[0].mxu0
      %v4097 = vadd.f32 %v3712, %v4096
      %v4098 = vpop.f32.mrb[0].mxu0
      %4099 = vmatprep.mubr.f32.mxu0 0.0
      %4100 = vmatmul.mubr.f32.gmra.mrb[0].mxu0 %v3419
      %v4101 = vpop.f32.mrb[0].mxu0
      %v4102 = vadd.f32 %v3717, %v4101
      %v4103 = vpop.f32.mrb[0].mxu0
      %4104 = vmatprep.mubr.f32.mxu0 0.0
      %4105 = vmatmul.mubr.f32.gmra.mrb[0].mxu0 %v3422
      %v4106 = vpop.f32.mrb[0].mxu0
      %v4107 = vadd.f32 %v3722, %v4106
      %v4108 = vpop.f32.mrb[0].mxu0
      %4109 = vmatprep.mubr.f32.mxu0 0.0
      %4110 = vmatmul.mubr.f32.gmra.mrb[0].mxu0 %v3425
      %v4111 = vpop.f32.mrb[0].mxu0
      %v4112 = vadd.f32 %v3727, %v4111
      %v4113 = vpop.f32.mrb[0].mxu0
      %4114 = vmatprep.mubr.f32.mxu0 0.0
      %4115 = vmatmul.mubr.f32.gmra.mrb[0].mxu0 %v3428
      %v4116 = vpop.f32.mrb[0].mxu0
      %v4117 = vadd.f32 %v3732, %v4116
      %v4118 = vpop.f32.mrb[0].mxu0
      %4119 = vmatprep.mubr.f32.mxu0 0.0
      %4120 = vmatmul.mubr.f32.gmra.mrb[0].mxu0 %v3431
      %v4121 = vpop.f32.mrb[0].mxu0
      %v4122 = vadd.f32 %v3737, %v4121
      %v4123 = vpop.f32.mrb[0].mxu0
      %4124 = vmatprep.mubr.f32.mxu0 0.0
      %4125 = vmatmul.mubr.f32.gmra.mrb[0].mxu0 %v3434
      %v4126 = vpop.f32.mrb[0].mxu0
      %v4127 = vadd.f32 %v3742, %v4126
      %v4128 = vpop.f32.mrb[0].mxu0
      %4129 = vmatprep.mubr.f32.mxu0 0.0
      %4130 = vmatmul.mubr.f32.gmra.mrb[0].mxu0 %v3437
      %v4131 = vpop.f32.mrb[0].mxu0
      %v4132 = vadd.f32 %v3747, %v4131
      %v4133 = vpop.f32.mrb[0].mxu0
      %4134 = vmatprep.mubr.f32.mxu0 0.0
      %4135 = vmatmul.mubr.f32.gmra.mrb[0].mxu0 %v3440
      %v4136 = vpop.f32.mrb[0].mxu0
      %v4137 = vadd.f32 %v3752, %v4136
      %v4138 = vpop.f32.mrb[0].mxu0
      %4139 = vmatprep.mubr.f32.mxu0 0.0
      %4140 = vmatmul.mubr.f32.gmra.mrb[0].mxu0 %v3443
      %v4141 = vpop.f32.mrb[0].mxu0
      %v4142 = vadd.f32 %v3757, %v4141
      %v4143 = vpop.f32.mrb[0].mxu0
      %4144 = vmatprep.mubr.f32.mxu0 0.0
      %4145 = vmatmul.mubr.f32.gmra.mrb[0].mxu0 %v3446
      %v4146 = vpop.f32.mrb[0].mxu0
      %v4147 = vadd.f32 %v3762, %v4146
      %v4148 = vpop.f32.mrb[0].mxu0
      %4149 = vmatprep.mubr.f32.mxu0 0.0
      %4150 = vmatmul.mubr.f32.gmra.mrb[0].mxu0 %v3449
      %v4151 = vpop.f32.mrb[0].mxu0
      %v4152 = vadd.f32 %v3767, %v4151
      %v4153 = vpop.f32.mrb[0].mxu0
      %4154 = vmatprep.mubr.f32.mxu0 0.0
      %4155 = vmatmul.mubr.f32.gmra.mrb[0].mxu0 %v3452
      %v4156 = vpop.f32.mrb[0].mxu0
      %v4157 = vadd.f32 %v3772, %v4156
      %v4158 = vpop.f32.mrb[0].mxu0
      %4159 = vmatprep.mubr.f32.mxu0 0.0
      %4160 = vmatmul.mubr.f32.gmra.mrb[0].mxu0 %v3455
      %v4161 = vpop.f32.mrb[0].mxu0
      %v4162 = vadd.f32 %v3777, %v4161
      %v4163 = vpop.f32.mrb[0].mxu0
      %4164 = vmatprep.mubr.f32.mxu0 0.0
      %4165 = vmatmul.mubr.f32.gmra.mrb[0].mxu0 %v3458
      %v4166 = vpop.f32.mrb[0].mxu0
      %v4167 = vadd.f32 %v3782, %v4166
      %v4168 = vpop.f32.mrb[0].mxu0
      %4169 = vmatprep.mubr.f32.mxu0 0.0
      %4170 = vmatmul.mubr.f32.gmra.mrb[0].mxu0 %v3461
      %v4171 = vpop.f32.mrb[0].mxu0
      %v4172 = vadd.f32 %v3787, %v4171
      %v4173 = vpop.f32.mrb[0].mxu0
      %4174 = vmatprep.mubr.f32.mxu0 0.0
      %4175 = vmatmul.mubr.f32.gmra.mrb[0].mxu0 %v3464
      %v4176 = vpop.f32.mrb[0].mxu0
      %v4177 = vadd.f32 %v3792, %v4176
      %v4178 = vpop.f32.mrb[0].mxu0
      %4179 = vmatprep.mubr.f32.mxu0 0.0
      %4180 = vmatmul.mubr.f32.gmra.mrb[0].mxu0 %v3467
      %v4181 = vpop.f32.mrb[0].mxu0
      %v4182 = vadd.f32 %v3797, %v4181
      %v4183 = vpop.f32.mrb[0].mxu0
      %4184 = vmatprep.mubr.f32.mxu0 0.0
      %4185 = vmatmul.mubr.f32.gmra.mrb[0].mxu0 %v3470
      %v4186 = vpop.f32.mrb[0].mxu0
      %v4187 = vadd.f32 %v3802, %v4186
      %v4188 = vpop.f32.mrb[0].mxu0
      %4189 = vmatprep.mubr.f32.mxu0 0.0
      %4190 = vmatmul.mubr.f32.gmra.mrb[0].mxu0 %v3473
      %v4191 = vpop.f32.mrb[0].mxu0
      %v4192 = vadd.f32 %v3807, %v4191
      %v4193 = vpop.f32.mrb[0].mxu0
      %4194 = vmatprep.mubr.f32.mxu0 0.0
      %4195 = vmatmul.mubr.f32.gmra.mrb[0].mxu0 %v3476
      %v4196 = vpop.f32.mrb[0].mxu0
      %v4197 = vadd.f32 %v3812, %v4196
      %v4198 = vpop.f32.mrb[0].mxu0
      %4199 = vmatprep.mubr.f32.mxu0 0.0
      %4200 = vmatmul.mubr.f32.gmra.mrb[0].mxu0 %v3479
      %v4201 = vpop.f32.mrb[0].mxu0
      %v4202 = vadd.f32 %v3817, %v4201
      %v4203 = vpop.f32.mrb[0].mxu0
      %4204 = vmatprep.mubr.f32.mxu0 0.0
      %4205 = vmatmul.mubr.f32.gmra.mrb[0].mxu0 %v3482
      %v4206 = vpop.f32.mrb[0].mxu0
      %v4207 = vadd.f32 %v3822, %v4206
      %v4208 = vpop.f32.mrb[0].mxu0
      %4209 = vmatprep.mubr.f32.mxu0 0.0
      %4210 = vmatmul.mubr.f32.gmra.mrb[0].mxu0 %v3485
      %v4211 = vpop.f32.mrb[0].mxu0
      %v4212 = vadd.f32 %v3827, %v4211
      %v4213 = vpop.f32.mrb[0].mxu0
      %4214 = vmatprep.mubr.f32.mxu0 0.0
      %4215 = vmatmul.mubr.f32.gmra.mrb[0].mxu0 %v3488
      %v4216 = vpop.f32.mrb[0].mxu0
      %v4217 = vadd.f32 %v3832, %v4216
      %v4218 = vpop.f32.mrb[0].mxu0
      %4219 = vmatprep.mubr.f32.mxu0 0.0
      %4220 = vmatmul.mubr.f32.gmra.mrb[0].mxu0 %v3491
      %v4221 = vpop.f32.mrb[0].mxu0
      %v4222 = vadd.f32 %v3837, %v4221
      %v4223 = vpop.f32.mrb[0].mxu0
      %4224 = vmatprep.mubr.f32.mxu0 0.0
      %4225 = vmatmul.mubr.f32.gmra.mrb[0].mxu0 %v3494
      %v4226 = vpop.f32.mrb[0].mxu0
      %v4227 = vadd.f32 %v3842, %v4226
      %v4228 = vpop.f32.mrb[0].mxu0
      %4229 = vmatprep.mubr.f32.mxu0 0.0
      %4230 = vmatmul.mubr.f32.gmra.mrb[0].mxu0 %v3497
      %v4231 = vpop.f32.mrb[0].mxu0
      %v4232 = vadd.f32 %v3847, %v4231
      %v4233 = vpop.f32.mrb[0].mxu0
      %4234 = vmatprep.mubr.f32.mxu0 0.0
      %4235 = vmatmul.mubr.f32.gmra.mrb[0].mxu0 %v3500
      %v4236 = vpop.f32.mrb[0].mxu0
      %v4237 = vadd.f32 %v3852, %v4236
      %v4238 = vpop.f32.mrb[0].mxu0
      %4239 = vmatprep.mubr.f32.mxu0 0.0
      %4240 = vmatmul.mubr.f32.gmra.mrb[0].mxu0 %v3503
      %v4241 = vpop.f32.mrb[0].mxu0
      %v4242 = vadd.f32 %v3857, %v4241
      %v4243 = vpop.f32.mrb[0].mxu0
      %4244 = vmatprep.mubr.f32.mxu0 0.0
      %4245 = vmatmul.mubr.f32.gmra.mrb[0].mxu0 %v3506
      %v4246 = vpop.f32.mrb[0].mxu0
      %v4247 = vadd.f32 %v3862, %v4246
      %v4248 = vpop.f32.mrb[0].mxu0
      %4249 = vmatprep.mubr.f32.mxu0 0.0
      %4250 = vmatmul.mubr.f32.gmra.mrb[0].mxu0 %v3509
      %v4251 = vpop.f32.mrb[0].mxu0
      %v4252 = vadd.f32 %v3867, %v4251
      %v4253 = vpop.f32.mrb[0].mxu0
      %4254 = vmatprep.mubr.f32.mxu0 0.0
      %4255 = vmatmul.mubr.f32.gmra.mrb[0].mxu0 %v3512
      %v4256 = vpop.f32.mrb[0].mxu0
      %v4257 = vadd.f32 %v3872, %v4256
      %v4258 = vpop.f32.mrb[0].mxu0
      %4259 = vmatprep.mubr.f32.mxu0 0.0
      %4260 = vmatmul.mubr.f32.gmra.mrb[0].mxu0 %v3515
      %v4261 = vpop.f32.mrb[0].mxu0
      %v4262 = vadd.f32 %v3877, %v4261
      %v4263 = vpop.f32.mrb[0].mxu0
      %4264 = vmatprep.mubr.f32.mxu0 0.0
      %4265 = vmatmul.mubr.f32.gmra.mrb[0].mxu0 %v3518
      %v4266 = vpop.f32.mrb[0].mxu0
      %v4267 = vadd.f32 %v3882, %v4266
      %v4268 = vpop.f32.mrb[0].mxu0
      %4269 = vmatprep.mubr.f32.mxu0 0.0
      %4270 = vmatmul.mubr.f32.gmra.mrb[0].mxu0 %v3521
      %v4271 = vpop.f32.mrb[0].mxu0
      %v4272 = vadd.f32 %v3887, %v4271
      %v4273 = vpop.f32.mrb[0].mxu0
      %4274 = vmatprep.mubr.f32.mxu0 0.0
      %4275 = vmatmul.mubr.f32.gmra.mrb[0].mxu0 %v3524
      %v4276 = vpop.f32.mrb[0].mxu0
      %v4277 = vadd.f32 %v3892, %v4276
      %v4278 = vpop.f32.mrb[0].mxu0
      %4279 = vmatprep.mubr.f32.mxu0 0.0
      %4280 = vmatmul.mubr.f32.gmra.mrb[0].mxu0 %v3527
      %v4281 = vpop.f32.mrb[0].mxu0
      %v4282 = vadd.f32 %v3897, %v4281
      %v4283 = vpop.f32.mrb[0].mxu0
      %4284 = vmatprep.mubr.f32.mxu0 0.0
      %4285 = vmatmul.mubr.f32.gmra.mrb[0].mxu0 %v3530
      %v4286 = vpop.f32.mrb[0].mxu0
      %v4287 = vadd.f32 %v3902, %v4286
      %v4288 = vpop.f32.mrb[0].mxu0
      %4289 = vmatprep.mubr.f32.mxu0 0.0
      %4290 = vmatmul.mubr.f32.gmra.mrb[0].mxu0 %v3533
      %v4291 = vpop.f32.mrb[0].mxu0
      %v4292 = vadd.f32 %v3907, %v4291
      %v4293 = vpop.f32.mrb[0].mxu0
      %4294 = vmatprep.mubr.f32.mxu0 0.0
      %4295 = vmatmul.mubr.f32.gmra.mrb[0].mxu0 %v3536
      %v4296 = vpop.f32.mrb[0].mxu0
      %v4297 = vadd.f32 %v3912, %v4296
      %v4298 = vpop.f32.mrb[0].mxu0
      %4299 = vmatprep.mubr.f32.mxu0 0.0
      %4300 = vmatmul.mubr.f32.gmra.mrb[0].mxu0 %v3539
      %v4301 = vpop.f32.mrb[0].mxu0
      %v4302 = vadd.f32 %v3917, %v4301
      %v4303 = vpop.f32.mrb[0].mxu0
      %4304 = vmatprep.mubr.f32.mxu0 0.0
      %4305 = vmatmul.mubr.f32.gmra.mrb[0].mxu0 %v3542
      %v4306 = vpop.f32.mrb[0].mxu0
      %v4307 = vadd.f32 %v3922, %v4306
      %v4308 = vpop.f32.mrb[0].mxu0
      %4309 = vmatprep.mubr.f32.mxu0 0.0
      %4310 = vmatmul.mubr.f32.gmra.mrb[0].mxu0 %v3545
      %v4311 = vpop.f32.mrb[0].mxu0
      %v4312 = vadd.f32 %v3927, %v4311
      %v4313 = vpop.f32.mrb[0].mxu0
      %4314 = vmatprep.mubr.f32.mxu0 0.0
      %4315 = vmatmul.mubr.f32.gmra.mrb[0].mxu0 %v3548
      %v4316 = vpop.f32.mrb[0].mxu0
      %v4317 = vadd.f32 %v3932, %v4316
      %v4318 = vpop.f32.mrb[0].mxu0
      %4319 = vmatprep.mubr.f32.mxu0 0.0
      %4320 = vmatmul.mubr.f32.gmra.mrb[0].mxu0 %v3551
      %v4321 = vpop.f32.mrb[0].mxu0
      %v4322 = vadd.f32 %v3937, %v4321
      %v4323 = vpop.f32.mrb[0].mxu0
      %4324 = vmatprep.mubr.f32.mxu0 0.0
      %4325 = vmatmul.mubr.f32.gmra.mrb[0].mxu0 %v3554
      %v4326 = vpop.f32.mrb[0].mxu0
      %v4327 = vadd.f32 %v3942, %v4326
      %v4328 = vpop.f32.mrb[0].mxu0
      %4329 = vdwg.mxu0
      %vm4330 = vcmask 261120
      %4331 = vst.msk [vmem:[%s170] sm:$0xff] %vm4330, %v4012
      %4332 = vst.msk [vmem:[%s170 + $0x8] sm:$0xff] %vm4330, %v4017
      %4333 = vst.msk [vmem:[%s170 + $0x10] sm:$0xff] %vm4330, %v4022
      %4334 = vst.msk [vmem:[%s170 + $0x18] sm:$0xff] %vm4330, %v4027
      %4335 = vst.msk [vmem:[%s170 + $0x20] sm:$0xff] %vm4330, %v4032
      %4336 = vst.msk [vmem:[%s170 + $0x28] sm:$0xff] %vm4330, %v4037
      %4337 = vst.msk [vmem:[%s170 + $0x30] sm:$0xff] %vm4330, %v4042
      %4338 = vst.msk [vmem:[%s170 + $0x38] sm:$0xff] %vm4330, %v4047
      %4339 = vst.msk [vmem:[%s170 + $0x40] sm:$0xff] %vm4330, %v4052
      %4340 = vst.msk [vmem:[%s170 + $0x48] sm:$0xff] %vm4330, %v4057
      %4341 = vst.msk [vmem:[%s170 + $0x50] sm:$0xff] %vm4330, %v4062
      %4342 = vst.msk [vmem:[%s170 + $0x58] sm:$0xff] %vm4330, %v4067
      %4343 = vst.msk [vmem:[%s170 + $0x60] sm:$0xff] %vm4330, %v4072
      %4344 = vst.msk [vmem:[%s170 + $0x68] sm:$0xff] %vm4330, %v4077
      %4345 = vst.msk [vmem:[%s170 + $0x70] sm:$0xff] %vm4330, %v4082
      %4346 = vst.msk [vmem:[%s170 + $0x78] sm:$0xff] %vm4330, %v4087
      %4347 = vst.msk [vmem:[%s170 + $0x80] sm:$0xff] %vm4330, %v4092
      %4348 = vst.msk [vmem:[%s170 + $0x88] sm:$0xff] %vm4330, %v4097
      %4349 = vst.msk [vmem:[%s170 + $0x90] sm:$0xff] %vm4330, %v4102
      %4350 = vst.msk [vmem:[%s170 + $0x98] sm:$0xff] %vm4330, %v4107
      %4351 = vst.msk [vmem:[%s170 + $0xa0] sm:$0xff] %vm4330, %v4112
      %4352 = vst.msk [vmem:[%s170 + $0xa8] sm:$0xff] %vm4330, %v4117
      %4353 = vst.msk [vmem:[%s170 + $0xb0] sm:$0xff] %vm4330, %v4122
      %4354 = vst.msk [vmem:[%s170 + $0xb8] sm:$0xff] %vm4330, %v4127
      %4355 = vst.msk [vmem:[%s170 + $0xc0] sm:$0xff] %vm4330, %v4132
      %4356 = vst.msk [vmem:[%s170 + $0xc8] sm:$0xff] %vm4330, %v4137
      %4357 = vst.msk [vmem:[%s170 + $0xd0] sm:$0xff] %vm4330, %v4142
      %4358 = vst.msk [vmem:[%s170 + $0xd8] sm:$0xff] %vm4330, %v4147
      %4359 = vst.msk [vmem:[%s170 + $0xe0] sm:$0xff] %vm4330, %v4152
      %4360 = vst.msk [vmem:[%s170 + $0xe8] sm:$0xff] %vm4330, %v4157
      %4361 = vst.msk [vmem:[%s170 + $0xf0] sm:$0xff] %vm4330, %v4162
      %4362 = vst.msk [vmem:[%s170 + $0xf8] sm:$0xff] %vm4330, %v4167
      %4363 = vst.msk [vmem:[%s170 + $0x100] sm:$0xff] %vm4330, %v4172
      %4364 = vst.msk [vmem:[%s170 + $0x108] sm:$0xff] %vm4330, %v4177
      %4365 = vst.msk [vmem:[%s170 + $0x110] sm:$0xff] %vm4330, %v4182
      %4366 = vst.msk [vmem:[%s170 + $0x118] sm:$0xff] %vm4330, %v4187
      %4367 = vst.msk [vmem:[%s170 + $0x120] sm:$0xff] %vm4330, %v4192
      %4368 = vst.msk [vmem:[%s170 + $0x128] sm:$0xff] %vm4330, %v4197
      %4369 = vst.msk [vmem:[%s170 + $0x130] sm:$0xff] %vm4330, %v4202
      %4370 = vst.msk [vmem:[%s170 + $0x138] sm:$0xff] %vm4330, %v4207
      %4371 = vst.msk [vmem:[%s170 + $0x140] sm:$0xff] %vm4330, %v4212
      %4372 = vst.msk [vmem:[%s170 + $0x148] sm:$0xff] %vm4330, %v4217
      %4373 = vst.msk [vmem:[%s170 + $0x150] sm:$0xff] %vm4330, %v4222
      %4374 = vst.msk [vmem:[%s170 + $0x158] sm:$0xff] %vm4330, %v4227
      %4375 = vst.msk [vmem:[%s170 + $0x160] sm:$0xff] %vm4330, %v4232
      %4376 = vst.msk [vmem:[%s170 + $0x168] sm:$0xff] %vm4330, %v4237
      %4377 = vst.msk [vmem:[%s170 + $0x170] sm:$0xff] %vm4330, %v4242
      %4378 = vst.msk [vmem:[%s170 + $0x178] sm:$0xff] %vm4330, %v4247
      %4379 = vst.msk [vmem:[%s170 + $0x180] sm:$0xff] %vm4330, %v4252
      %4380 = vst.msk [vmem:[%s170 + $0x188] sm:$0xff] %vm4330, %v4257
      %4381 = vst.msk [vmem:[%s170 + $0x190] sm:$0xff] %vm4330, %v4262
      %4382 = vst.msk [vmem:[%s170 + $0x198] sm:$0xff] %vm4330, %v4267
      %4383 = vst.msk [vmem:[%s170 + $0x1a0] sm:$0xff] %vm4330, %v4272
      %4384 = vst.msk [vmem:[%s170 + $0x1a8] sm:$0xff] %vm4330, %v4277
      %4385 = vst.msk [vmem:[%s170 + $0x1b0] sm:$0xff] %vm4330, %v4282
      %4386 = vst.msk [vmem:[%s170 + $0x1b8] sm:$0xff] %vm4330, %v4287
      %4387 = vst.msk [vmem:[%s170 + $0x1c0] sm:$0xff] %vm4330, %v4292
      %4388 = vst.msk [vmem:[%s170 + $0x1c8] sm:$0xff] %vm4330, %v4297
      %4389 = vst.msk [vmem:[%s170 + $0x1d0] sm:$0xff] %vm4330, %v4302
      %4390 = vst.msk [vmem:[%s170 + $0x1d8] sm:$0xff] %vm4330, %v4307
      %4391 = vst.msk [vmem:[%s170 + $0x1e0] sm:$0xff] %vm4330, %v4312
      %4392 = vst.msk [vmem:[%s170 + $0x1e8] sm:$0xff] %vm4330, %v4317
      %4393 = vst.msk [vmem:[%s170 + $0x1f0] sm:$0xff] %vm4330, %v4322
      %4394 = vst.msk [vmem:[%s170 + $0x1f8] sm:$0xff] %vm4330, %v4327
      %p4395 = scmp.lt.s32.totalorder %s14, 3
      %s4396 = scalar_select %p4395, %s14, 3
      %s4397 = smul.addr %s4396, 64
      %s4398 = smul.addr %s4397, 8
      %s4399 = scalar_lea.vmem %s3, %s4398
      // Predicated region
      $region33: #{bcrnn_forward.2} parent=31 // pred_check
        %p4400 = pneg %p100
      $region34: #{bcrnn_forward.2} parent=31 // pred_check_branch
        %4402 = sbr.rel (%p4400) target = $region36
      $region35: #{bcrnn_forward.2} parent=31 // pred_region
        _
      $region36: #{bcrnn_forward.2} parent=31 // pred_fallthru
        _
    $region32: #{bcrnn_forward.2} parent=5 // pred_fallthru
      _
    %p4403 = scmp.le.s32.totalorder 2, %s9
    // Predicated region
    $region37: #{bcrnn_forward.2} parent=5 // pred_check
      %p4404 = pneg %p4403
    $region38: #{bcrnn_forward.2} parent=5 // pred_check_branch
      %4406 = sbr.rel (%p4404) target = $region40
    $region39: #{bcrnn_forward.2} parent=5 // pred_region
      %s4407 = ssub.s32 %s9, 2
      // Predicated region
      $region41: #{bcrnn_forward.2} parent=39 // pred_check
        %p4408 = pneg %p106
      $region42: #{bcrnn_forward.2} parent=39 // pred_check_branch
        %4410 = sbr.rel (%p4408) target = $region44
      $region43: #{bcrnn_forward.2} parent=39 // pred_region
        %p4411 = scmp.lt.s32.totalorder %s15, 3
        %s4412 = scalar_select %p4411, %s15, 3
        %s4413 = smul.addr %s4412, 64
        %s4414 = smul.addr %s4413, 8
        %s4415 = scalar_lea.vmem %s3, %s4414
      $region44: #{bcrnn_forward.2} parent=39 // pred_fallthru
        _
    $region40: #{bcrnn_forward.2} parent=5 // pred_fallthru
      _
  $region6: #{bcrnn_forward.2} parent=0 // loop_footer
    %s13 = sadd.s32 1, %s9
  $region7: #{bcrnn_forward.2} parent=0 // loop_footer_branch
    %8 = sbr.rel target = $region3
  $region8: #{bcrnn_forward.2} parent=0 // loop_exit
    _

// kernel: bcrnn_forward.3
$region0: #{bcrnn_forward.3}
  #allocation0 [shape = 'u32[]', space=smem, size = 0x4, offset = 0x4, fixed_abs, tag = 'smem constant byte address 0x4 - core index']
  #allocation1 [shape = 'u32[144,128]{1,0:T(1,128)}', space=vmem, size = 0x12000, scoped, tag = 'internal scratch']
  #allocation2 [shape = 'f32[2,18,18,32]{3,2,1,0:T(8,128)}', space=vmem, size = 0x6c000, scoped, tag = 'scratch operand']
  %s0 = inlined_call_operand.vmem [shape: f32[4,512,32], index: 0, kind: input, shape index: {}]
  %s1 = inlined_call_operand.vmem [shape: f32[288,32], index: 1, kind: input, shape index: {}]
  %s2 = inlined_call_operand.vmem [shape: f32[1,32], index: 2, kind: input, shape index: {}]
  %s3 = inlined_call_operand.vmem [shape: f32[1,32], index: 3, kind: input, shape index: {}]
  %s4 = inlined_call_operand.vmem [shape: f32[2,4,2,32,256], index: 4, kind: output, shape index: {}]
  %s5 = sld [smem:[#allocation0]]
  $region60: #{bcrnn_forward.3} parent=0
    _
  %s7 = ssub.s32 1, %s5
  %s8 = scalar_select 0, %s7, %s5
  loop: start=0, step=1, limit=4
  $region2: #{bcrnn_forward.3} parent=0 // loop_pre_header
    _
  $region3: #{bcrnn_forward.3} parent=0 // loop_header
    %s10 = sphi 0, %s14
    %p11 = scmp.ge.s32.totalorder %s10, 4
    %s17 = sphi 0, %s29
    %s18 = sphi 0, %s25
    %s19 = sphi 0, %s17
    %s20 = sphi 0, %s18
    %s21 = sphi 0, %s19
    %s22 = sphi 0, %s20
    %s42 = sphi 0, %s44
    %s45 = sphi 0, %s42
    %s46 = sphi 0, %s45
    %s62 = sphi 0, %s46
    %s66 = sphi 0, %s66
    %s68 = sphi 0, %s66
    %s69 = sphi 0, %s68
    %s83 = sphi 0, %s69
    %s87 = sphi 0, %s87
    %s89 = sphi 0, %s87
    %s90 = sphi 0, %s89
    %s104 = sphi 0, %s90
    %s108 = sphi 0, %s108
    %s110 = sphi 0, %s108
    %s111 = sphi 0, %s110
    %s125 = sphi 0, %s111
    %s143 = sphi 0, %s145
    %s146 = sphi 0, %s143
    %s147 = sphi 0, %s146
    %s163 = sphi 0, %s147
  $region4: #{bcrnn_forward.3} parent=0 // loop_header_branch
    %13 = sbr.rel (%p11) target = $region8
  $region5: #{bcrnn_forward.3} parent=0 // loop_body
    %s15 = ssub.s32 %s10, 1
    %s16 = ssub.s32 %s10, 2
    %s23 = sadd.s32 1, %s18
    %p24 = scmp.ge.s32.totalorder %s23, 1
    %s25 = scalar_select %p24, 0, %s23
    %s26 = sadd.s32 1, %s17
    %s27 = scalar_select %p24, %s26, %s17
    %p28 = scmp.ge.s32.totalorder %s27, 2
    %s29 = scalar_select %p28, 0, %s27
    %s30 = ssub.s32 1, %s17
    %s31 = smul.u32 %s18, %s30
    %s32 = ssub.s32 0, %s18
    %s33 = smul.u32 %s32, %s17
    %s34 = sadd.s32 %s31, %s33
    %s35 = ssub.s32 1, %s29
    %s36 = smul.u32 %s25, %s35
    %s37 = ssub.s32 0, %s25
    %s38 = smul.u32 %s37, %s29
    %s39 = sadd.s32 %s36, %s38
    %s40 = ssub.s32 %s34, %s39
    %p41 = scmp.eq.s32.totalorder %s40, 0
    %s43 = sadd.s32 %s42, 1
    %s44 = scalar_select %p41, %s42, %s43
    %p47 = pneg %p41
    %p48 = scmp.eq.s32.totalorder %s10, 1
    %p49 = por %p47, %p48
    %p50 = scmp.ne.s32.totalorder %s42, %s45
    %p51 = scmp.eq.s32.totalorder %s10, 0
    %p52 = por %p50, %p51
    %p53 = scmp.ne.s32.totalorder %s42, %s45
    %p54 = scmp.eq.s32.totalorder %s15, 1
    %p55 = por %p53, %p54
    %p56 = scmp.ne.s32.totalorder %s45, %s46
    %p57 = scmp.eq.s32.totalorder %s15, 0
    %p58 = por %p56, %p57
    %p59 = scmp.ne.s32.totalorder %s45, %s46
    %p60 = scmp.eq.s32.totalorder %s16, 1
    %p61 = por %p59, %p60
    %p63 = scmp.ne.s32.totalorder %s46, %s62
    %p64 = scmp.eq.s32.totalorder %s16, 0
    %p65 = por %p63, %p64
    %s67 = sadd.s32 %s66, 1
    %p70 = scmp.eq.s32.totalorder %s10, 1
    %p71 = scmp.ne.s32.totalorder %s66, %s68
    %p72 = scmp.eq.s32.totalorder %s10, 0
    %p73 = por %p71, %p72
    %p74 = scmp.ne.s32.totalorder %s66, %s68
    %p75 = scmp.eq.s32.totalorder %s15, 1
    %p76 = por %p74, %p75
    %p77 = scmp.ne.s32.totalorder %s68, %s69
    %p78 = scmp.eq.s32.totalorder %s15, 0
    %p79 = por %p77, %p78
    %p80 = scmp.ne.s32.totalorder %s68, %s69
    %p81 = scmp.eq.s32.totalorder %s16, 1
    %p82 = por %p80, %p81
    %p84 = scmp.ne.s32.totalorder %s69, %s83
    %p85 = scmp.eq.s32.totalorder %s16, 0
    %p86 = por %p84, %p85
    %s88 = sadd.s32 %s87, 1
    %p91 = scmp.eq.s32.totalorder %s10, 1
    %p92 = scmp.ne.s32.totalorder %s87, %s89
    %p93 = scmp.eq.s32.totalorder %s10, 0
    %p94 = por %p92, %p93
    %p95 = scmp.ne.s32.totalorder %s87, %s89
    %p96 = scmp.eq.s32.totalorder %s15, 1
    %p97 = por %p95, %p96
    %p98 = scmp.ne.s32.totalorder %s89, %s90
    %p99 = scmp.eq.s32.totalorder %s15, 0
    %p100 = por %p98, %p99
    %p101 = scmp.ne.s32.totalorder %s89, %s90
    %p102 = scmp.eq.s32.totalorder %s16, 1
    %p103 = por %p101, %p102
    %p105 = scmp.ne.s32.totalorder %s90, %s104
    %p106 = scmp.eq.s32.totalorder %s16, 0
    %p107 = por %p105, %p106
    %s109 = sadd.s32 %s108, 1
    %p112 = scmp.eq.s32.totalorder %s10, 1
    %p113 = scmp.ne.s32.totalorder %s108, %s110
    %p114 = scmp.eq.s32.totalorder %s10, 0
    %p115 = por %p113, %p114
    %p116 = scmp.ne.s32.totalorder %s108, %s110
    %p117 = scmp.eq.s32.totalorder %s15, 1
    %p118 = por %p116, %p117
    %p119 = scmp.ne.s32.totalorder %s110, %s111
    %p120 = scmp.eq.s32.totalorder %s15, 0
    %p121 = por %p119, %p120
    %p122 = scmp.ne.s32.totalorder %s110, %s111
    %p123 = scmp.eq.s32.totalorder %s16, 1
    %p124 = por %p122, %p123
    %p126 = scmp.ne.s32.totalorder %s111, %s125
    %p127 = scmp.eq.s32.totalorder %s16, 0
    %p128 = por %p126, %p127
    %s129 = ssub.s32 1, %s17
    %s130 = smul.u32 %s18, %s129
    %s131 = ssub.s32 0, %s18
    %s132 = smul.u32 %s131, %s17
    %s133 = sadd.s32 %s130, %s132
    %s134 = ssub.s32 1, %s29
    %s135 = smul.u32 %s25, %s134
    %s136 = ssub.s32 0, %s25
    %s137 = smul.u32 %s136, %s29
    %s138 = sadd.s32 %s135, %s137
    %s139 = ssub.s32 %s17, %s29
    %s140 = ssub.s32 %s133, %s138
    %s141 = sor.u32 %s139, %s140
    %p142 = scmp.eq.s32.totalorder %s141, 0
    %s144 = sadd.s32 %s143, 1
    %s145 = scalar_select %p142, %s143, %s144
    %p148 = pneg %p142
    %p149 = scmp.eq.s32.totalorder %s10, 1
    %p150 = por %p148, %p149
    %p151 = scmp.ne.s32.totalorder %s143, %s146
    %p152 = scmp.eq.s32.totalorder %s10, 0
    %p153 = por %p151, %p152
    %p154 = scmp.ne.s32.totalorder %s143, %s146
    %p155 = scmp.eq.s32.totalorder %s15, 1
    %p156 = por %p154, %p155
    %p157 = scmp.ne.s32.totalorder %s146, %s147
    %p158 = scmp.eq.s32.totalorder %s15, 0
    %p159 = por %p157, %p158
    %p160 = scmp.ne.s32.totalorder %s146, %s147
    %p161 = scmp.eq.s32.totalorder %s16, 1
    %p162 = por %p160, %p161
    %p164 = scmp.ne.s32.totalorder %s147, %s163
    %p165 = scmp.eq.s32.totalorder %s16, 0
    %p166 = por %p164, %p165
    %p167 = scmp.le.s32.totalorder 1, %s10
    %p168 = scmp.lt.s32.totalorder %s10, 3
    %p169 = pnand %p167, %p168
    %p170 = pneg %p169
    // Predicated region
    $region9: #{bcrnn_forward.3} parent=5 // pred_check
      _
    $region10: #{bcrnn_forward.3} parent=5 // pred_check_branch
      %172 = sbr.rel (%p169) target = $region12
    $region11: #{bcrnn_forward.3} parent=5 // pred_region
      %s173 = ssub.s32 %s10, 1
      // Predicated region
      $region13: #{bcrnn_forward.3} parent=11 // pred_check
        %p174 = pneg %p79
      $region14: #{bcrnn_forward.3} parent=11 // pred_check_branch
        %176 = sbr.rel (%p174) target = $region16
      $region15: #{bcrnn_forward.3} parent=11 // pred_region
        _
      $region16: #{bcrnn_forward.3} parent=11 // pred_fallthru
        _
      // Predicated region
      $region17: #{bcrnn_forward.3} parent=11 // pred_check
        %p177 = pneg %p100
      $region18: #{bcrnn_forward.3} parent=11 // pred_check_branch
        %179 = sbr.rel (%p177) target = $region20
      $region19: #{bcrnn_forward.3} parent=11 // pred_region
        _
      $region20: #{bcrnn_forward.3} parent=11 // pred_fallthru
        _
      // Predicated region
      $region21: #{bcrnn_forward.3} parent=11 // pred_check
        %p180 = pneg %p121
      $region22: #{bcrnn_forward.3} parent=11 // pred_check_branch
        %182 = sbr.rel (%p180) target = $region24
      $region23: #{bcrnn_forward.3} parent=11 // pred_region
        _
      $region24: #{bcrnn_forward.3} parent=11 // pred_fallthru
        _
    $region12: #{bcrnn_forward.3} parent=5 // pred_fallthru
      _
    %p183 = scmp.lt.s32.totalorder %s10, 2
    // Predicated region
    $region25: #{bcrnn_forward.3} parent=5 // pred_check
      %p184 = pneg %p183
    $region26: #{bcrnn_forward.3} parent=5 // pred_check_branch
      %186 = sbr.rel (%p184) target = $region28
    $region27: #{bcrnn_forward.3} parent=5 // pred_region
      // Predicated region
      $region29: #{bcrnn_forward.3} parent=27 // pred_check
        %p187 = pneg %p52
      $region30: #{bcrnn_forward.3} parent=27 // pred_check_branch
        %189 = sbr.rel (%p187) target = $region32
      $region31: #{bcrnn_forward.3} parent=27 // pred_region
        %s190 = ssub.s32 1, %s17
        %s191 = smul.u32 %s18, %s190
        %s192 = ssub.s32 0, %s18
        %s193 = smul.u32 %s192, %s17
        %s194 = sadd.s32 %s191, %s193
        %s195 = smul.u32 4, %s194
        %p196 = scmp.lt.s32.totalorder %s195, 3
        %s197 = scalar_select %p196, %s195, 3
        %s198 = smul.addr %s197, 64
        %s199 = smul.addr %s198, 8
        %s200 = scalar_lea.vmem %s0, %s199
        %s201 = ssub.s32 1, %s17
        %s202 = smul.u32 %s18, %s201
        %s203 = ssub.s32 0, %s18
        %s204 = smul.u32 %s203, %s17
        %s205 = sadd.s32 %s202, %s204
        %s206 = smul.u32 4, %s205
      $region32: #{bcrnn_forward.3} parent=27 // pred_fallthru
        _
    $region28: #{bcrnn_forward.3} parent=5 // pred_fallthru
      _
    %p207 = scmp.le.s32.totalorder 1, %s10
    %p208 = scmp.lt.s32.totalorder %s10, 3
    %p209 = pnand %p207, %p208
    %p210 = pneg %p209
    // Predicated region
    $region33: #{bcrnn_forward.3} parent=5 // pred_check
      _
    $region34: #{bcrnn_forward.3} parent=5 // pred_check_branch
      %212 = sbr.rel (%p209) target = $region36
    $region35: #{bcrnn_forward.3} parent=5 // pred_region
      %s213 = ssub.s32 %s10, 1
      %s214 = ssub.s32 1, %s19
      %s215 = smul.u32 %s20, %s214
      %s216 = ssub.s32 0, %s20
      %s217 = smul.u32 %s216, %s19
      %s218 = sadd.s32 %s215, %s217
      %s219 = smul.u32 4, %s218
      %p220 = scmp.lt.s32.totalorder %s219, 3
      %s221 = scalar_select %p220, %s219, 3
      %s222 = smul.addr %s221, 64
      %s223 = smul.addr %s222, 8
      %s224 = scalar_lea.vmem %s0, %s223
      %p225 = pneg %p58
      %p226 = pneg %p55
      %p227 = pneg %p79
      %p228 = pneg %p76
      %p229 = pneg %p100
      %p230 = pneg %p97
      %p231 = pneg %p121
      %p232 = pneg %p118
      %p233 = pneg %p159
      %p234 = pneg %p156
      %s235 = ssub.s32 1, %s19
      %s236 = smul.u32 %s20, %s235
      %s237 = ssub.s32 0, %s20
      %s238 = smul.u32 %s237, %s19
      %s239 = sadd.s32 %s236, %s238
      %s240 = smul.u32 4, %s239
      %p241 = scmp.lt.s32.totalorder %s19, 1
      %s242 = scalar_select %p241, %s19, 1
      %p243 = scmp.lt.s32.totalorder %s240, 3
      %s244 = scalar_select %p243, %s240, 3
      %s245 = smul.addr %s244, 16
      %s246 = smul.addr %s242, 64
      %s247 = sadd.s32 %s245, %s246
      %s248 = smul.addr %s247, 8
      %s249 = scalar_lea.vmem %s4, %s248
      %s250 = ssub.s32 1, %s19
      %s251 = smul.u32 %s20, %s250
      %s252 = ssub.s32 0, %s20
      %s253 = smul.u32 %s252, %s19
      %s254 = sadd.s32 %s251, %s253
      %s255 = smul.u32 4, %s254
      %p256 = scmp.lt.s32.totalorder %s255, 3
      %s257 = scalar_select %p256, %s255, 3
      %s258 = smul.addr %s257, 64
      %s259 = smul.addr %s258, 8
      %s260 = scalar_lea.vmem %s0, %s259
      %s261 = ssub.s32 1, %s19
      %s262 = smul.u32 %s20, %s261
      %s263 = ssub.s32 0, %s20
      %s264 = smul.u32 %s263, %s19
      %s265 = sadd.s32 %s262, %s264
      %s266 = smul.u32 4, %s265
      %s267 = ssub.s32 1, %s19
      %s268 = smul.u32 %s20, %s267
      %s269 = ssub.s32 0, %s20
      %s270 = smul.u32 %s269, %s19
      %s271 = sadd.s32 %s268, %s270
      %s272 = smul.u32 4, %s271
      %p273 = scmp.lt.s32.totalorder %s19, 1
      %s274 = scalar_select %p273, %s19, 1
      %p275 = scmp.lt.s32.totalorder %s272, 3
      %s276 = scalar_select %p275, %s272, 3
      %s277 = smul.addr %s276, 16
      %s278 = smul.addr %s274, 64
      %s279 = sadd.s32 %s277, %s278
      %s280 = smul.addr %s279, 8
      %s281 = scalar_lea.vmem %s4, %s280
      %s282 = ssub.s32 1, %s19
      %s283 = smul.u32 %s20, %s282
      %s284 = ssub.s32 0, %s20
      %s285 = smul.u32 %s284, %s19
      %s286 = sadd.s32 %s283, %s285
      %s287 = smul.u32 4, %s286
      %p288 = scmp.eq.s32.totalorder %s20, 0
      // Predicated region
      $region37: #{bcrnn_forward.3} parent=35 // pred_check
        %p289 = pneg %p288
      $region38: #{bcrnn_forward.3} parent=35 // pred_check_branch
        %291 = sbr.rel (%p289) target = $region40
      $region39: #{bcrnn_forward.3} parent=35 // pred_region
        %vm292 = vcmask 261120
        %293 = vst.msk [vmem:[#allocation2] sm:$0xff] %vm292, 0.0
        %294 = vst.msk [vmem:[#allocation2 + $0x8] sm:$0xff] %vm292, 0.0
        %vm295 = vcmask 254976
        %296 = vst.msk [vmem:[#allocation2 + $0x10] sm:$0x3] %vm295, 0.0
        %297 = vst.msk [vmem:[#allocation2 + $0x18] sm:$0xff] %vm292, 0.0
        %298 = vst.msk [vmem:[#allocation2 + $0x20] sm:$0xff] %vm292, 0.0
        %299 = vst.msk [vmem:[#allocation2 + $0x28] sm:$0x3] %vm295, 0.0
        %300 = vst.msk [vmem:[#allocation2 + $0x30] sm:$0xff] %vm292, 0.0
        %301 = vst.msk [vmem:[#allocation2 + $0x38] sm:$0xff] %vm292, 0.0
        %302 = vst.msk [vmem:[#allocation2 + $0x40] sm:$0x3] %vm295, 0.0
        %303 = vst.msk [vmem:[#allocation2 + $0x48] sm:$0xff] %vm292, 0.0
        %304 = vst.msk [vmem:[#allocation2 + $0x50] sm:$0xff] %vm292, 0.0
        %305 = vst.msk [vmem:[#allocation2 + $0x58] sm:$0x3] %vm295, 0.0
        %306 = vst.msk [vmem:[#allocation2 + $0x60] sm:$0xff] %vm292, 0.0
        %307 = vst.msk [vmem:[#allocation2 + $0x68] sm:$0xff] %vm292, 0.0
        %308 = vst.msk [vmem:[#allocation2 + $0x70] sm:$0x3] %vm295, 0.0
        %309 = vst.msk [vmem:[#allocation2 + $0x78] sm:$0xff] %vm292, 0.0
        %310 = vst.msk [vmem:[#allocation2 + $0x80] sm:$0xff] %vm292, 0.0
        %311 = vst.msk [vmem:[#allocation2 + $0x88] sm:$0x3] %vm295, 0.0
        %312 = vst.msk [vmem:[#allocation2 + $0x90] sm:$0xff] %vm292, 0.0
        %313 = vst.msk [vmem:[#allocation2 + $0x98] sm:$0xff] %vm292, 0.0
        %314 = vst.msk [vmem:[#allocation2 + $0xa0] sm:$0x3] %vm295, 0.0
        %315 = vst.msk [vmem:[#allocation2 + $0xa8] sm:$0xff] %vm292, 0.0
        %316 = vst.msk [vmem:[#allocation2 + $0xb0] sm:$0xff] %vm292, 0.0
        %317 = vst.msk [vmem:[#allocation2 + $0xb8] sm:$0x3] %vm295, 0.0
        %318 = vst.msk [vmem:[#allocation2 + $0xc0] sm:$0xff] %vm292, 0.0
        %319 = vst.msk [vmem:[#allocation2 + $0xc8] sm:$0xff] %vm292, 0.0
        %320 = vst.msk [vmem:[#allocation2 + $0xd0] sm:$0x3] %vm295, 0.0
        %321 = vst.msk [vmem:[#allocation2 + $0xd8] sm:$0xff] %vm292, 0.0
        %322 = vst.msk [vmem:[#allocation2 + $0xe0] sm:$0xff] %vm292, 0.0
        %323 = vst.msk [vmem:[#allocation2 + $0xe8] sm:$0x3] %vm295, 0.0
        %324 = vst.msk [vmem:[#allocation2 + $0xf0] sm:$0xff] %vm292, 0.0
        %325 = vst.msk [vmem:[#allocation2 + $0xf8] sm:$0xff] %vm292, 0.0
        %326 = vst.msk [vmem:[#allocation2 + $0x100] sm:$0x3] %vm295, 0.0
        %327 = vst.msk [vmem:[#allocation2 + $0x108] sm:$0xff] %vm292, 0.0
        %328 = vst.msk [vmem:[#allocation2 + $0x110] sm:$0xff] %vm292, 0.0
        %329 = vst.msk [vmem:[#allocation2 + $0x118] sm:$0x3] %vm295, 0.0
        %330 = vst.msk [vmem:[#allocation2 + $0x120] sm:$0xff] %vm292, 0.0
        %331 = vst.msk [vmem:[#allocation2 + $0x128] sm:$0xff] %vm292, 0.0
        %332 = vst.msk [vmem:[#allocation2 + $0x130] sm:$0x3] %vm295, 0.0
        %333 = vst.msk [vmem:[#allocation2 + $0x138] sm:$0xff] %vm292, 0.0
        %334 = vst.msk [vmem:[#allocation2 + $0x140] sm:$0xff] %vm292, 0.0
        %335 = vst.msk [vmem:[#allocation2 + $0x148] sm:$0x3] %vm295, 0.0
        %336 = vst.msk [vmem:[#allocation2 + $0x150] sm:$0xff] %vm292, 0.0
        %337 = vst.msk [vmem:[#allocation2 + $0x158] sm:$0xff] %vm292, 0.0
        %338 = vst.msk [vmem:[#allocation2 + $0x160] sm:$0x3] %vm295, 0.0
        %339 = vst.msk [vmem:[#allocation2 + $0x168] sm:$0xff] %vm292, 0.0
        %340 = vst.msk [vmem:[#allocation2 + $0x170] sm:$0xff] %vm292, 0.0
        %341 = vst.msk [vmem:[#allocation2 + $0x178] sm:$0x3] %vm295, 0.0
        %342 = vst.msk [vmem:[#allocation2 + $0x180] sm:$0xff] %vm292, 0.0
        %343 = vst.msk [vmem:[#allocation2 + $0x188] sm:$0xff] %vm292, 0.0
        %344 = vst.msk [vmem:[#allocation2 + $0x190] sm:$0x3] %vm295, 0.0
        %345 = vst.msk [vmem:[#allocation2 + $0x198] sm:$0xff] %vm292, 0.0
        %346 = vst.msk [vmem:[#allocation2 + $0x1a0] sm:$0xff] %vm292, 0.0
        %347 = vst.msk [vmem:[#allocation2 + $0x1a8] sm:$0x3] %vm295, 0.0
        %348 = vst.msk [vmem:[#allocation2 + $0x1b0] sm:$0xff] %vm292, 0.0
        %349 = vst.msk [vmem:[#allocation2 + $0x1b8] sm:$0xff] %vm292, 0.0
        %350 = vst.msk [vmem:[#allocation2 + $0x1c0] sm:$0x3] %vm295, 0.0
        %351 = vst.msk [vmem:[#allocation2 + $0x1c8] sm:$0xff] %vm292, 0.0
        %352 = vst.msk [vmem:[#allocation2 + $0x1d0] sm:$0xff] %vm292, 0.0
        %353 = vst.msk [vmem:[#allocation2 + $0x1d8] sm:$0x3] %vm295, 0.0
        %354 = vst.msk [vmem:[#allocation2 + $0x1e0] sm:$0xff] %vm292, 0.0
        %355 = vst.msk [vmem:[#allocation2 + $0x1e8] sm:$0xff] %vm292, 0.0
        %356 = vst.msk [vmem:[#allocation2 + $0x1f0] sm:$0x3] %vm295, 0.0
        %357 = vst.msk [vmem:[#allocation2 + $0x1f8] sm:$0xff] %vm292, 0.0
        %358 = vst.msk [vmem:[#allocation2 + $0x200] sm:$0xff] %vm292, 0.0
        %359 = vst.msk [vmem:[#allocation2 + $0x208] sm:$0x3] %vm295, 0.0
        %360 = vst.msk [vmem:[#allocation2 + $0x210] sm:$0xff] %vm292, 0.0
        %361 = vst.msk [vmem:[#allocation2 + $0x218] sm:$0xff] %vm292, 0.0
        %362 = vst.msk [vmem:[#allocation2 + $0x220] sm:$0x3] %vm295, 0.0
        %363 = vst.msk [vmem:[#allocation2 + $0x228] sm:$0xff] %vm292, 0.0
        %364 = vst.msk [vmem:[#allocation2 + $0x230] sm:$0xff] %vm292, 0.0
        %365 = vst.msk [vmem:[#allocation2 + $0x238] sm:$0x3] %vm295, 0.0
        %366 = vst.msk [vmem:[#allocation2 + $0x240] sm:$0xff] %vm292, 0.0
        %367 = vst.msk [vmem:[#allocation2 + $0x248] sm:$0xff] %vm292, 0.0
        %368 = vst.msk [vmem:[#allocation2 + $0x250] sm:$0x3] %vm295, 0.0
        %369 = vst.msk [vmem:[#allocation2 + $0x258] sm:$0xff] %vm292, 0.0
        %370 = vst.msk [vmem:[#allocation2 + $0x260] sm:$0xff] %vm292, 0.0
        %371 = vst.msk [vmem:[#allocation2 + $0x268] sm:$0x3] %vm295, 0.0
        %372 = vst.msk [vmem:[#allocation2 + $0x270] sm:$0xff] %vm292, 0.0
        %373 = vst.msk [vmem:[#allocation2 + $0x278] sm:$0xff] %vm292, 0.0
        %374 = vst.msk [vmem:[#allocation2 + $0x280] sm:$0x3] %vm295, 0.0
        %375 = vst.msk [vmem:[#allocation2 + $0x288] sm:$0xff] %vm292, 0.0
        %376 = vst.msk [vmem:[#allocation2 + $0x290] sm:$0xff] %vm292, 0.0
        %377 = vst.msk [vmem:[#allocation2 + $0x298] sm:$0x3] %vm295, 0.0
        %378 = vst.msk [vmem:[#allocation2 + $0x2a0] sm:$0xff] %vm292, 0.0
        %379 = vst.msk [vmem:[#allocation2 + $0x2a8] sm:$0xff] %vm292, 0.0
        %380 = vst.msk [vmem:[#allocation2 + $0x2b0] sm:$0x3] %vm295, 0.0
        %381 = vst.msk [vmem:[#allocation2 + $0x2b8] sm:$0xff] %vm292, 0.0
        %382 = vst.msk [vmem:[#allocation2 + $0x2c0] sm:$0xff] %vm292, 0.0
        %383 = vst.msk [vmem:[#allocation2 + $0x2c8] sm:$0x3] %vm295, 0.0
        %384 = vst.msk [vmem:[#allocation2 + $0x2d0] sm:$0xff] %vm292, 0.0
        %385 = vst.msk [vmem:[#allocation2 + $0x2d8] sm:$0xff] %vm292, 0.0
        %386 = vst.msk [vmem:[#allocation2 + $0x2e0] sm:$0x3] %vm295, 0.0
        %387 = vst.msk [vmem:[#allocation2 + $0x2e8] sm:$0xff] %vm292, 0.0
        %388 = vst.msk [vmem:[#allocation2 + $0x2f0] sm:$0xff] %vm292, 0.0
        %389 = vst.msk [vmem:[#allocation2 + $0x2f8] sm:$0x3] %vm295, 0.0
        %390 = vst.msk [vmem:[#allocation2 + $0x300] sm:$0xff] %vm292, 0.0
        %391 = vst.msk [vmem:[#allocation2 + $0x308] sm:$0xff] %vm292, 0.0
        %392 = vst.msk [vmem:[#allocation2 + $0x310] sm:$0x3] %vm295, 0.0
        %393 = vst.msk [vmem:[#allocation2 + $0x318] sm:$0xff] %vm292, 0.0
        %394 = vst.msk [vmem:[#allocation2 + $0x320] sm:$0xff] %vm292, 0.0
        %395 = vst.msk [vmem:[#allocation2 + $0x328] sm:$0x3] %vm295, 0.0
        %396 = vst.msk [vmem:[#allocation2 + $0x330] sm:$0xff] %vm292, 0.0
        %397 = vst.msk [vmem:[#allocation2 + $0x338] sm:$0xff] %vm292, 0.0
        %398 = vst.msk [vmem:[#allocation2 + $0x340] sm:$0x3] %vm295, 0.0
        %399 = vst.msk [vmem:[#allocation2 + $0x348] sm:$0xff] %vm292, 0.0
        %400 = vst.msk [vmem:[#allocation2 + $0x350] sm:$0xff] %vm292, 0.0
        %401 = vst.msk [vmem:[#allocation2 + $0x358] sm:$0x3] %vm295, 0.0
      $region40: #{bcrnn_forward.3} parent=35 // pred_fallthru
        _
      %v402 = vld [vmem:[%s1] sm:$0xff]
      %v403 = vld [vmem:[%s1 + $0x8] sm:$0xff]
      %v404 = vld [vmem:[%s1 + $0x10] sm:$0xff]
      %v405 = vld [vmem:[%s1 + $0x18] sm:$0xff]
      %v406 = vld [vmem:[%s1 + $0x20] sm:$0xff]
      %v407 = vld [vmem:[%s1 + $0x28] sm:$0xff]
      %v408 = vld [vmem:[%s1 + $0x30] sm:$0xff]
      %v409 = vld [vmem:[%s1 + $0x38] sm:$0xff]
      %v410 = vld [vmem:[%s1 + $0x40] sm:$0xff]
      %v411 = vld [vmem:[%s1 + $0x48] sm:$0xff]
      %v412 = vld [vmem:[%s1 + $0x50] sm:$0xff]
      %v413 = vld [vmem:[%s1 + $0x58] sm:$0xff]
      %v414 = vld [vmem:[%s1 + $0x60] sm:$0xff]
      %v415 = vld [vmem:[%s1 + $0x68] sm:$0xff]
      %v416 = vld [vmem:[%s1 + $0x70] sm:$0xff]
      %v417 = vld [vmem:[%s1 + $0x78] sm:$0xff]
      %v418 = vld [vmem:[%s1 + $0x80] sm:$0xff]
      %v419 = vld [vmem:[%s1 + $0x88] sm:$0xff]
      %v420 = vld [vmem:[%s1 + $0x90] sm:$0xff]
      %v421 = vld [vmem:[%s1 + $0x98] sm:$0xff]
      %v422 = vld [vmem:[%s1 + $0xa0] sm:$0xff]
      %v423 = vld [vmem:[%s1 + $0xa8] sm:$0xff]
      %v424 = vld [vmem:[%s1 + $0xb0] sm:$0xff]
      %v425 = vld [vmem:[%s1 + $0xb8] sm:$0xff]
      %v426 = vld [vmem:[%s1 + $0xc0] sm:$0xff]
      %v427 = vld [vmem:[%s1 + $0xc8] sm:$0xff]
      %v428 = vld [vmem:[%s1 + $0xd0] sm:$0xff]
      %v429 = vld [vmem:[%s1 + $0xd8] sm:$0xff]
      %v430 = vld [vmem:[%s1 + $0xe0] sm:$0xff]
      %v431 = vld [vmem:[%s1 + $0xe8] sm:$0xff]
      %v432 = vld [vmem:[%s1 + $0xf0] sm:$0xff]
      %v433 = vld [vmem:[%s1 + $0xf8] sm:$0xff]
      %v434 = vld [vmem:[%s1 + $0x100] sm:$0xff]
      %v435 = vld [vmem:[%s1 + $0x108] sm:$0xff]
      %v436 = vld [vmem:[%s1 + $0x110] sm:$0xff]
      %v437 = vld [vmem:[%s1 + $0x118] sm:$0xff]
      %v438 = vld [vmem:[%s2] sm:$0x1]
      %v439 = vld [vmem:[%s3] sm:$0x1]
      loop: start=0, step=1, limit=4
      $region41: #{bcrnn_forward.3} parent=35 // loop_pre_header
        _
      $region42: #{bcrnn_forward.3} parent=35 // loop_header
        %s441 = sphi 0, %s445
        %p442 = scmp.ge.s32.totalorder %s441, 4
      $region43: #{bcrnn_forward.3} parent=35 // loop_header_branch
        %444 = sbr.rel (%p442) target = $region47
      $region44: #{bcrnn_forward.3} parent=35 // loop_body
        %s446 = ssub.s32 1, %s19
        %s447 = smul.u32 %s441, %s446
        %s448 = ssub.s32 3, %s441
        %s449 = smul.u32 %s448, %s19
        %s450 = sadd.s32 %s447, %s449
        %v451 = vld [vmem:[#allocation2] sm:$0xff]
        %v452 = vld [vmem:[#allocation2 + $0x8] sm:$0xff]
        %v453 = vld [vmem:[#allocation2 + $0x18] sm:$0xff]
        %v454 = vld [vmem:[#allocation2 + $0x20] sm:$0xff]
        %v455 = vld [vmem:[#allocation2 + $0x30] sm:$0xff]
        %v456 = vld [vmem:[#allocation2 + $0x38] sm:$0xff]
        %v457 = vld [vmem:[#allocation2 + $0x48] sm:$0xff]
        %v458 = vld [vmem:[#allocation2 + $0x50] sm:$0xff]
        %v459 = vld [vmem:[#allocation2 + $0x60] sm:$0xff]
        %v460 = vld [vmem:[#allocation2 + $0x68] sm:$0xff]
        %v461 = vld [vmem:[#allocation2 + $0x78] sm:$0xff]
        %v462 = vld [vmem:[#allocation2 + $0x80] sm:$0xff]
        %v463 = vld [vmem:[#allocation2 + $0x90] sm:$0xff]
        %v464 = vld [vmem:[#allocation2 + $0x98] sm:$0xff]
        %v465 = vld [vmem:[#allocation2 + $0xa8] sm:$0xff]
        %v466 = vld [vmem:[#allocation2 + $0xb0] sm:$0xff]
        %v467 = vld [vmem:[#allocation2 + $0xc0] sm:$0xff]
        %v468 = vld [vmem:[#allocation2 + $0xc8] sm:$0xff]
        %v469 = vld [vmem:[#allocation2 + $0xd8] sm:$0xff]
        %v470 = vld [vmem:[#allocation2 + $0xe0] sm:$0xff]
        %v471 = vld [vmem:[#allocation2 + $0xf0] sm:$0xff]
        %v472 = vld [vmem:[#allocation2 + $0xf8] sm:$0xff]
        %v473 = vld [vmem:[#allocation2 + $0x108] sm:$0xff]
        %v474 = vld [vmem:[#allocation2 + $0x110] sm:$0xff]
        %v475 = vld [vmem:[#allocation2 + $0x120] sm:$0xff]
        %v476 = vld [vmem:[#allocation2 + $0x128] sm:$0xff]
        %v477 = vld [vmem:[#allocation2 + $0x138] sm:$0xff]
        %v478 = vld [vmem:[#allocation2 + $0x140] sm:$0xff]
        %v479 = vld [vmem:[#allocation2 + $0x150] sm:$0xff]
        %v480 = vld [vmem:[#allocation2 + $0x158] sm:$0xff]
        %v481 = vld [vmem:[#allocation2 + $0x168] sm:$0xff]
        %v482 = vld [vmem:[#allocation2 + $0x170] sm:$0xff]
        %v483 = vld [vmem:[#allocation2 + $0x1b0] sm:$0xff]
        %v484 = vld [vmem:[#allocation2 + $0x1b8] sm:$0xff]
        %v485 = vld [vmem:[#allocation2 + $0x1c8] sm:$0xff]
        %v486 = vld [vmem:[#allocation2 + $0x1d0] sm:$0xff]
        %v487 = vld [vmem:[#allocation2 + $0x1e0] sm:$0xff]
        %v488 = vld [vmem:[#allocation2 + $0x1e8] sm:$0xff]
        %v489 = vld [vmem:[#allocation2 + $0x1f8] sm:$0xff]
        %v490 = vld [vmem:[#allocation2 + $0x200] sm:$0xff]
        %v491 = vld [vmem:[#allocation2 + $0x210] sm:$0xff]
        %v492 = vld [vmem:[#allocation2 + $0x218] sm:$0xff]
        %v493 = vld [vmem:[#allocation2 + $0x228] sm:$0xff]
        %v494 = vld [vmem:[#allocation2 + $0x230] sm:$0xff]
        %v495 = vld [vmem:[#allocation2 + $0x240] sm:$0xff]
        %v496 = vld [vmem:[#allocation2 + $0x248] sm:$0xff]
        %v497 = vld [vmem:[#allocation2 + $0x258] sm:$0xff]
        %v498 = vld [vmem:[#allocation2 + $0x260] sm:$0xff]
        %v499 = vld [vmem:[#allocation2 + $0x270] sm:$0xff]
        %v500 = vld [vmem:[#allocation2 + $0x278] sm:$0xff]
        %v501 = vld [vmem:[#allocation2 + $0x288] sm:$0xff]
        %v502 = vld [vmem:[#allocation2 + $0x290] sm:$0xff]
        %v503 = vld [vmem:[#allocation2 + $0x2a0] sm:$0xff]
        %v504 = vld [vmem:[#allocation2 + $0x2a8] sm:$0xff]
        %v505 = vld [vmem:[#allocation2 + $0x2b8] sm:$0xff]
        %v506 = vld [vmem:[#allocation2 + $0x2c0] sm:$0xff]
        %v507 = vld [vmem:[#allocation2 + $0x2d0] sm:$0xff]
        %v508 = vld [vmem:[#allocation2 + $0x2d8] sm:$0xff]
        %v509 = vld [vmem:[#allocation2 + $0x2e8] sm:$0xff]
        %v510 = vld [vmem:[#allocation2 + $0x2f0] sm:$0xff]
        %v511 = vld [vmem:[#allocation2 + $0x300] sm:$0xff]
        %v512 = vld [vmem:[#allocation2 + $0x308] sm:$0xff]
        %v513 = vld [vmem:[#allocation2 + $0x318] sm:$0xff]
        %v514 = vld [vmem:[#allocation2 + $0x320] sm:$0xff]
        %v515 = vld [vmem:[#allocation2 + $0x1] sm:$0xff]
        %v516 = vld [vmem:[#allocation2 + $0x9] sm:$0xff]
        %v517 = vld [vmem:[#allocation2 + $0x19] sm:$0xff]
        %v518 = vld [vmem:[#allocation2 + $0x21] sm:$0xff]
        %v519 = vld [vmem:[#allocation2 + $0x31] sm:$0xff]
        %v520 = vld [vmem:[#allocation2 + $0x39] sm:$0xff]
        %v521 = vld [vmem:[#allocation2 + $0x49] sm:$0xff]
        %v522 = vld [vmem:[#allocation2 + $0x51] sm:$0xff]
        %v523 = vld [vmem:[#allocation2 + $0x61] sm:$0xff]
        %v524 = vld [vmem:[#allocation2 + $0x69] sm:$0xff]
        %v525 = vld [vmem:[#allocation2 + $0x79] sm:$0xff]
        %v526 = vld [vmem:[#allocation2 + $0x81] sm:$0xff]
        %v527 = vld [vmem:[#allocation2 + $0x91] sm:$0xff]
        %v528 = vld [vmem:[#allocation2 + $0x99] sm:$0xff]
        %v529 = vld [vmem:[#allocation2 + $0xa9] sm:$0xff]
        %v530 = vld [vmem:[#allocation2 + $0xb1] sm:$0xff]
        %v531 = vld [vmem:[#allocation2 + $0xc1] sm:$0xff]
        %v532 = vld [vmem:[#allocation2 + $0xc9] sm:$0xff]
        %v533 = vld [vmem:[#allocation2 + $0xd9] sm:$0xff]
        %v534 = vld [vmem:[#allocation2 + $0xe1] sm:$0xff]
        %v535 = vld [vmem:[#allocation2 + $0xf1] sm:$0xff]
        %v536 = vld [vmem:[#allocation2 + $0xf9] sm:$0xff]
        %v537 = vld [vmem:[#allocation2 + $0x109] sm:$0xff]
        %v538 = vld [vmem:[#allocation2 + $0x111] sm:$0xff]
        %v539 = vld [vmem:[#allocation2 + $0x121] sm:$0xff]
        %v540 = vld [vmem:[#allocation2 + $0x129] sm:$0xff]
        %v541 = vld [vmem:[#allocation2 + $0x139] sm:$0xff]
        %v542 = vld [vmem:[#allocation2 + $0x141] sm:$0xff]
        %v543 = vld [vmem:[#allocation2 + $0x151] sm:$0xff]
        %v544 = vld [vmem:[#allocation2 + $0x159] sm:$0xff]
        %v545 = vld [vmem:[#allocation2 + $0x169] sm:$0xff]
        %v546 = vld [vmem:[#allocation2 + $0x171] sm:$0xff]
        %v547 = vld [vmem:[#allocation2 + $0x1b1] sm:$0xff]
        %v548 = vld [vmem:[#allocation2 + $0x1b9] sm:$0xff]
        %v549 = vld [vmem:[#allocation2 + $0x1c9] sm:$0xff]
        %v550 = vld [vmem:[#allocation2 + $0x1d1] sm:$0xff]
        %v551 = vld [vmem:[#allocation2 + $0x1e1] sm:$0xff]
        %v552 = vld [vmem:[#allocation2 + $0x1e9] sm:$0xff]
        %v553 = vld [vmem:[#allocation2 + $0x1f9] sm:$0xff]
        %v554 = vld [vmem:[#allocation2 + $0x201] sm:$0xff]
        %v555 = vld [vmem:[#allocation2 + $0x211] sm:$0xff]
        %v556 = vld [vmem:[#allocation2 + $0x219] sm:$0xff]
        %v557 = vld [vmem:[#allocation2 + $0x229] sm:$0xff]
        %v558 = vld [vmem:[#allocation2 + $0x231] sm:$0xff]
        %v559 = vld [vmem:[#allocation2 + $0x241] sm:$0xff]
        %v560 = vld [vmem:[#allocation2 + $0x249] sm:$0xff]
        %v561 = vld [vmem:[#allocation2 + $0x259] sm:$0xff]
        %v562 = vld [vmem:[#allocation2 + $0x261] sm:$0xff]
        %v563 = vld [vmem:[#allocation2 + $0x271] sm:$0xff]
        %v564 = vld [vmem:[#allocation2 + $0x279] sm:$0xff]
        %v565 = vld [vmem:[#allocation2 + $0x289] sm:$0xff]
        %v566 = vld [vmem:[#allocation2 + $0x291] sm:$0xff]
        %v567 = vld [vmem:[#allocation2 + $0x2a1] sm:$0xff]
        %v568 = vld [vmem:[#allocation2 + $0x2a9] sm:$0xff]
        %v569 = vld [vmem:[#allocation2 + $0x2b9] sm:$0xff]
        %v570 = vld [vmem:[#allocation2 + $0x2c1] sm:$0xff]
        %v571 = vld [vmem:[#allocation2 + $0x2d1] sm:$0xff]
        %v572 = vld [vmem:[#allocation2 + $0x2d9] sm:$0xff]
        %v573 = vld [vmem:[#allocation2 + $0x2e9] sm:$0xff]
        %v574 = vld [vmem:[#allocation2 + $0x2f1] sm:$0xff]
        %v575 = vld [vmem:[#allocation2 + $0x301] sm:$0xff]
        %v576 = vld [vmem:[#allocation2 + $0x309] sm:$0xff]
        %v577 = vld [vmem:[#allocation2 + $0x319] sm:$0xff]
        %v578 = vld [vmem:[#allocation2 + $0x321] sm:$0xff]
        %v579 = vld [vmem:[#allocation2 + $0x2] sm:$0xff]
        %v580 = vld [vmem:[#allocation2 + $0xa] sm:$0xff]
        %v581 = vld [vmem:[#allocation2 + $0x1a] sm:$0xff]
        %v582 = vld [vmem:[#allocation2 + $0x22] sm:$0xff]
        %v583 = vld [vmem:[#allocation2 + $0x32] sm:$0xff]
        %v584 = vld [vmem:[#allocation2 + $0x3a] sm:$0xff]
        %v585 = vld [vmem:[#allocation2 + $0x4a] sm:$0xff]
        %v586 = vld [vmem:[#allocation2 + $0x52] sm:$0xff]
        %v587 = vld [vmem:[#allocation2 + $0x62] sm:$0xff]
        %v588 = vld [vmem:[#allocation2 + $0x6a] sm:$0xff]
        %v589 = vld [vmem:[#allocation2 + $0x7a] sm:$0xff]
        %v590 = vld [vmem:[#allocation2 + $0x82] sm:$0xff]
        %v591 = vld [vmem:[#allocation2 + $0x92] sm:$0xff]
        %v592 = vld [vmem:[#allocation2 + $0x9a] sm:$0xff]
        %v593 = vld [vmem:[#allocation2 + $0xaa] sm:$0xff]
        %v594 = vld [vmem:[#allocation2 + $0xb2] sm:$0xff]
        %v595 = vld [vmem:[#allocation2 + $0xc2] sm:$0xff]
        %v596 = vld [vmem:[#allocation2 + $0xca] sm:$0xff]
        %v597 = vld [vmem:[#allocation2 + $0xda] sm:$0xff]
        %v598 = vld [vmem:[#allocation2 + $0xe2] sm:$0xff]
        %v599 = vld [vmem:[#allocation2 + $0xf2] sm:$0xff]
        %v600 = vld [vmem:[#allocation2 + $0xfa] sm:$0xff]
        %v601 = vld [vmem:[#allocation2 + $0x10a] sm:$0xff]
        %v602 = vld [vmem:[#allocation2 + $0x112] sm:$0xff]
        %v603 = vld [vmem:[#allocation2 + $0x122] sm:$0xff]
        %v604 = vld [vmem:[#allocation2 + $0x12a] sm:$0xff]
        %v605 = vld [vmem:[#allocation2 + $0x13a] sm:$0xff]
        %v606 = vld [vmem:[#allocation2 + $0x142] sm:$0xff]
        %v607 = vld [vmem:[#allocation2 + $0x152] sm:$0xff]
        %v608 = vld [vmem:[#allocation2 + $0x15a] sm:$0xff]
        %v609 = vld [vmem:[#allocation2 + $0x16a] sm:$0xff]
        %v610 = vld [vmem:[#allocation2 + $0x172] sm:$0xff]
        %v611 = vld [vmem:[#allocation2 + $0x1b2] sm:$0xff]
        %v612 = vld [vmem:[#allocation2 + $0x1ba] sm:$0xff]
        %v613 = vld [vmem:[#allocation2 + $0x1ca] sm:$0xff]
        %v614 = vld [vmem:[#allocation2 + $0x1d2] sm:$0xff]
        %v615 = vld [vmem:[#allocation2 + $0x1e2] sm:$0xff]
        %v616 = vld [vmem:[#allocation2 + $0x1ea] sm:$0xff]
        %v617 = vld [vmem:[#allocation2 + $0x1fa] sm:$0xff]
        %v618 = vld [vmem:[#allocation2 + $0x202] sm:$0xff]
        %v619 = vld [vmem:[#allocation2 + $0x212] sm:$0xff]
        %v620 = vld [vmem:[#allocation2 + $0x21a] sm:$0xff]
        %v621 = vld [vmem:[#allocation2 + $0x22a] sm:$0xff]
        %v622 = vld [vmem:[#allocation2 + $0x232] sm:$0xff]
        %v623 = vld [vmem:[#allocation2 + $0x242] sm:$0xff]
        %v624 = vld [vmem:[#allocation2 + $0x24a] sm:$0xff]
        %v625 = vld [vmem:[#allocation2 + $0x25a] sm:$0xff]
        %v626 = vld [vmem:[#allocation2 + $0x262] sm:$0xff]
        %v627 = vld [vmem:[#allocation2 + $0x272] sm:$0xff]
        %v628 = vld [vmem:[#allocation2 + $0x27a] sm:$0xff]
        %v629 = vld [vmem:[#allocation2 + $0x28a] sm:$0xff]
        %v630 = vld [vmem:[#allocation2 + $0x292] sm:$0xff]
        %v631 = vld [vmem:[#allocation2 + $0x2a2] sm:$0xff]
        %v632 = vld [vmem:[#allocation2 + $0x2aa] sm:$0xff]
        %v633 = vld [vmem:[#allocation2 + $0x2ba] sm:$0xff]
        %v634 = vld [vmem:[#allocation2 + $0x2c2] sm:$0xff]
        %v635 = vld [vmem:[#allocation2 + $0x2d2] sm:$0xff]
        %v636 = vld [vmem:[#allocation2 + $0x2da] sm:$0xff]
        %v637 = vld [vmem:[#allocation2 + $0x2ea] sm:$0xff]
        %v638 = vld [vmem:[#allocation2 + $0x2f2] sm:$0xff]
        %v639 = vld [vmem:[#allocation2 + $0x302] sm:$0xff]
        %v640 = vld [vmem:[#allocation2 + $0x30a] sm:$0xff]
        %v641 = vld [vmem:[#allocation2 + $0x31a] sm:$0xff]
        %v642 = vld [vmem:[#allocation2 + $0x322] sm:$0xff]
        %s643 = scalar_lea.vmem [#allocation2], 24
        %v644 = vld [vmem:[%s643] sm:$0xff]
        %v645 = vld [vmem:[%s643 + $0x8] sm:$0xff]
        %v646 = vld [vmem:[%s643 + $0x18] sm:$0xff]
        %v647 = vld [vmem:[%s643 + $0x20] sm:$0xff]
        %v648 = vld [vmem:[%s643 + $0x30] sm:$0xff]
        %v649 = vld [vmem:[%s643 + $0x38] sm:$0xff]
        %v650 = vld [vmem:[%s643 + $0x48] sm:$0xff]
        %v651 = vld [vmem:[%s643 + $0x50] sm:$0xff]
        %v652 = vld [vmem:[%s643 + $0x60] sm:$0xff]
        %v653 = vld [vmem:[%s643 + $0x68] sm:$0xff]
        %v654 = vld [vmem:[%s643 + $0x78] sm:$0xff]
        %v655 = vld [vmem:[%s643 + $0x80] sm:$0xff]
        %v656 = vld [vmem:[%s643 + $0x90] sm:$0xff]
        %v657 = vld [vmem:[%s643 + $0x98] sm:$0xff]
        %v658 = vld [vmem:[%s643 + $0xa8] sm:$0xff]
        %v659 = vld [vmem:[%s643 + $0xb0] sm:$0xff]
        %v660 = vld [vmem:[%s643 + $0xc0] sm:$0xff]
        %v661 = vld [vmem:[%s643 + $0xc8] sm:$0xff]
        %v662 = vld [vmem:[%s643 + $0xd8] sm:$0xff]
        %v663 = vld [vmem:[%s643 + $0xe0] sm:$0xff]
        %v664 = vld [vmem:[%s643 + $0xf0] sm:$0xff]
        %v665 = vld [vmem:[%s643 + $0xf8] sm:$0xff]
        %v666 = vld [vmem:[%s643 + $0x108] sm:$0xff]
        %v667 = vld [vmem:[%s643 + $0x110] sm:$0xff]
        %v668 = vld [vmem:[%s643 + $0x120] sm:$0xff]
        %v669 = vld [vmem:[%s643 + $0x128] sm:$0xff]
        %v670 = vld [vmem:[%s643 + $0x138] sm:$0xff]
        %v671 = vld [vmem:[%s643 + $0x140] sm:$0xff]
        %v672 = vld [vmem:[%s643 + $0x150] sm:$0xff]
        %v673 = vld [vmem:[%s643 + $0x158] sm:$0xff]
        %v674 = vld [vmem:[%s643 + $0x168] sm:$0xff]
        %v675 = vld [vmem:[%s643 + $0x170] sm:$0xff]
        %v676 = vld [vmem:[%s643 + $0x1b0] sm:$0xff]
        %v677 = vld [vmem:[%s643 + $0x1b8] sm:$0xff]
        %v678 = vld [vmem:[%s643 + $0x1c8] sm:$0xff]
        %v679 = vld [vmem:[%s643 + $0x1d0] sm:$0xff]
        %v680 = vld [vmem:[%s643 + $0x1e0] sm:$0xff]
        %v681 = vld [vmem:[%s643 + $0x1e8] sm:$0xff]
        %v682 = vld [vmem:[%s643 + $0x1f8] sm:$0xff]
        %v683 = vld [vmem:[%s643 + $0x200] sm:$0xff]
        %v684 = vld [vmem:[%s643 + $0x210] sm:$0xff]
        %v685 = vld [vmem:[%s643 + $0x218] sm:$0xff]
        %v686 = vld [vmem:[%s643 + $0x228] sm:$0xff]
        %v687 = vld [vmem:[%s643 + $0x230] sm:$0xff]
        %v688 = vld [vmem:[%s643 + $0x240] sm:$0xff]
        %v689 = vld [vmem:[%s643 + $0x248] sm:$0xff]
        %v690 = vld [vmem:[%s643 + $0x258] sm:$0xff]
        %v691 = vld [vmem:[%s643 + $0x260] sm:$0xff]
        %v692 = vld [vmem:[%s643 + $0x270] sm:$0xff]
        %v693 = vld [vmem:[%s643 + $0x278] sm:$0xff]
        %v694 = vld [vmem:[%s643 + $0x288] sm:$0xff]
        %v695 = vld [vmem:[%s643 + $0x290] sm:$0xff]
        %v696 = vld [vmem:[%s643 + $0x2a0] sm:$0xff]
        %v697 = vld [vmem:[%s643 + $0x2a8] sm:$0xff]
        %v698 = vld [vmem:[%s643 + $0x2b8] sm:$0xff]
        %v699 = vld [vmem:[%s643 + $0x2c0] sm:$0xff]
        %v700 = vld [vmem:[%s643 + $0x2d0] sm:$0xff]
        %v701 = vld [vmem:[%s643 + $0x2d8] sm:$0xff]
        %v702 = vld [vmem:[%s643 + $0x2e8] sm:$0xff]
        %v703 = vld [vmem:[%s643 + $0x2f0] sm:$0xff]
        %v704 = vld [vmem:[%s643 + $0x300] sm:$0xff]
        %v705 = vld [vmem:[%s643 + $0x308] sm:$0xff]
        %v706 = vld [vmem:[%s643 + $0x318] sm:$0xff]
        %v707 = vld [vmem:[%s643 + $0x320] sm:$0xff]
        %v708 = vld [vmem:[%s643 + $0x1] sm:$0xff]
        %v709 = vld [vmem:[%s643 + $0x9] sm:$0xff]
        %v710 = vld [vmem:[%s643 + $0x19] sm:$0xff]
        %v711 = vld [vmem:[%s643 + $0x21] sm:$0xff]
        %v712 = vld [vmem:[%s643 + $0x31] sm:$0xff]
        %v713 = vld [vmem:[%s643 + $0x39] sm:$0xff]
        %v714 = vld [vmem:[%s643 + $0x49] sm:$0xff]
        %v715 = vld [vmem:[%s643 + $0x51] sm:$0xff]
        %v716 = vld [vmem:[%s643 + $0x61] sm:$0xff]
        %v717 = vld [vmem:[%s643 + $0x69] sm:$0xff]
        %v718 = vld [vmem:[%s643 + $0x79] sm:$0xff]
        %v719 = vld [vmem:[%s643 + $0x81] sm:$0xff]
        %v720 = vld [vmem:[%s643 + $0x91] sm:$0xff]
        %v721 = vld [vmem:[%s643 + $0x99] sm:$0xff]
        %v722 = vld [vmem:[%s643 + $0xa9] sm:$0xff]
        %v723 = vld [vmem:[%s643 + $0xb1] sm:$0xff]
        %v724 = vld [vmem:[%s643 + $0xc1] sm:$0xff]
        %v725 = vld [vmem:[%s643 + $0xc9] sm:$0xff]
        %v726 = vld [vmem:[%s643 + $0xd9] sm:$0xff]
        %v727 = vld [vmem:[%s643 + $0xe1] sm:$0xff]
        %v728 = vld [vmem:[%s643 + $0xf1] sm:$0xff]
        %v729 = vld [vmem:[%s643 + $0xf9] sm:$0xff]
        %v730 = vld [vmem:[%s643 + $0x109] sm:$0xff]
        %v731 = vld [vmem:[%s643 + $0x111] sm:$0xff]
        %v732 = vld [vmem:[%s643 + $0x121] sm:$0xff]
        %v733 = vld [vmem:[%s643 + $0x129] sm:$0xff]
        %v734 = vld [vmem:[%s643 + $0x139] sm:$0xff]
        %v735 = vld [vmem:[%s643 + $0x141] sm:$0xff]
        %v736 = vld [vmem:[%s643 + $0x151] sm:$0xff]
        %v737 = vld [vmem:[%s643 + $0x159] sm:$0xff]
        %v738 = vld [vmem:[%s643 + $0x169] sm:$0xff]
        %v739 = vld [vmem:[%s643 + $0x171] sm:$0xff]
        %v740 = vld [vmem:[%s643 + $0x1b1] sm:$0xff]
        %v741 = vld [vmem:[%s643 + $0x1b9] sm:$0xff]
        %v742 = vld [vmem:[%s643 + $0x1c9] sm:$0xff]
        %v743 = vld [vmem:[%s643 + $0x1d1] sm:$0xff]
        %v744 = vld [vmem:[%s643 + $0x1e1] sm:$0xff]
        %v745 = vld [vmem:[%s643 + $0x1e9] sm:$0xff]
        %v746 = vld [vmem:[%s643 + $0x1f9] sm:$0xff]
        %v747 = vld [vmem:[%s643 + $0x201] sm:$0xff]
        %v748 = vld [vmem:[%s643 + $0x211] sm:$0xff]
        %v749 = vld [vmem:[%s643 + $0x219] sm:$0xff]
        %v750 = vld [vmem:[%s643 + $0x229] sm:$0xff]
        %v751 = vld [vmem:[%s643 + $0x231] sm:$0xff]
        %v752 = vld [vmem:[%s643 + $0x241] sm:$0xff]
        %v753 = vld [vmem:[%s643 + $0x249] sm:$0xff]
        %v754 = vld [vmem:[%s643 + $0x259] sm:$0xff]
        %v755 = vld [vmem:[%s643 + $0x261] sm:$0xff]
        %v756 = vld [vmem:[%s643 + $0x271] sm:$0xff]
        %v757 = vld [vmem:[%s643 + $0x279] sm:$0xff]
        %v758 = vld [vmem:[%s643 + $0x289] sm:$0xff]
        %v759 = vld [vmem:[%s643 + $0x291] sm:$0xff]
        %v760 = vld [vmem:[%s643 + $0x2a1] sm:$0xff]
        %v761 = vld [vmem:[%s643 + $0x2a9] sm:$0xff]
        %v762 = vld [vmem:[%s643 + $0x2b9] sm:$0xff]
        %v763 = vld [vmem:[%s643 + $0x2c1] sm:$0xff]
        %v764 = vld [vmem:[%s643 + $0x2d1] sm:$0xff]
        %v765 = vld [vmem:[%s643 + $0x2d9] sm:$0xff]
        %v766 = vld [vmem:[%s643 + $0x2e9] sm:$0xff]
        %v767 = vld [vmem:[%s643 + $0x2f1] sm:$0xff]
        %v768 = vld [vmem:[%s643 + $0x301] sm:$0xff]
        %v769 = vld [vmem:[%s643 + $0x309] sm:$0xff]
        %v770 = vld [vmem:[%s643 + $0x319] sm:$0xff]
        %v771 = vld [vmem:[%s643 + $0x321] sm:$0xff]
        %v772 = vld [vmem:[%s643 + $0x2] sm:$0xff]
        %v773 = vld [vmem:[%s643 + $0xa] sm:$0xff]
        %v774 = vld [vmem:[%s643 + $0x1a] sm:$0xff]
        %v775 = vld [vmem:[%s643 + $0x22] sm:$0xff]
        %v776 = vld [vmem:[%s643 + $0x32] sm:$0xff]
        %v777 = vld [vmem:[%s643 + $0x3a] sm:$0xff]
        %v778 = vld [vmem:[%s643 + $0x4a] sm:$0xff]
        %v779 = vld [vmem:[%s643 + $0x52] sm:$0xff]
        %v780 = vld [vmem:[%s643 + $0x62] sm:$0xff]
        %v781 = vld [vmem:[%s643 + $0x6a] sm:$0xff]
        %v782 = vld [vmem:[%s643 + $0x7a] sm:$0xff]
        %v783 = vld [vmem:[%s643 + $0x82] sm:$0xff]
        %v784 = vld [vmem:[%s643 + $0x92] sm:$0xff]
        %v785 = vld [vmem:[%s643 + $0x9a] sm:$0xff]
        %v786 = vld [vmem:[%s643 + $0xaa] sm:$0xff]
        %v787 = vld [vmem:[%s643 + $0xb2] sm:$0xff]
        %v788 = vld [vmem:[%s643 + $0xc2] sm:$0xff]
        %v789 = vld [vmem:[%s643 + $0xca] sm:$0xff]
        %v790 = vld [vmem:[%s643 + $0xda] sm:$0xff]
        %v791 = vld [vmem:[%s643 + $0xe2] sm:$0xff]
        %v792 = vld [vmem:[%s643 + $0xf2] sm:$0xff]
        %v793 = vld [vmem:[%s643 + $0xfa] sm:$0xff]
        %v794 = vld [vmem:[%s643 + $0x10a] sm:$0xff]
        %v795 = vld [vmem:[%s643 + $0x112] sm:$0xff]
        %v796 = vld [vmem:[%s643 + $0x122] sm:$0xff]
        %v797 = vld [vmem:[%s643 + $0x12a] sm:$0xff]
        %v798 = vld [vmem:[%s643 + $0x13a] sm:$0xff]
        %v799 = vld [vmem:[%s643 + $0x142] sm:$0xff]
        %v800 = vld [vmem:[%s643 + $0x152] sm:$0xff]
        %v801 = vld [vmem:[%s643 + $0x15a] sm:$0xff]
        %v802 = vld [vmem:[%s643 + $0x16a] sm:$0xff]
        %v803 = vld [vmem:[%s643 + $0x172] sm:$0xff]
        %v804 = vld [vmem:[%s643 + $0x1b2] sm:$0xff]
        %v805 = vld [vmem:[%s643 + $0x1ba] sm:$0xff]
        %v806 = vld [vmem:[%s643 + $0x1ca] sm:$0xff]
        %v807 = vld [vmem:[%s643 + $0x1d2] sm:$0xff]
        %v808 = vld [vmem:[%s643 + $0x1e2] sm:$0xff]
        %v809 = vld [vmem:[%s643 + $0x1ea] sm:$0xff]
        %v810 = vld [vmem:[%s643 + $0x1fa] sm:$0xff]
        %v811 = vld [vmem:[%s643 + $0x202] sm:$0xff]
        %v812 = vld [vmem:[%s643 + $0x212] sm:$0xff]
        %v813 = vld [vmem:[%s643 + $0x21a] sm:$0xff]
        %v814 = vld [vmem:[%s643 + $0x22a] sm:$0xff]
        %v815 = vld [vmem:[%s643 + $0x232] sm:$0xff]
        %v816 = vld [vmem:[%s643 + $0x242] sm:$0xff]
        %v817 = vld [vmem:[%s643 + $0x24a] sm:$0xff]
        %v818 = vld [vmem:[%s643 + $0x25a] sm:$0xff]
        %v819 = vld [vmem:[%s643 + $0x262] sm:$0xff]
        %v820 = vld [vmem:[%s643 + $0x272] sm:$0xff]
        %v821 = vld [vmem:[%s643 + $0x27a] sm:$0xff]
        %v822 = vld [vmem:[%s643 + $0x28a] sm:$0xff]
        %v823 = vld [vmem:[%s643 + $0x292] sm:$0xff]
        %v824 = vld [vmem:[%s643 + $0x2a2] sm:$0xff]
        %v825 = vld [vmem:[%s643 + $0x2aa] sm:$0xff]
        %v826 = vld [vmem:[%s643 + $0x2ba] sm:$0xff]
        %v827 = vld [vmem:[%s643 + $0x2c2] sm:$0xff]
        %v828 = vld [vmem:[%s643 + $0x2d2] sm:$0xff]
        %v829 = vld [vmem:[%s643 + $0x2da] sm:$0xff]
        %v830 = vld [vmem:[%s643 + $0x2ea] sm:$0xff]
        %v831 = vld [vmem:[%s643 + $0x2f2] sm:$0xff]
        %v832 = vld [vmem:[%s643 + $0x302] sm:$0xff]
        %v833 = vld [vmem:[%s643 + $0x30a] sm:$0xff]
        %v834 = vld [vmem:[%s643 + $0x31a] sm:$0xff]
        %v835 = vld [vmem:[%s643 + $0x322] sm:$0xff]
        %s836 = scalar_lea.vmem [#allocation2], 48
        %v837 = vld [vmem:[%s836] sm:$0xff]
        %v838 = vld [vmem:[%s836 + $0x8] sm:$0xff]
        %v839 = vld [vmem:[%s836 + $0x18] sm:$0xff]
        %v840 = vld [vmem:[%s836 + $0x20] sm:$0xff]
        %v841 = vld [vmem:[%s836 + $0x30] sm:$0xff]
        %v842 = vld [vmem:[%s836 + $0x38] sm:$0xff]
        %v843 = vld [vmem:[%s836 + $0x48] sm:$0xff]
        %v844 = vld [vmem:[%s836 + $0x50] sm:$0xff]
        %v845 = vld [vmem:[%s836 + $0x60] sm:$0xff]
        %v846 = vld [vmem:[%s836 + $0x68] sm:$0xff]
        %v847 = vld [vmem:[%s836 + $0x78] sm:$0xff]
        %v848 = vld [vmem:[%s836 + $0x80] sm:$0xff]
        %v849 = vld [vmem:[%s836 + $0x90] sm:$0xff]
        %v850 = vld [vmem:[%s836 + $0x98] sm:$0xff]
        %v851 = vld [vmem:[%s836 + $0xa8] sm:$0xff]
        %v852 = vld [vmem:[%s836 + $0xb0] sm:$0xff]
        %v853 = vld [vmem:[%s836 + $0xc0] sm:$0xff]
        %v854 = vld [vmem:[%s836 + $0xc8] sm:$0xff]
        %v855 = vld [vmem:[%s836 + $0xd8] sm:$0xff]
        %v856 = vld [vmem:[%s836 + $0xe0] sm:$0xff]
        %v857 = vld [vmem:[%s836 + $0xf0] sm:$0xff]
        %v858 = vld [vmem:[%s836 + $0xf8] sm:$0xff]
        %v859 = vld [vmem:[%s836 + $0x108] sm:$0xff]
        %v860 = vld [vmem:[%s836 + $0x110] sm:$0xff]
        %v861 = vld [vmem:[%s836 + $0x120] sm:$0xff]
        %v862 = vld [vmem:[%s836 + $0x128] sm:$0xff]
        %v863 = vld [vmem:[%s836 + $0x138] sm:$0xff]
        %v864 = vld [vmem:[%s836 + $0x140] sm:$0xff]
        %v865 = vld [vmem:[%s836 + $0x150] sm:$0xff]
        %v866 = vld [vmem:[%s836 + $0x158] sm:$0xff]
        %v867 = vld [vmem:[%s836 + $0x168] sm:$0xff]
        %v868 = vld [vmem:[%s836 + $0x170] sm:$0xff]
        %v869 = vld [vmem:[%s836 + $0x1b0] sm:$0xff]
        %v870 = vld [vmem:[%s836 + $0x1b8] sm:$0xff]
        %v871 = vld [vmem:[%s836 + $0x1c8] sm:$0xff]
        %v872 = vld [vmem:[%s836 + $0x1d0] sm:$0xff]
        %v873 = vld [vmem:[%s836 + $0x1e0] sm:$0xff]
        %v874 = vld [vmem:[%s836 + $0x1e8] sm:$0xff]
        %v875 = vld [vmem:[%s836 + $0x1f8] sm:$0xff]
        %v876 = vld [vmem:[%s836 + $0x200] sm:$0xff]
        %v877 = vld [vmem:[%s836 + $0x210] sm:$0xff]
        %v878 = vld [vmem:[%s836 + $0x218] sm:$0xff]
        %v879 = vld [vmem:[%s836 + $0x228] sm:$0xff]
        %v880 = vld [vmem:[%s836 + $0x230] sm:$0xff]
        %v881 = vld [vmem:[%s836 + $0x240] sm:$0xff]
        %v882 = vld [vmem:[%s836 + $0x248] sm:$0xff]
        %v883 = vld [vmem:[%s836 + $0x258] sm:$0xff]
        %v884 = vld [vmem:[%s836 + $0x260] sm:$0xff]
        %v885 = vld [vmem:[%s836 + $0x270] sm:$0xff]
        %v886 = vld [vmem:[%s836 + $0x278] sm:$0xff]
        %v887 = vld [vmem:[%s836 + $0x288] sm:$0xff]
        %v888 = vld [vmem:[%s836 + $0x290] sm:$0xff]
        %v889 = vld [vmem:[%s836 + $0x2a0] sm:$0xff]
        %v890 = vld [vmem:[%s836 + $0x2a8] sm:$0xff]
        %v891 = vld [vmem:[%s836 + $0x2b8] sm:$0xff]
        %v892 = vld [vmem:[%s836 + $0x2c0] sm:$0xff]
        %v893 = vld [vmem:[%s836 + $0x2d0] sm:$0xff]
        %v894 = vld [vmem:[%s836 + $0x2d8] sm:$0xff]
        %v895 = vld [vmem:[%s836 + $0x2e8] sm:$0xff]
        %v896 = vld [vmem:[%s836 + $0x2f0] sm:$0xff]
        %v897 = vld [vmem:[%s836 + $0x300] sm:$0xff]
        %v898 = vld [vmem:[%s836 + $0x308] sm:$0xff]
        %v899 = vld [vmem:[%s836 + $0x318] sm:$0xff]
        %v900 = vld [vmem:[%s836 + $0x320] sm:$0xff]
        %v901 = vld [vmem:[%s836 + $0x1] sm:$0xff]
        %v902 = vld [vmem:[%s836 + $0x9] sm:$0xff]
        %v903 = vld [vmem:[%s836 + $0x19] sm:$0xff]
        %v904 = vld [vmem:[%s836 + $0x21] sm:$0xff]
        %v905 = vld [vmem:[%s836 + $0x31] sm:$0xff]
        %v906 = vld [vmem:[%s836 + $0x39] sm:$0xff]
        %v907 = vld [vmem:[%s836 + $0x49] sm:$0xff]
        %v908 = vld [vmem:[%s836 + $0x51] sm:$0xff]
        %v909 = vld [vmem:[%s836 + $0x61] sm:$0xff]
        %v910 = vld [vmem:[%s836 + $0x69] sm:$0xff]
        %v911 = vld [vmem:[%s836 + $0x79] sm:$0xff]
        %v912 = vld [vmem:[%s836 + $0x81] sm:$0xff]
        %v913 = vld [vmem:[%s836 + $0x91] sm:$0xff]
        %v914 = vld [vmem:[%s836 + $0x99] sm:$0xff]
        %v915 = vld [vmem:[%s836 + $0xa9] sm:$0xff]
        %v916 = vld [vmem:[%s836 + $0xb1] sm:$0xff]
        %v917 = vld [vmem:[%s836 + $0xc1] sm:$0xff]
        %v918 = vld [vmem:[%s836 + $0xc9] sm:$0xff]
        %v919 = vld [vmem:[%s836 + $0xd9] sm:$0xff]
        %v920 = vld [vmem:[%s836 + $0xe1] sm:$0xff]
        %v921 = vld [vmem:[%s836 + $0xf1] sm:$0xff]
        %v922 = vld [vmem:[%s836 + $0xf9] sm:$0xff]
        %v923 = vld [vmem:[%s836 + $0x109] sm:$0xff]
        %v924 = vld [vmem:[%s836 + $0x111] sm:$0xff]
        %v925 = vld [vmem:[%s836 + $0x121] sm:$0xff]
        %v926 = vld [vmem:[%s836 + $0x129] sm:$0xff]
        %v927 = vld [vmem:[%s836 + $0x139] sm:$0xff]
        %v928 = vld [vmem:[%s836 + $0x141] sm:$0xff]
        %v929 = vld [vmem:[%s836 + $0x151] sm:$0xff]
        %v930 = vld [vmem:[%s836 + $0x159] sm:$0xff]
        %v931 = vld [vmem:[%s836 + $0x169] sm:$0xff]
        %v932 = vld [vmem:[%s836 + $0x171] sm:$0xff]
        %v933 = vld [vmem:[%s836 + $0x1b1] sm:$0xff]
        %v934 = vld [vmem:[%s836 + $0x1b9] sm:$0xff]
        %v935 = vld [vmem:[%s836 + $0x1c9] sm:$0xff]
        %v936 = vld [vmem:[%s836 + $0x1d1] sm:$0xff]
        %v937 = vld [vmem:[%s836 + $0x1e1] sm:$0xff]
        %v938 = vld [vmem:[%s836 + $0x1e9] sm:$0xff]
        %v939 = vld [vmem:[%s836 + $0x1f9] sm:$0xff]
        %v940 = vld [vmem:[%s836 + $0x201] sm:$0xff]
        %v941 = vld [vmem:[%s836 + $0x211] sm:$0xff]
        %v942 = vld [vmem:[%s836 + $0x219] sm:$0xff]
        %v943 = vld [vmem:[%s836 + $0x229] sm:$0xff]
        %v944 = vld [vmem:[%s836 + $0x231] sm:$0xff]
        %v945 = vld [vmem:[%s836 + $0x241] sm:$0xff]
        %v946 = vld [vmem:[%s836 + $0x249] sm:$0xff]
        %v947 = vld [vmem:[%s836 + $0x259] sm:$0xff]
        %v948 = vld [vmem:[%s836 + $0x261] sm:$0xff]
        %v949 = vld [vmem:[%s836 + $0x271] sm:$0xff]
        %v950 = vld [vmem:[%s836 + $0x279] sm:$0xff]
        %v951 = vld [vmem:[%s836 + $0x289] sm:$0xff]
        %v952 = vld [vmem:[%s836 + $0x291] sm:$0xff]
        %v953 = vld [vmem:[%s836 + $0x2a1] sm:$0xff]
        %v954 = vld [vmem:[%s836 + $0x2a9] sm:$0xff]
        %v955 = vld [vmem:[%s836 + $0x2b9] sm:$0xff]
        %v956 = vld [vmem:[%s836 + $0x2c1] sm:$0xff]
        %v957 = vld [vmem:[%s836 + $0x2d1] sm:$0xff]
        %v958 = vld [vmem:[%s836 + $0x2d9] sm:$0xff]
        %v959 = vld [vmem:[%s836 + $0x2e9] sm:$0xff]
        %v960 = vld [vmem:[%s836 + $0x2f1] sm:$0xff]
        %v961 = vld [vmem:[%s836 + $0x301] sm:$0xff]
        %v962 = vld [vmem:[%s836 + $0x309] sm:$0xff]
        %v963 = vld [vmem:[%s836 + $0x319] sm:$0xff]
        %v964 = vld [vmem:[%s836 + $0x321] sm:$0xff]
        %v965 = vld [vmem:[%s836 + $0x2] sm:$0xff]
        %v966 = vld [vmem:[%s836 + $0xa] sm:$0xff]
        %v967 = vld [vmem:[%s836 + $0x1a] sm:$0xff]
        %v968 = vld [vmem:[%s836 + $0x22] sm:$0xff]
        %v969 = vld [vmem:[%s836 + $0x32] sm:$0xff]
        %v970 = vld [vmem:[%s836 + $0x3a] sm:$0xff]
        %v971 = vld [vmem:[%s836 + $0x4a] sm:$0xff]
        %v972 = vld [vmem:[%s836 + $0x52] sm:$0xff]
        %v973 = vld [vmem:[%s836 + $0x62] sm:$0xff]
        %v974 = vld [vmem:[%s836 + $0x6a] sm:$0xff]
        %v975 = vld [vmem:[%s836 + $0x7a] sm:$0xff]
        %v976 = vld [vmem:[%s836 + $0x82] sm:$0xff]
        %v977 = vld [vmem:[%s836 + $0x92] sm:$0xff]
        %v978 = vld [vmem:[%s836 + $0x9a] sm:$0xff]
        %v979 = vld [vmem:[%s836 + $0xaa] sm:$0xff]
        %v980 = vld [vmem:[%s836 + $0xb2] sm:$0xff]
        %v981 = vld [vmem:[%s836 + $0xc2] sm:$0xff]
        %v982 = vld [vmem:[%s836 + $0xca] sm:$0xff]
        %v983 = vld [vmem:[%s836 + $0xda] sm:$0xff]
        %v984 = vld [vmem:[%s836 + $0xe2] sm:$0xff]
        %v985 = vld [vmem:[%s836 + $0xf2] sm:$0xff]
        %v986 = vld [vmem:[%s836 + $0xfa] sm:$0xff]
        %v987 = vld [vmem:[%s836 + $0x10a] sm:$0xff]
        %v988 = vld [vmem:[%s836 + $0x112] sm:$0xff]
        %v989 = vld [vmem:[%s836 + $0x122] sm:$0xff]
        %v990 = vld [vmem:[%s836 + $0x12a] sm:$0xff]
        %v991 = vld [vmem:[%s836 + $0x13a] sm:$0xff]
        %v992 = vld [vmem:[%s836 + $0x142] sm:$0xff]
        %v993 = vld [vmem:[%s836 + $0x152] sm:$0xff]
        %v994 = vld [vmem:[%s836 + $0x15a] sm:$0xff]
        %v995 = vld [vmem:[%s836 + $0x16a] sm:$0xff]
        %v996 = vld [vmem:[%s836 + $0x172] sm:$0xff]
        %v997 = vld [vmem:[%s836 + $0x1b2] sm:$0xff]
        %v998 = vld [vmem:[%s836 + $0x1ba] sm:$0xff]
        %v999 = vld [vmem:[%s836 + $0x1ca] sm:$0xff]
        %v1000 = vld [vmem:[%s836 + $0x1d2] sm:$0xff]
        %v1001 = vld [vmem:[%s836 + $0x1e2] sm:$0xff]
        %v1002 = vld [vmem:[%s836 + $0x1ea] sm:$0xff]
        %v1003 = vld [vmem:[%s836 + $0x1fa] sm:$0xff]
        %v1004 = vld [vmem:[%s836 + $0x202] sm:$0xff]
        %v1005 = vld [vmem:[%s836 + $0x212] sm:$0xff]
        %v1006 = vld [vmem:[%s836 + $0x21a] sm:$0xff]
        %v1007 = vld [vmem:[%s836 + $0x22a] sm:$0xff]
        %v1008 = vld [vmem:[%s836 + $0x232] sm:$0xff]
        %v1009 = vld [vmem:[%s836 + $0x242] sm:$0xff]
        %v1010 = vld [vmem:[%s836 + $0x24a] sm:$0xff]
        %v1011 = vld [vmem:[%s836 + $0x25a] sm:$0xff]
        %v1012 = vld [vmem:[%s836 + $0x262] sm:$0xff]
        %v1013 = vld [vmem:[%s836 + $0x272] sm:$0xff]
        %v1014 = vld [vmem:[%s836 + $0x27a] sm:$0xff]
        %v1015 = vld [vmem:[%s836 + $0x28a] sm:$0xff]
        %v1016 = vld [vmem:[%s836 + $0x292] sm:$0xff]
        %v1017 = vld [vmem:[%s836 + $0x2a2] sm:$0xff]
        %v1018 = vld [vmem:[%s836 + $0x2aa] sm:$0xff]
        %v1019 = vld [vmem:[%s836 + $0x2ba] sm:$0xff]
        %v1020 = vld [vmem:[%s836 + $0x2c2] sm:$0xff]
        %v1021 = vld [vmem:[%s836 + $0x2d2] sm:$0xff]
        %v1022 = vld [vmem:[%s836 + $0x2da] sm:$0xff]
        %v1023 = vld [vmem:[%s836 + $0x2ea] sm:$0xff]
        %v1024 = vld [vmem:[%s836 + $0x2f2] sm:$0xff]
        %v1025 = vld [vmem:[%s836 + $0x302] sm:$0xff]
        %v1026 = vld [vmem:[%s836 + $0x30a] sm:$0xff]
        %v1027 = vld [vmem:[%s836 + $0x31a] sm:$0xff]
        %v1028 = vld [vmem:[%s836 + $0x322] sm:$0xff]
        %1093 = vrot.lane.b32.xlu0 %v515, 32
        %v1094 = vpop.permute.xlu0 %1093
        %1095 = vrot.lane.b32.xlu0 %v516, 32
        %v1096 = vpop.permute.xlu0 %1095
        %1097 = vrot.lane.b32.xlu0 %v517, 32
        %v1098 = vpop.permute.xlu0 %1097
        %1099 = vrot.lane.b32.xlu0 %v518, 32
        %v1100 = vpop.permute.xlu0 %1099
        %1101 = vrot.lane.b32.xlu0 %v519, 32
        %v1102 = vpop.permute.xlu0 %1101
        %1103 = vrot.lane.b32.xlu0 %v520, 32
        %v1104 = vpop.permute.xlu0 %1103
        %1105 = vrot.lane.b32.xlu0 %v521, 32
        %v1106 = vpop.permute.xlu0 %1105
        %1107 = vrot.lane.b32.xlu0 %v522, 32
        %v1108 = vpop.permute.xlu0 %1107
        %1109 = vrot.lane.b32.xlu0 %v523, 32
        %v1110 = vpop.permute.xlu0 %1109
        %1111 = vrot.lane.b32.xlu0 %v524, 32
        %v1112 = vpop.permute.xlu0 %1111
        %1113 = vrot.lane.b32.xlu0 %v525, 32
        %v1114 = vpop.permute.xlu0 %1113
        %1115 = vrot.lane.b32.xlu0 %v526, 32
        %v1116 = vpop.permute.xlu0 %1115
        %1117 = vrot.lane.b32.xlu0 %v527, 32
        %v1118 = vpop.permute.xlu0 %1117
        %1119 = vrot.lane.b32.xlu0 %v528, 32
        %v1120 = vpop.permute.xlu0 %1119
        %1121 = vrot.lane.b32.xlu0 %v529, 32
        %v1122 = vpop.permute.xlu0 %1121
        %1123 = vrot.lane.b32.xlu0 %v530, 32
        %v1124 = vpop.permute.xlu0 %1123
        %1125 = vrot.lane.b32.xlu0 %v531, 32
        %v1126 = vpop.permute.xlu0 %1125
        %1127 = vrot.lane.b32.xlu0 %v532, 32
        %v1128 = vpop.permute.xlu0 %1127
        %1129 = vrot.lane.b32.xlu0 %v533, 32
        %v1130 = vpop.permute.xlu0 %1129
        %1131 = vrot.lane.b32.xlu0 %v534, 32
        %v1132 = vpop.permute.xlu0 %1131
        %1133 = vrot.lane.b32.xlu0 %v535, 32
        %v1134 = vpop.permute.xlu0 %1133
        %1135 = vrot.lane.b32.xlu0 %v536, 32
        %v1136 = vpop.permute.xlu0 %1135
        %1137 = vrot.lane.b32.xlu0 %v537, 32
        %v1138 = vpop.permute.xlu0 %1137
        %1139 = vrot.lane.b32.xlu0 %v538, 32
        %v1140 = vpop.permute.xlu0 %1139
        %1141 = vrot.lane.b32.xlu0 %v539, 32
        %v1142 = vpop.permute.xlu0 %1141
        %1143 = vrot.lane.b32.xlu0 %v540, 32
        %v1144 = vpop.permute.xlu0 %1143
        %1145 = vrot.lane.b32.xlu0 %v541, 32
        %v1146 = vpop.permute.xlu0 %1145
        %1147 = vrot.lane.b32.xlu0 %v542, 32
        %v1148 = vpop.permute.xlu0 %1147
        %1149 = vrot.lane.b32.xlu0 %v543, 32
        %v1150 = vpop.permute.xlu0 %1149
        %1151 = vrot.lane.b32.xlu0 %v544, 32
        %v1152 = vpop.permute.xlu0 %1151
        %1153 = vrot.lane.b32.xlu0 %v545, 32
        %v1154 = vpop.permute.xlu0 %1153
        %1155 = vrot.lane.b32.xlu0 %v546, 32
        %v1156 = vpop.permute.xlu0 %1155
        %1157 = vrot.lane.b32.xlu0 %v547, 32
        %v1158 = vpop.permute.xlu0 %1157
        %1159 = vrot.lane.b32.xlu0 %v548, 32
        %v1160 = vpop.permute.xlu0 %1159
        %1161 = vrot.lane.b32.xlu0 %v549, 32
        %v1162 = vpop.permute.xlu0 %1161
        %1163 = vrot.lane.b32.xlu0 %v550, 32
        %v1164 = vpop.permute.xlu0 %1163
        %1165 = vrot.lane.b32.xlu0 %v551, 32
        %v1166 = vpop.permute.xlu0 %1165
        %1167 = vrot.lane.b32.xlu0 %v552, 32
        %v1168 = vpop.permute.xlu0 %1167
        %1169 = vrot.lane.b32.xlu0 %v553, 32
        %v1170 = vpop.permute.xlu0 %1169
        %1171 = vrot.lane.b32.xlu0 %v554, 32
        %v1172 = vpop.permute.xlu0 %1171
        %1173 = vrot.lane.b32.xlu0 %v555, 32
        %v1174 = vpop.permute.xlu0 %1173
        %1175 = vrot.lane.b32.xlu0 %v556, 32
        %v1176 = vpop.permute.xlu0 %1175
        %1177 = vrot.lane.b32.xlu0 %v557, 32
        %v1178 = vpop.permute.xlu0 %1177
        %1179 = vrot.lane.b32.xlu0 %v558, 32
        %v1180 = vpop.permute.xlu0 %1179
        %1181 = vrot.lane.b32.xlu0 %v559, 32
        %v1182 = vpop.permute.xlu0 %1181
        %1183 = vrot.lane.b32.xlu0 %v560, 32
        %v1184 = vpop.permute.xlu0 %1183
        %1185 = vrot.lane.b32.xlu0 %v561, 32
        %v1186 = vpop.permute.xlu0 %1185
        %1187 = vrot.lane.b32.xlu0 %v562, 32
        %v1188 = vpop.permute.xlu0 %1187
        %1189 = vrot.lane.b32.xlu0 %v563, 32
        %v1190 = vpop.permute.xlu0 %1189
        %1191 = vrot.lane.b32.xlu0 %v564, 32
        %v1192 = vpop.permute.xlu0 %1191
        %1193 = vrot.lane.b32.xlu0 %v565, 32
        %v1194 = vpop.permute.xlu0 %1193
        %1195 = vrot.lane.b32.xlu0 %v566, 32
        %v1196 = vpop.permute.xlu0 %1195
        %1197 = vrot.lane.b32.xlu0 %v567, 32
        %v1198 = vpop.permute.xlu0 %1197
        %1199 = vrot.lane.b32.xlu0 %v568, 32
        %v1200 = vpop.permute.xlu0 %1199
        %1201 = vrot.lane.b32.xlu0 %v569, 32
        %v1202 = vpop.permute.xlu0 %1201
        %1203 = vrot.lane.b32.xlu0 %v570, 32
        %v1204 = vpop.permute.xlu0 %1203
        %1205 = vrot.lane.b32.xlu0 %v571, 32
        %v1206 = vpop.permute.xlu0 %1205
        %1207 = vrot.lane.b32.xlu0 %v572, 32
        %v1208 = vpop.permute.xlu0 %1207
        %1209 = vrot.lane.b32.xlu0 %v573, 32
        %v1210 = vpop.permute.xlu0 %1209
        %1211 = vrot.lane.b32.xlu0 %v574, 32
        %v1212 = vpop.permute.xlu0 %1211
        %1213 = vrot.lane.b32.xlu0 %v575, 32
        %v1214 = vpop.permute.xlu0 %1213
        %1215 = vrot.lane.b32.xlu0 %v576, 32
        %v1216 = vpop.permute.xlu0 %1215
        %1217 = vrot.lane.b32.xlu0 %v577, 32
        %v1218 = vpop.permute.xlu0 %1217
        %1219 = vrot.lane.b32.xlu0 %v578, 32
        %v1220 = vpop.permute.xlu0 %1219
        %1349 = vrot.lane.b32.xlu0 %v579, 64
        %v1350 = vpop.permute.xlu0 %1349
        %1351 = vrot.lane.b32.xlu0 %v580, 64
        %v1352 = vpop.permute.xlu0 %1351
        %1353 = vrot.lane.b32.xlu0 %v581, 64
        %v1354 = vpop.permute.xlu0 %1353
        %1355 = vrot.lane.b32.xlu0 %v582, 64
        %v1356 = vpop.permute.xlu0 %1355
        %1357 = vrot.lane.b32.xlu0 %v583, 64
        %v1358 = vpop.permute.xlu0 %1357
        %1359 = vrot.lane.b32.xlu0 %v584, 64
        %v1360 = vpop.permute.xlu0 %1359
        %1361 = vrot.lane.b32.xlu0 %v585, 64
        %v1362 = vpop.permute.xlu0 %1361
        %1363 = vrot.lane.b32.xlu0 %v586, 64
        %v1364 = vpop.permute.xlu0 %1363
        %1365 = vrot.lane.b32.xlu0 %v587, 64
        %v1366 = vpop.permute.xlu0 %1365
        %1367 = vrot.lane.b32.xlu0 %v588, 64
        %v1368 = vpop.permute.xlu0 %1367
        %1369 = vrot.lane.b32.xlu0 %v589, 64
        %v1370 = vpop.permute.xlu0 %1369
        %1371 = vrot.lane.b32.xlu0 %v590, 64
        %v1372 = vpop.permute.xlu0 %1371
        %1373 = vrot.lane.b32.xlu0 %v591, 64
        %v1374 = vpop.permute.xlu0 %1373
        %1375 = vrot.lane.b32.xlu0 %v592, 64
        %v1376 = vpop.permute.xlu0 %1375
        %1377 = vrot.lane.b32.xlu0 %v593, 64
        %v1378 = vpop.permute.xlu0 %1377
        %1379 = vrot.lane.b32.xlu0 %v594, 64
        %v1380 = vpop.permute.xlu0 %1379
        %1381 = vrot.lane.b32.xlu0 %v595, 64
        %v1382 = vpop.permute.xlu0 %1381
        %1383 = vrot.lane.b32.xlu0 %v596, 64
        %v1384 = vpop.permute.xlu0 %1383
        %1385 = vrot.lane.b32.xlu0 %v597, 64
        %v1386 = vpop.permute.xlu0 %1385
        %1387 = vrot.lane.b32.xlu0 %v598, 64
        %v1388 = vpop.permute.xlu0 %1387
        %1389 = vrot.lane.b32.xlu0 %v599, 64
        %v1390 = vpop.permute.xlu0 %1389
        %1391 = vrot.lane.b32.xlu0 %v600, 64
        %v1392 = vpop.permute.xlu0 %1391
        %1393 = vrot.lane.b32.xlu0 %v601, 64
        %v1394 = vpop.permute.xlu0 %1393
        %1395 = vrot.lane.b32.xlu0 %v602, 64
        %v1396 = vpop.permute.xlu0 %1395
        %1397 = vrot.lane.b32.xlu0 %v603, 64
        %v1398 = vpop.permute.xlu0 %1397
        %1399 = vrot.lane.b32.xlu0 %v604, 64
        %v1400 = vpop.permute.xlu0 %1399
        %1401 = vrot.lane.b32.xlu0 %v605, 64
        %v1402 = vpop.permute.xlu0 %1401
        %1403 = vrot.lane.b32.xlu0 %v606, 64
        %v1404 = vpop.permute.xlu0 %1403
        %1405 = vrot.lane.b32.xlu0 %v607, 64
        %v1406 = vpop.permute.xlu0 %1405
        %1407 = vrot.lane.b32.xlu0 %v608, 64
        %v1408 = vpop.permute.xlu0 %1407
        %1409 = vrot.lane.b32.xlu0 %v609, 64
        %v1410 = vpop.permute.xlu0 %1409
        %1411 = vrot.lane.b32.xlu0 %v610, 64
        %v1412 = vpop.permute.xlu0 %1411
        %1413 = vrot.lane.b32.xlu0 %v611, 64
        %v1414 = vpop.permute.xlu0 %1413
        %1415 = vrot.lane.b32.xlu0 %v612, 64
        %v1416 = vpop.permute.xlu0 %1415
        %1417 = vrot.lane.b32.xlu0 %v613, 64
        %v1418 = vpop.permute.xlu0 %1417
        %1419 = vrot.lane.b32.xlu0 %v614, 64
        %v1420 = vpop.permute.xlu0 %1419
        %1421 = vrot.lane.b32.xlu0 %v615, 64
        %v1422 = vpop.permute.xlu0 %1421
        %1423 = vrot.lane.b32.xlu0 %v616, 64
        %v1424 = vpop.permute.xlu0 %1423
        %1425 = vrot.lane.b32.xlu0 %v617, 64
        %v1426 = vpop.permute.xlu0 %1425
        %1427 = vrot.lane.b32.xlu0 %v618, 64
        %v1428 = vpop.permute.xlu0 %1427
        %1429 = vrot.lane.b32.xlu0 %v619, 64
        %v1430 = vpop.permute.xlu0 %1429
        %1431 = vrot.lane.b32.xlu0 %v620, 64
        %v1432 = vpop.permute.xlu0 %1431
        %1433 = vrot.lane.b32.xlu0 %v621, 64
        %v1434 = vpop.permute.xlu0 %1433
        %1435 = vrot.lane.b32.xlu0 %v622, 64
        %v1436 = vpop.permute.xlu0 %1435
        %1437 = vrot.lane.b32.xlu0 %v623, 64
        %v1438 = vpop.permute.xlu0 %1437
        %1439 = vrot.lane.b32.xlu0 %v624, 64
        %v1440 = vpop.permute.xlu0 %1439
        %1441 = vrot.lane.b32.xlu0 %v625, 64
        %v1442 = vpop.permute.xlu0 %1441
        %1443 = vrot.lane.b32.xlu0 %v626, 64
        %v1444 = vpop.permute.xlu0 %1443
        %1445 = vrot.lane.b32.xlu0 %v627, 64
        %v1446 = vpop.permute.xlu0 %1445
        %1447 = vrot.lane.b32.xlu0 %v628, 64
        %v1448 = vpop.permute.xlu0 %1447
        %1449 = vrot.lane.b32.xlu0 %v629, 64
        %v1450 = vpop.permute.xlu0 %1449
        %1451 = vrot.lane.b32.xlu0 %v630, 64
        %v1452 = vpop.permute.xlu0 %1451
        %1453 = vrot.lane.b32.xlu0 %v631, 64
        %v1454 = vpop.permute.xlu0 %1453
        %1455 = vrot.lane.b32.xlu0 %v632, 64
        %v1456 = vpop.permute.xlu0 %1455
        %1457 = vrot.lane.b32.xlu0 %v633, 64
        %v1458 = vpop.permute.xlu0 %1457
        %1459 = vrot.lane.b32.xlu0 %v634, 64
        %v1460 = vpop.permute.xlu0 %1459
        %1461 = vrot.lane.b32.xlu0 %v635, 64
        %v1462 = vpop.permute.xlu0 %1461
        %1463 = vrot.lane.b32.xlu0 %v636, 64
        %v1464 = vpop.permute.xlu0 %1463
        %1465 = vrot.lane.b32.xlu0 %v637, 64
        %v1466 = vpop.permute.xlu0 %1465
        %1467 = vrot.lane.b32.xlu0 %v638, 64
        %v1468 = vpop.permute.xlu0 %1467
        %1469 = vrot.lane.b32.xlu0 %v639, 64
        %v1470 = vpop.permute.xlu0 %1469
        %1471 = vrot.lane.b32.xlu0 %v640, 64
        %v1472 = vpop.permute.xlu0 %1471
        %1473 = vrot.lane.b32.xlu0 %v641, 64
        %v1474 = vpop.permute.xlu0 %1473
        %1475 = vrot.lane.b32.xlu0 %v642, 64
        %v1476 = vpop.permute.xlu0 %1475
        %1605 = vrot.lane.b32.xlu0 %v644, 96
        %v1606 = vpop.permute.xlu0 %1605
        %1607 = vrot.lane.b32.xlu0 %v645, 96
        %v1608 = vpop.permute.xlu0 %1607
        %1609 = vrot.lane.b32.xlu0 %v646, 96
        %v1610 = vpop.permute.xlu0 %1609
        %1611 = vrot.lane.b32.xlu0 %v647, 96
        %v1612 = vpop.permute.xlu0 %1611
        %1613 = vrot.lane.b32.xlu0 %v648, 96
        %v1614 = vpop.permute.xlu0 %1613
        %1615 = vrot.lane.b32.xlu0 %v649, 96
        %v1616 = vpop.permute.xlu0 %1615
        %1617 = vrot.lane.b32.xlu0 %v650, 96
        %v1618 = vpop.permute.xlu0 %1617
        %1619 = vrot.lane.b32.xlu0 %v651, 96
        %v1620 = vpop.permute.xlu0 %1619
        %1621 = vrot.lane.b32.xlu0 %v652, 96
        %v1622 = vpop.permute.xlu0 %1621
        %1623 = vrot.lane.b32.xlu0 %v653, 96
        %v1624 = vpop.permute.xlu0 %1623
        %1625 = vrot.lane.b32.xlu0 %v654, 96
        %v1626 = vpop.permute.xlu0 %1625
        %1627 = vrot.lane.b32.xlu0 %v655, 96
        %v1628 = vpop.permute.xlu0 %1627
        %1629 = vrot.lane.b32.xlu0 %v656, 96
        %v1630 = vpop.permute.xlu0 %1629
        %1631 = vrot.lane.b32.xlu0 %v657, 96
        %v1632 = vpop.permute.xlu0 %1631
        %1633 = vrot.lane.b32.xlu0 %v658, 96
        %v1634 = vpop.permute.xlu0 %1633
        %1635 = vrot.lane.b32.xlu0 %v659, 96
        %v1636 = vpop.permute.xlu0 %1635
        %1637 = vrot.lane.b32.xlu0 %v660, 96
        %v1638 = vpop.permute.xlu0 %1637
        %1639 = vrot.lane.b32.xlu0 %v661, 96
        %v1640 = vpop.permute.xlu0 %1639
        %1641 = vrot.lane.b32.xlu0 %v662, 96
        %v1642 = vpop.permute.xlu0 %1641
        %1643 = vrot.lane.b32.xlu0 %v663, 96
        %v1644 = vpop.permute.xlu0 %1643
        %1645 = vrot.lane.b32.xlu0 %v664, 96
        %v1646 = vpop.permute.xlu0 %1645
        %1647 = vrot.lane.b32.xlu0 %v665, 96
        %v1648 = vpop.permute.xlu0 %1647
        %1649 = vrot.lane.b32.xlu0 %v666, 96
        %v1650 = vpop.permute.xlu0 %1649
        %1651 = vrot.lane.b32.xlu0 %v667, 96
        %v1652 = vpop.permute.xlu0 %1651
        %1653 = vrot.lane.b32.xlu0 %v668, 96
        %v1654 = vpop.permute.xlu0 %1653
        %1655 = vrot.lane.b32.xlu0 %v669, 96
        %v1656 = vpop.permute.xlu0 %1655
        %1657 = vrot.lane.b32.xlu0 %v670, 96
        %v1658 = vpop.permute.xlu0 %1657
        %1659 = vrot.lane.b32.xlu0 %v671, 96
        %v1660 = vpop.permute.xlu0 %1659
        %1661 = vrot.lane.b32.xlu0 %v672, 96
        %v1662 = vpop.permute.xlu0 %1661
        %1663 = vrot.lane.b32.xlu0 %v673, 96
        %v1664 = vpop.permute.xlu0 %1663
        %1665 = vrot.lane.b32.xlu0 %v674, 96
        %v1666 = vpop.permute.xlu0 %1665
        %1667 = vrot.lane.b32.xlu0 %v675, 96
        %v1668 = vpop.permute.xlu0 %1667
        %1669 = vrot.lane.b32.xlu0 %v676, 96
        %v1670 = vpop.permute.xlu0 %1669
        %1671 = vrot.lane.b32.xlu0 %v677, 96
        %v1672 = vpop.permute.xlu0 %1671
        %1673 = vrot.lane.b32.xlu0 %v678, 96
        %v1674 = vpop.permute.xlu0 %1673
        %1675 = vrot.lane.b32.xlu0 %v679, 96
        %v1676 = vpop.permute.xlu0 %1675
        %1677 = vrot.lane.b32.xlu0 %v680, 96
        %v1678 = vpop.permute.xlu0 %1677
        %1679 = vrot.lane.b32.xlu0 %v681, 96
        %v1680 = vpop.permute.xlu0 %1679
        %1681 = vrot.lane.b32.xlu0 %v682, 96
        %v1682 = vpop.permute.xlu0 %1681
        %1683 = vrot.lane.b32.xlu0 %v683, 96
        %v1684 = vpop.permute.xlu0 %1683
        %1685 = vrot.lane.b32.xlu0 %v684, 96
        %v1686 = vpop.permute.xlu0 %1685
        %1687 = vrot.lane.b32.xlu0 %v685, 96
        %v1688 = vpop.permute.xlu0 %1687
        %1689 = vrot.lane.b32.xlu0 %v686, 96
        %v1690 = vpop.permute.xlu0 %1689
        %1691 = vrot.lane.b32.xlu0 %v687, 96
        %v1692 = vpop.permute.xlu0 %1691
        %1693 = vrot.lane.b32.xlu0 %v688, 96
        %v1694 = vpop.permute.xlu0 %1693
        %1695 = vrot.lane.b32.xlu0 %v689, 96
        %v1696 = vpop.permute.xlu0 %1695
        %1697 = vrot.lane.b32.xlu0 %v690, 96
        %v1698 = vpop.permute.xlu0 %1697
        %1699 = vrot.lane.b32.xlu0 %v691, 96
        %v1700 = vpop.permute.xlu0 %1699
        %1701 = vrot.lane.b32.xlu0 %v692, 96
        %v1702 = vpop.permute.xlu0 %1701
        %1703 = vrot.lane.b32.xlu0 %v693, 96
        %v1704 = vpop.permute.xlu0 %1703
        %1705 = vrot.lane.b32.xlu0 %v694, 96
        %v1706 = vpop.permute.xlu0 %1705
        %1707 = vrot.lane.b32.xlu0 %v695, 96
        %v1708 = vpop.permute.xlu0 %1707
        %1709 = vrot.lane.b32.xlu0 %v696, 96
        %v1710 = vpop.permute.xlu0 %1709
        %1711 = vrot.lane.b32.xlu0 %v697, 96
        %v1712 = vpop.permute.xlu0 %1711
        %1713 = vrot.lane.b32.xlu0 %v698, 96
        %v1714 = vpop.permute.xlu0 %1713
        %1715 = vrot.lane.b32.xlu0 %v699, 96
        %v1716 = vpop.permute.xlu0 %1715
        %1717 = vrot.lane.b32.xlu0 %v700, 96
        %v1718 = vpop.permute.xlu0 %1717
        %1719 = vrot.lane.b32.xlu0 %v701, 96
        %v1720 = vpop.permute.xlu0 %1719
        %1721 = vrot.lane.b32.xlu0 %v702, 96
        %v1722 = vpop.permute.xlu0 %1721
        %1723 = vrot.lane.b32.xlu0 %v703, 96
        %v1724 = vpop.permute.xlu0 %1723
        %1725 = vrot.lane.b32.xlu0 %v704, 96
        %v1726 = vpop.permute.xlu0 %1725
        %1727 = vrot.lane.b32.xlu0 %v705, 96
        %v1728 = vpop.permute.xlu0 %1727
        %1729 = vrot.lane.b32.xlu0 %v706, 96
        %v1730 = vpop.permute.xlu0 %1729
        %1731 = vrot.lane.b32.xlu0 %v707, 96
        %v1732 = vpop.permute.xlu0 %1731
        %1861 = vrot.lane.b32.xlu0 %v772, 32
        %v1862 = vpop.permute.xlu0 %1861
        %1863 = vrot.lane.b32.xlu0 %v773, 32
        %v1864 = vpop.permute.xlu0 %1863
        %1865 = vrot.lane.b32.xlu0 %v774, 32
        %v1866 = vpop.permute.xlu0 %1865
        %1867 = vrot.lane.b32.xlu0 %v775, 32
        %v1868 = vpop.permute.xlu0 %1867
        %1869 = vrot.lane.b32.xlu0 %v776, 32
        %v1870 = vpop.permute.xlu0 %1869
        %1871 = vrot.lane.b32.xlu0 %v777, 32
        %v1872 = vpop.permute.xlu0 %1871
        %1873 = vrot.lane.b32.xlu0 %v778, 32
        %v1874 = vpop.permute.xlu0 %1873
        %1875 = vrot.lane.b32.xlu0 %v779, 32
        %v1876 = vpop.permute.xlu0 %1875
        %1877 = vrot.lane.b32.xlu0 %v780, 32
        %v1878 = vpop.permute.xlu0 %1877
        %1879 = vrot.lane.b32.xlu0 %v781, 32
        %v1880 = vpop.permute.xlu0 %1879
        %1881 = vrot.lane.b32.xlu0 %v782, 32
        %v1882 = vpop.permute.xlu0 %1881
        %1883 = vrot.lane.b32.xlu0 %v783, 32
        %v1884 = vpop.permute.xlu0 %1883
        %1885 = vrot.lane.b32.xlu0 %v784, 32
        %v1886 = vpop.permute.xlu0 %1885
        %1887 = vrot.lane.b32.xlu0 %v785, 32
        %v1888 = vpop.permute.xlu0 %1887
        %1889 = vrot.lane.b32.xlu0 %v786, 32
        %v1890 = vpop.permute.xlu0 %1889
        %1891 = vrot.lane.b32.xlu0 %v787, 32
        %v1892 = vpop.permute.xlu0 %1891
        %1893 = vrot.lane.b32.xlu0 %v788, 32
        %v1894 = vpop.permute.xlu0 %1893
        %1895 = vrot.lane.b32.xlu0 %v789, 32
        %v1896 = vpop.permute.xlu0 %1895
        %1897 = vrot.lane.b32.xlu0 %v790, 32
        %v1898 = vpop.permute.xlu0 %1897
        %1899 = vrot.lane.b32.xlu0 %v791, 32
        %v1900 = vpop.permute.xlu0 %1899
        %1901 = vrot.lane.b32.xlu0 %v792, 32
        %v1902 = vpop.permute.xlu0 %1901
        %1903 = vrot.lane.b32.xlu0 %v793, 32
        %v1904 = vpop.permute.xlu0 %1903
        %1905 = vrot.lane.b32.xlu0 %v794, 32
        %v1906 = vpop.permute.xlu0 %1905
        %1907 = vrot.lane.b32.xlu0 %v795, 32
        %v1908 = vpop.permute.xlu0 %1907
        %1909 = vrot.lane.b32.xlu0 %v796, 32
        %v1910 = vpop.permute.xlu0 %1909
        %1911 = vrot.lane.b32.xlu0 %v797, 32
        %v1912 = vpop.permute.xlu0 %1911
        %1913 = vrot.lane.b32.xlu0 %v798, 32
        %v1914 = vpop.permute.xlu0 %1913
        %1915 = vrot.lane.b32.xlu0 %v799, 32
        %v1916 = vpop.permute.xlu0 %1915
        %1917 = vrot.lane.b32.xlu0 %v800, 32
        %v1918 = vpop.permute.xlu0 %1917
        %1919 = vrot.lane.b32.xlu0 %v801, 32
        %v1920 = vpop.permute.xlu0 %1919
        %1921 = vrot.lane.b32.xlu0 %v802, 32
        %v1922 = vpop.permute.xlu0 %1921
        %1923 = vrot.lane.b32.xlu0 %v803, 32
        %v1924 = vpop.permute.xlu0 %1923
        %1925 = vrot.lane.b32.xlu0 %v804, 32
        %v1926 = vpop.permute.xlu0 %1925
        %1927 = vrot.lane.b32.xlu0 %v805, 32
        %v1928 = vpop.permute.xlu0 %1927
        %1929 = vrot.lane.b32.xlu0 %v806, 32
        %v1930 = vpop.permute.xlu0 %1929
        %1931 = vrot.lane.b32.xlu0 %v807, 32
        %v1932 = vpop.permute.xlu0 %1931
        %1933 = vrot.lane.b32.xlu0 %v808, 32
        %v1934 = vpop.permute.xlu0 %1933
        %1935 = vrot.lane.b32.xlu0 %v809, 32
        %v1936 = vpop.permute.xlu0 %1935
        %1937 = vrot.lane.b32.xlu0 %v810, 32
        %v1938 = vpop.permute.xlu0 %1937
        %1939 = vrot.lane.b32.xlu0 %v811, 32
        %v1940 = vpop.permute.xlu0 %1939
        %1941 = vrot.lane.b32.xlu0 %v812, 32
        %v1942 = vpop.permute.xlu0 %1941
        %1943 = vrot.lane.b32.xlu0 %v813, 32
        %v1944 = vpop.permute.xlu0 %1943
        %1945 = vrot.lane.b32.xlu0 %v814, 32
        %v1946 = vpop.permute.xlu0 %1945
        %1947 = vrot.lane.b32.xlu0 %v815, 32
        %v1948 = vpop.permute.xlu0 %1947
        %1949 = vrot.lane.b32.xlu0 %v816, 32
        %v1950 = vpop.permute.xlu0 %1949
        %1951 = vrot.lane.b32.xlu0 %v817, 32
        %v1952 = vpop.permute.xlu0 %1951
        %1953 = vrot.lane.b32.xlu0 %v818, 32
        %v1954 = vpop.permute.xlu0 %1953
        %1955 = vrot.lane.b32.xlu0 %v819, 32
        %v1956 = vpop.permute.xlu0 %1955
        %1957 = vrot.lane.b32.xlu0 %v820, 32
        %v1958 = vpop.permute.xlu0 %1957
        %1959 = vrot.lane.b32.xlu0 %v821, 32
        %v1960 = vpop.permute.xlu0 %1959
        %1961 = vrot.lane.b32.xlu0 %v822, 32
        %v1962 = vpop.permute.xlu0 %1961
        %1963 = vrot.lane.b32.xlu0 %v823, 32
        %v1964 = vpop.permute.xlu0 %1963
        %1965 = vrot.lane.b32.xlu0 %v824, 32
        %v1966 = vpop.permute.xlu0 %1965
        %1967 = vrot.lane.b32.xlu0 %v825, 32
        %v1968 = vpop.permute.xlu0 %1967
        %1969 = vrot.lane.b32.xlu0 %v826, 32
        %v1970 = vpop.permute.xlu0 %1969
        %1971 = vrot.lane.b32.xlu0 %v827, 32
        %v1972 = vpop.permute.xlu0 %1971
        %1973 = vrot.lane.b32.xlu0 %v828, 32
        %v1974 = vpop.permute.xlu0 %1973
        %1975 = vrot.lane.b32.xlu0 %v829, 32
        %v1976 = vpop.permute.xlu0 %1975
        %1977 = vrot.lane.b32.xlu0 %v830, 32
        %v1978 = vpop.permute.xlu0 %1977
        %1979 = vrot.lane.b32.xlu0 %v831, 32
        %v1980 = vpop.permute.xlu0 %1979
        %1981 = vrot.lane.b32.xlu0 %v832, 32
        %v1982 = vpop.permute.xlu0 %1981
        %1983 = vrot.lane.b32.xlu0 %v833, 32
        %v1984 = vpop.permute.xlu0 %1983
        %1985 = vrot.lane.b32.xlu0 %v834, 32
        %v1986 = vpop.permute.xlu0 %1985
        %1987 = vrot.lane.b32.xlu0 %v835, 32
        %v1988 = vpop.permute.xlu0 %1987
        %2117 = vrot.lane.b32.xlu0 %v837, 64
        %v2118 = vpop.permute.xlu0 %2117
        %2119 = vrot.lane.b32.xlu0 %v838, 64
        %v2120 = vpop.permute.xlu0 %2119
        %2121 = vrot.lane.b32.xlu0 %v839, 64
        %v2122 = vpop.permute.xlu0 %2121
        %2123 = vrot.lane.b32.xlu0 %v840, 64
        %v2124 = vpop.permute.xlu0 %2123
        %2125 = vrot.lane.b32.xlu0 %v841, 64
        %v2126 = vpop.permute.xlu0 %2125
        %2127 = vrot.lane.b32.xlu0 %v842, 64
        %v2128 = vpop.permute.xlu0 %2127
        %2129 = vrot.lane.b32.xlu0 %v843, 64
        %v2130 = vpop.permute.xlu0 %2129
        %2131 = vrot.lane.b32.xlu0 %v844, 64
        %v2132 = vpop.permute.xlu0 %2131
        %2133 = vrot.lane.b32.xlu0 %v845, 64
        %v2134 = vpop.permute.xlu0 %2133
        %2135 = vrot.lane.b32.xlu0 %v846, 64
        %v2136 = vpop.permute.xlu0 %2135
        %2137 = vrot.lane.b32.xlu0 %v847, 64
        %v2138 = vpop.permute.xlu0 %2137
        %2139 = vrot.lane.b32.xlu0 %v848, 64
        %v2140 = vpop.permute.xlu0 %2139
        %2141 = vrot.lane.b32.xlu0 %v849, 64
        %v2142 = vpop.permute.xlu0 %2141
        %2143 = vrot.lane.b32.xlu0 %v850, 64
        %v2144 = vpop.permute.xlu0 %2143
        %2145 = vrot.lane.b32.xlu0 %v851, 64
        %v2146 = vpop.permute.xlu0 %2145
        %2147 = vrot.lane.b32.xlu0 %v852, 64
        %v2148 = vpop.permute.xlu0 %2147
        %2149 = vrot.lane.b32.xlu0 %v853, 64
        %v2150 = vpop.permute.xlu0 %2149
        %2151 = vrot.lane.b32.xlu0 %v854, 64
        %v2152 = vpop.permute.xlu0 %2151
        %2153 = vrot.lane.b32.xlu0 %v855, 64
        %v2154 = vpop.permute.xlu0 %2153
        %2155 = vrot.lane.b32.xlu0 %v856, 64
        %v2156 = vpop.permute.xlu0 %2155
        %2157 = vrot.lane.b32.xlu0 %v857, 64
        %v2158 = vpop.permute.xlu0 %2157
        %2159 = vrot.lane.b32.xlu0 %v858, 64
        %v2160 = vpop.permute.xlu0 %2159
        %2161 = vrot.lane.b32.xlu0 %v859, 64
        %v2162 = vpop.permute.xlu0 %2161
        %2163 = vrot.lane.b32.xlu0 %v860, 64
        %v2164 = vpop.permute.xlu0 %2163
        %2165 = vrot.lane.b32.xlu0 %v861, 64
        %v2166 = vpop.permute.xlu0 %2165
        %2167 = vrot.lane.b32.xlu0 %v862, 64
        %v2168 = vpop.permute.xlu0 %2167
        %2169 = vrot.lane.b32.xlu0 %v863, 64
        %v2170 = vpop.permute.xlu0 %2169
        %2171 = vrot.lane.b32.xlu0 %v864, 64
        %v2172 = vpop.permute.xlu0 %2171
        %2173 = vrot.lane.b32.xlu0 %v865, 64
        %v2174 = vpop.permute.xlu0 %2173
        %2175 = vrot.lane.b32.xlu0 %v866, 64
        %v2176 = vpop.permute.xlu0 %2175
        %2177 = vrot.lane.b32.xlu0 %v867, 64
        %v2178 = vpop.permute.xlu0 %2177
        %2179 = vrot.lane.b32.xlu0 %v868, 64
        %v2180 = vpop.permute.xlu0 %2179
        %2181 = vrot.lane.b32.xlu0 %v869, 64
        %v2182 = vpop.permute.xlu0 %2181
        %2183 = vrot.lane.b32.xlu0 %v870, 64
        %v2184 = vpop.permute.xlu0 %2183
        %2185 = vrot.lane.b32.xlu0 %v871, 64
        %v2186 = vpop.permute.xlu0 %2185
        %2187 = vrot.lane.b32.xlu0 %v872, 64
        %v2188 = vpop.permute.xlu0 %2187
        %2189 = vrot.lane.b32.xlu0 %v873, 64
        %v2190 = vpop.permute.xlu0 %2189
        %2191 = vrot.lane.b32.xlu0 %v874, 64
        %v2192 = vpop.permute.xlu0 %2191
        %2193 = vrot.lane.b32.xlu0 %v875, 64
        %v2194 = vpop.permute.xlu0 %2193
        %2195 = vrot.lane.b32.xlu0 %v876, 64
        %v2196 = vpop.permute.xlu0 %2195
        %2197 = vrot.lane.b32.xlu0 %v877, 64
        %v2198 = vpop.permute.xlu0 %2197
        %2199 = vrot.lane.b32.xlu0 %v878, 64
        %v2200 = vpop.permute.xlu0 %2199
        %2201 = vrot.lane.b32.xlu0 %v879, 64
        %v2202 = vpop.permute.xlu0 %2201
        %2203 = vrot.lane.b32.xlu0 %v880, 64
        %v2204 = vpop.permute.xlu0 %2203
        %2205 = vrot.lane.b32.xlu0 %v881, 64
        %v2206 = vpop.permute.xlu0 %2205
        %2207 = vrot.lane.b32.xlu0 %v882, 64
        %v2208 = vpop.permute.xlu0 %2207
        %2209 = vrot.lane.b32.xlu0 %v883, 64
        %v2210 = vpop.permute.xlu0 %2209
        %2211 = vrot.lane.b32.xlu0 %v884, 64
        %v2212 = vpop.permute.xlu0 %2211
        %2213 = vrot.lane.b32.xlu0 %v885, 64
        %v2214 = vpop.permute.xlu0 %2213
        %2215 = vrot.lane.b32.xlu0 %v886, 64
        %v2216 = vpop.permute.xlu0 %2215
        %2217 = vrot.lane.b32.xlu0 %v887, 64
        %v2218 = vpop.permute.xlu0 %2217
        %2219 = vrot.lane.b32.xlu0 %v888, 64
        %v2220 = vpop.permute.xlu0 %2219
        %2221 = vrot.lane.b32.xlu0 %v889, 64
        %v2222 = vpop.permute.xlu0 %2221
        %2223 = vrot.lane.b32.xlu0 %v890, 64
        %v2224 = vpop.permute.xlu0 %2223
        %2225 = vrot.lane.b32.xlu0 %v891, 64
        %v2226 = vpop.permute.xlu0 %2225
        %2227 = vrot.lane.b32.xlu0 %v892, 64
        %v2228 = vpop.permute.xlu0 %2227
        %2229 = vrot.lane.b32.xlu0 %v893, 64
        %v2230 = vpop.permute.xlu0 %2229
        %2231 = vrot.lane.b32.xlu0 %v894, 64
        %v2232 = vpop.permute.xlu0 %2231
        %2233 = vrot.lane.b32.xlu0 %v895, 64
        %v2234 = vpop.permute.xlu0 %2233
        %2235 = vrot.lane.b32.xlu0 %v896, 64
        %v2236 = vpop.permute.xlu0 %2235
        %2237 = vrot.lane.b32.xlu0 %v897, 64
        %v2238 = vpop.permute.xlu0 %2237
        %2239 = vrot.lane.b32.xlu0 %v898, 64
        %v2240 = vpop.permute.xlu0 %2239
        %2241 = vrot.lane.b32.xlu0 %v899, 64
        %v2242 = vpop.permute.xlu0 %2241
        %2243 = vrot.lane.b32.xlu0 %v900, 64
        %v2244 = vpop.permute.xlu0 %2243
        %2373 = vrot.lane.b32.xlu0 %v901, 96
        %v2374 = vpop.permute.xlu0 %2373
        %2375 = vrot.lane.b32.xlu0 %v902, 96
        %v2376 = vpop.permute.xlu0 %2375
        %2377 = vrot.lane.b32.xlu0 %v903, 96
        %v2378 = vpop.permute.xlu0 %2377
        %2379 = vrot.lane.b32.xlu0 %v904, 96
        %v2380 = vpop.permute.xlu0 %2379
        %2381 = vrot.lane.b32.xlu0 %v905, 96
        %v2382 = vpop.permute.xlu0 %2381
        %2383 = vrot.lane.b32.xlu0 %v906, 96
        %v2384 = vpop.permute.xlu0 %2383
        %2385 = vrot.lane.b32.xlu0 %v907, 96
        %v2386 = vpop.permute.xlu0 %2385
        %2387 = vrot.lane.b32.xlu0 %v908, 96
        %v2388 = vpop.permute.xlu0 %2387
        %2389 = vrot.lane.b32.xlu0 %v909, 96
        %v2390 = vpop.permute.xlu0 %2389
        %2391 = vrot.lane.b32.xlu0 %v910, 96
        %v2392 = vpop.permute.xlu0 %2391
        %2393 = vrot.lane.b32.xlu0 %v911, 96
        %v2394 = vpop.permute.xlu0 %2393
        %2395 = vrot.lane.b32.xlu0 %v912, 96
        %v2396 = vpop.permute.xlu0 %2395
        %2397 = vrot.lane.b32.xlu0 %v913, 96
        %v2398 = vpop.permute.xlu0 %2397
        %2399 = vrot.lane.b32.xlu0 %v914, 96
        %v2400 = vpop.permute.xlu0 %2399
        %2401 = vrot.lane.b32.xlu0 %v915, 96
        %v2402 = vpop.permute.xlu0 %2401
        %2403 = vrot.lane.b32.xlu0 %v916, 96
        %v2404 = vpop.permute.xlu0 %2403
        %2405 = vrot.lane.b32.xlu0 %v917, 96
        %v2406 = vpop.permute.xlu0 %2405
        %2407 = vrot.lane.b32.xlu0 %v918, 96
        %v2408 = vpop.permute.xlu0 %2407
        %2409 = vrot.lane.b32.xlu0 %v919, 96
        %v2410 = vpop.permute.xlu0 %2409
        %2411 = vrot.lane.b32.xlu0 %v920, 96
        %v2412 = vpop.permute.xlu0 %2411
        %2413 = vrot.lane.b32.xlu0 %v921, 96
        %v2414 = vpop.permute.xlu0 %2413
        %2415 = vrot.lane.b32.xlu0 %v922, 96
        %v2416 = vpop.permute.xlu0 %2415
        %2417 = vrot.lane.b32.xlu0 %v923, 96
        %v2418 = vpop.permute.xlu0 %2417
        %2419 = vrot.lane.b32.xlu0 %v924, 96
        %v2420 = vpop.permute.xlu0 %2419
        %2421 = vrot.lane.b32.xlu0 %v925, 96
        %v2422 = vpop.permute.xlu0 %2421
        %2423 = vrot.lane.b32.xlu0 %v926, 96
        %v2424 = vpop.permute.xlu0 %2423
        %2425 = vrot.lane.b32.xlu0 %v927, 96
        %v2426 = vpop.permute.xlu0 %2425
        %2427 = vrot.lane.b32.xlu0 %v928, 96
        %v2428 = vpop.permute.xlu0 %2427
        %2429 = vrot.lane.b32.xlu0 %v929, 96
        %v2430 = vpop.permute.xlu0 %2429
        %2431 = vrot.lane.b32.xlu0 %v930, 96
        %v2432 = vpop.permute.xlu0 %2431
        %2433 = vrot.lane.b32.xlu0 %v931, 96
        %v2434 = vpop.permute.xlu0 %2433
        %2435 = vrot.lane.b32.xlu0 %v932, 96
        %v2436 = vpop.permute.xlu0 %2435
        %2437 = vrot.lane.b32.xlu0 %v933, 96
        %v2438 = vpop.permute.xlu0 %2437
        %2439 = vrot.lane.b32.xlu0 %v934, 96
        %v2440 = vpop.permute.xlu0 %2439
        %2441 = vrot.lane.b32.xlu0 %v935, 96
        %v2442 = vpop.permute.xlu0 %2441
        %2443 = vrot.lane.b32.xlu0 %v936, 96
        %v2444 = vpop.permute.xlu0 %2443
        %2445 = vrot.lane.b32.xlu0 %v937, 96
        %v2446 = vpop.permute.xlu0 %2445
        %2447 = vrot.lane.b32.xlu0 %v938, 96
        %v2448 = vpop.permute.xlu0 %2447
        %2449 = vrot.lane.b32.xlu0 %v939, 96
        %v2450 = vpop.permute.xlu0 %2449
        %2451 = vrot.lane.b32.xlu0 %v940, 96
        %v2452 = vpop.permute.xlu0 %2451
        %2453 = vrot.lane.b32.xlu0 %v941, 96
        %v2454 = vpop.permute.xlu0 %2453
        %2455 = vrot.lane.b32.xlu0 %v942, 96
        %v2456 = vpop.permute.xlu0 %2455
        %2457 = vrot.lane.b32.xlu0 %v943, 96
        %v2458 = vpop.permute.xlu0 %2457
        %2459 = vrot.lane.b32.xlu0 %v944, 96
        %v2460 = vpop.permute.xlu0 %2459
        %2461 = vrot.lane.b32.xlu0 %v945, 96
        %v2462 = vpop.permute.xlu0 %2461
        %2463 = vrot.lane.b32.xlu0 %v946, 96
        %v2464 = vpop.permute.xlu0 %2463
        %2465 = vrot.lane.b32.xlu0 %v947, 96
        %v2466 = vpop.permute.xlu0 %2465
        %2467 = vrot.lane.b32.xlu0 %v948, 96
        %v2468 = vpop.permute.xlu0 %2467
        %2469 = vrot.lane.b32.xlu0 %v949, 96
        %v2470 = vpop.permute.xlu0 %2469
        %2471 = vrot.lane.b32.xlu0 %v950, 96
        %v2472 = vpop.permute.xlu0 %2471
        %2473 = vrot.lane.b32.xlu0 %v951, 96
        %v2474 = vpop.permute.xlu0 %2473
        %2475 = vrot.lane.b32.xlu0 %v952, 96
        %v2476 = vpop.permute.xlu0 %2475
        %2477 = vrot.lane.b32.xlu0 %v953, 96
        %v2478 = vpop.permute.xlu0 %2477
        %2479 = vrot.lane.b32.xlu0 %v954, 96
        %v2480 = vpop.permute.xlu0 %2479
        %2481 = vrot.lane.b32.xlu0 %v955, 96
        %v2482 = vpop.permute.xlu0 %2481
        %2483 = vrot.lane.b32.xlu0 %v956, 96
        %v2484 = vpop.permute.xlu0 %2483
        %2485 = vrot.lane.b32.xlu0 %v957, 96
        %v2486 = vpop.permute.xlu0 %2485
        %2487 = vrot.lane.b32.xlu0 %v958, 96
        %v2488 = vpop.permute.xlu0 %2487
        %2489 = vrot.lane.b32.xlu0 %v959, 96
        %v2490 = vpop.permute.xlu0 %2489
        %2491 = vrot.lane.b32.xlu0 %v960, 96
        %v2492 = vpop.permute.xlu0 %2491
        %2493 = vrot.lane.b32.xlu0 %v961, 96
        %v2494 = vpop.permute.xlu0 %2493
        %2495 = vrot.lane.b32.xlu0 %v962, 96
        %v2496 = vpop.permute.xlu0 %2495
        %2497 = vrot.lane.b32.xlu0 %v963, 96
        %v2498 = vpop.permute.xlu0 %2497
        %2499 = vrot.lane.b32.xlu0 %v964, 96
        %v2500 = vpop.permute.xlu0 %2499
        %vm2565 = vcmask 261120
        %v2566 = vsel %vm2565, %v451, %v1094
        %v2567 = vsel %vm2565, %v452, %v1096
        %v2568 = vsel %vm2565, %v453, %v1098
        %v2569 = vsel %vm2565, %v454, %v1100
        %v2570 = vsel %vm2565, %v455, %v1102
        %v2571 = vsel %vm2565, %v456, %v1104
        %v2572 = vsel %vm2565, %v457, %v1106
        %v2573 = vsel %vm2565, %v458, %v1108
        %v2574 = vsel %vm2565, %v459, %v1110
        %v2575 = vsel %vm2565, %v460, %v1112
        %v2576 = vsel %vm2565, %v461, %v1114
        %v2577 = vsel %vm2565, %v462, %v1116
        %v2578 = vsel %vm2565, %v463, %v1118
        %v2579 = vsel %vm2565, %v464, %v1120
        %v2580 = vsel %vm2565, %v465, %v1122
        %v2581 = vsel %vm2565, %v466, %v1124
        %v2582 = vsel %vm2565, %v467, %v1126
        %v2583 = vsel %vm2565, %v468, %v1128
        %v2584 = vsel %vm2565, %v469, %v1130
        %v2585 = vsel %vm2565, %v470, %v1132
        %v2586 = vsel %vm2565, %v471, %v1134
        %v2587 = vsel %vm2565, %v472, %v1136
        %v2588 = vsel %vm2565, %v473, %v1138
        %v2589 = vsel %vm2565, %v474, %v1140
        %v2590 = vsel %vm2565, %v475, %v1142
        %v2591 = vsel %vm2565, %v476, %v1144
        %v2592 = vsel %vm2565, %v477, %v1146
        %v2593 = vsel %vm2565, %v478, %v1148
        %v2594 = vsel %vm2565, %v479, %v1150
        %v2595 = vsel %vm2565, %v480, %v1152
        %v2596 = vsel %vm2565, %v481, %v1154
        %v2597 = vsel %vm2565, %v482, %v1156
        %v2598 = vsel %vm2565, %v483, %v1158
        %v2599 = vsel %vm2565, %v484, %v1160
        %v2600 = vsel %vm2565, %v485, %v1162
        %v2601 = vsel %vm2565, %v486, %v1164
        %v2602 = vsel %vm2565, %v487, %v1166
        %v2603 = vsel %vm2565, %v488, %v1168
        %v2604 = vsel %vm2565, %v489, %v1170
        %v2605 = vsel %vm2565, %v490, %v1172
        %v2606 = vsel %vm2565, %v491, %v1174
        %v2607 = vsel %vm2565, %v492, %v1176
        %v2608 = vsel %vm2565, %v493, %v1178
        %v2609 = vsel %vm2565, %v494, %v1180
        %v2610 = vsel %vm2565, %v495, %v1182
        %v2611 = vsel %vm2565, %v496, %v1184
        %v2612 = vsel %vm2565, %v497, %v1186
        %v2613 = vsel %vm2565, %v498, %v1188
        %v2614 = vsel %vm2565, %v499, %v1190
        %v2615 = vsel %vm2565, %v500, %v1192
        %v2616 = vsel %vm2565, %v501, %v1194
        %v2617 = vsel %vm2565, %v502, %v1196
        %v2618 = vsel %vm2565, %v503, %v1198
        %v2619 = vsel %vm2565, %v504, %v1200
        %v2620 = vsel %vm2565, %v505, %v1202
        %v2621 = vsel %vm2565, %v506, %v1204
        %v2622 = vsel %vm2565, %v507, %v1206
        %v2623 = vsel %vm2565, %v508, %v1208
        %v2624 = vsel %vm2565, %v509, %v1210
        %v2625 = vsel %vm2565, %v510, %v1212
        %v2626 = vsel %vm2565, %v511, %v1214
        %v2627 = vsel %vm2565, %v512, %v1216
        %v2628 = vsel %vm2565, %v513, %v1218
        %v2629 = vsel %vm2565, %v514, %v1220
        %vm2630 = vcmask 523264
        %v2631 = vsel %vm2630, %v2566, %v1350
        %v2632 = vsel %vm2630, %v2567, %v1352
        %v2633 = vsel %vm2630, %v2568, %v1354
        %v2634 = vsel %vm2630, %v2569, %v1356
        %v2635 = vsel %vm2630, %v2570, %v1358
        %v2636 = vsel %vm2630, %v2571, %v1360
        %v2637 = vsel %vm2630, %v2572, %v1362
        %v2638 = vsel %vm2630, %v2573, %v1364
        %v2639 = vsel %vm2630, %v2574, %v1366
        %v2640 = vsel %vm2630, %v2575, %v1368
        %v2641 = vsel %vm2630, %v2576, %v1370
        %v2642 = vsel %vm2630, %v2577, %v1372
        %v2643 = vsel %vm2630, %v2578, %v1374
        %v2644 = vsel %vm2630, %v2579, %v1376
        %v2645 = vsel %vm2630, %v2580, %v1378
        %v2646 = vsel %vm2630, %v2581, %v1380
        %v2647 = vsel %vm2630, %v2582, %v1382
        %v2648 = vsel %vm2630, %v2583, %v1384
        %v2649 = vsel %vm2630, %v2584, %v1386
        %v2650 = vsel %vm2630, %v2585, %v1388
        %v2651 = vsel %vm2630, %v2586, %v1390
        %v2652 = vsel %vm2630, %v2587, %v1392
        %v2653 = vsel %vm2630, %v2588, %v1394
        %v2654 = vsel %vm2630, %v2589, %v1396
        %v2655 = vsel %vm2630, %v2590, %v1398
        %v2656 = vsel %vm2630, %v2591, %v1400
        %v2657 = vsel %vm2630, %v2592, %v1402
        %v2658 = vsel %vm2630, %v2593, %v1404
        %v2659 = vsel %vm2630, %v2594, %v1406
        %v2660 = vsel %vm2630, %v2595, %v1408
        %v2661 = vsel %vm2630, %v2596, %v1410
        %v2662 = vsel %vm2630, %v2597, %v1412
        %v2663 = vsel %vm2630, %v2598, %v1414
        %v2664 = vsel %vm2630, %v2599, %v1416
        %v2665 = vsel %vm2630, %v2600, %v1418
        %v2666 = vsel %vm2630, %v2601, %v1420
        %v2667 = vsel %vm2630, %v2602, %v1422
        %v2668 = vsel %vm2630, %v2603, %v1424
        %v2669 = vsel %vm2630, %v2604, %v1426
        %v2670 = vsel %vm2630, %v2605, %v1428
        %v2671 = vsel %vm2630, %v2606, %v1430
        %v2672 = vsel %vm2630, %v2607, %v1432
        %v2673 = vsel %vm2630, %v2608, %v1434
        %v2674 = vsel %vm2630, %v2609, %v1436
        %v2675 = vsel %vm2630, %v2610, %v1438
        %v2676 = vsel %vm2630, %v2611, %v1440
        %v2677 = vsel %vm2630, %v2612, %v1442
        %v2678 = vsel %vm2630, %v2613, %v1444
        %v2679 = vsel %vm2630, %v2614, %v1446
        %v2680 = vsel %vm2630, %v2615, %v1448
        %v2681 = vsel %vm2630, %v2616, %v1450
        %v2682 = vsel %vm2630, %v2617, %v1452
        %v2683 = vsel %vm2630, %v2618, %v1454
        %v2684 = vsel %vm2630, %v2619, %v1456
        %v2685 = vsel %vm2630, %v2620, %v1458
        %v2686 = vsel %vm2630, %v2621, %v1460
        %v2687 = vsel %vm2630, %v2622, %v1462
        %v2688 = vsel %vm2630, %v2623, %v1464
        %v2689 = vsel %vm2630, %v2624, %v1466
        %v2690 = vsel %vm2630, %v2625, %v1468
        %v2691 = vsel %vm2630, %v2626, %v1470
        %v2692 = vsel %vm2630, %v2627, %v1472
        %v2693 = vsel %vm2630, %v2628, %v1474
        %v2694 = vsel %vm2630, %v2629, %v1476
        %vm2695 = vcmask 785408
        %v2696 = vsel %vm2695, %v2631, %v1606
        %v2697 = vsel %vm2695, %v2632, %v1608
        %v2698 = vsel %vm2695, %v2633, %v1610
        %v2699 = vsel %vm2695, %v2634, %v1612
        %v2700 = vsel %vm2695, %v2635, %v1614
        %v2701 = vsel %vm2695, %v2636, %v1616
        %v2702 = vsel %vm2695, %v2637, %v1618
        %v2703 = vsel %vm2695, %v2638, %v1620
        %v2704 = vsel %vm2695, %v2639, %v1622
        %v2705 = vsel %vm2695, %v2640, %v1624
        %v2706 = vsel %vm2695, %v2641, %v1626
        %v2707 = vsel %vm2695, %v2642, %v1628
        %v2708 = vsel %vm2695, %v2643, %v1630
        %v2709 = vsel %vm2695, %v2644, %v1632
        %v2710 = vsel %vm2695, %v2645, %v1634
        %v2711 = vsel %vm2695, %v2646, %v1636
        %v2712 = vsel %vm2695, %v2647, %v1638
        %v2713 = vsel %vm2695, %v2648, %v1640
        %v2714 = vsel %vm2695, %v2649, %v1642
        %v2715 = vsel %vm2695, %v2650, %v1644
        %v2716 = vsel %vm2695, %v2651, %v1646
        %v2717 = vsel %vm2695, %v2652, %v1648
        %v2718 = vsel %vm2695, %v2653, %v1650
        %v2719 = vsel %vm2695, %v2654, %v1652
        %v2720 = vsel %vm2695, %v2655, %v1654
        %v2721 = vsel %vm2695, %v2656, %v1656
        %v2722 = vsel %vm2695, %v2657, %v1658
        %v2723 = vsel %vm2695, %v2658, %v1660
        %v2724 = vsel %vm2695, %v2659, %v1662
        %v2725 = vsel %vm2695, %v2660, %v1664
        %v2726 = vsel %vm2695, %v2661, %v1666
        %v2727 = vsel %vm2695, %v2662, %v1668
        %v2728 = vsel %vm2695, %v2663, %v1670
        %v2729 = vsel %vm2695, %v2664, %v1672
        %v2730 = vsel %vm2695, %v2665, %v1674
        %v2731 = vsel %vm2695, %v2666, %v1676
        %v2732 = vsel %vm2695, %v2667, %v1678
        %v2733 = vsel %vm2695, %v2668, %v1680
        %v2734 = vsel %vm2695, %v2669, %v1682
        %v2735 = vsel %vm2695, %v2670, %v1684
        %v2736 = vsel %vm2695, %v2671, %v1686
        %v2737 = vsel %vm2695, %v2672, %v1688
        %v2738 = vsel %vm2695, %v2673, %v1690
        %v2739 = vsel %vm2695, %v2674, %v1692
        %v2740 = vsel %vm2695, %v2675, %v1694
        %v2741 = vsel %vm2695, %v2676, %v1696
        %v2742 = vsel %vm2695, %v2677, %v1698
        %v2743 = vsel %vm2695, %v2678, %v1700
        %v2744 = vsel %vm2695, %v2679, %v1702
        %v2745 = vsel %vm2695, %v2680, %v1704
        %v2746 = vsel %vm2695, %v2681, %v1706
        %v2747 = vsel %vm2695, %v2682, %v1708
        %v2748 = vsel %vm2695, %v2683, %v1710
        %v2749 = vsel %vm2695, %v2684, %v1712
        %v2750 = vsel %vm2695, %v2685, %v1714
        %v2751 = vsel %vm2695, %v2686, %v1716
        %v2752 = vsel %vm2695, %v2687, %v1718
        %v2753 = vsel %vm2695, %v2688, %v1720
        %v2754 = vsel %vm2695, %v2689, %v1722
        %v2755 = vsel %vm2695, %v2690, %v1724
        %v2756 = vsel %vm2695, %v2691, %v1726
        %v2757 = vsel %vm2695, %v2692, %v1728
        %v2758 = vsel %vm2695, %v2693, %v1730
        %v2759 = vsel %vm2695, %v2694, %v1732
        %v2760 = vsel %vm2565, %v708, %v1862
        %v2761 = vsel %vm2565, %v709, %v1864
        %v2762 = vsel %vm2565, %v710, %v1866
        %v2763 = vsel %vm2565, %v711, %v1868
        %v2764 = vsel %vm2565, %v712, %v1870
        %v2765 = vsel %vm2565, %v713, %v1872
        %v2766 = vsel %vm2565, %v714, %v1874
        %v2767 = vsel %vm2565, %v715, %v1876
        %v2768 = vsel %vm2565, %v716, %v1878
        %v2769 = vsel %vm2565, %v717, %v1880
        %v2770 = vsel %vm2565, %v718, %v1882
        %v2771 = vsel %vm2565, %v719, %v1884
        %v2772 = vsel %vm2565, %v720, %v1886
        %v2773 = vsel %vm2565, %v721, %v1888
        %v2774 = vsel %vm2565, %v722, %v1890
        %v2775 = vsel %vm2565, %v723, %v1892
        %v2776 = vsel %vm2565, %v724, %v1894
        %v2777 = vsel %vm2565, %v725, %v1896
        %v2778 = vsel %vm2565, %v726, %v1898
        %v2779 = vsel %vm2565, %v727, %v1900
        %v2780 = vsel %vm2565, %v728, %v1902
        %v2781 = vsel %vm2565, %v729, %v1904
        %v2782 = vsel %vm2565, %v730, %v1906
        %v2783 = vsel %vm2565, %v731, %v1908
        %v2784 = vsel %vm2565, %v732, %v1910
        %v2785 = vsel %vm2565, %v733, %v1912
        %v2786 = vsel %vm2565, %v734, %v1914
        %v2787 = vsel %vm2565, %v735, %v1916
        %v2788 = vsel %vm2565, %v736, %v1918
        %v2789 = vsel %vm2565, %v737, %v1920
        %v2790 = vsel %vm2565, %v738, %v1922
        %v2791 = vsel %vm2565, %v739, %v1924
        %v2792 = vsel %vm2565, %v740, %v1926
        %v2793 = vsel %vm2565, %v741, %v1928
        %v2794 = vsel %vm2565, %v742, %v1930
        %v2795 = vsel %vm2565, %v743, %v1932
        %v2796 = vsel %vm2565, %v744, %v1934
        %v2797 = vsel %vm2565, %v745, %v1936
        %v2798 = vsel %vm2565, %v746, %v1938
        %v2799 = vsel %vm2565, %v747, %v1940
        %v2800 = vsel %vm2565, %v748, %v1942
        %v2801 = vsel %vm2565, %v749, %v1944
        %v2802 = vsel %vm2565, %v750, %v1946
        %v2803 = vsel %vm2565, %v751, %v1948
        %v2804 = vsel %vm2565, %v752, %v1950
        %v2805 = vsel %vm2565, %v753, %v1952
        %v2806 = vsel %vm2565, %v754, %v1954
        %v2807 = vsel %vm2565, %v755, %v1956
        %v2808 = vsel %vm2565, %v756, %v1958
        %v2809 = vsel %vm2565, %v757, %v1960
        %v2810 = vsel %vm2565, %v758, %v1962
        %v2811 = vsel %vm2565, %v759, %v1964
        %v2812 = vsel %vm2565, %v760, %v1966
        %v2813 = vsel %vm2565, %v761, %v1968
        %v2814 = vsel %vm2565, %v762, %v1970
        %v2815 = vsel %vm2565, %v763, %v1972
        %v2816 = vsel %vm2565, %v764, %v1974
        %v2817 = vsel %vm2565, %v765, %v1976
        %v2818 = vsel %vm2565, %v766, %v1978
        %v2819 = vsel %vm2565, %v767, %v1980
        %v2820 = vsel %vm2565, %v768, %v1982
        %v2821 = vsel %vm2565, %v769, %v1984
        %v2822 = vsel %vm2565, %v770, %v1986
        %v2823 = vsel %vm2565, %v771, %v1988
        %v2824 = vsel %vm2630, %v2760, %v2118
        %v2825 = vsel %vm2630, %v2761, %v2120
        %v2826 = vsel %vm2630, %v2762, %v2122
        %v2827 = vsel %vm2630, %v2763, %v2124
        %v2828 = vsel %vm2630, %v2764, %v2126
        %v2829 = vsel %vm2630, %v2765, %v2128
        %v2830 = vsel %vm2630, %v2766, %v2130
        %v2831 = vsel %vm2630, %v2767, %v2132
        %v2832 = vsel %vm2630, %v2768, %v2134
        %v2833 = vsel %vm2630, %v2769, %v2136
        %v2834 = vsel %vm2630, %v2770, %v2138
        %v2835 = vsel %vm2630, %v2771, %v2140
        %v2836 = vsel %vm2630, %v2772, %v2142
        %v2837 = vsel %vm2630, %v2773, %v2144
        %v2838 = vsel %vm2630, %v2774, %v2146
        %v2839 = vsel %vm2630, %v2775, %v2148
        %v2840 = vsel %vm2630, %v2776, %v2150
        %v2841 = vsel %vm2630, %v2777, %v2152
        %v2842 = vsel %vm2630, %v2778, %v2154
        %v2843 = vsel %vm2630, %v2779, %v2156
        %v2844 = vsel %vm2630, %v2780, %v2158
        %v2845 = vsel %vm2630, %v2781, %v2160
        %v2846 = vsel %vm2630, %v2782, %v2162
        %v2847 = vsel %vm2630, %v2783, %v2164
        %v2848 = vsel %vm2630, %v2784, %v2166
        %v2849 = vsel %vm2630, %v2785, %v2168
        %v2850 = vsel %vm2630, %v2786, %v2170
        %v2851 = vsel %vm2630, %v2787, %v2172
        %v2852 = vsel %vm2630, %v2788, %v2174
        %v2853 = vsel %vm2630, %v2789, %v2176
        %v2854 = vsel %vm2630, %v2790, %v2178
        %v2855 = vsel %vm2630, %v2791, %v2180
        %v2856 = vsel %vm2630, %v2792, %v2182
        %v2857 = vsel %vm2630, %v2793, %v2184
        %v2858 = vsel %vm2630, %v2794, %v2186
        %v2859 = vsel %vm2630, %v2795, %v2188
        %v2860 = vsel %vm2630, %v2796, %v2190
        %v2861 = vsel %vm2630, %v2797, %v2192
        %v2862 = vsel %vm2630, %v2798, %v2194
        %v2863 = vsel %vm2630, %v2799, %v2196
        %v2864 = vsel %vm2630, %v2800, %v2198
        %v2865 = vsel %vm2630, %v2801, %v2200
        %v2866 = vsel %vm2630, %v2802, %v2202
        %v2867 = vsel %vm2630, %v2803, %v2204
        %v2868 = vsel %vm2630, %v2804, %v2206
        %v2869 = vsel %vm2630, %v2805, %v2208
        %v2870 = vsel %vm2630, %v2806, %v2210
        %v2871 = vsel %vm2630, %v2807, %v2212
        %v2872 = vsel %vm2630, %v2808, %v2214
        %v2873 = vsel %vm2630, %v2809, %v2216
        %v2874 = vsel %vm2630, %v2810, %v2218
        %v2875 = vsel %vm2630, %v2811, %v2220
        %v2876 = vsel %vm2630, %v2812, %v2222
        %v2877 = vsel %vm2630, %v2813, %v2224
        %v2878 = vsel %vm2630, %v2814, %v2226
        %v2879 = vsel %vm2630, %v2815, %v2228
        %v2880 = vsel %vm2630, %v2816, %v2230
        %v2881 = vsel %vm2630, %v2817, %v2232
        %v2882 = vsel %vm2630, %v2818, %v2234
        %v2883 = vsel %vm2630, %v2819, %v2236
        %v2884 = vsel %vm2630, %v2820, %v2238
        %v2885 = vsel %vm2630, %v2821, %v2240
        %v2886 = vsel %vm2630, %v2822, %v2242
        %v2887 = vsel %vm2630, %v2823, %v2244
        %v2888 = vsel %vm2695, %v2824, %v2374
        %v2889 = vsel %vm2695, %v2825, %v2376
        %v2890 = vsel %vm2695, %v2826, %v2378
        %v2891 = vsel %vm2695, %v2827, %v2380
        %v2892 = vsel %vm2695, %v2828, %v2382
        %v2893 = vsel %vm2695, %v2829, %v2384
        %v2894 = vsel %vm2695, %v2830, %v2386
        %v2895 = vsel %vm2695, %v2831, %v2388
        %v2896 = vsel %vm2695, %v2832, %v2390
        %v2897 = vsel %vm2695, %v2833, %v2392
        %v2898 = vsel %vm2695, %v2834, %v2394
        %v2899 = vsel %vm2695, %v2835, %v2396
        %v2900 = vsel %vm2695, %v2836, %v2398
        %v2901 = vsel %vm2695, %v2837, %v2400
        %v2902 = vsel %vm2695, %v2838, %v2402
        %v2903 = vsel %vm2695, %v2839, %v2404
        %v2904 = vsel %vm2695, %v2840, %v2406
        %v2905 = vsel %vm2695, %v2841, %v2408
        %v2906 = vsel %vm2695, %v2842, %v2410
        %v2907 = vsel %vm2695, %v2843, %v2412
        %v2908 = vsel %vm2695, %v2844, %v2414
        %v2909 = vsel %vm2695, %v2845, %v2416
        %v2910 = vsel %vm2695, %v2846, %v2418
        %v2911 = vsel %vm2695, %v2847, %v2420
        %v2912 = vsel %vm2695, %v2848, %v2422
        %v2913 = vsel %vm2695, %v2849, %v2424
        %v2914 = vsel %vm2695, %v2850, %v2426
        %v2915 = vsel %vm2695, %v2851, %v2428
        %v2916 = vsel %vm2695, %v2852, %v2430
        %v2917 = vsel %vm2695, %v2853, %v2432
        %v2918 = vsel %vm2695, %v2854, %v2434
        %v2919 = vsel %vm2695, %v2855, %v2436
        %v2920 = vsel %vm2695, %v2856, %v2438
        %v2921 = vsel %vm2695, %v2857, %v2440
        %v2922 = vsel %vm2695, %v2858, %v2442
        %v2923 = vsel %vm2695, %v2859, %v2444
        %v2924 = vsel %vm2695, %v2860, %v2446
        %v2925 = vsel %vm2695, %v2861, %v2448
        %v2926 = vsel %vm2695, %v2862, %v2450
        %v2927 = vsel %vm2695, %v2863, %v2452
        %v2928 = vsel %vm2695, %v2864, %v2454
        %v2929 = vsel %vm2695, %v2865, %v2456
        %v2930 = vsel %vm2695, %v2866, %v2458
        %v2931 = vsel %vm2695, %v2867, %v2460
        %v2932 = vsel %vm2695, %v2868, %v2462
        %v2933 = vsel %vm2695, %v2869, %v2464
        %v2934 = vsel %vm2695, %v2870, %v2466
        %v2935 = vsel %vm2695, %v2871, %v2468
        %v2936 = vsel %vm2695, %v2872, %v2470
        %v2937 = vsel %vm2695, %v2873, %v2472
        %v2938 = vsel %vm2695, %v2874, %v2474
        %v2939 = vsel %vm2695, %v2875, %v2476
        %v2940 = vsel %vm2695, %v2876, %v2478
        %v2941 = vsel %vm2695, %v2877, %v2480
        %v2942 = vsel %vm2695, %v2878, %v2482
        %v2943 = vsel %vm2695, %v2879, %v2484
        %v2944 = vsel %vm2695, %v2880, %v2486
        %v2945 = vsel %vm2695, %v2881, %v2488
        %v2946 = vsel %vm2695, %v2882, %v2490
        %v2947 = vsel %vm2695, %v2883, %v2492
        %v2948 = vsel %vm2695, %v2884, %v2494
        %v2949 = vsel %vm2695, %v2885, %v2496
        %v2950 = vsel %vm2695, %v2886, %v2498
        %v2951 = vsel %vm2695, %v2887, %v2500
        %s2952 = smul.u32 %s450, 512
        %s2953 = scalar_lea.vmem %s260, %s2952
        %v2954 = vld [vmem:[%s2953] sm:$0xff]
        %v2955 = vld [vmem:[%s2953 + $0x8] sm:$0xff]
        %v2956 = vld [vmem:[%s2953 + $0x10] sm:$0xff]
        %v2957 = vld [vmem:[%s2953 + $0x18] sm:$0xff]
        %v2958 = vld [vmem:[%s2953 + $0x20] sm:$0xff]
        %v2959 = vld [vmem:[%s2953 + $0x28] sm:$0xff]
        %v2960 = vld [vmem:[%s2953 + $0x30] sm:$0xff]
        %v2961 = vld [vmem:[%s2953 + $0x38] sm:$0xff]
        %v2962 = vld [vmem:[%s2953 + $0x40] sm:$0xff]
        %v2963 = vld [vmem:[%s2953 + $0x48] sm:$0xff]
        %v2964 = vld [vmem:[%s2953 + $0x50] sm:$0xff]
        %v2965 = vld [vmem:[%s2953 + $0x58] sm:$0xff]
        %v2966 = vld [vmem:[%s2953 + $0x60] sm:$0xff]
        %v2967 = vld [vmem:[%s2953 + $0x68] sm:$0xff]
        %v2968 = vld [vmem:[%s2953 + $0x70] sm:$0xff]
        %v2969 = vld [vmem:[%s2953 + $0x78] sm:$0xff]
        %v2970 = vld [vmem:[%s2953 + $0x80] sm:$0xff]
        %v2971 = vld [vmem:[%s2953 + $0x88] sm:$0xff]
        %v2972 = vld [vmem:[%s2953 + $0x90] sm:$0xff]
        %v2973 = vld [vmem:[%s2953 + $0x98] sm:$0xff]
        %v2974 = vld [vmem:[%s2953 + $0xa0] sm:$0xff]
        %v2975 = vld [vmem:[%s2953 + $0xa8] sm:$0xff]
        %v2976 = vld [vmem:[%s2953 + $0xb0] sm:$0xff]
        %v2977 = vld [vmem:[%s2953 + $0xb8] sm:$0xff]
        %v2978 = vld [vmem:[%s2953 + $0xc0] sm:$0xff]
        %v2979 = vld [vmem:[%s2953 + $0xc8] sm:$0xff]
        %v2980 = vld [vmem:[%s2953 + $0xd0] sm:$0xff]
        %v2981 = vld [vmem:[%s2953 + $0xd8] sm:$0xff]
        %v2982 = vld [vmem:[%s2953 + $0xe0] sm:$0xff]
        %v2983 = vld [vmem:[%s2953 + $0xe8] sm:$0xff]
        %v2984 = vld [vmem:[%s2953 + $0xf0] sm:$0xff]
        %v2985 = vld [vmem:[%s2953 + $0xf8] sm:$0xff]
        %v2986 = vld [vmem:[%s2953 + $0x100] sm:$0xff]
        %v2987 = vld [vmem:[%s2953 + $0x108] sm:$0xff]
        %v2988 = vld [vmem:[%s2953 + $0x110] sm:$0xff]
        %v2989 = vld [vmem:[%s2953 + $0x118] sm:$0xff]
        %v2990 = vld [vmem:[%s2953 + $0x120] sm:$0xff]
        %v2991 = vld [vmem:[%s2953 + $0x128] sm:$0xff]
        %v2992 = vld [vmem:[%s2953 + $0x130] sm:$0xff]
        %v2993 = vld [vmem:[%s2953 + $0x138] sm:$0xff]
        %v2994 = vld [vmem:[%s2953 + $0x140] sm:$0xff]
        %v2995 = vld [vmem:[%s2953 + $0x148] sm:$0xff]
        %v2996 = vld [vmem:[%s2953 + $0x150] sm:$0xff]
        %v2997 = vld [vmem:[%s2953 + $0x158] sm:$0xff]
        %v2998 = vld [vmem:[%s2953 + $0x160] sm:$0xff]
        %v2999 = vld [vmem:[%s2953 + $0x168] sm:$0xff]
        %v3000 = vld [vmem:[%s2953 + $0x170] sm:$0xff]
        %v3001 = vld [vmem:[%s2953 + $0x178] sm:$0xff]
        %v3002 = vld [vmem:[%s2953 + $0x180] sm:$0xff]
        %v3003 = vld [vmem:[%s2953 + $0x188] sm:$0xff]
        %v3004 = vld [vmem:[%s2953 + $0x190] sm:$0xff]
        %v3005 = vld [vmem:[%s2953 + $0x198] sm:$0xff]
        %v3006 = vld [vmem:[%s2953 + $0x1a0] sm:$0xff]
        %v3007 = vld [vmem:[%s2953 + $0x1a8] sm:$0xff]
        %v3008 = vld [vmem:[%s2953 + $0x1b0] sm:$0xff]
        %v3009 = vld [vmem:[%s2953 + $0x1b8] sm:$0xff]
        %v3010 = vld [vmem:[%s2953 + $0x1c0] sm:$0xff]
        %v3011 = vld [vmem:[%s2953 + $0x1c8] sm:$0xff]
        %v3012 = vld [vmem:[%s2953 + $0x1d0] sm:$0xff]
        %v3013 = vld [vmem:[%s2953 + $0x1d8] sm:$0xff]
        %v3014 = vld [vmem:[%s2953 + $0x1e0] sm:$0xff]
        %v3015 = vld [vmem:[%s2953 + $0x1e8] sm:$0xff]
        %v3016 = vld [vmem:[%s2953 + $0x1f0] sm:$0xff]
        %v3017 = vld [vmem:[%s2953 + $0x1f8] sm:$0xff]
        %v3019 = vsel %vm2565, %v965, 0
        %v3022 = vsel %vm2565, %v966, 0
        %v3025 = vsel %vm2565, %v967, 0
        %v3028 = vsel %vm2565, %v968, 0
        %v3031 = vsel %vm2565, %v969, 0
        %v3034 = vsel %vm2565, %v970, 0
        %v3037 = vsel %vm2565, %v971, 0
        %v3040 = vsel %vm2565, %v972, 0
        %v3043 = vsel %vm2565, %v973, 0
        %v3046 = vsel %vm2565, %v974, 0
        %v3049 = vsel %vm2565, %v975, 0
        %v3052 = vsel %vm2565, %v976, 0
        %v3055 = vsel %vm2565, %v977, 0
        %v3058 = vsel %vm2565, %v978, 0
        %v3061 = vsel %vm2565, %v979, 0
        %v3064 = vsel %vm2565, %v980, 0
        %v3067 = vsel %vm2565, %v981, 0
        %v3070 = vsel %vm2565, %v982, 0
        %v3073 = vsel %vm2565, %v983, 0
        %v3076 = vsel %vm2565, %v984, 0
        %v3079 = vsel %vm2565, %v985, 0
        %v3082 = vsel %vm2565, %v986, 0
        %v3085 = vsel %vm2565, %v987, 0
        %v3088 = vsel %vm2565, %v988, 0
        %v3091 = vsel %vm2565, %v989, 0
        %v3094 = vsel %vm2565, %v990, 0
        %v3097 = vsel %vm2565, %v991, 0
        %v3100 = vsel %vm2565, %v992, 0
        %v3103 = vsel %vm2565, %v993, 0
        %v3106 = vsel %vm2565, %v994, 0
        %v3109 = vsel %vm2565, %v995, 0
        %v3112 = vsel %vm2565, %v996, 0
        %v3115 = vsel %vm2565, %v997, 0
        %v3118 = vsel %vm2565, %v998, 0
        %v3121 = vsel %vm2565, %v999, 0
        %v3124 = vsel %vm2565, %v1000, 0
        %v3127 = vsel %vm2565, %v1001, 0
        %v3130 = vsel %vm2565, %v1002, 0
        %v3133 = vsel %vm2565, %v1003, 0
        %v3136 = vsel %vm2565, %v1004, 0
        %v3139 = vsel %vm2565, %v1005, 0
        %v3142 = vsel %vm2565, %v1006, 0
        %v3145 = vsel %vm2565, %v1007, 0
        %v3148 = vsel %vm2565, %v1008, 0
        %v3151 = vsel %vm2565, %v1009, 0
        %v3154 = vsel %vm2565, %v1010, 0
        %v3157 = vsel %vm2565, %v1011, 0
        %v3160 = vsel %vm2565, %v1012, 0
        %v3163 = vsel %vm2565, %v1013, 0
        %v3166 = vsel %vm2565, %v1014, 0
        %v3169 = vsel %vm2565, %v1015, 0
        %v3172 = vsel %vm2565, %v1016, 0
        %v3175 = vsel %vm2565, %v1017, 0
        %v3178 = vsel %vm2565, %v1018, 0
        %v3181 = vsel %vm2565, %v1019, 0
        %v3184 = vsel %vm2565, %v1020, 0
        %v3187 = vsel %vm2565, %v1021, 0
        %v3190 = vsel %vm2565, %v1022, 0
        %v3193 = vsel %vm2565, %v1023, 0
        %v3196 = vsel %vm2565, %v1024, 0
        %v3199 = vsel %vm2565, %v1025, 0
        %v3202 = vsel %vm2565, %v1026, 0
        %v3205 = vsel %vm2565, %v1027, 0
        %v3208 = vsel %vm2565, %v1028, 0
        %3210 = vmatprep.subr.mxu0 0.0
        %3211 = vmatpush1.msra.mxu0 %v402
        %3212 = vmatprep.subr.mxu0 0.0
        %3213 = vmatpush1.msra.mxu0 %v403
        %3214 = vmatprep.subr.mxu0 0.0
        %3215 = vmatpush1.msra.mxu0 %v404
        %3216 = vmatprep.subr.mxu0 0.0
        %3217 = vmatpush1.msra.mxu0 %v405
        %3218 = vmatprep.subr.mxu0 0.0
        %3219 = vmatpush1.msra.mxu0 %v406
        %3220 = vmatprep.subr.mxu0 0.0
        %3221 = vmatpush1.msra.mxu0 %v407
        %3222 = vmatprep.subr.mxu0 0.0
        %3223 = vmatpush1.msra.mxu0 %v408
        %3224 = vmatprep.subr.mxu0 0.0
        %3225 = vmatpush1.msra.mxu0 %v409
        %3226 = vmatprep.subr.mxu0 0.0
        %3227 = vmatpush1.msra.mxu0 %v410
        %3228 = vmatprep.subr.mxu0 0.0
        %3229 = vmatpush1.msra.mxu0 %v411
        %3230 = vmatprep.subr.mxu0 0.0
        %3231 = vmatpush1.msra.mxu0 %v412
        %3232 = vmatprep.subr.mxu0 0.0
        %3233 = vmatpush1.msra.mxu0 %v413
        %3234 = vmatprep.subr.mxu0 0.0
        %3235 = vmatpush1.msra.mxu0 %v414
        %3236 = vmatprep.subr.mxu0 0.0
        %3237 = vmatpush1.msra.mxu0 %v415
        %3238 = vmatprep.subr.mxu0 0.0
        %3239 = vmatpush1.msra.mxu0 %v416
        %3240 = vmatprep.subr.mxu0 0.0
        %3241 = vmatpush1.msra.mxu0 %v417
        %3242 = vmatprep.subr.mxu0 0.0
        %3243 = vmatpush1.msra.mxu0 %v418
        %3244 = vmatprep.subr.mxu0 0.0
        %3245 = vmatpush1.msra.mxu0 %v419
        %3246 = vmatprep.subr.mxu0 0.0
        %3247 = vmatpush1.msra.mxu0 %v420
        %3248 = vmatprep.subr.mxu0 0.0
        %3249 = vmatpush1.msra.mxu0 %v421
        %3250 = vmatprep.subr.mxu0 0.0
        %3251 = vmatpush1.msra.mxu0 %v422
        %3252 = vmatprep.subr.mxu0 0.0
        %3253 = vmatpush1.msra.mxu0 %v423
        %3254 = vmatprep.subr.mxu0 0.0
        %3255 = vmatpush1.msra.mxu0 %v424
        %3256 = vmatprep.subr.mxu0 0.0
        %3257 = vmatpush1.msra.mxu0 %v425
        %3258 = vmatprep.subr.mxu0 0.0
        %3259 = vmatpush1.msra.mxu0 %v426
        %3260 = vmatprep.subr.mxu0 0.0
        %3261 = vmatpush1.msra.mxu0 %v427
        %3262 = vmatprep.subr.mxu0 0.0
        %3263 = vmatpush1.msra.mxu0 %v428
        %3264 = vmatprep.subr.mxu0 0.0
        %3265 = vmatpush1.msra.mxu0 %v429
        %3266 = vmatprep.subr.mxu0 0.0
        %3267 = vmatpush1.msra.mxu0 %v430
        %3268 = vmatprep.subr.mxu0 0.0
        %3269 = vmatpush1.msra.mxu0 %v431
        %3270 = vmatprep.subr.mxu0 0.0
        %3271 = vmatpush1.msra.mxu0 %v432
        %3272 = vmatprep.subr.mxu0 0.0
        %3273 = vmatpush1.msra.mxu0 %v433
        %3274 = vmatprep.mubr.f32.mxu0 %v2888
        %3275 = vmatmul.mubr.f32.gmra.mrb[0].mxu0 %v2696
        %v3276 = vpop.f32.mrb[0].mxu0
        %v3277 = vadd.f32 0.0, %v3276
        %v3278 = vpop.f32.mrb[0].mxu0
        %3279 = vmatprep.mubr.f32.mxu0 %v2889
        %3280 = vmatmul.mubr.f32.gmra.mrb[0].mxu0 %v2697
        %v3281 = vpop.f32.mrb[0].mxu0
        %v3282 = vadd.f32 0.0, %v3281
        %v3283 = vpop.f32.mrb[0].mxu0
        %3284 = vmatprep.mubr.f32.mxu0 %v2890
        %3285 = vmatmul.mubr.f32.gmra.mrb[0].mxu0 %v2698
        %v3286 = vpop.f32.mrb[0].mxu0
        %v3287 = vadd.f32 0.0, %v3286
        %v3288 = vpop.f32.mrb[0].mxu0
        %3289 = vmatprep.mubr.f32.mxu0 %v2891
        %3290 = vmatmul.mubr.f32.gmra.mrb[0].mxu0 %v2699
        %v3291 = vpop.f32.mrb[0].mxu0
        %v3292 = vadd.f32 0.0, %v3291
        %v3293 = vpop.f32.mrb[0].mxu0
        %3294 = vmatprep.mubr.f32.mxu0 %v2892
        %3295 = vmatmul.mubr.f32.gmra.mrb[0].mxu0 %v2700
        %v3296 = vpop.f32.mrb[0].mxu0
        %v3297 = vadd.f32 0.0, %v3296
        %v3298 = vpop.f32.mrb[0].mxu0
        %3299 = vmatprep.mubr.f32.mxu0 %v2893
        %3300 = vmatmul.mubr.f32.gmra.mrb[0].mxu0 %v2701
        %v3301 = vpop.f32.mrb[0].mxu0
        %v3302 = vadd.f32 0.0, %v3301
        %v3303 = vpop.f32.mrb[0].mxu0
        %3304 = vmatprep.mubr.f32.mxu0 %v2894
        %3305 = vmatmul.mubr.f32.gmra.mrb[0].mxu0 %v2702
        %v3306 = vpop.f32.mrb[0].mxu0
        %v3307 = vadd.f32 0.0, %v3306
        %v3308 = vpop.f32.mrb[0].mxu0
        %3309 = vmatprep.mubr.f32.mxu0 %v2895
        %3310 = vmatmul.mubr.f32.gmra.mrb[0].mxu0 %v2703
        %v3311 = vpop.f32.mrb[0].mxu0
        %v3312 = vadd.f32 0.0, %v3311
        %v3313 = vpop.f32.mrb[0].mxu0
        %3314 = vmatprep.mubr.f32.mxu0 %v2896
        %3315 = vmatmul.mubr.f32.gmra.mrb[0].mxu0 %v2704
        %v3316 = vpop.f32.mrb[0].mxu0
        %v3317 = vadd.f32 0.0, %v3316
        %v3318 = vpop.f32.mrb[0].mxu0
        %3319 = vmatprep.mubr.f32.mxu0 %v2897
        %3320 = vmatmul.mubr.f32.gmra.mrb[0].mxu0 %v2705
        %v3321 = vpop.f32.mrb[0].mxu0
        %v3322 = vadd.f32 0.0, %v3321
        %v3323 = vpop.f32.mrb[0].mxu0
        %3324 = vmatprep.mubr.f32.mxu0 %v2898
        %3325 = vmatmul.mubr.f32.gmra.mrb[0].mxu0 %v2706
        %v3326 = vpop.f32.mrb[0].mxu0
        %v3327 = vadd.f32 0.0, %v3326
        %v3328 = vpop.f32.mrb[0].mxu0
        %3329 = vmatprep.mubr.f32.mxu0 %v2899
        %3330 = vmatmul.mubr.f32.gmra.mrb[0].mxu0 %v2707
        %v3331 = vpop.f32.mrb[0].mxu0
        %v3332 = vadd.f32 0.0, %v3331
        %v3333 = vpop.f32.mrb[0].mxu0
        %3334 = vmatprep.mubr.f32.mxu0 %v2900
        %3335 = vmatmul.mubr.f32.gmra.mrb[0].mxu0 %v2708
        %v3336 = vpop.f32.mrb[0].mxu0
        %v3337 = vadd.f32 0.0, %v3336
        %v3338 = vpop.f32.mrb[0].mxu0
        %3339 = vmatprep.mubr.f32.mxu0 %v2901
        %3340 = vmatmul.mubr.f32.gmra.mrb[0].mxu0 %v2709
        %v3341 = vpop.f32.mrb[0].mxu0
        %v3342 = vadd.f32 0.0, %v3341
        %v3343 = vpop.f32.mrb[0].mxu0
        %3344 = vmatprep.mubr.f32.mxu0 %v2902
        %3345 = vmatmul.mubr.f32.gmra.mrb[0].mxu0 %v2710
        %v3346 = vpop.f32.mrb[0].mxu0
        %v3347 = vadd.f32 0.0, %v3346
        %v3348 = vpop.f32.mrb[0].mxu0
        %3349 = vmatprep.mubr.f32.mxu0 %v2903
        %3350 = vmatmul.mubr.f32.gmra.mrb[0].mxu0 %v2711
        %v3351 = vpop.f32.mrb[0].mxu0
        %v3352 = vadd.f32 0.0, %v3351
        %v3353 = vpop.f32.mrb[0].mxu0
        %3354 = vmatprep.mubr.f32.mxu0 %v2904
        %3355 = vmatmul.mubr.f32.gmra.mrb[0].mxu0 %v2712
        %v3356 = vpop.f32.mrb[0].mxu0
        %v3357 = vadd.f32 0.0, %v3356
        %v3358 = vpop.f32.mrb[0].mxu0
        %3359 = vmatprep.mubr.f32.mxu0 %v2905
        %3360 = vmatmul.mubr.f32.gmra.mrb[0].mxu0 %v2713
        %v3361 = vpop.f32.mrb[0].mxu0
        %v3362 = vadd.f32 0.0, %v3361
        %v3363 = vpop.f32.mrb[0].mxu0
        %3364 = vmatprep.mubr.f32.mxu0 %v2906
        %3365 = vmatmul.mubr.f32.gmra.mrb[0].mxu0 %v2714
        %v3366 = vpop.f32.mrb[0].mxu0
        %v3367 = vadd.f32 0.0, %v3366
        %v3368 = vpop.f32.mrb[0].mxu0
        %3369 = vmatprep.mubr.f32.mxu0 %v2907
        %3370 = vmatmul.mubr.f32.gmra.mrb[0].mxu0 %v2715
        %v3371 = vpop.f32.mrb[0].mxu0
        %v3372 = vadd.f32 0.0, %v3371
        %v3373 = vpop.f32.mrb[0].mxu0
        %3374 = vmatprep.mubr.f32.mxu0 %v2908
        %3375 = vmatmul.mubr.f32.gmra.mrb[0].mxu0 %v2716
        %v3376 = vpop.f32.mrb[0].mxu0
        %v3377 = vadd.f32 0.0, %v3376
        %v3378 = vpop.f32.mrb[0].mxu0
        %3379 = vmatprep.mubr.f32.mxu0 %v2909
        %3380 = vmatmul.mubr.f32.gmra.mrb[0].mxu0 %v2717
        %v3381 = vpop.f32.mrb[0].mxu0
        %v3382 = vadd.f32 0.0, %v3381
        %v3383 = vpop.f32.mrb[0].mxu0
        %3384 = vmatprep.mubr.f32.mxu0 %v2910
        %3385 = vmatmul.mubr.f32.gmra.mrb[0].mxu0 %v2718
        %v3386 = vpop.f32.mrb[0].mxu0
        %v3387 = vadd.f32 0.0, %v3386
        %v3388 = vpop.f32.mrb[0].mxu0
        %3389 = vmatprep.mubr.f32.mxu0 %v2911
        %3390 = vmatmul.mubr.f32.gmra.mrb[0].mxu0 %v2719
        %v3391 = vpop.f32.mrb[0].mxu0
        %v3392 = vadd.f32 0.0, %v3391
        %v3393 = vpop.f32.mrb[0].mxu0
        %3394 = vmatprep.mubr.f32.mxu0 %v2912
        %3395 = vmatmul.mubr.f32.gmra.mrb[0].mxu0 %v2720
        %v3396 = vpop.f32.mrb[0].mxu0
        %v3397 = vadd.f32 0.0, %v3396
        %v3398 = vpop.f32.mrb[0].mxu0
        %3399 = vmatprep.mubr.f32.mxu0 %v2913
        %3400 = vmatmul.mubr.f32.gmra.mrb[0].mxu0 %v2721
        %v3401 = vpop.f32.mrb[0].mxu0
        %v3402 = vadd.f32 0.0, %v3401
        %v3403 = vpop.f32.mrb[0].mxu0
        %3404 = vmatprep.mubr.f32.mxu0 %v2914
        %3405 = vmatmul.mubr.f32.gmra.mrb[0].mxu0 %v2722
        %v3406 = vpop.f32.mrb[0].mxu0
        %v3407 = vadd.f32 0.0, %v3406
        %v3408 = vpop.f32.mrb[0].mxu0
        %3409 = vmatprep.mubr.f32.mxu0 %v2915
        %3410 = vmatmul.mubr.f32.gmra.mrb[0].mxu0 %v2723
        %v3411 = vpop.f32.mrb[0].mxu0
        %v3412 = vadd.f32 0.0, %v3411
        %v3413 = vpop.f32.mrb[0].mxu0
        %3414 = vmatprep.mubr.f32.mxu0 %v2916
        %3415 = vmatmul.mubr.f32.gmra.mrb[0].mxu0 %v2724
        %v3416 = vpop.f32.mrb[0].mxu0
        %v3417 = vadd.f32 0.0, %v3416
        %v3418 = vpop.f32.mrb[0].mxu0
        %3419 = vmatprep.mubr.f32.mxu0 %v2917
        %3420 = vmatmul.mubr.f32.gmra.mrb[0].mxu0 %v2725
        %v3421 = vpop.f32.mrb[0].mxu0
        %v3422 = vadd.f32 0.0, %v3421
        %v3423 = vpop.f32.mrb[0].mxu0
        %3424 = vmatprep.mubr.f32.mxu0 %v2918
        %3425 = vmatmul.mubr.f32.gmra.mrb[0].mxu0 %v2726
        %v3426 = vpop.f32.mrb[0].mxu0
        %v3427 = vadd.f32 0.0, %v3426
        %v3428 = vpop.f32.mrb[0].mxu0
        %3429 = vmatprep.mubr.f32.mxu0 %v2919
        %3430 = vmatmul.mubr.f32.gmra.mrb[0].mxu0 %v2727
        %v3431 = vpop.f32.mrb[0].mxu0
        %v3432 = vadd.f32 0.0, %v3431
        %v3433 = vpop.f32.mrb[0].mxu0
        %3434 = vmatprep.mubr.f32.mxu0 %v2920
        %3435 = vmatmul.mubr.f32.gmra.mrb[0].mxu0 %v2728
        %v3436 = vpop.f32.mrb[0].mxu0
        %v3437 = vadd.f32 0.0, %v3436
        %v3438 = vpop.f32.mrb[0].mxu0
        %3439 = vmatprep.mubr.f32.mxu0 %v2921
        %3440 = vmatmul.mubr.f32.gmra.mrb[0].mxu0 %v2729
        %v3441 = vpop.f32.mrb[0].mxu0
        %v3442 = vadd.f32 0.0, %v3441
        %v3443 = vpop.f32.mrb[0].mxu0
        %3444 = vmatprep.mubr.f32.mxu0 %v2922
        %3445 = vmatmul.mubr.f32.gmra.mrb[0].mxu0 %v2730
        %v3446 = vpop.f32.mrb[0].mxu0
        %v3447 = vadd.f32 0.0, %v3446
        %v3448 = vpop.f32.mrb[0].mxu0
        %3449 = vmatprep.mubr.f32.mxu0 %v2923
        %3450 = vmatmul.mubr.f32.gmra.mrb[0].mxu0 %v2731
        %v3451 = vpop.f32.mrb[0].mxu0
        %v3452 = vadd.f32 0.0, %v3451
        %v3453 = vpop.f32.mrb[0].mxu0
        %3454 = vmatprep.mubr.f32.mxu0 %v2924
        %3455 = vmatmul.mubr.f32.gmra.mrb[0].mxu0 %v2732
        %v3456 = vpop.f32.mrb[0].mxu0
        %v3457 = vadd.f32 0.0, %v3456
        %v3458 = vpop.f32.mrb[0].mxu0
        %3459 = vmatprep.mubr.f32.mxu0 %v2925
        %3460 = vmatmul.mubr.f32.gmra.mrb[0].mxu0 %v2733
        %v3461 = vpop.f32.mrb[0].mxu0
        %v3462 = vadd.f32 0.0, %v3461
        %v3463 = vpop.f32.mrb[0].mxu0
        %3464 = vmatprep.mubr.f32.mxu0 %v2926
        %3465 = vmatmul.mubr.f32.gmra.mrb[0].mxu0 %v2734
        %v3466 = vpop.f32.mrb[0].mxu0
        %v3467 = vadd.f32 0.0, %v3466
        %v3468 = vpop.f32.mrb[0].mxu0
        %3469 = vmatprep.mubr.f32.mxu0 %v2927
        %3470 = vmatmul.mubr.f32.gmra.mrb[0].mxu0 %v2735
        %v3471 = vpop.f32.mrb[0].mxu0
        %v3472 = vadd.f32 0.0, %v3471
        %v3473 = vpop.f32.mrb[0].mxu0
        %3474 = vmatprep.mubr.f32.mxu0 %v2928
        %3475 = vmatmul.mubr.f32.gmra.mrb[0].mxu0 %v2736
        %v3476 = vpop.f32.mrb[0].mxu0
        %v3477 = vadd.f32 0.0, %v3476
        %v3478 = vpop.f32.mrb[0].mxu0
        %3479 = vmatprep.mubr.f32.mxu0 %v2929
        %3480 = vmatmul.mubr.f32.gmra.mrb[0].mxu0 %v2737
        %v3481 = vpop.f32.mrb[0].mxu0
        %v3482 = vadd.f32 0.0, %v3481
        %v3483 = vpop.f32.mrb[0].mxu0
        %3484 = vmatprep.mubr.f32.mxu0 %v2930
        %3485 = vmatmul.mubr.f32.gmra.mrb[0].mxu0 %v2738
        %v3486 = vpop.f32.mrb[0].mxu0
        %v3487 = vadd.f32 0.0, %v3486
        %v3488 = vpop.f32.mrb[0].mxu0
        %3489 = vmatprep.mubr.f32.mxu0 %v2931
        %3490 = vmatmul.mubr.f32.gmra.mrb[0].mxu0 %v2739
        %v3491 = vpop.f32.mrb[0].mxu0
        %v3492 = vadd.f32 0.0, %v3491
        %v3493 = vpop.f32.mrb[0].mxu0
        %3494 = vmatprep.mubr.f32.mxu0 %v2932
        %3495 = vmatmul.mubr.f32.gmra.mrb[0].mxu0 %v2740
        %v3496 = vpop.f32.mrb[0].mxu0
        %v3497 = vadd.f32 0.0, %v3496
        %v3498 = vpop.f32.mrb[0].mxu0
        %3499 = vmatprep.mubr.f32.mxu0 %v2933
        %3500 = vmatmul.mubr.f32.gmra.mrb[0].mxu0 %v2741
        %v3501 = vpop.f32.mrb[0].mxu0
        %v3502 = vadd.f32 0.0, %v3501
        %v3503 = vpop.f32.mrb[0].mxu0
        %3504 = vmatprep.mubr.f32.mxu0 %v2934
        %3505 = vmatmul.mubr.f32.gmra.mrb[0].mxu0 %v2742
        %v3506 = vpop.f32.mrb[0].mxu0
        %v3507 = vadd.f32 0.0, %v3506
        %v3508 = vpop.f32.mrb[0].mxu0
        %3509 = vmatprep.mubr.f32.mxu0 %v2935
        %3510 = vmatmul.mubr.f32.gmra.mrb[0].mxu0 %v2743
        %v3511 = vpop.f32.mrb[0].mxu0
        %v3512 = vadd.f32 0.0, %v3511
        %v3513 = vpop.f32.mrb[0].mxu0
        %3514 = vmatprep.mubr.f32.mxu0 %v2936
        %3515 = vmatmul.mubr.f32.gmra.mrb[0].mxu0 %v2744
        %v3516 = vpop.f32.mrb[0].mxu0
        %v3517 = vadd.f32 0.0, %v3516
        %v3518 = vpop.f32.mrb[0].mxu0
        %3519 = vmatprep.mubr.f32.mxu0 %v2937
        %3520 = vmatmul.mubr.f32.gmra.mrb[0].mxu0 %v2745
        %v3521 = vpop.f32.mrb[0].mxu0
        %v3522 = vadd.f32 0.0, %v3521
        %v3523 = vpop.f32.mrb[0].mxu0
        %3524 = vmatprep.mubr.f32.mxu0 %v2938
        %3525 = vmatmul.mubr.f32.gmra.mrb[0].mxu0 %v2746
        %v3526 = vpop.f32.mrb[0].mxu0
        %v3527 = vadd.f32 0.0, %v3526
        %v3528 = vpop.f32.mrb[0].mxu0
        %3529 = vmatprep.mubr.f32.mxu0 %v2939
        %3530 = vmatmul.mubr.f32.gmra.mrb[0].mxu0 %v2747
        %v3531 = vpop.f32.mrb[0].mxu0
        %v3532 = vadd.f32 0.0, %v3531
        %v3533 = vpop.f32.mrb[0].mxu0
        %3534 = vmatprep.mubr.f32.mxu0 %v2940
        %3535 = vmatmul.mubr.f32.gmra.mrb[0].mxu0 %v2748
        %v3536 = vpop.f32.mrb[0].mxu0
        %v3537 = vadd.f32 0.0, %v3536
        %v3538 = vpop.f32.mrb[0].mxu0
        %3539 = vmatprep.mubr.f32.mxu0 %v2941
        %3540 = vmatmul.mubr.f32.gmra.mrb[0].mxu0 %v2749
        %v3541 = vpop.f32.mrb[0].mxu0
        %v3542 = vadd.f32 0.0, %v3541
        %v3543 = vpop.f32.mrb[0].mxu0
        %3544 = vmatprep.mubr.f32.mxu0 %v2942
        %3545 = vmatmul.mubr.f32.gmra.mrb[0].mxu0 %v2750
        %v3546 = vpop.f32.mrb[0].mxu0
        %v3547 = vadd.f32 0.0, %v3546
        %v3548 = vpop.f32.mrb[0].mxu0
        %3549 = vmatprep.mubr.f32.mxu0 %v2943
        %3550 = vmatmul.mubr.f32.gmra.mrb[0].mxu0 %v2751
        %v3551 = vpop.f32.mrb[0].mxu0
        %v3552 = vadd.f32 0.0, %v3551
        %v3553 = vpop.f32.mrb[0].mxu0
        %3554 = vmatprep.mubr.f32.mxu0 %v2944
        %3555 = vmatmul.mubr.f32.gmra.mrb[0].mxu0 %v2752
        %v3556 = vpop.f32.mrb[0].mxu0
        %v3557 = vadd.f32 0.0, %v3556
        %v3558 = vpop.f32.mrb[0].mxu0
        %3559 = vmatprep.mubr.f32.mxu0 %v2945
        %3560 = vmatmul.mubr.f32.gmra.mrb[0].mxu0 %v2753
        %v3561 = vpop.f32.mrb[0].mxu0
        %v3562 = vadd.f32 0.0, %v3561
        %v3563 = vpop.f32.mrb[0].mxu0
        %3564 = vmatprep.mubr.f32.mxu0 %v2946
        %3565 = vmatmul.mubr.f32.gmra.mrb[0].mxu0 %v2754
        %v3566 = vpop.f32.mrb[0].mxu0
        %v3567 = vadd.f32 0.0, %v3566
        %v3568 = vpop.f32.mrb[0].mxu0
        %3569 = vmatprep.mubr.f32.mxu0 %v2947
        %3570 = vmatmul.mubr.f32.gmra.mrb[0].mxu0 %v2755
        %v3571 = vpop.f32.mrb[0].mxu0
        %v3572 = vadd.f32 0.0, %v3571
        %v3573 = vpop.f32.mrb[0].mxu0
        %3574 = vmatprep.mubr.f32.mxu0 %v2948
        %3575 = vmatmul.mubr.f32.gmra.mrb[0].mxu0 %v2756
        %v3576 = vpop.f32.mrb[0].mxu0
        %v3577 = vadd.f32 0.0, %v3576
        %v3578 = vpop.f32.mrb[0].mxu0
        %3579 = vmatprep.mubr.f32.mxu0 %v2949
        %3580 = vmatmul.mubr.f32.gmra.mrb[0].mxu0 %v2757
        %v3581 = vpop.f32.mrb[0].mxu0
        %v3582 = vadd.f32 0.0, %v3581
        %v3583 = vpop.f32.mrb[0].mxu0
        %3584 = vmatprep.mubr.f32.mxu0 %v2950
        %3585 = vmatmul.mubr.f32.gmra.mrb[0].mxu0 %v2758
        %v3586 = vpop.f32.mrb[0].mxu0
        %v3587 = vadd.f32 0.0, %v3586
        %v3588 = vpop.f32.mrb[0].mxu0
        %3589 = vmatprep.mubr.f32.mxu0 %v2951
        %3590 = vmatmul.mubr.f32.gmra.mrb[0].mxu0 %v2759
        %v3591 = vpop.f32.mrb[0].mxu0
        %v3592 = vadd.f32 0.0, %v3591
        %v3593 = vpop.f32.mrb[0].mxu0
        %3594 = vdwg.mxu0
        %3595 = vmatprep.subr.mxu0 0.0
        %3596 = vmatpush1.msra.mxu0 %v434
        %3597 = vmatprep.subr.mxu0 0.0
        %3598 = vmatpush1.msra.mxu0 %v435
        %3599 = vmatprep.subr.mxu0 0.0
        %3600 = vmatpush1.msra.mxu0 %v436
        %3601 = vmatprep.subr.mxu0 0.0
        %3602 = vmatpush1.msra.mxu0 %v437
        %3603 = vmatprep.subr.mxu0 0.0
        %3604 = vmatpush1.msra.mxu0 0.0
        %3605 = vmatprep.subr.mxu0 0.0
        %3606 = vmatpush1.msra.mxu0 0.0
        %3607 = vmatprep.subr.mxu0 0.0
        %3608 = vmatpush1.msra.mxu0 0.0
        %3609 = vmatprep.subr.mxu0 0.0
        %3610 = vmatpush1.msra.mxu0 0.0
        %3611 = vmatprep.subr.mxu0 0.0
        %3612 = vmatpush1.msra.mxu0 0.0
        %3613 = vmatprep.subr.mxu0 0.0
        %3614 = vmatpush1.msra.mxu0 0.0
        %3615 = vmatprep.subr.mxu0 0.0
        %3616 = vmatpush1.msra.mxu0 0.0
        %3617 = vmatprep.subr.mxu0 0.0
        %3618 = vmatpush1.msra.mxu0 0.0
        %3619 = vmatprep.subr.mxu0 0.0
        %3620 = vmatpush1.msra.mxu0 0.0
        %3621 = vmatprep.subr.mxu0 0.0
        %3622 = vmatpush1.msra.mxu0 0.0
        %3623 = vmatprep.subr.mxu0 0.0
        %3624 = vmatpush1.msra.mxu0 0.0
        %3625 = vmatprep.subr.mxu0 0.0
        %3626 = vmatpush1.msra.mxu0 0.0
        %3627 = vmatprep.subr.mxu0 0.0
        %3628 = vmatpush1.msra.mxu0 0.0
        %3629 = vmatprep.subr.mxu0 0.0
        %3630 = vmatpush1.msra.mxu0 0.0
        %3631 = vmatprep.subr.mxu0 0.0
        %3632 = vmatpush1.msra.mxu0 0.0
        %3633 = vmatprep.subr.mxu0 0.0
        %3634 = vmatpush1.msra.mxu0 0.0
        %3635 = vmatprep.subr.mxu0 0.0
        %3636 = vmatpush1.msra.mxu0 0.0
        %3637 = vmatprep.subr.mxu0 0.0
        %3638 = vmatpush1.msra.mxu0 0.0
        %3639 = vmatprep.subr.mxu0 0.0
        %3640 = vmatpush1.msra.mxu0 0.0
        %3641 = vmatprep.subr.mxu0 0.0
        %3642 = vmatpush1.msra.mxu0 0.0
        %3643 = vmatprep.subr.mxu0 0.0
        %3644 = vmatpush1.msra.mxu0 0.0
        %3645 = vmatprep.subr.mxu0 0.0
        %3646 = vmatpush1.msra.mxu0 0.0
        %3647 = vmatprep.subr.mxu0 0.0
        %3648 = vmatpush1.msra.mxu0 0.0
        %3649 = vmatprep.subr.mxu0 0.0
        %3650 = vmatpush1.msra.mxu0 0.0
        %3651 = vmatprep.subr.mxu0 0.0
        %3652 = vmatpush1.msra.mxu0 0.0
        %3653 = vmatprep.subr.mxu0 0.0
        %3654 = vmatpush1.msra.mxu0 0.0
        %3655 = vmatprep.subr.mxu0 0.0
        %3656 = vmatpush1.msra.mxu0 0.0
        %3657 = vmatprep.subr.mxu0 0.0
        %3658 = vmatpush1.msra.mxu0 0.0
        %3659 = vmatprep.mubr.f32.mxu0 0.0
        %3660 = vmatmul.mubr.f32.gmra.mrb[0].mxu0 %v3019
        %v3661 = vpop.f32.mrb[0].mxu0
        %v3662 = vadd.f32 %v3277, %v3661
        %v3663 = vpop.f32.mrb[0].mxu0
        %3664 = vmatprep.mubr.f32.mxu0 0.0
        %3665 = vmatmul.mubr.f32.gmra.mrb[0].mxu0 %v3022
        %v3666 = vpop.f32.mrb[0].mxu0
        %v3667 = vadd.f32 %v3282, %v3666
        %v3668 = vpop.f32.mrb[0].mxu0
        %3669 = vmatprep.mubr.f32.mxu0 0.0
        %3670 = vmatmul.mubr.f32.gmra.mrb[0].mxu0 %v3025
        %v3671 = vpop.f32.mrb[0].mxu0
        %v3672 = vadd.f32 %v3287, %v3671
        %v3673 = vpop.f32.mrb[0].mxu0
        %3674 = vmatprep.mubr.f32.mxu0 0.0
        %3675 = vmatmul.mubr.f32.gmra.mrb[0].mxu0 %v3028
        %v3676 = vpop.f32.mrb[0].mxu0
        %v3677 = vadd.f32 %v3292, %v3676
        %v3678 = vpop.f32.mrb[0].mxu0
        %3679 = vmatprep.mubr.f32.mxu0 0.0
        %3680 = vmatmul.mubr.f32.gmra.mrb[0].mxu0 %v3031
        %v3681 = vpop.f32.mrb[0].mxu0
        %v3682 = vadd.f32 %v3297, %v3681
        %v3683 = vpop.f32.mrb[0].mxu0
        %3684 = vmatprep.mubr.f32.mxu0 0.0
        %3685 = vmatmul.mubr.f32.gmra.mrb[0].mxu0 %v3034
        %v3686 = vpop.f32.mrb[0].mxu0
        %v3687 = vadd.f32 %v3302, %v3686
        %v3688 = vpop.f32.mrb[0].mxu0
        %3689 = vmatprep.mubr.f32.mxu0 0.0
        %3690 = vmatmul.mubr.f32.gmra.mrb[0].mxu0 %v3037
        %v3691 = vpop.f32.mrb[0].mxu0
        %v3692 = vadd.f32 %v3307, %v3691
        %v3693 = vpop.f32.mrb[0].mxu0
        %3694 = vmatprep.mubr.f32.mxu0 0.0
        %3695 = vmatmul.mubr.f32.gmra.mrb[0].mxu0 %v3040
        %v3696 = vpop.f32.mrb[0].mxu0
        %v3697 = vadd.f32 %v3312, %v3696
        %v3698 = vpop.f32.mrb[0].mxu0
        %3699 = vmatprep.mubr.f32.mxu0 0.0
        %3700 = vmatmul.mubr.f32.gmra.mrb[0].mxu0 %v3043
        %v3701 = vpop.f32.mrb[0].mxu0
        %v3702 = vadd.f32 %v3317, %v3701
        %v3703 = vpop.f32.mrb[0].mxu0
        %3704 = vmatprep.mubr.f32.mxu0 0.0
        %3705 = vmatmul.mubr.f32.gmra.mrb[0].mxu0 %v3046
        %v3706 = vpop.f32.mrb[0].mxu0
        %v3707 = vadd.f32 %v3322, %v3706
        %v3708 = vpop.f32.mrb[0].mxu0
        %3709 = vmatprep.mubr.f32.mxu0 0.0
        %3710 = vmatmul.mubr.f32.gmra.mrb[0].mxu0 %v3049
        %v3711 = vpop.f32.mrb[0].mxu0
        %v3712 = vadd.f32 %v3327, %v3711
        %v3713 = vpop.f32.mrb[0].mxu0
        %3714 = vmatprep.mubr.f32.mxu0 0.0
        %3715 = vmatmul.mubr.f32.gmra.mrb[0].mxu0 %v3052
        %v3716 = vpop.f32.mrb[0].mxu0
        %v3717 = vadd.f32 %v3332, %v3716
        %v3718 = vpop.f32.mrb[0].mxu0
        %3719 = vmatprep.mubr.f32.mxu0 0.0
        %3720 = vmatmul.mubr.f32.gmra.mrb[0].mxu0 %v3055
        %v3721 = vpop.f32.mrb[0].mxu0
        %v3722 = vadd.f32 %v3337, %v3721
        %v3723 = vpop.f32.mrb[0].mxu0
        %3724 = vmatprep.mubr.f32.mxu0 0.0
        %3725 = vmatmul.mubr.f32.gmra.mrb[0].mxu0 %v3058
        %v3726 = vpop.f32.mrb[0].mxu0
        %v3727 = vadd.f32 %v3342, %v3726
        %v3728 = vpop.f32.mrb[0].mxu0
        %3729 = vmatprep.mubr.f32.mxu0 0.0
        %3730 = vmatmul.mubr.f32.gmra.mrb[0].mxu0 %v3061
        %v3731 = vpop.f32.mrb[0].mxu0
        %v3732 = vadd.f32 %v3347, %v3731
        %v3733 = vpop.f32.mrb[0].mxu0
        %3734 = vmatprep.mubr.f32.mxu0 0.0
        %3735 = vmatmul.mubr.f32.gmra.mrb[0].mxu0 %v3064
        %v3736 = vpop.f32.mrb[0].mxu0
        %v3737 = vadd.f32 %v3352, %v3736
        %v3738 = vpop.f32.mrb[0].mxu0
        %3739 = vmatprep.mubr.f32.mxu0 0.0
        %3740 = vmatmul.mubr.f32.gmra.mrb[0].mxu0 %v3067
        %v3741 = vpop.f32.mrb[0].mxu0
        %v3742 = vadd.f32 %v3357, %v3741
        %v3743 = vpop.f32.mrb[0].mxu0
        %3744 = vmatprep.mubr.f32.mxu0 0.0
        %3745 = vmatmul.mubr.f32.gmra.mrb[0].mxu0 %v3070
        %v3746 = vpop.f32.mrb[0].mxu0
        %v3747 = vadd.f32 %v3362, %v3746
        %v3748 = vpop.f32.mrb[0].mxu0
        %3749 = vmatprep.mubr.f32.mxu0 0.0
        %3750 = vmatmul.mubr.f32.gmra.mrb[0].mxu0 %v3073
        %v3751 = vpop.f32.mrb[0].mxu0
        %v3752 = vadd.f32 %v3367, %v3751
        %v3753 = vpop.f32.mrb[0].mxu0
        %3754 = vmatprep.mubr.f32.mxu0 0.0
        %3755 = vmatmul.mubr.f32.gmra.mrb[0].mxu0 %v3076
        %v3756 = vpop.f32.mrb[0].mxu0
        %v3757 = vadd.f32 %v3372, %v3756
        %v3758 = vpop.f32.mrb[0].mxu0
        %3759 = vmatprep.mubr.f32.mxu0 0.0
        %3760 = vmatmul.mubr.f32.gmra.mrb[0].mxu0 %v3079
        %v3761 = vpop.f32.mrb[0].mxu0
        %v3762 = vadd.f32 %v3377, %v3761
        %v3763 = vpop.f32.mrb[0].mxu0
        %3764 = vmatprep.mubr.f32.mxu0 0.0
        %3765 = vmatmul.mubr.f32.gmra.mrb[0].mxu0 %v3082
        %v3766 = vpop.f32.mrb[0].mxu0
        %v3767 = vadd.f32 %v3382, %v3766
        %v3768 = vpop.f32.mrb[0].mxu0
        %3769 = vmatprep.mubr.f32.mxu0 0.0
        %3770 = vmatmul.mubr.f32.gmra.mrb[0].mxu0 %v3085
        %v3771 = vpop.f32.mrb[0].mxu0
        %v3772 = vadd.f32 %v3387, %v3771
        %v3773 = vpop.f32.mrb[0].mxu0
        %3774 = vmatprep.mubr.f32.mxu0 0.0
        %3775 = vmatmul.mubr.f32.gmra.mrb[0].mxu0 %v3088
        %v3776 = vpop.f32.mrb[0].mxu0
        %v3777 = vadd.f32 %v3392, %v3776
        %v3778 = vpop.f32.mrb[0].mxu0
        %3779 = vmatprep.mubr.f32.mxu0 0.0
        %3780 = vmatmul.mubr.f32.gmra.mrb[0].mxu0 %v3091
        %v3781 = vpop.f32.mrb[0].mxu0
        %v3782 = vadd.f32 %v3397, %v3781
        %v3783 = vpop.f32.mrb[0].mxu0
        %3784 = vmatprep.mubr.f32.mxu0 0.0
        %3785 = vmatmul.mubr.f32.gmra.mrb[0].mxu0 %v3094
        %v3786 = vpop.f32.mrb[0].mxu0
        %v3787 = vadd.f32 %v3402, %v3786
        %v3788 = vpop.f32.mrb[0].mxu0
        %3789 = vmatprep.mubr.f32.mxu0 0.0
        %3790 = vmatmul.mubr.f32.gmra.mrb[0].mxu0 %v3097
        %v3791 = vpop.f32.mrb[0].mxu0
        %v3792 = vadd.f32 %v3407, %v3791
        %v3793 = vpop.f32.mrb[0].mxu0
        %3794 = vmatprep.mubr.f32.mxu0 0.0
        %3795 = vmatmul.mubr.f32.gmra.mrb[0].mxu0 %v3100
        %v3796 = vpop.f32.mrb[0].mxu0
        %v3797 = vadd.f32 %v3412, %v3796
        %v3798 = vpop.f32.mrb[0].mxu0
        %3799 = vmatprep.mubr.f32.mxu0 0.0
        %3800 = vmatmul.mubr.f32.gmra.mrb[0].mxu0 %v3103
        %v3801 = vpop.f32.mrb[0].mxu0
        %v3802 = vadd.f32 %v3417, %v3801
        %v3803 = vpop.f32.mrb[0].mxu0
        %3804 = vmatprep.mubr.f32.mxu0 0.0
        %3805 = vmatmul.mubr.f32.gmra.mrb[0].mxu0 %v3106
        %v3806 = vpop.f32.mrb[0].mxu0
        %v3807 = vadd.f32 %v3422, %v3806
        %v3808 = vpop.f32.mrb[0].mxu0
        %3809 = vmatprep.mubr.f32.mxu0 0.0
        %3810 = vmatmul.mubr.f32.gmra.mrb[0].mxu0 %v3109
        %v3811 = vpop.f32.mrb[0].mxu0
        %v3812 = vadd.f32 %v3427, %v3811
        %v3813 = vpop.f32.mrb[0].mxu0
        %3814 = vmatprep.mubr.f32.mxu0 0.0
        %3815 = vmatmul.mubr.f32.gmra.mrb[0].mxu0 %v3112
        %v3816 = vpop.f32.mrb[0].mxu0
        %v3817 = vadd.f32 %v3432, %v3816
        %v3818 = vpop.f32.mrb[0].mxu0
        %3819 = vmatprep.mubr.f32.mxu0 0.0
        %3820 = vmatmul.mubr.f32.gmra.mrb[0].mxu0 %v3115
        %v3821 = vpop.f32.mrb[0].mxu0
        %v3822 = vadd.f32 %v3437, %v3821
        %v3823 = vpop.f32.mrb[0].mxu0
        %3824 = vmatprep.mubr.f32.mxu0 0.0
        %3825 = vmatmul.mubr.f32.gmra.mrb[0].mxu0 %v3118
        %v3826 = vpop.f32.mrb[0].mxu0
        %v3827 = vadd.f32 %v3442, %v3826
        %v3828 = vpop.f32.mrb[0].mxu0
        %3829 = vmatprep.mubr.f32.mxu0 0.0
        %3830 = vmatmul.mubr.f32.gmra.mrb[0].mxu0 %v3121
        %v3831 = vpop.f32.mrb[0].mxu0
        %v3832 = vadd.f32 %v3447, %v3831
        %v3833 = vpop.f32.mrb[0].mxu0
        %3834 = vmatprep.mubr.f32.mxu0 0.0
        %3835 = vmatmul.mubr.f32.gmra.mrb[0].mxu0 %v3124
        %v3836 = vpop.f32.mrb[0].mxu0
        %v3837 = vadd.f32 %v3452, %v3836
        %v3838 = vpop.f32.mrb[0].mxu0
        %3839 = vmatprep.mubr.f32.mxu0 0.0
        %3840 = vmatmul.mubr.f32.gmra.mrb[0].mxu0 %v3127
        %v3841 = vpop.f32.mrb[0].mxu0
        %v3842 = vadd.f32 %v3457, %v3841
        %v3843 = vpop.f32.mrb[0].mxu0
        %3844 = vmatprep.mubr.f32.mxu0 0.0
        %3845 = vmatmul.mubr.f32.gmra.mrb[0].mxu0 %v3130
        %v3846 = vpop.f32.mrb[0].mxu0
        %v3847 = vadd.f32 %v3462, %v3846
        %v3848 = vpop.f32.mrb[0].mxu0
        %3849 = vmatprep.mubr.f32.mxu0 0.0
        %3850 = vmatmul.mubr.f32.gmra.mrb[0].mxu0 %v3133
        %v3851 = vpop.f32.mrb[0].mxu0
        %v3852 = vadd.f32 %v3467, %v3851
        %v3853 = vpop.f32.mrb[0].mxu0
        %3854 = vmatprep.mubr.f32.mxu0 0.0
        %3855 = vmatmul.mubr.f32.gmra.mrb[0].mxu0 %v3136
        %v3856 = vpop.f32.mrb[0].mxu0
        %v3857 = vadd.f32 %v3472, %v3856
        %v3858 = vpop.f32.mrb[0].mxu0
        %3859 = vmatprep.mubr.f32.mxu0 0.0
        %3860 = vmatmul.mubr.f32.gmra.mrb[0].mxu0 %v3139
        %v3861 = vpop.f32.mrb[0].mxu0
        %v3862 = vadd.f32 %v3477, %v3861
        %v3863 = vpop.f32.mrb[0].mxu0
        %3864 = vmatprep.mubr.f32.mxu0 0.0
        %3865 = vmatmul.mubr.f32.gmra.mrb[0].mxu0 %v3142
        %v3866 = vpop.f32.mrb[0].mxu0
        %v3867 = vadd.f32 %v3482, %v3866
        %v3868 = vpop.f32.mrb[0].mxu0
        %3869 = vmatprep.mubr.f32.mxu0 0.0
        %3870 = vmatmul.mubr.f32.gmra.mrb[0].mxu0 %v3145
        %v3871 = vpop.f32.mrb[0].mxu0
        %v3872 = vadd.f32 %v3487, %v3871
        %v3873 = vpop.f32.mrb[0].mxu0
        %3874 = vmatprep.mubr.f32.mxu0 0.0
        %3875 = vmatmul.mubr.f32.gmra.mrb[0].mxu0 %v3148
        %v3876 = vpop.f32.mrb[0].mxu0
        %v3877 = vadd.f32 %v3492, %v3876
        %v3878 = vpop.f32.mrb[0].mxu0
        %3879 = vmatprep.mubr.f32.mxu0 0.0
        %3880 = vmatmul.mubr.f32.gmra.mrb[0].mxu0 %v3151
        %v3881 = vpop.f32.mrb[0].mxu0
        %v3882 = vadd.f32 %v3497, %v3881
        %v3883 = vpop.f32.mrb[0].mxu0
        %3884 = vmatprep.mubr.f32.mxu0 0.0
        %3885 = vmatmul.mubr.f32.gmra.mrb[0].mxu0 %v3154
        %v3886 = vpop.f32.mrb[0].mxu0
        %v3887 = vadd.f32 %v3502, %v3886
        %v3888 = vpop.f32.mrb[0].mxu0
        %3889 = vmatprep.mubr.f32.mxu0 0.0
        %3890 = vmatmul.mubr.f32.gmra.mrb[0].mxu0 %v3157
        %v3891 = vpop.f32.mrb[0].mxu0
        %v3892 = vadd.f32 %v3507, %v3891
        %v3893 = vpop.f32.mrb[0].mxu0
        %3894 = vmatprep.mubr.f32.mxu0 0.0
        %3895 = vmatmul.mubr.f32.gmra.mrb[0].mxu0 %v3160
        %v3896 = vpop.f32.mrb[0].mxu0
        %v3897 = vadd.f32 %v3512, %v3896
        %v3898 = vpop.f32.mrb[0].mxu0
        %3899 = vmatprep.mubr.f32.mxu0 0.0
        %3900 = vmatmul.mubr.f32.gmra.mrb[0].mxu0 %v3163
        %v3901 = vpop.f32.mrb[0].mxu0
        %v3902 = vadd.f32 %v3517, %v3901
        %v3903 = vpop.f32.mrb[0].mxu0
        %3904 = vmatprep.mubr.f32.mxu0 0.0
        %3905 = vmatmul.mubr.f32.gmra.mrb[0].mxu0 %v3166
        %v3906 = vpop.f32.mrb[0].mxu0
        %v3907 = vadd.f32 %v3522, %v3906
        %v3908 = vpop.f32.mrb[0].mxu0
        %3909 = vmatprep.mubr.f32.mxu0 0.0
        %3910 = vmatmul.mubr.f32.gmra.mrb[0].mxu0 %v3169
        %v3911 = vpop.f32.mrb[0].mxu0
        %v3912 = vadd.f32 %v3527, %v3911
        %v3913 = vpop.f32.mrb[0].mxu0
        %3914 = vmatprep.mubr.f32.mxu0 0.0
        %3915 = vmatmul.mubr.f32.gmra.mrb[0].mxu0 %v3172
        %v3916 = vpop.f32.mrb[0].mxu0
        %v3917 = vadd.f32 %v3532, %v3916
        %v3918 = vpop.f32.mrb[0].mxu0
        %3919 = vmatprep.mubr.f32.mxu0 0.0
        %3920 = vmatmul.mubr.f32.gmra.mrb[0].mxu0 %v3175
        %v3921 = vpop.f32.mrb[0].mxu0
        %v3922 = vadd.f32 %v3537, %v3921
        %v3923 = vpop.f32.mrb[0].mxu0
        %3924 = vmatprep.mubr.f32.mxu0 0.0
        %3925 = vmatmul.mubr.f32.gmra.mrb[0].mxu0 %v3178
        %v3926 = vpop.f32.mrb[0].mxu0
        %v3927 = vadd.f32 %v3542, %v3926
        %v3928 = vpop.f32.mrb[0].mxu0
        %3929 = vmatprep.mubr.f32.mxu0 0.0
        %3930 = vmatmul.mubr.f32.gmra.mrb[0].mxu0 %v3181
        %v3931 = vpop.f32.mrb[0].mxu0
        %v3932 = vadd.f32 %v3547, %v3931
        %v3933 = vpop.f32.mrb[0].mxu0
        %3934 = vmatprep.mubr.f32.mxu0 0.0
        %3935 = vmatmul.mubr.f32.gmra.mrb[0].mxu0 %v3184
        %v3936 = vpop.f32.mrb[0].mxu0
        %v3937 = vadd.f32 %v3552, %v3936
        %v3938 = vpop.f32.mrb[0].mxu0
        %3939 = vmatprep.mubr.f32.mxu0 0.0
        %3940 = vmatmul.mubr.f32.gmra.mrb[0].mxu0 %v3187
        %v3941 = vpop.f32.mrb[0].mxu0
        %v3942 = vadd.f32 %v3557, %v3941
        %v3943 = vpop.f32.mrb[0].mxu0
        %3944 = vmatprep.mubr.f32.mxu0 0.0
        %3945 = vmatmul.mubr.f32.gmra.mrb[0].mxu0 %v3190
        %v3946 = vpop.f32.mrb[0].mxu0
        %v3947 = vadd.f32 %v3562, %v3946
        %v3948 = vpop.f32.mrb[0].mxu0
        %3949 = vmatprep.mubr.f32.mxu0 0.0
        %3950 = vmatmul.mubr.f32.gmra.mrb[0].mxu0 %v3193
        %v3951 = vpop.f32.mrb[0].mxu0
        %v3952 = vadd.f32 %v3567, %v3951
        %v3953 = vpop.f32.mrb[0].mxu0
        %3954 = vmatprep.mubr.f32.mxu0 0.0
        %3955 = vmatmul.mubr.f32.gmra.mrb[0].mxu0 %v3196
        %v3956 = vpop.f32.mrb[0].mxu0
        %v3957 = vadd.f32 %v3572, %v3956
        %v3958 = vpop.f32.mrb[0].mxu0
        %3959 = vmatprep.mubr.f32.mxu0 0.0
        %3960 = vmatmul.mubr.f32.gmra.mrb[0].mxu0 %v3199
        %v3961 = vpop.f32.mrb[0].mxu0
        %v3962 = vadd.f32 %v3577, %v3961
        %v3963 = vpop.f32.mrb[0].mxu0
        %3964 = vmatprep.mubr.f32.mxu0 0.0
        %3965 = vmatmul.mubr.f32.gmra.mrb[0].mxu0 %v3202
        %v3966 = vpop.f32.mrb[0].mxu0
        %v3967 = vadd.f32 %v3582, %v3966
        %v3968 = vpop.f32.mrb[0].mxu0
        %3969 = vmatprep.mubr.f32.mxu0 0.0
        %3970 = vmatmul.mubr.f32.gmra.mrb[0].mxu0 %v3205
        %v3971 = vpop.f32.mrb[0].mxu0
        %v3972 = vadd.f32 %v3587, %v3971
        %v3973 = vpop.f32.mrb[0].mxu0
        %3974 = vmatprep.mubr.f32.mxu0 0.0
        %3975 = vmatmul.mubr.f32.gmra.mrb[0].mxu0 %v3208
        %v3976 = vpop.f32.mrb[0].mxu0
        %v3977 = vadd.f32 %v3592, %v3976
        %v3978 = vpop.f32.mrb[0].mxu0
        %3979 = vdwg.mxu0
        %v3980 = vadd.f32 %v2954, %v3662
        %v3981 = vadd.f32 %v2955, %v3667
        %v3982 = vadd.f32 %v2956, %v3672
        %v3983 = vadd.f32 %v2957, %v3677
        %v3984 = vadd.f32 %v2958, %v3682
        %v3985 = vadd.f32 %v2959, %v3687
        %v3986 = vadd.f32 %v2960, %v3692
        %v3987 = vadd.f32 %v2961, %v3697
        %v3988 = vadd.f32 %v2962, %v3702
        %v3989 = vadd.f32 %v2963, %v3707
        %v3990 = vadd.f32 %v2964, %v3712
        %v3991 = vadd.f32 %v2965, %v3717
        %v3992 = vadd.f32 %v2966, %v3722
        %v3993 = vadd.f32 %v2967, %v3727
        %v3994 = vadd.f32 %v2968, %v3732
        %v3995 = vadd.f32 %v2969, %v3737
        %v3996 = vadd.f32 %v2970, %v3742
        %v3997 = vadd.f32 %v2971, %v3747
        %v3998 = vadd.f32 %v2972, %v3752
        %v3999 = vadd.f32 %v2973, %v3757
        %v4000 = vadd.f32 %v2974, %v3762
        %v4001 = vadd.f32 %v2975, %v3767
        %v4002 = vadd.f32 %v2976, %v3772
        %v4003 = vadd.f32 %v2977, %v3777
        %v4004 = vadd.f32 %v2978, %v3782
        %v4005 = vadd.f32 %v2979, %v3787
        %v4006 = vadd.f32 %v2980, %v3792
        %v4007 = vadd.f32 %v2981, %v3797
        %v4008 = vadd.f32 %v2982, %v3802
        %v4009 = vadd.f32 %v2983, %v3807
        %v4010 = vadd.f32 %v2984, %v3812
        %v4011 = vadd.f32 %v2985, %v3817
        %v4012 = vadd.f32 %v2986, %v3822
        %v4013 = vadd.f32 %v2987, %v3827
        %v4014 = vadd.f32 %v2988, %v3832
        %v4015 = vadd.f32 %v2989, %v3837
        %v4016 = vadd.f32 %v2990, %v3842
        %v4017 = vadd.f32 %v2991, %v3847
        %v4018 = vadd.f32 %v2992, %v3852
        %v4019 = vadd.f32 %v2993, %v3857
        %v4020 = vadd.f32 %v2994, %v3862
        %v4021 = vadd.f32 %v2995, %v3867
        %v4022 = vadd.f32 %v2996, %v3872
        %v4023 = vadd.f32 %v2997, %v3877
        %v4024 = vadd.f32 %v2998, %v3882
        %v4025 = vadd.f32 %v2999, %v3887
        %v4026 = vadd.f32 %v3000, %v3892
        %v4027 = vadd.f32 %v3001, %v3897
        %v4028 = vadd.f32 %v3002, %v3902
        %v4029 = vadd.f32 %v3003, %v3907
        %v4030 = vadd.f32 %v3004, %v3912
        %v4031 = vadd.f32 %v3005, %v3917
        %v4032 = vadd.f32 %v3006, %v3922
        %v4033 = vadd.f32 %v3007, %v3927
        %v4034 = vadd.f32 %v3008, %v3932
        %v4035 = vadd.f32 %v3009, %v3937
        %v4036 = vadd.f32 %v3010, %v3942
        %v4037 = vadd.f32 %v3011, %v3947
        %v4038 = vadd.f32 %v3012, %v3952
        %v4039 = vadd.f32 %v3013, %v3957
        %v4040 = vadd.f32 %v3014, %v3962
        %v4041 = vadd.f32 %v3015, %v3967
        %v4042 = vadd.f32 %v3016, %v3972
        %v4043 = vadd.f32 %v3017, %v3977
        %v4044 = vmax.f32 %v3980, 0.0
        %v4045 = vmax.f32 %v3981, 0.0
        %v4046 = vmax.f32 %v3982, 0.0
        %v4047 = vmax.f32 %v3983, 0.0
        %v4048 = vmax.f32 %v3984, 0.0
        %v4049 = vmax.f32 %v3985, 0.0
        %v4050 = vmax.f32 %v3986, 0.0
        %v4051 = vmax.f32 %v3987, 0.0
        %v4052 = vmax.f32 %v3988, 0.0
        %v4053 = vmax.f32 %v3989, 0.0
        %v4054 = vmax.f32 %v3990, 0.0
        %v4055 = vmax.f32 %v3991, 0.0
        %v4056 = vmax.f32 %v3992, 0.0
        %v4057 = vmax.f32 %v3993, 0.0
        %v4058 = vmax.f32 %v3994, 0.0
        %v4059 = vmax.f32 %v3995, 0.0
        %v4060 = vmax.f32 %v3996, 0.0
        %v4061 = vmax.f32 %v3997, 0.0
        %v4062 = vmax.f32 %v3998, 0.0
        %v4063 = vmax.f32 %v3999, 0.0
        %v4064 = vmax.f32 %v4000, 0.0
        %v4065 = vmax.f32 %v4001, 0.0
        %v4066 = vmax.f32 %v4002, 0.0
        %v4067 = vmax.f32 %v4003, 0.0
        %v4068 = vmax.f32 %v4004, 0.0
        %v4069 = vmax.f32 %v4005, 0.0
        %v4070 = vmax.f32 %v4006, 0.0
        %v4071 = vmax.f32 %v4007, 0.0
        %v4072 = vmax.f32 %v4008, 0.0
        %v4073 = vmax.f32 %v4009, 0.0
        %v4074 = vmax.f32 %v4010, 0.0
        %v4075 = vmax.f32 %v4011, 0.0
        %v4076 = vmax.f32 %v4012, 0.0
        %v4077 = vmax.f32 %v4013, 0.0
        %v4078 = vmax.f32 %v4014, 0.0
        %v4079 = vmax.f32 %v4015, 0.0
        %v4080 = vmax.f32 %v4016, 0.0
        %v4081 = vmax.f32 %v4017, 0.0
        %v4082 = vmax.f32 %v4018, 0.0
        %v4083 = vmax.f32 %v4019, 0.0
        %v4084 = vmax.f32 %v4020, 0.0
        %v4085 = vmax.f32 %v4021, 0.0
        %v4086 = vmax.f32 %v4022, 0.0
        %v4087 = vmax.f32 %v4023, 0.0
        %v4088 = vmax.f32 %v4024, 0.0
        %v4089 = vmax.f32 %v4025, 0.0
        %v4090 = vmax.f32 %v4026, 0.0
        %v4091 = vmax.f32 %v4027, 0.0
        %v4092 = vmax.f32 %v4028, 0.0
        %v4093 = vmax.f32 %v4029, 0.0
        %v4094 = vmax.f32 %v4030, 0.0
        %v4095 = vmax.f32 %v4031, 0.0
        %v4096 = vmax.f32 %v4032, 0.0
        %v4097 = vmax.f32 %v4033, 0.0
        %v4098 = vmax.f32 %v4034, 0.0
        %v4099 = vmax.f32 %v4035, 0.0
        %v4100 = vmax.f32 %v4036, 0.0
        %v4101 = vmax.f32 %v4037, 0.0
        %v4102 = vmax.f32 %v4038, 0.0
        %v4103 = vmax.f32 %v4039, 0.0
        %v4104 = vmax.f32 %v4040, 0.0
        %v4105 = vmax.f32 %v4041, 0.0
        %v4106 = vmax.f32 %v4042, 0.0
        %v4107 = vmax.f32 %v4043, 0.0
        %v4108 = vsel %vm2565, %v4044, 0.0
        %v4109 = vsel %vm2565, %v4045, 0.0
        %v4110 = vadd.f32 %v4108, %v4109
        %v4111 = vsel %vm2565, %v4046, 0.0
        %v4112 = vadd.f32 %v4110, %v4111
        %v4113 = vsel %vm2565, %v4047, 0.0
        %v4114 = vadd.f32 %v4112, %v4113
        %v4115 = vsel %vm2565, %v4048, 0.0
        %v4116 = vadd.f32 %v4114, %v4115
        %v4117 = vsel %vm2565, %v4049, 0.0
        %v4118 = vadd.f32 %v4116, %v4117
        %v4119 = vsel %vm2565, %v4050, 0.0
        %v4120 = vadd.f32 %v4118, %v4119
        %v4121 = vsel %vm2565, %v4051, 0.0
        %v4122 = vadd.f32 %v4120, %v4121
        %v4123 = vsel %vm2565, %v4052, 0.0
        %v4124 = vadd.f32 %v4122, %v4123
        %v4125 = vsel %vm2565, %v4053, 0.0
        %v4126 = vadd.f32 %v4124, %v4125
        %v4127 = vsel %vm2565, %v4054, 0.0
        %v4128 = vadd.f32 %v4126, %v4127
        %v4129 = vsel %vm2565, %v4055, 0.0
        %v4130 = vadd.f32 %v4128, %v4129
        %v4131 = vsel %vm2565, %v4056, 0.0
        %v4132 = vadd.f32 %v4130, %v4131
        %v4133 = vsel %vm2565, %v4057, 0.0
        %v4134 = vadd.f32 %v4132, %v4133
        %v4135 = vsel %vm2565, %v4058, 0.0
        %v4136 = vadd.f32 %v4134, %v4135
        %v4137 = vsel %vm2565, %v4059, 0.0
        %v4138 = vadd.f32 %v4136, %v4137
        %v4139 = vsel %vm2565, %v4060, 0.0
        %v4140 = vadd.f32 %v4138, %v4139
        %v4141 = vsel %vm2565, %v4061, 0.0
        %v4142 = vadd.f32 %v4140, %v4141
        %v4143 = vsel %vm2565, %v4062, 0.0
        %v4144 = vadd.f32 %v4142, %v4143
        %v4145 = vsel %vm2565, %v4063, 0.0
        %v4146 = vadd.f32 %v4144, %v4145
        %v4147 = vsel %vm2565, %v4064, 0.0
        %v4148 = vadd.f32 %v4146, %v4147
        %v4149 = vsel %vm2565, %v4065, 0.0
        %v4150 = vadd.f32 %v4148, %v4149
        %v4151 = vsel %vm2565, %v4066, 0.0
        %v4152 = vadd.f32 %v4150, %v4151
        %v4153 = vsel %vm2565, %v4067, 0.0
        %v4154 = vadd.f32 %v4152, %v4153
        %v4155 = vsel %vm2565, %v4068, 0.0
        %v4156 = vadd.f32 %v4154, %v4155
        %v4157 = vsel %vm2565, %v4069, 0.0
        %v4158 = vadd.f32 %v4156, %v4157
        %v4159 = vsel %vm2565, %v4070, 0.0
        %v4160 = vadd.f32 %v4158, %v4159
        %v4161 = vsel %vm2565, %v4071, 0.0
        %v4162 = vadd.f32 %v4160, %v4161
        %v4163 = vsel %vm2565, %v4072, 0.0
        %v4164 = vadd.f32 %v4162, %v4163
        %v4165 = vsel %vm2565, %v4073, 0.0
        %v4166 = vadd.f32 %v4164, %v4165
        %v4167 = vsel %vm2565, %v4074, 0.0
        %v4168 = vadd.f32 %v4166, %v4167
        %v4169 = vsel %vm2565, %v4075, 0.0
        %v4170 = vadd.f32 %v4168, %v4169
        %v4171 = vsel %vm2565, %v4076, 0.0
        %v4172 = vadd.f32 %v4170, %v4171
        %v4173 = vsel %vm2565, %v4077, 0.0
        %v4174 = vadd.f32 %v4172, %v4173
        %v4175 = vsel %vm2565, %v4078, 0.0
        %v4176 = vadd.f32 %v4174, %v4175
        %v4177 = vsel %vm2565, %v4079, 0.0
        %v4178 = vadd.f32 %v4176, %v4177
        %v4179 = vsel %vm2565, %v4080, 0.0
        %v4180 = vadd.f32 %v4178, %v4179
        %v4181 = vsel %vm2565, %v4081, 0.0
        %v4182 = vadd.f32 %v4180, %v4181
        %v4183 = vsel %vm2565, %v4082, 0.0
        %v4184 = vadd.f32 %v4182, %v4183
        %v4185 = vsel %vm2565, %v4083, 0.0
        %v4186 = vadd.f32 %v4184, %v4185
        %v4187 = vsel %vm2565, %v4084, 0.0
        %v4188 = vadd.f32 %v4186, %v4187
        %v4189 = vsel %vm2565, %v4085, 0.0
        %v4190 = vadd.f32 %v4188, %v4189
        %v4191 = vsel %vm2565, %v4086, 0.0
        %v4192 = vadd.f32 %v4190, %v4191
        %v4193 = vsel %vm2565, %v4087, 0.0
        %v4194 = vadd.f32 %v4192, %v4193
        %v4195 = vsel %vm2565, %v4088, 0.0
        %v4196 = vadd.f32 %v4194, %v4195
        %v4197 = vsel %vm2565, %v4089, 0.0
        %v4198 = vadd.f32 %v4196, %v4197
        %v4199 = vsel %vm2565, %v4090, 0.0
        %v4200 = vadd.f32 %v4198, %v4199
        %v4201 = vsel %vm2565, %v4091, 0.0
        %v4202 = vadd.f32 %v4200, %v4201
        %v4203 = vsel %vm2565, %v4092, 0.0
        %v4204 = vadd.f32 %v4202, %v4203
        %v4205 = vsel %vm2565, %v4093, 0.0
        %v4206 = vadd.f32 %v4204, %v4205
        %v4207 = vsel %vm2565, %v4094, 0.0
        %v4208 = vadd.f32 %v4206, %v4207
        %v4209 = vsel %vm2565, %v4095, 0.0
        %v4210 = vadd.f32 %v4208, %v4209
        %v4211 = vsel %vm2565, %v4096, 0.0
        %v4212 = vadd.f32 %v4210, %v4211
        %v4213 = vsel %vm2565, %v4097, 0.0
        %v4214 = vadd.f32 %v4212, %v4213
        %v4215 = vsel %vm2565, %v4098, 0.0
        %v4216 = vadd.f32 %v4214, %v4215
        %v4217 = vsel %vm2565, %v4099, 0.0
        %v4218 = vadd.f32 %v4216, %v4217
        %v4219 = vsel %vm2565, %v4100, 0.0
        %v4220 = vadd.f32 %v4218, %v4219
        %v4221 = vsel %vm2565, %v4101, 0.0
        %v4222 = vadd.f32 %v4220, %v4221
        %v4223 = vsel %vm2565, %v4102, 0.0
        %v4224 = vadd.f32 %v4222, %v4223
        %v4225 = vsel %vm2565, %v4103, 0.0
        %v4226 = vadd.f32 %v4224, %v4225
        %v4227 = vsel %vm2565, %v4104, 0.0
        %v4228 = vadd.f32 %v4226, %v4227
        %v4229 = vsel %vm2565, %v4105, 0.0
        %v4230 = vadd.f32 %v4228, %v4229
        %v4231 = vsel %vm2565, %v4106, 0.0
        %v4232 = vadd.f32 %v4230, %v4231
        %v4233 = vsel %vm2565, %v4107, 0.0
        %v4234 = vadd.f32 %v4232, %v4233
        %v4235 = vrot.slane %v4234, 4
        %v4236 = vadd.f32 %v4234, %v4235
        %v4237 = vrot.slane %v4236, 2
        %v4238 = vadd.f32 %v4236, %v4237
        %v4239 = vrot.slane %v4238, 1
        %v4240 = vadd.f32 %v4238, %v4239
        %v4241 = vmul.f32 %v4240, 0.001953125
        %v4242 = vsub.f32 %v4044, %v4241
        %v4243 = vsub.f32 %v4045, %v4241
        %v4244 = vsub.f32 %v4046, %v4241
        %v4245 = vsub.f32 %v4047, %v4241
        %v4246 = vsub.f32 %v4048, %v4241
        %v4247 = vsub.f32 %v4049, %v4241
        %v4248 = vsub.f32 %v4050, %v4241
        %v4249 = vsub.f32 %v4051, %v4241
        %v4250 = vsub.f32 %v4052, %v4241
        %v4251 = vsub.f32 %v4053, %v4241
        %v4252 = vsub.f32 %v4054, %v4241
        %v4253 = vsub.f32 %v4055, %v4241
        %v4254 = vsub.f32 %v4056, %v4241
        %v4255 = vsub.f32 %v4057, %v4241
        %v4256 = vsub.f32 %v4058, %v4241
        %v4257 = vsub.f32 %v4059, %v4241
        %v4258 = vsub.f32 %v4060, %v4241
        %v4259 = vsub.f32 %v4061, %v4241
        %v4260 = vsub.f32 %v4062, %v4241
        %v4261 = vsub.f32 %v4063, %v4241
        %v4262 = vsub.f32 %v4064, %v4241
        %v4263 = vsub.f32 %v4065, %v4241
        %v4264 = vsub.f32 %v4066, %v4241
        %v4265 = vsub.f32 %v4067, %v4241
        %v4266 = vsub.f32 %v4068, %v4241
        %v4267 = vsub.f32 %v4069, %v4241
        %v4268 = vsub.f32 %v4070, %v4241
        %v4269 = vsub.f32 %v4071, %v4241
        %v4270 = vsub.f32 %v4072, %v4241
        %v4271 = vsub.f32 %v4073, %v4241
        %v4272 = vsub.f32 %v4074, %v4241
        %v4273 = vsub.f32 %v4075, %v4241
        %v4274 = vsub.f32 %v4076, %v4241
        %v4275 = vsub.f32 %v4077, %v4241
        %v4276 = vsub.f32 %v4078, %v4241
        %v4277 = vsub.f32 %v4079, %v4241
        %v4278 = vsub.f32 %v4080, %v4241
        %v4279 = vsub.f32 %v4081, %v4241
        %v4280 = vsub.f32 %v4082, %v4241
        %v4281 = vsub.f32 %v4083, %v4241
        %v4282 = vsub.f32 %v4084, %v4241
        %v4283 = vsub.f32 %v4085, %v4241
        %v4284 = vsub.f32 %v4086, %v4241
        %v4285 = vsub.f32 %v4087, %v4241
        %v4286 = vsub.f32 %v4088, %v4241
        %v4287 = vsub.f32 %v4089, %v4241
        %v4288 = vsub.f32 %v4090, %v4241
        %v4289 = vsub.f32 %v4091, %v4241
        %v4290 = vsub.f32 %v4092, %v4241
        %v4291 = vsub.f32 %v4093, %v4241
        %v4292 = vsub.f32 %v4094, %v4241
        %v4293 = vsub.f32 %v4095, %v4241
        %v4294 = vsub.f32 %v4096, %v4241
        %v4295 = vsub.f32 %v4097, %v4241
        %v4296 = vsub.f32 %v4098, %v4241
        %v4297 = vsub.f32 %v4099, %v4241
        %v4298 = vsub.f32 %v4100, %v4241
        %v4299 = vsub.f32 %v4101, %v4241
        %v4300 = vsub.f32 %v4102, %v4241
        %v4301 = vsub.f32 %v4103, %v4241
        %v4302 = vsub.f32 %v4104, %v4241
        %v4303 = vsub.f32 %v4105, %v4241
        %v4304 = vsub.f32 %v4106, %v4241
        %v4305 = vsub.f32 %v4107, %v4241
        %v4306 = vmul.f32 %v4242, %v4242
        %v4307 = vmul.f32 %v4243, %v4243
        %v4308 = vmul.f32 %v4244, %v4244
        %v4309 = vmul.f32 %v4245, %v4245
        %v4310 = vmul.f32 %v4246, %v4246
        %v4311 = vmul.f32 %v4247, %v4247
        %v4312 = vmul.f32 %v4248, %v4248
        %v4313 = vmul.f32 %v4249, %v4249
        %v4314 = vmul.f32 %v4250, %v4250
        %v4315 = vmul.f32 %v4251, %v4251
        %v4316 = vmul.f32 %v4252, %v4252
        %v4317 = vmul.f32 %v4253, %v4253
        %v4318 = vmul.f32 %v4254, %v4254
        %v4319 = vmul.f32 %v4255, %v4255
        %v4320 = vmul.f32 %v4256, %v4256
        %v4321 = vmul.f32 %v4257, %v4257
        %v4322 = vmul.f32 %v4258, %v4258
        %v4323 = vmul.f32 %v4259, %v4259
        %v4324 = vmul.f32 %v4260, %v4260
        %v4325 = vmul.f32 %v4261, %v4261
        %v4326 = vmul.f32 %v4262, %v4262
        %v4327 = vmul.f32 %v4263, %v4263
        %v4328 = vmul.f32 %v4264, %v4264
        %v4329 = vmul.f32 %v4265, %v4265
        %v4330 = vmul.f32 %v4266, %v4266
        %v4331 = vmul.f32 %v4267, %v4267
        %v4332 = vmul.f32 %v4268, %v4268
        %v4333 = vmul.f32 %v4269, %v4269
        %v4334 = vmul.f32 %v4270, %v4270
        %v4335 = vmul.f32 %v4271, %v4271
        %v4336 = vmul.f32 %v4272, %v4272
        %v4337 = vmul.f32 %v4273, %v4273
        %v4338 = vmul.f32 %v4274, %v4274
        %v4339 = vmul.f32 %v4275, %v4275
        %v4340 = vmul.f32 %v4276, %v4276
        %v4341 = vmul.f32 %v4277, %v4277
        %v4342 = vmul.f32 %v4278, %v4278
        %v4343 = vmul.f32 %v4279, %v4279
        %v4344 = vmul.f32 %v4280, %v4280
        %v4345 = vmul.f32 %v4281, %v4281
        %v4346 = vmul.f32 %v4282, %v4282
        %v4347 = vmul.f32 %v4283, %v4283
        %v4348 = vmul.f32 %v4284, %v4284
        %v4349 = vmul.f32 %v4285, %v4285
        %v4350 = vmul.f32 %v4286, %v4286
        %v4351 = vmul.f32 %v4287, %v4287
        %v4352 = vmul.f32 %v4288, %v4288
        %v4353 = vmul.f32 %v4289, %v4289
        %v4354 = vmul.f32 %v4290, %v4290
        %v4355 = vmul.f32 %v4291, %v4291
        %v4356 = vmul.f32 %v4292, %v4292
        %v4357 = vmul.f32 %v4293, %v4293
        %v4358 = vmul.f32 %v4294, %v4294
        %v4359 = vmul.f32 %v4295, %v4295
        %v4360 = vmul.f32 %v4296, %v4296
        %v4361 = vmul.f32 %v4297, %v4297
        %v4362 = vmul.f32 %v4298, %v4298
        %v4363 = vmul.f32 %v4299, %v4299
        %v4364 = vmul.f32 %v4300, %v4300
        %v4365 = vmul.f32 %v4301, %v4301
        %v4366 = vmul.f32 %v4302, %v4302
        %v4367 = vmul.f32 %v4303, %v4303
        %v4368 = vmul.f32 %v4304, %v4304
        %v4369 = vmul.f32 %v4305, %v4305
        %v4370 = vsel %vm2565, %v4306, 0.0
        %v4371 = vsel %vm2565, %v4307, 0.0
        %v4372 = vadd.f32 %v4370, %v4371
        %v4373 = vsel %vm2565, %v4308, 0.0
        %v4374 = vadd.f32 %v4372, %v4373
        %v4375 = vsel %vm2565, %v4309, 0.0
        %v4376 = vadd.f32 %v4374, %v4375
        %v4377 = vsel %vm2565, %v4310, 0.0
        %v4378 = vadd.f32 %v4376, %v4377
        %v4379 = vsel %vm2565, %v4311, 0.0
        %v4380 = vadd.f32 %v4378, %v4379
        %v4381 = vsel %vm2565, %v4312, 0.0
        %v4382 = vadd.f32 %v4380, %v4381
        %v4383 = vsel %vm2565, %v4313, 0.0
        %v4384 = vadd.f32 %v4382, %v4383
        %v4385 = vsel %vm2565, %v4314, 0.0
        %v4386 = vadd.f32 %v4384, %v4385
        %v4387 = vsel %vm2565, %v4315, 0.0
        %v4388 = vadd.f32 %v4386, %v4387
        %v4389 = vsel %vm2565, %v4316, 0.0
        %v4390 = vadd.f32 %v4388, %v4389
        %v4391 = vsel %vm2565, %v4317, 0.0
        %v4392 = vadd.f32 %v4390, %v4391
        %v4393 = vsel %vm2565, %v4318, 0.0
        %v4394 = vadd.f32 %v4392, %v4393
        %v4395 = vsel %vm2565, %v4319, 0.0
        %v4396 = vadd.f32 %v4394, %v4395
        %v4397 = vsel %vm2565, %v4320, 0.0
        %v4398 = vadd.f32 %v4396, %v4397
        %v4399 = vsel %vm2565, %v4321, 0.0
        %v4400 = vadd.f32 %v4398, %v4399
        %v4401 = vsel %vm2565, %v4322, 0.0
        %v4402 = vadd.f32 %v4400, %v4401
        %v4403 = vsel %vm2565, %v4323, 0.0
        %v4404 = vadd.f32 %v4402, %v4403
        %v4405 = vsel %vm2565, %v4324, 0.0
        %v4406 = vadd.f32 %v4404, %v4405
        %v4407 = vsel %vm2565, %v4325, 0.0
        %v4408 = vadd.f32 %v4406, %v4407
        %v4409 = vsel %vm2565, %v4326, 0.0
        %v4410 = vadd.f32 %v4408, %v4409
        %v4411 = vsel %vm2565, %v4327, 0.0
        %v4412 = vadd.f32 %v4410, %v4411
        %v4413 = vsel %vm2565, %v4328, 0.0
        %v4414 = vadd.f32 %v4412, %v4413
        %v4415 = vsel %vm2565, %v4329, 0.0
        %v4416 = vadd.f32 %v4414, %v4415
        %v4417 = vsel %vm2565, %v4330, 0.0
        %v4418 = vadd.f32 %v4416, %v4417
        %v4419 = vsel %vm2565, %v4331, 0.0
        %v4420 = vadd.f32 %v4418, %v4419
        %v4421 = vsel %vm2565, %v4332, 0.0
        %v4422 = vadd.f32 %v4420, %v4421
        %v4423 = vsel %vm2565, %v4333, 0.0
        %v4424 = vadd.f32 %v4422, %v4423
        %v4425 = vsel %vm2565, %v4334, 0.0
        %v4426 = vadd.f32 %v4424, %v4425
        %v4427 = vsel %vm2565, %v4335, 0.0
        %v4428 = vadd.f32 %v4426, %v4427
        %v4429 = vsel %vm2565, %v4336, 0.0
        %v4430 = vadd.f32 %v4428, %v4429
        %v4431 = vsel %vm2565, %v4337, 0.0
        %v4432 = vadd.f32 %v4430, %v4431
        %v4433 = vsel %vm2565, %v4338, 0.0
        %v4434 = vadd.f32 %v4432, %v4433
        %v4435 = vsel %vm2565, %v4339, 0.0
        %v4436 = vadd.f32 %v4434, %v4435
        %v4437 = vsel %vm2565, %v4340, 0.0
        %v4438 = vadd.f32 %v4436, %v4437
        %v4439 = vsel %vm2565, %v4341, 0.0
        %v4440 = vadd.f32 %v4438, %v4439
        %v4441 = vsel %vm2565, %v4342, 0.0
        %v4442 = vadd.f32 %v4440, %v4441
        %v4443 = vsel %vm2565, %v4343, 0.0
        %v4444 = vadd.f32 %v4442, %v4443
        %v4445 = vsel %vm2565, %v4344, 0.0
        %v4446 = vadd.f32 %v4444, %v4445
        %v4447 = vsel %vm2565, %v4345, 0.0
        %v4448 = vadd.f32 %v4446, %v4447
        %v4449 = vsel %vm2565, %v4346, 0.0
        %v4450 = vadd.f32 %v4448, %v4449
        %v4451 = vsel %vm2565, %v4347, 0.0
        %v4452 = vadd.f32 %v4450, %v4451
        %v4453 = vsel %vm2565, %v4348, 0.0
        %v4454 = vadd.f32 %v4452, %v4453
        %v4455 = vsel %vm2565, %v4349, 0.0
        %v4456 = vadd.f32 %v4454, %v4455
        %v4457 = vsel %vm2565, %v4350, 0.0
        %v4458 = vadd.f32 %v4456, %v4457
        %v4459 = vsel %vm2565, %v4351, 0.0
        %v4460 = vadd.f32 %v4458, %v4459
        %v4461 = vsel %vm2565, %v4352, 0.0
        %v4462 = vadd.f32 %v4460, %v4461
        %v4463 = vsel %vm2565, %v4353, 0.0
        %v4464 = vadd.f32 %v4462, %v4463
        %v4465 = vsel %vm2565, %v4354, 0.0
        %v4466 = vadd.f32 %v4464, %v4465
        %v4467 = vsel %vm2565, %v4355, 0.0
        %v4468 = vadd.f32 %v4466, %v4467
        %v4469 = vsel %vm2565, %v4356, 0.0
        %v4470 = vadd.f32 %v4468, %v4469
        %v4471 = vsel %vm2565, %v4357, 0.0
        %v4472 = vadd.f32 %v4470, %v4471
        %v4473 = vsel %vm2565, %v4358, 0.0
        %v4474 = vadd.f32 %v4472, %v4473
        %v4475 = vsel %vm2565, %v4359, 0.0
        %v4476 = vadd.f32 %v4474, %v4475
        %v4477 = vsel %vm2565, %v4360, 0.0
        %v4478 = vadd.f32 %v4476, %v4477
        %v4479 = vsel %vm2565, %v4361, 0.0
        %v4480 = vadd.f32 %v4478, %v4479
        %v4481 = vsel %vm2565, %v4362, 0.0
        %v4482 = vadd.f32 %v4480, %v4481
        %v4483 = vsel %vm2565, %v4363, 0.0
        %v4484 = vadd.f32 %v4482, %v4483
        %v4485 = vsel %vm2565, %v4364, 0.0
        %v4486 = vadd.f32 %v4484, %v4485
        %v4487 = vsel %vm2565, %v4365, 0.0
        %v4488 = vadd.f32 %v4486, %v4487
        %v4489 = vsel %vm2565, %v4366, 0.0
        %v4490 = vadd.f32 %v4488, %v4489
        %v4491 = vsel %vm2565, %v4367, 0.0
        %v4492 = vadd.f32 %v4490, %v4491
        %v4493 = vsel %vm2565, %v4368, 0.0
        %v4494 = vadd.f32 %v4492, %v4493
        %v4495 = vsel %vm2565, %v4369, 0.0
        %v4496 = vadd.f32 %v4494, %v4495
        %v4497 = vrot.slane %v4496, 4
        %v4498 = vadd.f32 %v4496, %v4497
        %v4499 = vrot.slane %v4498, 2
        %v4500 = vadd.f32 %v4498, %v4499
        %v4501 = vrot.slane %v4500, 1
        %v4502 = vadd.f32 %v4500, %v4501
        %v4503 = vmul.f32 %v4502, 0.001953125
        %v4504 = vadd.f32 %v4503, 1e-05
        %v4505 = vrsqrt.pop %v4504
        %v4506 = vmul.f32 %v4505, %v438
        %v4507 = vlaneseq
        %v4508 = vshrl.u32 %v4507, 7
        %v4509 = vsub.s32 0, %v4508
        %v4510 = vrot.slane %v4506, %v4509
        %v4511 = vmul.f32 %v4242, %v4510
        %v4512 = vmul.f32 %v4243, %v4510
        %v4513 = vmul.f32 %v4244, %v4510
        %v4514 = vmul.f32 %v4245, %v4510
        %v4515 = vmul.f32 %v4246, %v4510
        %v4516 = vmul.f32 %v4247, %v4510
        %v4517 = vmul.f32 %v4248, %v4510
        %v4518 = vmul.f32 %v4249, %v4510
        %v4519 = vmul.f32 %v4250, %v4510
        %v4520 = vmul.f32 %v4251, %v4510
        %v4521 = vmul.f32 %v4252, %v4510
        %v4522 = vmul.f32 %v4253, %v4510
        %v4523 = vmul.f32 %v4254, %v4510
        %v4524 = vmul.f32 %v4255, %v4510
        %v4525 = vmul.f32 %v4256, %v4510
        %v4526 = vmul.f32 %v4257, %v4510
        %v4527 = vmul.f32 %v4258, %v4510
        %v4528 = vmul.f32 %v4259, %v4510
        %v4529 = vmul.f32 %v4260, %v4510
        %v4530 = vmul.f32 %v4261, %v4510
        %v4531 = vmul.f32 %v4262, %v4510
        %v4532 = vmul.f32 %v4263, %v4510
        %v4533 = vmul.f32 %v4264, %v4510
        %v4534 = vmul.f32 %v4265, %v4510
        %v4535 = vmul.f32 %v4266, %v4510
        %v4536 = vmul.f32 %v4267, %v4510
        %v4537 = vmul.f32 %v4268, %v4510
        %v4538 = vmul.f32 %v4269, %v4510
        %v4539 = vmul.f32 %v4270, %v4510
        %v4540 = vmul.f32 %v4271, %v4510
        %v4541 = vmul.f32 %v4272, %v4510
        %v4542 = vmul.f32 %v4273, %v4510
        %v4543 = vmul.f32 %v4274, %v4510
        %v4544 = vmul.f32 %v4275, %v4510
        %v4545 = vmul.f32 %v4276, %v4510
        %v4546 = vmul.f32 %v4277, %v4510
        %v4547 = vmul.f32 %v4278, %v4510
        %v4548 = vmul.f32 %v4279, %v4510
        %v4549 = vmul.f32 %v4280, %v4510
        %v4550 = vmul.f32 %v4281, %v4510
        %v4551 = vmul.f32 %v4282, %v4510
        %v4552 = vmul.f32 %v4283, %v4510
        %v4553 = vmul.f32 %v4284, %v4510
        %v4554 = vmul.f32 %v4285, %v4510
        %v4555 = vmul.f32 %v4286, %v4510
        %v4556 = vmul.f32 %v4287, %v4510
        %v4557 = vmul.f32 %v4288, %v4510
        %v4558 = vmul.f32 %v4289, %v4510
        %v4559 = vmul.f32 %v4290, %v4510
        %v4560 = vmul.f32 %v4291, %v4510
        %v4561 = vmul.f32 %v4292, %v4510
        %v4562 = vmul.f32 %v4293, %v4510
        %v4563 = vmul.f32 %v4294, %v4510
        %v4564 = vmul.f32 %v4295, %v4510
        %v4565 = vmul.f32 %v4296, %v4510
        %v4566 = vmul.f32 %v4297, %v4510
        %v4567 = vmul.f32 %v4298, %v4510
        %v4568 = vmul.f32 %v4299, %v4510
        %v4569 = vmul.f32 %v4300, %v4510
        %v4570 = vmul.f32 %v4301, %v4510
        %v4571 = vmul.f32 %v4302, %v4510
        %v4572 = vmul.f32 %v4303, %v4510
        %v4573 = vmul.f32 %v4304, %v4510
        %v4574 = vmul.f32 %v4305, %v4510
        %v4576 = vlaneseq
        %v4577 = vshrl.u32 %v4576, 7
        %v4578 = vsub.s32 0, %v4577
        %v4579 = vrot.slane %v439, %v4578
        %v4581 = vadd.f32 %v4511, %v4579
        %v4582 = vadd.f32 %v4512, %v4579
        %v4583 = vadd.f32 %v4513, %v4579
        %v4584 = vadd.f32 %v4514, %v4579
        %v4585 = vadd.f32 %v4515, %v4579
        %v4586 = vadd.f32 %v4516, %v4579
        %v4587 = vadd.f32 %v4517, %v4579
        %v4588 = vadd.f32 %v4518, %v4579
        %v4589 = vadd.f32 %v4519, %v4579
        %v4590 = vadd.f32 %v4520, %v4579
        %v4591 = vadd.f32 %v4521, %v4579
        %v4592 = vadd.f32 %v4522, %v4579
        %v4593 = vadd.f32 %v4523, %v4579
        %v4594 = vadd.f32 %v4524, %v4579
        %v4595 = vadd.f32 %v4525, %v4579
        %v4596 = vadd.f32 %v4526, %v4579
        %v4597 = vadd.f32 %v4527, %v4579
        %v4598 = vadd.f32 %v4528, %v4579
        %v4599 = vadd.f32 %v4529, %v4579
        %v4600 = vadd.f32 %v4530, %v4579
        %v4601 = vadd.f32 %v4531, %v4579
        %v4602 = vadd.f32 %v4532, %v4579
        %v4603 = vadd.f32 %v4533, %v4579
        %v4604 = vadd.f32 %v4534, %v4579
        %v4605 = vadd.f32 %v4535, %v4579
        %v4606 = vadd.f32 %v4536, %v4579
        %v4607 = vadd.f32 %v4537, %v4579
        %v4608 = vadd.f32 %v4538, %v4579
        %v4609 = vadd.f32 %v4539, %v4579
        %v4610 = vadd.f32 %v4540, %v4579
        %v4611 = vadd.f32 %v4541, %v4579
        %v4612 = vadd.f32 %v4542, %v4579
        %v4613 = vadd.f32 %v4543, %v4579
        %v4614 = vadd.f32 %v4544, %v4579
        %v4615 = vadd.f32 %v4545, %v4579
        %v4616 = vadd.f32 %v4546, %v4579
        %v4617 = vadd.f32 %v4547, %v4579
        %v4618 = vadd.f32 %v4548, %v4579
        %v4619 = vadd.f32 %v4549, %v4579
        %v4620 = vadd.f32 %v4550, %v4579
        %v4621 = vadd.f32 %v4551, %v4579
        %v4622 = vadd.f32 %v4552, %v4579
        %v4623 = vadd.f32 %v4553, %v4579
        %v4624 = vadd.f32 %v4554, %v4579
        %v4625 = vadd.f32 %v4555, %v4579
        %v4626 = vadd.f32 %v4556, %v4579
        %v4627 = vadd.f32 %v4557, %v4579
        %v4628 = vadd.f32 %v4558, %v4579
        %v4629 = vadd.f32 %v4559, %v4579
        %v4630 = vadd.f32 %v4560, %v4579
        %v4631 = vadd.f32 %v4561, %v4579
        %v4632 = vadd.f32 %v4562, %v4579
        %v4633 = vadd.f32 %v4563, %v4579
        %v4634 = vadd.f32 %v4564, %v4579
        %v4635 = vadd.f32 %v4565, %v4579
        %v4636 = vadd.f32 %v4566, %v4579
        %v4637 = vadd.f32 %v4567, %v4579
        %v4638 = vadd.f32 %v4568, %v4579
        %v4639 = vadd.f32 %v4569, %v4579
        %v4640 = vadd.f32 %v4570, %v4579
        %v4641 = vadd.f32 %v4571, %v4579
        %v4642 = vadd.f32 %v4572, %v4579
        %v4643 = vadd.f32 %v4573, %v4579
        %v4644 = vadd.f32 %v4574, %v4579
        %4645 = vst.msk [vmem:[%s643 + $0x1] sm:$0xff] %vm2565, %v4581
        %4646 = vst.msk [vmem:[%s643 + $0x9] sm:$0xff] %vm2565, %v4582
        %4647 = vst.msk [vmem:[%s643 + $0x19] sm:$0xff] %vm2565, %v4583
        %4648 = vst.msk [vmem:[%s643 + $0x21] sm:$0xff] %vm2565, %v4584
        %4649 = vst.msk [vmem:[%s643 + $0x31] sm:$0xff] %vm2565, %v4585
        %4650 = vst.msk [vmem:[%s643 + $0x39] sm:$0xff] %vm2565, %v4586
        %4651 = vst.msk [vmem:[%s643 + $0x49] sm:$0xff] %vm2565, %v4587
        %4652 = vst.msk [vmem:[%s643 + $0x51] sm:$0xff] %vm2565, %v4588
        %4653 = vst.msk [vmem:[%s643 + $0x61] sm:$0xff] %vm2565, %v4589
        %4654 = vst.msk [vmem:[%s643 + $0x69] sm:$0xff] %vm2565, %v4590
        %4655 = vst.msk [vmem:[%s643 + $0x79] sm:$0xff] %vm2565, %v4591
        %4656 = vst.msk [vmem:[%s643 + $0x81] sm:$0xff] %vm2565, %v4592
        %4657 = vst.msk [vmem:[%s643 + $0x91] sm:$0xff] %vm2565, %v4593
        %4658 = vst.msk [vmem:[%s643 + $0x99] sm:$0xff] %vm2565, %v4594
        %4659 = vst.msk [vmem:[%s643 + $0xa9] sm:$0xff] %vm2565, %v4595
        %4660 = vst.msk [vmem:[%s643 + $0xb1] sm:$0xff] %vm2565, %v4596
        %4661 = vst.msk [vmem:[%s643 + $0xc1] sm:$0xff] %vm2565, %v4597
        %4662 = vst.msk [vmem:[%s643 + $0xc9] sm:$0xff] %vm2565, %v4598
        %4663 = vst.msk [vmem:[%s643 + $0xd9] sm:$0xff] %vm2565, %v4599
        %4664 = vst.msk [vmem:[%s643 + $0xe1] sm:$0xff] %vm2565, %v4600
        %4665 = vst.msk [vmem:[%s643 + $0xf1] sm:$0xff] %vm2565, %v4601
        %4666 = vst.msk [vmem:[%s643 + $0xf9] sm:$0xff] %vm2565, %v4602
        %4667 = vst.msk [vmem:[%s643 + $0x109] sm:$0xff] %vm2565, %v4603
        %4668 = vst.msk [vmem:[%s643 + $0x111] sm:$0xff] %vm2565, %v4604
        %4669 = vst.msk [vmem:[%s643 + $0x121] sm:$0xff] %vm2565, %v4605
        %4670 = vst.msk [vmem:[%s643 + $0x129] sm:$0xff] %vm2565, %v4606
        %4671 = vst.msk [vmem:[%s643 + $0x139] sm:$0xff] %vm2565, %v4607
        %4672 = vst.msk [vmem:[%s643 + $0x141] sm:$0xff] %vm2565, %v4608
        %4673 = vst.msk [vmem:[%s643 + $0x151] sm:$0xff] %vm2565, %v4609
        %4674 = vst.msk [vmem:[%s643 + $0x159] sm:$0xff] %vm2565, %v4610
        %4675 = vst.msk [vmem:[%s643 + $0x169] sm:$0xff] %vm2565, %v4611
        %4676 = vst.msk [vmem:[%s643 + $0x171] sm:$0xff] %vm2565, %v4612
        %4677 = vst.msk [vmem:[%s643 + $0x1b1] sm:$0xff] %vm2565, %v4613
        %4678 = vst.msk [vmem:[%s643 + $0x1b9] sm:$0xff] %vm2565, %v4614
        %4679 = vst.msk [vmem:[%s643 + $0x1c9] sm:$0xff] %vm2565, %v4615
        %4680 = vst.msk [vmem:[%s643 + $0x1d1] sm:$0xff] %vm2565, %v4616
        %4681 = vst.msk [vmem:[%s643 + $0x1e1] sm:$0xff] %vm2565, %v4617
        %4682 = vst.msk [vmem:[%s643 + $0x1e9] sm:$0xff] %vm2565, %v4618
        %4683 = vst.msk [vmem:[%s643 + $0x1f9] sm:$0xff] %vm2565, %v4619
        %4684 = vst.msk [vmem:[%s643 + $0x201] sm:$0xff] %vm2565, %v4620
        %4685 = vst.msk [vmem:[%s643 + $0x211] sm:$0xff] %vm2565, %v4621
        %4686 = vst.msk [vmem:[%s643 + $0x219] sm:$0xff] %vm2565, %v4622
        %4687 = vst.msk [vmem:[%s643 + $0x229] sm:$0xff] %vm2565, %v4623
        %4688 = vst.msk [vmem:[%s643 + $0x231] sm:$0xff] %vm2565, %v4624
        %4689 = vst.msk [vmem:[%s643 + $0x241] sm:$0xff] %vm2565, %v4625
        %4690 = vst.msk [vmem:[%s643 + $0x249] sm:$0xff] %vm2565, %v4626
        %4691 = vst.msk [vmem:[%s643 + $0x259] sm:$0xff] %vm2565, %v4627
        %4692 = vst.msk [vmem:[%s643 + $0x261] sm:$0xff] %vm2565, %v4628
        %4693 = vst.msk [vmem:[%s643 + $0x271] sm:$0xff] %vm2565, %v4629
        %4694 = vst.msk [vmem:[%s643 + $0x279] sm:$0xff] %vm2565, %v4630
        %4695 = vst.msk [vmem:[%s643 + $0x289] sm:$0xff] %vm2565, %v4631
        %4696 = vst.msk [vmem:[%s643 + $0x291] sm:$0xff] %vm2565, %v4632
        %4697 = vst.msk [vmem:[%s643 + $0x2a1] sm:$0xff] %vm2565, %v4633
        %4698 = vst.msk [vmem:[%s643 + $0x2a9] sm:$0xff] %vm2565, %v4634
        %4699 = vst.msk [vmem:[%s643 + $0x2b9] sm:$0xff] %vm2565, %v4635
        %4700 = vst.msk [vmem:[%s643 + $0x2c1] sm:$0xff] %vm2565, %v4636
        %4701 = vst.msk [vmem:[%s643 + $0x2d1] sm:$0xff] %vm2565, %v4637
        %4702 = vst.msk [vmem:[%s643 + $0x2d9] sm:$0xff] %vm2565, %v4638
        %4703 = vst.msk [vmem:[%s643 + $0x2e9] sm:$0xff] %vm2565, %v4639
        %4704 = vst.msk [vmem:[%s643 + $0x2f1] sm:$0xff] %vm2565, %v4640
        %4705 = vst.msk [vmem:[%s643 + $0x301] sm:$0xff] %vm2565, %v4641
        %4706 = vst.msk [vmem:[%s643 + $0x309] sm:$0xff] %vm2565, %v4642
        %4707 = vst.msk [vmem:[%s643 + $0x319] sm:$0xff] %vm2565, %v4643
        %4708 = vst.msk [vmem:[%s643 + $0x321] sm:$0xff] %vm2565, %v4644
        %4709 = vxpose.xlu0.b32.start [1/16] %v4581, 128
        %4710 = vxpose.xlu0.b32.cont [2/16] %v4582, 128
        %4711 = vxpose.xlu0.b32.cont [3/16] %v4583, 128
        %4712 = vxpose.xlu0.b32.cont [4/16] %v4584, 128
        %4713 = vxpose.xlu0.b32.cont [5/16] %v4585, 128
        %4714 = vxpose.xlu0.b32.cont [6/16] %v4586, 128
        %4715 = vxpose.xlu0.b32.cont [7/16] %v4587, 128
        %4716 = vxpose.xlu0.b32.cont [8/16] %v4588, 128
        %4717 = vxpose.xlu0.b32.cont [9/16] %v4589, 128
        %4718 = vxpose.xlu0.b32.cont [10/16] %v4590, 128
        %4719 = vxpose.xlu0.b32.cont [11/16] %v4591, 128
        %4720 = vxpose.xlu0.b32.cont [12/16] %v4592, 128
        %4721 = vxpose.xlu0.b32.cont [13/16] %v4593, 128
        %4722 = vxpose.xlu0.b32.cont [14/16] %v4594, 128
        %4723 = vxpose.xlu0.b32.cont [15/16] %v4595, 128
        %4724 = vxpose.xlu0.b32.end [16/16] %v4596, 128
        %v4725 = vpop.trf.xlu0
        %v4726 = vpop.trf.xlu0
        %v4727 = vpop.trf.xlu0
        %v4728 = vpop.trf.xlu0
        %v4729 = vpop.trf.xlu0
        %v4730 = vpop.trf.xlu0
        %v4731 = vpop.trf.xlu0
        %v4732 = vpop.trf.xlu0
        %v4733 = vpop.trf.xlu0
        %v4734 = vpop.trf.xlu0
        %v4735 = vpop.trf.xlu0
        %v4736 = vpop.trf.xlu0
        %v4737 = vpop.trf.xlu0
        %v4738 = vpop.trf.xlu0
        %v4739 = vpop.trf.xlu0
        %v4740 = vpop.trf.xlu0
        %4741 = vxpose.xlu0.b32.start [1/16] %v4597, 128
        %4742 = vxpose.xlu0.b32.cont [2/16] %v4598, 128
        %4743 = vxpose.xlu0.b32.cont [3/16] %v4599, 128
        %4744 = vxpose.xlu0.b32.cont [4/16] %v4600, 128
        %4745 = vxpose.xlu0.b32.cont [5/16] %v4601, 128
        %4746 = vxpose.xlu0.b32.cont [6/16] %v4602, 128
        %4747 = vxpose.xlu0.b32.cont [7/16] %v4603, 128
        %4748 = vxpose.xlu0.b32.cont [8/16] %v4604, 128
        %4749 = vxpose.xlu0.b32.cont [9/16] %v4605, 128
        %4750 = vxpose.xlu0.b32.cont [10/16] %v4606, 128
        %4751 = vxpose.xlu0.b32.cont [11/16] %v4607, 128
        %4752 = vxpose.xlu0.b32.cont [12/16] %v4608, 128
        %4753 = vxpose.xlu0.b32.cont [13/16] %v4609, 128
        %4754 = vxpose.xlu0.b32.cont [14/16] %v4610, 128
        %4755 = vxpose.xlu0.b32.cont [15/16] %v4611, 128
        %4756 = vxpose.xlu0.b32.end [16/16] %v4612, 128
        %v4757 = vpop.trf.xlu0
        %v4758 = vpop.trf.xlu0
        %v4759 = vpop.trf.xlu0
        %v4760 = vpop.trf.xlu0
        %v4761 = vpop.trf.xlu0
        %v4762 = vpop.trf.xlu0
        %v4763 = vpop.trf.xlu0
        %v4764 = vpop.trf.xlu0
        %v4765 = vpop.trf.xlu0
        %v4766 = vpop.trf.xlu0
        %v4767 = vpop.trf.xlu0
        %v4768 = vpop.trf.xlu0
        %v4769 = vpop.trf.xlu0
        %v4770 = vpop.trf.xlu0
        %v4771 = vpop.trf.xlu0
        %v4772 = vpop.trf.xlu0
        %4773 = vxpose.xlu0.b32.start [1/16] %v4613, 128
        %4774 = vxpose.xlu0.b32.cont [2/16] %v4614, 128
        %4775 = vxpose.xlu0.b32.cont [3/16] %v4615, 128
        %4776 = vxpose.xlu0.b32.cont [4/16] %v4616, 128
        %4777 = vxpose.xlu0.b32.cont [5/16] %v4617, 128
        %4778 = vxpose.xlu0.b32.cont [6/16] %v4618, 128
        %4779 = vxpose.xlu0.b32.cont [7/16] %v4619, 128
        %4780 = vxpose.xlu0.b32.cont [8/16] %v4620, 128
        %4781 = vxpose.xlu0.b32.cont [9/16] %v4621, 128
        %4782 = vxpose.xlu0.b32.cont [10/16] %v4622, 128
        %4783 = vxpose.xlu0.b32.cont [11/16] %v4623, 128
        %4784 = vxpose.xlu0.b32.cont [12/16] %v4624, 128
        %4785 = vxpose.xlu0.b32.cont [13/16] %v4625, 128
        %4786 = vxpose.xlu0.b32.cont [14/16] %v4626, 128
        %4787 = vxpose.xlu0.b32.cont [15/16] %v4627, 128
        %4788 = vxpose.xlu0.b32.end [16/16] %v4628, 128
        %v4789 = vpop.trf.xlu0
        %v4790 = vpop.trf.xlu0
        %v4791 = vpop.trf.xlu0
        %v4792 = vpop.trf.xlu0
        %v4793 = vpop.trf.xlu0
        %v4794 = vpop.trf.xlu0
        %v4795 = vpop.trf.xlu0
        %v4796 = vpop.trf.xlu0
        %v4797 = vpop.trf.xlu0
        %v4798 = vpop.trf.xlu0
        %v4799 = vpop.trf.xlu0
        %v4800 = vpop.trf.xlu0
        %v4801 = vpop.trf.xlu0
        %v4802 = vpop.trf.xlu0
        %v4803 = vpop.trf.xlu0
        %v4804 = vpop.trf.xlu0
        %4805 = vxpose.xlu0.b32.start [1/16] %v4629, 128
        %4806 = vxpose.xlu0.b32.cont [2/16] %v4630, 128
        %4807 = vxpose.xlu0.b32.cont [3/16] %v4631, 128
        %4808 = vxpose.xlu0.b32.cont [4/16] %v4632, 128
        %4809 = vxpose.xlu0.b32.cont [5/16] %v4633, 128
        %4810 = vxpose.xlu0.b32.cont [6/16] %v4634, 128
        %4811 = vxpose.xlu0.b32.cont [7/16] %v4635, 128
        %4812 = vxpose.xlu0.b32.cont [8/16] %v4636, 128
        %4813 = vxpose.xlu0.b32.cont [9/16] %v4637, 128
        %4814 = vxpose.xlu0.b32.cont [10/16] %v4638, 128
        %4815 = vxpose.xlu0.b32.cont [11/16] %v4639, 128
        %4816 = vxpose.xlu0.b32.cont [12/16] %v4640, 128
        %4817 = vxpose.xlu0.b32.cont [13/16] %v4641, 128
        %4818 = vxpose.xlu0.b32.cont [14/16] %v4642, 128
        %4819 = vxpose.xlu0.b32.cont [15/16] %v4643, 128
        %4820 = vxpose.xlu0.b32.end [16/16] %v4644, 128
        %v4821 = vpop.trf.xlu0
        %v4822 = vpop.trf.xlu0
        %v4823 = vpop.trf.xlu0
        %v4824 = vpop.trf.xlu0
        %v4825 = vpop.trf.xlu0
        %v4826 = vpop.trf.xlu0
        %v4827 = vpop.trf.xlu0
        %v4828 = vpop.trf.xlu0
        %v4829 = vpop.trf.xlu0
        %v4830 = vpop.trf.xlu0
        %v4831 = vpop.trf.xlu0
        %v4832 = vpop.trf.xlu0
        %v4833 = vpop.trf.xlu0
        %v4834 = vpop.trf.xlu0
        %v4835 = vpop.trf.xlu0
        %v4836 = vpop.trf.xlu0
        %s4837 = smul.u32 %s450, 16
        %s4838 = smul.addr %s4837, 8
        %s4839 = scalar_lea.vmem %s281, %s4838
        %4840 = vst [vmem:[%s4839] sm:$0xff] %v4725
        %4841 = vst [vmem:[%s4839 + $0x8] sm:$0xff] %v4757
        %4842 = vst [vmem:[%s4839 + $0x10] sm:$0xff] %v4726
        %4843 = vst [vmem:[%s4839 + $0x18] sm:$0xff] %v4758
        %4844 = vst [vmem:[%s4839 + $0x20] sm:$0xff] %v4727
        %4845 = vst [vmem:[%s4839 + $0x28] sm:$0xff] %v4759
        %4846 = vst [vmem:[%s4839 + $0x30] sm:$0xff] %v4728
        %4847 = vst [vmem:[%s4839 + $0x38] sm:$0xff] %v4760
        %4848 = vst [vmem:[%s4839 + $0x40] sm:$0xff] %v4789
        %4849 = vst [vmem:[%s4839 + $0x48] sm:$0xff] %v4821
        %4850 = vst [vmem:[%s4839 + $0x50] sm:$0xff] %v4790
        %4851 = vst [vmem:[%s4839 + $0x58] sm:$0xff] %v4822
        %4852 = vst [vmem:[%s4839 + $0x60] sm:$0xff] %v4791
        %4853 = vst [vmem:[%s4839 + $0x68] sm:$0xff] %v4823
        %4854 = vst [vmem:[%s4839 + $0x70] sm:$0xff] %v4792
        %4855 = vst [vmem:[%s4839 + $0x78] sm:$0xff] %v4824
      $region45: #{bcrnn_forward.3} parent=35 // loop_footer
        %s445 = sadd.s32 1, %s441
      $region46: #{bcrnn_forward.3} parent=35 // loop_footer_branch
        %440 = sbr.rel target = $region42
      $region47: #{bcrnn_forward.3} parent=35 // loop_exit
        _
      %s4856 = ssub.s32 1, %s19
      %s4857 = smul.u32 %s20, %s4856
      %s4858 = ssub.s32 0, %s20
      %s4859 = smul.u32 %s4858, %s19
      %s4860 = sadd.s32 %s4857, %s4859
      %s4861 = smul.u32 4, %s4860
      %p4862 = scmp.lt.s32.totalorder %s19, 1
      %s4863 = scalar_select %p4862, %s19, 1
      %p4864 = scmp.lt.s32.totalorder %s4861, 3
      %s4865 = scalar_select %p4864, %s4861, 3
      %s4866 = smul.addr %s4865, 16
      %s4867 = smul.addr %s4863, 64
      %s4868 = sadd.s32 %s4866, %s4867
      %s4869 = smul.addr %s4868, 8
      %s4870 = scalar_lea.vmem %s4, %s4869
      // Predicated region
      $region48: #{bcrnn_forward.3} parent=35 // pred_check
        %p4871 = pneg %p156
      $region49: #{bcrnn_forward.3} parent=35 // pred_check_branch
        %4873 = sbr.rel (%p4871) target = $region51
      $region50: #{bcrnn_forward.3} parent=35 // pred_region
        %s4874 = ssub.s32 1, %s19
        %s4875 = smul.u32 %s20, %s4874
        %s4876 = ssub.s32 0, %s20
        %s4877 = smul.u32 %s4876, %s19
        %s4878 = sadd.s32 %s4875, %s4877
        %s4879 = smul.u32 4, %s4878
      $region51: #{bcrnn_forward.3} parent=35 // pred_fallthru
        _
    $region36: #{bcrnn_forward.3} parent=5 // pred_fallthru
      _
    %p4880 = scmp.le.s32.totalorder 2, %s10
    // Predicated region
    $region52: #{bcrnn_forward.3} parent=5 // pred_check
      %p4881 = pneg %p4880
    $region53: #{bcrnn_forward.3} parent=5 // pred_check_branch
      %4883 = sbr.rel (%p4881) target = $region55
    $region54: #{bcrnn_forward.3} parent=5 // pred_region
      %s4884 = ssub.s32 %s10, 2
      // Predicated region
      $region56: #{bcrnn_forward.3} parent=54 // pred_check
        %p4885 = pneg %p162
      $region57: #{bcrnn_forward.3} parent=54 // pred_check_branch
        %4887 = sbr.rel (%p4885) target = $region59
      $region58: #{bcrnn_forward.3} parent=54 // pred_region
        %s4888 = ssub.s32 1, %s21
        %s4889 = smul.u32 %s22, %s4888
        %s4890 = ssub.s32 0, %s22
        %s4891 = smul.u32 %s4890, %s21
        %s4892 = sadd.s32 %s4889, %s4891
        %s4893 = smul.u32 4, %s4892
        %p4894 = scmp.lt.s32.totalorder %s21, 1
        %s4895 = scalar_select %p4894, %s21, 1
        %p4896 = scmp.lt.s32.totalorder %s4893, 3
        %s4897 = scalar_select %p4896, %s4893, 3
        %s4898 = smul.addr %s4897, 16
        %s4899 = smul.addr %s4895, 64
        %s4900 = sadd.s32 %s4898, %s4899
        %s4901 = smul.addr %s4900, 8
        %s4902 = scalar_lea.vmem %s4, %s4901
      $region59: #{bcrnn_forward.3} parent=54 // pred_fallthru
        _
    $region55: #{bcrnn_forward.3} parent=5 // pred_fallthru
      _
  $region6: #{bcrnn_forward.3} parent=0 // loop_footer
    %s14 = sadd.s32 1, %s10
  $region7: #{bcrnn_forward.3} parent=0 // loop_footer_branch
    %9 = sbr.rel target = $region3
  $region8: #{bcrnn_forward.3} parent=0 // loop_exit
    _

</llo_original>
